<compile_context>
chip_gen: v7x
topology: tpu7x:2x2x1
jax: 0.10.0
libtpu: 0.0.40
codegen_flags: <defaults>
</compile_context>

<pallas_src>
import numpy as np

import jax
import jax.numpy as jnp
from jax.experimental import pallas as pl
from jax.experimental.pallas import tpu as pltpu

_BN_EPS = 1e-5


def make_decoder_kernel(cfgs):
    """cfgs: per-layer static tuples (cout, k, nl_in, nl_out, has_bn)."""

    def kernel(*refs):
        x_ref = refs[0]
        o_ref = refs[-1]
        a = x_ref[...]                                     # (Cin0, N*Lin0) f32
        idx = 1
        for (cout, k, nl_in, nl_out, has_bn) in cfgs:
            w = refs[idx][...]; idx += 1                   # (K*Cout, Cin) stacked taps
            if has_bn:
                gamma = refs[idx][...]; idx += 1           # (Cout, 1)
                beta = refs[idx][...]; idx += 1            # (Cout, 1)

            # 1) ONE MXU matmul for all K taps of this layer (channel contraction).
            #    (Default f32 precision; set lax.Precision.HIGHEST if bit-parity with
            #     PyTorch f32 ConvTranspose1d is required.)
            z = jnp.dot(w, a, preferred_element_type=jnp.float32)      # (K*Cout, NL_in)

            # 2) spatial scatter o = l*stride + t - pad via PRECOMPUTED 0/1 matrices
            #    (bf16 inputs, exact values; converted to f32 right before the dot).
            #    No in-kernel iota/compare work, no quadratic int32 temporaries.
            y = jnp.zeros((cout, nl_out), jnp.float32)
            for t in range(k):                             # static, K <= 10
                s_t = refs[idx][...].astype(jnp.float32); idx += 1     # (NL_in, NL_out)
                z_t = z[t * cout:(t + 1) * cout, :]                    # (Cout, NL_in)
                y = y + jnp.dot(z_t, s_t, preferred_element_type=jnp.float32)

            # 3) fused BatchNorm (training-mode batch stats, two-pass variance) + ReLU,
            #    or Tanh on the last layer.
            if has_bn:
                inv_n = 1.0 / float(nl_out)
                mean = jnp.sum(y, axis=1, keepdims=True) * inv_n
                yc = y - mean
                var = jnp.sum(yc * yc, axis=1, keepdims=True) * inv_n  # biased batch var
                yn = yc * jax.lax.rsqrt(var + _BN_EPS)
                a = jnp.maximum(yn * gamma + beta, 0.0)
            else:
                a = jnp.tanh(y)
        o_ref[...] = a                                     # lane-dense (nc, N*Lout)

    return kernel


def _make_scatter_taps(n_batch, l_in, l_out, k, stride, pad, dtype=jnp.bfloat16):
    """Static per-tap 0/1 scatter matrices: input col (n, l) -> output col (n, l*s+t-p)."""
    mats = []
    for t in range(k):
        s = np.zeros((n_batch * l_in, n_batch * l_out), np.float32)
        for n in range(n_batch):
            for l in range(l_in):
                o = l * stride + t - pad
                if 0 <= o < l_out:
                    s[n * l_in + l, n * l_out + o] = 1.0
        mats.append(jnp.asarray(s, dtype))
    return mats


def ecg_decoder_forward(z, conv_bn_params, layer_cfg):
    """z: (N, Cin, Lin) NCL -> (N, nc, Lout_final) NCL.

    conv_bn_params: per layer (w_stack (K*Cout, Cin), gamma (Cout,1) or None, beta or None)
    """
    n_batch, c_in, l_in = z.shape
    x2d = jnp.transpose(z, (1, 0, 2)).reshape(c_in, n_batch * l_in)    # (C, N*L)

    cfgs = []
    kernel_inputs = [x2d]
    l_cur = l_in
    flops = 0
    transcendentals = 0
    for (cin, cout, k, stride, pad, has_bn), (w_stack, gamma, beta) in zip(
            layer_cfg, conv_bn_params):
        l_out = (l_cur - 1) * stride - 2 * pad + k
        nl_in, nl_out = n_batch * l_cur, n_batch * l_out
        cfgs.append((cout, k, nl_in, nl_out, has_bn))
        kernel_inputs.append(w_stack)
        if has_bn:
            kernel_inputs.append(gamma)
            kernel_inputs.append(beta)
            transcendentals += cout                  # rsqrt per channel
        else:
            transcendentals += cout * nl_out         # tanh per output element
        kernel_inputs.extend(_make_scatter_taps(n_batch, l_cur, l_out, k, stride, pad))
        flops += 2 * (k * cout) * cin * nl_in        # channel matmul
        flops += 2 * k * cout * nl_in * nl_out       # per-tap scatter matmuls (actual work)
        l_cur = l_out
    nc = layer_cfg[-1][1]

    bytes_accessed = sum(int(a.size) * a.dtype.itemsize for a in kernel_inputs)
    bytes_accessed += nc * n_batch * l_cur * 4       # output

    kernel = make_decoder_kernel(tuple(cfgs))
    vmem_spec = pl.BlockSpec(memory_space=pltpu.MemorySpace.VMEM)
    out2d = pl.pallas_call(
        kernel,
        out_shape=jax.ShapeDtypeStruct((nc, n_batch * l_cur), jnp.float32),
        in_specs=[vmem_spec] * len(kernel_inputs),
        out_specs=vmem_spec,
        compiler_params=pltpu.CompilerParams(vmem_limit_bytes=32 * 1024 * 1024),
        cost_estimate=pl.CostEstimate(
            flops=int(flops),
            transcendentals=int(transcendentals),
            bytes_accessed=int(bytes_accessed)),
    )(*kernel_inputs)

    return jnp.transpose(out2d.reshape(nc, n_batch, l_cur), (1, 0, 2))


if __name__ == "__main__":
    class Opt:
        nz = 8
        ngf = 4
        nc = 1

    opt = Opt()
    N, L_IN = 2, 1  # DCGAN-style latent: (N, nz, 1)

    layer_cfg = [
        # (Cin,          Cout,         K, stride, pad, has_bn)
        (opt.nz,       opt.ngf * 16, 10, 1, 0, True),
        (opt.ngf * 16, opt.ngf * 8,   4, 2, 1, True),
        (opt.ngf * 8,  opt.ngf * 4,   4, 2, 1, True),
        (opt.ngf * 4,  opt.ngf * 2,   4, 2, 1, True),
        (opt.ngf * 2,  opt.ngf,       4, 2, 1, True),
        (opt.ngf,      opt.nc,        4, 2, 1, False),
    ]

    key = jax.random.PRNGKey(0)
    key, kz = jax.random.split(key)
    z = jax.random.normal(kz, (N, opt.nz, L_IN), jnp.float32)

    # Deterministic DCGAN-style init: conv weights ~ N(0, 0.02); BN gamma=1, beta=0.
    # TODO(synk): BatchNorm1d running-stat updates are not modeled (forward-only batch stats).
    conv_bn_params = []
    for (cin, cout, k_sz, stride, pad, has_bn) in layer_cfg:
        key, kw = jax.random.split(key)
        # PyTorch ConvTranspose1d weight layout: (Cin, Cout, K) -> stacked (K*Cout, Cin)
        w = 0.02 * jax.random.normal(kw, (cin, cout, k_sz), jnp.float32)
        w_stack = jnp.transpose(w, (2, 1, 0)).reshape(k_sz * cout, cin)
        if has_bn:
            conv_bn_params.append((w_stack,
                                   jnp.ones((cout, 1), jnp.float32),
                                   jnp.zeros((cout, 1), jnp.float32)))
        else:
            conv_bn_params.append((w_stack, None, None))

    out = ecg_decoder_forward(z, conv_bn_params, layer_cfg)
    out = jax.block_until_ready(out)

    assert out.shape == (N, opt.nc, 320), out.shape
    assert bool(jnp.all(jnp.isfinite(out)))
    assert bool(jnp.all(jnp.abs(out) <= 1.0))  # tanh range
    print("KERNEL_OK")
</pallas_src>

<mosaic_0001>
module attributes {stable_mosaic.version = 11 : i64} {
  func.func @kernel(%arg0: memref<8x2xf32, #tpu.memory_space<vmem>>, %arg1: memref<640x8xf32, #tpu.memory_space<vmem>>, %arg2: memref<64x1xf32, #tpu.memory_space<vmem>>, %arg3: memref<64x1xf32, #tpu.memory_space<vmem>>, %arg4: memref<2x20xbf16, #tpu.memory_space<vmem>>, %arg5: memref<2x20xbf16, #tpu.memory_space<vmem>>, %arg6: memref<2x20xbf16, #tpu.memory_space<vmem>>, %arg7: memref<2x20xbf16, #tpu.memory_space<vmem>>, %arg8: memref<2x20xbf16, #tpu.memory_space<vmem>>, %arg9: memref<2x20xbf16, #tpu.memory_space<vmem>>, %arg10: memref<2x20xbf16, #tpu.memory_space<vmem>>, %arg11: memref<2x20xbf16, #tpu.memory_space<vmem>>, %arg12: memref<2x20xbf16, #tpu.memory_space<vmem>>, %arg13: memref<2x20xbf16, #tpu.memory_space<vmem>>, %arg14: memref<128x64xf32, #tpu.memory_space<vmem>>, %arg15: memref<32x1xf32, #tpu.memory_space<vmem>>, %arg16: memref<32x1xf32, #tpu.memory_space<vmem>>, %arg17: memref<20x40xbf16, #tpu.memory_space<vmem>>, %arg18: memref<20x40xbf16, #tpu.memory_space<vmem>>, %arg19: memref<20x40xbf16, #tpu.memory_space<vmem>>, %arg20: memref<20x40xbf16, #tpu.memory_space<vmem>>, %arg21: memref<64x32xf32, #tpu.memory_space<vmem>>, %arg22: memref<16x1xf32, #tpu.memory_space<vmem>>, %arg23: memref<16x1xf32, #tpu.memory_space<vmem>>, %arg24: memref<40x80xbf16, #tpu.memory_space<vmem>>, %arg25: memref<40x80xbf16, #tpu.memory_space<vmem>>, %arg26: memref<40x80xbf16, #tpu.memory_space<vmem>>, %arg27: memref<40x80xbf16, #tpu.memory_space<vmem>>, %arg28: memref<32x16xf32, #tpu.memory_space<vmem>>, %arg29: memref<8x1xf32, #tpu.memory_space<vmem>>, %arg30: memref<8x1xf32, #tpu.memory_space<vmem>>, %arg31: memref<80x160xbf16, #tpu.memory_space<vmem>>, %arg32: memref<80x160xbf16, #tpu.memory_space<vmem>>, %arg33: memref<80x160xbf16, #tpu.memory_space<vmem>>, %arg34: memref<80x160xbf16, #tpu.memory_space<vmem>>, %arg35: memref<16x8xf32, #tpu.memory_space<vmem>>, %arg36: memref<4x1xf32, #tpu.memory_space<vmem>>, %arg37: memref<4x1xf32, #tpu.memory_space<vmem>>, %arg38: memref<160x320xbf16, #tpu.memory_space<vmem>>, %arg39: memref<160x320xbf16, #tpu.memory_space<vmem>>, %arg40: memref<160x320xbf16, #tpu.memory_space<vmem>>, %arg41: memref<160x320xbf16, #tpu.memory_space<vmem>>, %arg42: memref<4x4xf32, #tpu.memory_space<vmem>>, %arg43: memref<320x640xbf16, #tpu.memory_space<vmem>>, %arg44: memref<320x640xbf16, #tpu.memory_space<vmem>>, %arg45: memref<320x640xbf16, #tpu.memory_space<vmem>>, %arg46: memref<320x640xbf16, #tpu.memory_space<vmem>>, %arg47: memref<1x640xf32, #tpu.memory_space<vmem>>) attributes {dimension_semantics = [], scalar_prefetch = 0 : i64, scratch_operands = 0 : i64, tpu.core_type = #tpu.core_type<tc>} {
    %c0 = arith.constant 0 : index
    %c0_0 = arith.constant 0 : index
    %0 = vector.load %arg0[%c0, %c0_0] : memref<8x2xf32, #tpu.memory_space<vmem>>, vector<8x2xf32>
    %c0_1 = arith.constant 0 : index
    %c0_2 = arith.constant 0 : index
    %1 = vector.load %arg1[%c0_1, %c0_2] : memref<640x8xf32, #tpu.memory_space<vmem>>, vector<640x8xf32>
    %c0_3 = arith.constant 0 : index
    %c0_4 = arith.constant 0 : index
    %2 = vector.load %arg2[%c0_3, %c0_4] : memref<64x1xf32, #tpu.memory_space<vmem>>, vector<64x1xf32>
    %c0_5 = arith.constant 0 : index
    %c0_6 = arith.constant 0 : index
    %3 = vector.load %arg3[%c0_5, %c0_6] : memref<64x1xf32, #tpu.memory_space<vmem>>, vector<64x1xf32>
    %cst = arith.constant dense<0.000000e+00> : vector<640x2xf32>
    %4 = tpu.matmul %1, %0, %cst {dimension_numbers = #tpu.dot_dimension_numbers<[1], [0], [0], [1], [0, 0, 1, 1], [], []>} : vector<640x8xf32>, vector<8x2xf32>, vector<640x2xf32> -> vector<640x2xf32>
    %cst_7 = arith.constant 0.000000e+00 : f32
    %5 = vector.broadcast %cst_7 : f32 to vector<64x20xf32>
    %c0_8 = arith.constant 0 : index
    %c0_9 = arith.constant 0 : index
    %6 = vector.load %arg4[%c0_8, %c0_9] : memref<2x20xbf16, #tpu.memory_space<vmem>>, vector<2x20xbf16>
    %7 = arith.extf %6 : vector<2x20xbf16> to vector<2x20xf32>
    %8 = vector.extract_strided_slice %4 {offsets = [0, 0], sizes = [64, 2], strides = [1, 1]} : vector<640x2xf32> to vector<64x2xf32>
    %cst_10 = arith.constant dense<0.000000e+00> : vector<64x20xf32>
    %9 = tpu.matmul %8, %7, %cst_10 {dimension_numbers = #tpu.dot_dimension_numbers<[1], [0], [0], [1], [0, 0, 1, 1], [], []>} : vector<64x2xf32>, vector<2x20xf32>, vector<64x20xf32> -> vector<64x20xf32>
    %10 = arith.addf %5, %9 : vector<64x20xf32>
    %c0_11 = arith.constant 0 : index
    %c0_12 = arith.constant 0 : index
    %11 = vector.load %arg5[%c0_11, %c0_12] : memref<2x20xbf16, #tpu.memory_space<vmem>>, vector<2x20xbf16>
    %12 = arith.extf %11 : vector<2x20xbf16> to vector<2x20xf32>
    %13 = vector.extract_strided_slice %4 {offsets = [64, 0], sizes = [64, 2], strides = [1, 1]} : vector<640x2xf32> to vector<64x2xf32>
    %cst_13 = arith.constant dense<0.000000e+00> : vector<64x20xf32>
    %14 = tpu.matmul %13, %12, %cst_13 {dimension_numbers = #tpu.dot_dimension_numbers<[1], [0], [0], [1], [0, 0, 1, 1], [], []>} : vector<64x2xf32>, vector<2x20xf32>, vector<64x20xf32> -> vector<64x20xf32>
    %15 = arith.addf %10, %14 : vector<64x20xf32>
    %c0_14 = arith.constant 0 : index
    %c0_15 = arith.constant 0 : index
    %16 = vector.load %arg6[%c0_14, %c0_15] : memref<2x20xbf16, #tpu.memory_space<vmem>>, vector<2x20xbf16>
    %17 = arith.extf %16 : vector<2x20xbf16> to vector<2x20xf32>
    %18 = vector.extract_strided_slice %4 {offsets = [128, 0], sizes = [64, 2], strides = [1, 1]} : vector<640x2xf32> to vector<64x2xf32>
    %cst_16 = arith.constant dense<0.000000e+00> : vector<64x20xf32>
    %19 = tpu.matmul %18, %17, %cst_16 {dimension_numbers = #tpu.dot_dimension_numbers<[1], [0], [0], [1], [0, 0, 1, 1], [], []>} : vector<64x2xf32>, vector<2x20xf32>, vector<64x20xf32> -> vector<64x20xf32>
    %20 = arith.addf %15, %19 : vector<64x20xf32>
    %c0_17 = arith.constant 0 : index
    %c0_18 = arith.constant 0 : index
    %21 = vector.load %arg7[%c0_17, %c0_18] : memref<2x20xbf16, #tpu.memory_space<vmem>>, vector<2x20xbf16>
    %22 = arith.extf %21 : vector<2x20xbf16> to vector<2x20xf32>
    %23 = vector.extract_strided_slice %4 {offsets = [192, 0], sizes = [64, 2], strides = [1, 1]} : vector<640x2xf32> to vector<64x2xf32>
    %cst_19 = arith.constant dense<0.000000e+00> : vector<64x20xf32>
    %24 = tpu.matmul %23, %22, %cst_19 {dimension_numbers = #tpu.dot_dimension_numbers<[1], [0], [0], [1], [0, 0, 1, 1], [], []>} : vector<64x2xf32>, vector<2x20xf32>, vector<64x20xf32> -> vector<64x20xf32>
    %25 = arith.addf %20, %24 : vector<64x20xf32>
    %c0_20 = arith.constant 0 : index
    %c0_21 = arith.constant 0 : index
    %26 = vector.load %arg8[%c0_20, %c0_21] : memref<2x20xbf16, #tpu.memory_space<vmem>>, vector<2x20xbf16>
    %27 = arith.extf %26 : vector<2x20xbf16> to vector<2x20xf32>
    %28 = vector.extract_strided_slice %4 {offsets = [256, 0], sizes = [64, 2], strides = [1, 1]} : vector<640x2xf32> to vector<64x2xf32>
    %cst_22 = arith.constant dense<0.000000e+00> : vector<64x20xf32>
    %29 = tpu.matmul %28, %27, %cst_22 {dimension_numbers = #tpu.dot_dimension_numbers<[1], [0], [0], [1], [0, 0, 1, 1], [], []>} : vector<64x2xf32>, vector<2x20xf32>, vector<64x20xf32> -> vector<64x20xf32>
    %30 = arith.addf %25, %29 : vector<64x20xf32>
    %c0_23 = arith.constant 0 : index
    %c0_24 = arith.constant 0 : index
    %31 = vector.load %arg9[%c0_23, %c0_24] : memref<2x20xbf16, #tpu.memory_space<vmem>>, vector<2x20xbf16>
    %32 = arith.extf %31 : vector<2x20xbf16> to vector<2x20xf32>
    %33 = vector.extract_strided_slice %4 {offsets = [320, 0], sizes = [64, 2], strides = [1, 1]} : vector<640x2xf32> to vector<64x2xf32>
    %cst_25 = arith.constant dense<0.000000e+00> : vector<64x20xf32>
    %34 = tpu.matmul %33, %32, %cst_25 {dimension_numbers = #tpu.dot_dimension_numbers<[1], [0], [0], [1], [0, 0, 1, 1], [], []>} : vector<64x2xf32>, vector<2x20xf32>, vector<64x20xf32> -> vector<64x20xf32>
    %35 = arith.addf %30, %34 : vector<64x20xf32>
    %c0_26 = arith.constant 0 : index
    %c0_27 = arith.constant 0 : index
    %36 = vector.load %arg10[%c0_26, %c0_27] : memref<2x20xbf16, #tpu.memory_space<vmem>>, vector<2x20xbf16>
    %37 = arith.extf %36 : vector<2x20xbf16> to vector<2x20xf32>
    %38 = vector.extract_strided_slice %4 {offsets = [384, 0], sizes = [64, 2], strides = [1, 1]} : vector<640x2xf32> to vector<64x2xf32>
    %cst_28 = arith.constant dense<0.000000e+00> : vector<64x20xf32>
    %39 = tpu.matmul %38, %37, %cst_28 {dimension_numbers = #tpu.dot_dimension_numbers<[1], [0], [0], [1], [0, 0, 1, 1], [], []>} : vector<64x2xf32>, vector<2x20xf32>, vector<64x20xf32> -> vector<64x20xf32>
    %40 = arith.addf %35, %39 : vector<64x20xf32>
    %c0_29 = arith.constant 0 : index
    %c0_30 = arith.constant 0 : index
    %41 = vector.load %arg11[%c0_29, %c0_30] : memref<2x20xbf16, #tpu.memory_space<vmem>>, vector<2x20xbf16>
    %42 = arith.extf %41 : vector<2x20xbf16> to vector<2x20xf32>
    %43 = vector.extract_strided_slice %4 {offsets = [448, 0], sizes = [64, 2], strides = [1, 1]} : vector<640x2xf32> to vector<64x2xf32>
    %cst_31 = arith.constant dense<0.000000e+00> : vector<64x20xf32>
    %44 = tpu.matmul %43, %42, %cst_31 {dimension_numbers = #tpu.dot_dimension_numbers<[1], [0], [0], [1], [0, 0, 1, 1], [], []>} : vector<64x2xf32>, vector<2x20xf32>, vector<64x20xf32> -> vector<64x20xf32>
    %45 = arith.addf %40, %44 : vector<64x20xf32>
    %c0_32 = arith.constant 0 : index
    %c0_33 = arith.constant 0 : index
    %46 = vector.load %arg12[%c0_32, %c0_33] : memref<2x20xbf16, #tpu.memory_space<vmem>>, vector<2x20xbf16>
    %47 = arith.extf %46 : vector<2x20xbf16> to vector<2x20xf32>
    %48 = vector.extract_strided_slice %4 {offsets = [512, 0], sizes = [64, 2], strides = [1, 1]} : vector<640x2xf32> to vector<64x2xf32>
    %cst_34 = arith.constant dense<0.000000e+00> : vector<64x20xf32>
    %49 = tpu.matmul %48, %47, %cst_34 {dimension_numbers = #tpu.dot_dimension_numbers<[1], [0], [0], [1], [0, 0, 1, 1], [], []>} : vector<64x2xf32>, vector<2x20xf32>, vector<64x20xf32> -> vector<64x20xf32>
    %50 = arith.addf %45, %49 : vector<64x20xf32>
    %c0_35 = arith.constant 0 : index
    %c0_36 = arith.constant 0 : index
    %51 = vector.load %arg13[%c0_35, %c0_36] : memref<2x20xbf16, #tpu.memory_space<vmem>>, vector<2x20xbf16>
    %52 = arith.extf %51 : vector<2x20xbf16> to vector<2x20xf32>
    %53 = vector.extract_strided_slice %4 {offsets = [576, 0], sizes = [64, 2], strides = [1, 1]} : vector<640x2xf32> to vector<64x2xf32>
    %cst_37 = arith.constant dense<0.000000e+00> : vector<64x20xf32>
    %54 = tpu.matmul %53, %52, %cst_37 {dimension_numbers = #tpu.dot_dimension_numbers<[1], [0], [0], [1], [0, 0, 1, 1], [], []>} : vector<64x2xf32>, vector<2x20xf32>, vector<64x20xf32> -> vector<64x20xf32>
    %55 = arith.addf %50, %54 : vector<64x20xf32>
    %cst_38 = arith.constant dense<0.000000e+00> : vector<64xf32>
    %56 = vector.multi_reduction <add>, %55, %cst_38 [1] : vector<64x20xf32> to vector<64xf32>
    %57 = vector.shape_cast %56 : vector<64xf32> to vector<64x1xf32>
    %cst_39 = arith.constant 5.000000e-02 : f32
    %58 = vector.broadcast %cst_39 : f32 to vector<64x1xf32>
    %59 = arith.mulf %57, %58 : vector<64x1xf32>
    %60 = vector.broadcast %59 : vector<64x1xf32> to vector<64x20xf32>
    %61 = arith.subf %55, %60 : vector<64x20xf32>
    %62 = arith.mulf %61, %61 : vector<64x20xf32>
    %cst_40 = arith.constant dense<0.000000e+00> : vector<64xf32>
    %63 = vector.multi_reduction <add>, %62, %cst_40 [1] : vector<64x20xf32> to vector<64xf32>
    %64 = vector.shape_cast %63 : vector<64xf32> to vector<64x1xf32>
    %cst_41 = arith.constant 5.000000e-02 : f32
    %65 = vector.broadcast %cst_41 : f32 to vector<64x1xf32>
    %66 = arith.mulf %64, %65 : vector<64x1xf32>
    %cst_42 = arith.constant 9.99999974E-6 : f32
    %67 = vector.broadcast %cst_42 : f32 to vector<64x1xf32>
    %68 = arith.addf %66, %67 : vector<64x1xf32>
    %69 = math.rsqrt %68 : vector<64x1xf32>
    %70 = vector.broadcast %69 : vector<64x1xf32> to vector<64x20xf32>
    %71 = arith.mulf %61, %70 : vector<64x20xf32>
    %72 = vector.broadcast %2 : vector<64x1xf32> to vector<64x20xf32>
    %73 = arith.mulf %71, %72 : vector<64x20xf32>
    %74 = vector.broadcast %3 : vector<64x1xf32> to vector<64x20xf32>
    %75 = arith.addf %73, %74 : vector<64x20xf32>
    %cst_43 = arith.constant 0.000000e+00 : f32
    %76 = vector.broadcast %cst_43 : f32 to vector<64x20xf32>
    %77 = arith.maximumf %75, %76 : vector<64x20xf32>
    %c0_44 = arith.constant 0 : index
    %c0_45 = arith.constant 0 : index
    %78 = vector.load %arg14[%c0_44, %c0_45] : memref<128x64xf32, #tpu.memory_space<vmem>>, vector<128x64xf32>
    %c0_46 = arith.constant 0 : index
    %c0_47 = arith.constant 0 : index
    %79 = vector.load %arg15[%c0_46, %c0_47] : memref<32x1xf32, #tpu.memory_space<vmem>>, vector<32x1xf32>
    %c0_48 = arith.constant 0 : index
    %c0_49 = arith.constant 0 : index
    %80 = vector.load %arg16[%c0_48, %c0_49] : memref<32x1xf32, #tpu.memory_space<vmem>>, vector<32x1xf32>
    %cst_50 = arith.constant dense<0.000000e+00> : vector<128x20xf32>
    %81 = tpu.matmul %78, %77, %cst_50 {dimension_numbers = #tpu.dot_dimension_numbers<[1], [0], [0], [1], [0, 0, 1, 1], [], []>} : vector<128x64xf32>, vector<64x20xf32>, vector<128x20xf32> -> vector<128x20xf32>
    %cst_51 = arith.constant 0.000000e+00 : f32
    %82 = vector.broadcast %cst_51 : f32 to vector<32x40xf32>
    %c0_52 = arith.constant 0 : index
    %c0_53 = arith.constant 0 : index
    %83 = vector.load %arg17[%c0_52, %c0_53] : memref<20x40xbf16, #tpu.memory_space<vmem>>, vector<20x40xbf16>
    %84 = arith.extf %83 : vector<20x40xbf16> to vector<20x40xf32>
    %85 = vector.extract_strided_slice %81 {offsets = [0, 0], sizes = [32, 20], strides = [1, 1]} : vector<128x20xf32> to vector<32x20xf32>
    %cst_54 = arith.constant dense<0.000000e+00> : vector<32x40xf32>
    %86 = tpu.matmul %85, %84, %cst_54 {dimension_numbers = #tpu.dot_dimension_numbers<[1], [0], [0], [1], [0, 0, 1, 1], [], []>} : vector<32x20xf32>, vector<20x40xf32>, vector<32x40xf32> -> vector<32x40xf32>
    %87 = arith.addf %82, %86 : vector<32x40xf32>
    %c0_55 = arith.constant 0 : index
    %c0_56 = arith.constant 0 : index
    %88 = vector.load %arg18[%c0_55, %c0_56] : memref<20x40xbf16, #tpu.memory_space<vmem>>, vector<20x40xbf16>
    %89 = arith.extf %88 : vector<20x40xbf16> to vector<20x40xf32>
    %90 = vector.extract_strided_slice %81 {offsets = [32, 0], sizes = [32, 20], strides = [1, 1]} : vector<128x20xf32> to vector<32x20xf32>
    %cst_57 = arith.constant dense<0.000000e+00> : vector<32x40xf32>
    %91 = tpu.matmul %90, %89, %cst_57 {dimension_numbers = #tpu.dot_dimension_numbers<[1], [0], [0], [1], [0, 0, 1, 1], [], []>} : vector<32x20xf32>, vector<20x40xf32>, vector<32x40xf32> -> vector<32x40xf32>
    %92 = arith.addf %87, %91 : vector<32x40xf32>
    %c0_58 = arith.constant 0 : index
    %c0_59 = arith.constant 0 : index
    %93 = vector.load %arg19[%c0_58, %c0_59] : memref<20x40xbf16, #tpu.memory_space<vmem>>, vector<20x40xbf16>
    %94 = arith.extf %93 : vector<20x40xbf16> to vector<20x40xf32>
    %95 = vector.extract_strided_slice %81 {offsets = [64, 0], sizes = [32, 20], strides = [1, 1]} : vector<128x20xf32> to vector<32x20xf32>
    %cst_60 = arith.constant dense<0.000000e+00> : vector<32x40xf32>
    %96 = tpu.matmul %95, %94, %cst_60 {dimension_numbers = #tpu.dot_dimension_numbers<[1], [0], [0], [1], [0, 0, 1, 1], [], []>} : vector<32x20xf32>, vector<20x40xf32>, vector<32x40xf32> -> vector<32x40xf32>
    %97 = arith.addf %92, %96 : vector<32x40xf32>
    %c0_61 = arith.constant 0 : index
    %c0_62 = arith.constant 0 : index
    %98 = vector.load %arg20[%c0_61, %c0_62] : memref<20x40xbf16, #tpu.memory_space<vmem>>, vector<20x40xbf16>
    %99 = arith.extf %98 : vector<20x40xbf16> to vector<20x40xf32>
    %100 = vector.extract_strided_slice %81 {offsets = [96, 0], sizes = [32, 20], strides = [1, 1]} : vector<128x20xf32> to vector<32x20xf32>
    %cst_63 = arith.constant dense<0.000000e+00> : vector<32x40xf32>
    %101 = tpu.matmul %100, %99, %cst_63 {dimension_numbers = #tpu.dot_dimension_numbers<[1], [0], [0], [1], [0, 0, 1, 1], [], []>} : vector<32x20xf32>, vector<20x40xf32>, vector<32x40xf32> -> vector<32x40xf32>
    %102 = arith.addf %97, %101 : vector<32x40xf32>
    %cst_64 = arith.constant dense<0.000000e+00> : vector<32xf32>
    %103 = vector.multi_reduction <add>, %102, %cst_64 [1] : vector<32x40xf32> to vector<32xf32>
    %104 = vector.shape_cast %103 : vector<32xf32> to vector<32x1xf32>
    %cst_65 = arith.constant 2.500000e-02 : f32
    %105 = vector.broadcast %cst_65 : f32 to vector<32x1xf32>
    %106 = arith.mulf %104, %105 : vector<32x1xf32>
    %107 = vector.broadcast %106 : vector<32x1xf32> to vector<32x40xf32>
    %108 = arith.subf %102, %107 : vector<32x40xf32>
    %109 = arith.mulf %108, %108 : vector<32x40xf32>
    %cst_66 = arith.constant dense<0.000000e+00> : vector<32xf32>
    %110 = vector.multi_reduction <add>, %109, %cst_66 [1] : vector<32x40xf32> to vector<32xf32>
    %111 = vector.shape_cast %110 : vector<32xf32> to vector<32x1xf32>
    %cst_67 = arith.constant 2.500000e-02 : f32
    %112 = vector.broadcast %cst_67 : f32 to vector<32x1xf32>
    %113 = arith.mulf %111, %112 : vector<32x1xf32>
    %cst_68 = arith.constant 9.99999974E-6 : f32
    %114 = vector.broadcast %cst_68 : f32 to vector<32x1xf32>
    %115 = arith.addf %113, %114 : vector<32x1xf32>
    %116 = math.rsqrt %115 : vector<32x1xf32>
    %117 = vector.broadcast %116 : vector<32x1xf32> to vector<32x40xf32>
    %118 = arith.mulf %108, %117 : vector<32x40xf32>
    %119 = vector.broadcast %79 : vector<32x1xf32> to vector<32x40xf32>
    %120 = arith.mulf %118, %119 : vector<32x40xf32>
    %121 = vector.broadcast %80 : vector<32x1xf32> to vector<32x40xf32>
    %122 = arith.addf %120, %121 : vector<32x40xf32>
    %cst_69 = arith.constant 0.000000e+00 : f32
    %123 = vector.broadcast %cst_69 : f32 to vector<32x40xf32>
    %124 = arith.maximumf %122, %123 : vector<32x40xf32>
    %c0_70 = arith.constant 0 : index
    %c0_71 = arith.constant 0 : index
    %125 = vector.load %arg21[%c0_70, %c0_71] : memref<64x32xf32, #tpu.memory_space<vmem>>, vector<64x32xf32>
    %c0_72 = arith.constant 0 : index
    %c0_73 = arith.constant 0 : index
    %126 = vector.load %arg22[%c0_72, %c0_73] : memref<16x1xf32, #tpu.memory_space<vmem>>, vector<16x1xf32>
    %c0_74 = arith.constant 0 : index
    %c0_75 = arith.constant 0 : index
    %127 = vector.load %arg23[%c0_74, %c0_75] : memref<16x1xf32, #tpu.memory_space<vmem>>, vector<16x1xf32>
    %cst_76 = arith.constant dense<0.000000e+00> : vector<64x40xf32>
    %128 = tpu.matmul %125, %124, %cst_76 {dimension_numbers = #tpu.dot_dimension_numbers<[1], [0], [0], [1], [0, 0, 1, 1], [], []>} : vector<64x32xf32>, vector<32x40xf32>, vector<64x40xf32> -> vector<64x40xf32>
    %cst_77 = arith.constant 0.000000e+00 : f32
    %129 = vector.broadcast %cst_77 : f32 to vector<16x80xf32>
    %c0_78 = arith.constant 0 : index
    %c0_79 = arith.constant 0 : index
    %130 = vector.load %arg24[%c0_78, %c0_79] : memref<40x80xbf16, #tpu.memory_space<vmem>>, vector<40x80xbf16>
    %131 = arith.extf %130 : vector<40x80xbf16> to vector<40x80xf32>
    %132 = vector.extract_strided_slice %128 {offsets = [0, 0], sizes = [16, 40], strides = [1, 1]} : vector<64x40xf32> to vector<16x40xf32>
    %cst_80 = arith.constant dense<0.000000e+00> : vector<16x80xf32>
    %133 = tpu.matmul %132, %131, %cst_80 {dimension_numbers = #tpu.dot_dimension_numbers<[1], [0], [0], [1], [0, 0, 1, 1], [], []>} : vector<16x40xf32>, vector<40x80xf32>, vector<16x80xf32> -> vector<16x80xf32>
    %134 = arith.addf %129, %133 : vector<16x80xf32>
    %c0_81 = arith.constant 0 : index
    %c0_82 = arith.constant 0 : index
    %135 = vector.load %arg25[%c0_81, %c0_82] : memref<40x80xbf16, #tpu.memory_space<vmem>>, vector<40x80xbf16>
    %136 = arith.extf %135 : vector<40x80xbf16> to vector<40x80xf32>
    %137 = vector.extract_strided_slice %128 {offsets = [16, 0], sizes = [16, 40], strides = [1, 1]} : vector<64x40xf32> to vector<16x40xf32>
    %cst_83 = arith.constant dense<0.000000e+00> : vector<16x80xf32>
    %138 = tpu.matmul %137, %136, %cst_83 {dimension_numbers = #tpu.dot_dimension_numbers<[1], [0], [0], [1], [0, 0, 1, 1], [], []>} : vector<16x40xf32>, vector<40x80xf32>, vector<16x80xf32> -> vector<16x80xf32>
    %139 = arith.addf %134, %138 : vector<16x80xf32>
    %c0_84 = arith.constant 0 : index
    %c0_85 = arith.constant 0 : index
    %140 = vector.load %arg26[%c0_84, %c0_85] : memref<40x80xbf16, #tpu.memory_space<vmem>>, vector<40x80xbf16>
    %141 = arith.extf %140 : vector<40x80xbf16> to vector<40x80xf32>
    %142 = vector.extract_strided_slice %128 {offsets = [32, 0], sizes = [16, 40], strides = [1, 1]} : vector<64x40xf32> to vector<16x40xf32>
    %cst_86 = arith.constant dense<0.000000e+00> : vector<16x80xf32>
    %143 = tpu.matmul %142, %141, %cst_86 {dimension_numbers = #tpu.dot_dimension_numbers<[1], [0], [0], [1], [0, 0, 1, 1], [], []>} : vector<16x40xf32>, vector<40x80xf32>, vector<16x80xf32> -> vector<16x80xf32>
    %144 = arith.addf %139, %143 : vector<16x80xf32>
    %c0_87 = arith.constant 0 : index
    %c0_88 = arith.constant 0 : index
    %145 = vector.load %arg27[%c0_87, %c0_88] : memref<40x80xbf16, #tpu.memory_space<vmem>>, vector<40x80xbf16>
    %146 = arith.extf %145 : vector<40x80xbf16> to vector<40x80xf32>
    %147 = vector.extract_strided_slice %128 {offsets = [48, 0], sizes = [16, 40], strides = [1, 1]} : vector<64x40xf32> to vector<16x40xf32>
    %cst_89 = arith.constant dense<0.000000e+00> : vector<16x80xf32>
    %148 = tpu.matmul %147, %146, %cst_89 {dimension_numbers = #tpu.dot_dimension_numbers<[1], [0], [0], [1], [0, 0, 1, 1], [], []>} : vector<16x40xf32>, vector<40x80xf32>, vector<16x80xf32> -> vector<16x80xf32>
    %149 = arith.addf %144, %148 : vector<16x80xf32>
    %cst_90 = arith.constant dense<0.000000e+00> : vector<16xf32>
    %150 = vector.multi_reduction <add>, %149, %cst_90 [1] : vector<16x80xf32> to vector<16xf32>
    %151 = vector.shape_cast %150 : vector<16xf32> to vector<16x1xf32>
    %cst_91 = arith.constant 1.250000e-02 : f32
    %152 = vector.broadcast %cst_91 : f32 to vector<16x1xf32>
    %153 = arith.mulf %151, %152 : vector<16x1xf32>
    %154 = vector.broadcast %153 : vector<16x1xf32> to vector<16x80xf32>
    %155 = arith.subf %149, %154 : vector<16x80xf32>
    %156 = arith.mulf %155, %155 : vector<16x80xf32>
    %cst_92 = arith.constant dense<0.000000e+00> : vector<16xf32>
    %157 = vector.multi_reduction <add>, %156, %cst_92 [1] : vector<16x80xf32> to vector<16xf32>
    %158 = vector.shape_cast %157 : vector<16xf32> to vector<16x1xf32>
    %cst_93 = arith.constant 1.250000e-02 : f32
    %159 = vector.broadcast %cst_93 : f32 to vector<16x1xf32>
    %160 = arith.mulf %158, %159 : vector<16x1xf32>
    %cst_94 = arith.constant 9.99999974E-6 : f32
    %161 = vector.broadcast %cst_94 : f32 to vector<16x1xf32>
    %162 = arith.addf %160, %161 : vector<16x1xf32>
    %163 = math.rsqrt %162 : vector<16x1xf32>
    %164 = vector.broadcast %163 : vector<16x1xf32> to vector<16x80xf32>
    %165 = arith.mulf %155, %164 : vector<16x80xf32>
    %166 = vector.broadcast %126 : vector<16x1xf32> to vector<16x80xf32>
    %167 = arith.mulf %165, %166 : vector<16x80xf32>
    %168 = vector.broadcast %127 : vector<16x1xf32> to vector<16x80xf32>
    %169 = arith.addf %167, %168 : vector<16x80xf32>
    %cst_95 = arith.constant 0.000000e+00 : f32
    %170 = vector.broadcast %cst_95 : f32 to vector<16x80xf32>
    %171 = arith.maximumf %169, %170 : vector<16x80xf32>
    %c0_96 = arith.constant 0 : index
    %c0_97 = arith.constant 0 : index
    %172 = vector.load %arg28[%c0_96, %c0_97] : memref<32x16xf32, #tpu.memory_space<vmem>>, vector<32x16xf32>
    %c0_98 = arith.constant 0 : index
    %c0_99 = arith.constant 0 : index
    %173 = vector.load %arg29[%c0_98, %c0_99] : memref<8x1xf32, #tpu.memory_space<vmem>>, vector<8x1xf32>
    %c0_100 = arith.constant 0 : index
    %c0_101 = arith.constant 0 : index
    %174 = vector.load %arg30[%c0_100, %c0_101] : memref<8x1xf32, #tpu.memory_space<vmem>>, vector<8x1xf32>
    %cst_102 = arith.constant dense<0.000000e+00> : vector<32x80xf32>
    %175 = tpu.matmul %172, %171, %cst_102 {dimension_numbers = #tpu.dot_dimension_numbers<[1], [0], [0], [1], [0, 0, 1, 1], [], []>} : vector<32x16xf32>, vector<16x80xf32>, vector<32x80xf32> -> vector<32x80xf32>
    %cst_103 = arith.constant 0.000000e+00 : f32
    %176 = vector.broadcast %cst_103 : f32 to vector<8x160xf32>
    %c0_104 = arith.constant 0 : index
    %c0_105 = arith.constant 0 : index
    %177 = vector.load %arg31[%c0_104, %c0_105] : memref<80x160xbf16, #tpu.memory_space<vmem>>, vector<80x160xbf16>
    %178 = arith.extf %177 : vector<80x160xbf16> to vector<80x160xf32>
    %179 = vector.extract_strided_slice %175 {offsets = [0, 0], sizes = [8, 80], strides = [1, 1]} : vector<32x80xf32> to vector<8x80xf32>
    %cst_106 = arith.constant dense<0.000000e+00> : vector<8x160xf32>
    %180 = tpu.matmul %179, %178, %cst_106 {dimension_numbers = #tpu.dot_dimension_numbers<[1], [0], [0], [1], [0, 0, 1, 1], [], []>} : vector<8x80xf32>, vector<80x160xf32>, vector<8x160xf32> -> vector<8x160xf32>
    %181 = arith.addf %176, %180 : vector<8x160xf32>
    %c0_107 = arith.constant 0 : index
    %c0_108 = arith.constant 0 : index
    %182 = vector.load %arg32[%c0_107, %c0_108] : memref<80x160xbf16, #tpu.memory_space<vmem>>, vector<80x160xbf16>
    %183 = arith.extf %182 : vector<80x160xbf16> to vector<80x160xf32>
    %184 = vector.extract_strided_slice %175 {offsets = [8, 0], sizes = [8, 80], strides = [1, 1]} : vector<32x80xf32> to vector<8x80xf32>
    %cst_109 = arith.constant dense<0.000000e+00> : vector<8x160xf32>
    %185 = tpu.matmul %184, %183, %cst_109 {dimension_numbers = #tpu.dot_dimension_numbers<[1], [0], [0], [1], [0, 0, 1, 1], [], []>} : vector<8x80xf32>, vector<80x160xf32>, vector<8x160xf32> -> vector<8x160xf32>
    %186 = arith.addf %181, %185 : vector<8x160xf32>
    %c0_110 = arith.constant 0 : index
    %c0_111 = arith.constant 0 : index
    %187 = vector.load %arg33[%c0_110, %c0_111] : memref<80x160xbf16, #tpu.memory_space<vmem>>, vector<80x160xbf16>
    %188 = arith.extf %187 : vector<80x160xbf16> to vector<80x160xf32>
    %189 = vector.extract_strided_slice %175 {offsets = [16, 0], sizes = [8, 80], strides = [1, 1]} : vector<32x80xf32> to vector<8x80xf32>
    %cst_112 = arith.constant dense<0.000000e+00> : vector<8x160xf32>
    %190 = tpu.matmul %189, %188, %cst_112 {dimension_numbers = #tpu.dot_dimension_numbers<[1], [0], [0], [1], [0, 0, 1, 1], [], []>} : vector<8x80xf32>, vector<80x160xf32>, vector<8x160xf32> -> vector<8x160xf32>
    %191 = arith.addf %186, %190 : vector<8x160xf32>
    %c0_113 = arith.constant 0 : index
    %c0_114 = arith.constant 0 : index
    %192 = vector.load %arg34[%c0_113, %c0_114] : memref<80x160xbf16, #tpu.memory_space<vmem>>, vector<80x160xbf16>
    %193 = arith.extf %192 : vector<80x160xbf16> to vector<80x160xf32>
    %194 = vector.extract_strided_slice %175 {offsets = [24, 0], sizes = [8, 80], strides = [1, 1]} : vector<32x80xf32> to vector<8x80xf32>
    %cst_115 = arith.constant dense<0.000000e+00> : vector<8x160xf32>
    %195 = tpu.matmul %194, %193, %cst_115 {dimension_numbers = #tpu.dot_dimension_numbers<[1], [0], [0], [1], [0, 0, 1, 1], [], []>} : vector<8x80xf32>, vector<80x160xf32>, vector<8x160xf32> -> vector<8x160xf32>
    %196 = arith.addf %191, %195 : vector<8x160xf32>
    %cst_116 = arith.constant dense<0.000000e+00> : vector<8xf32>
    %197 = vector.multi_reduction <add>, %196, %cst_116 [1] : vector<8x160xf32> to vector<8xf32>
    %198 = vector.shape_cast %197 : vector<8xf32> to vector<8x1xf32>
    %cst_117 = arith.constant 6.250000e-03 : f32
    %199 = vector.broadcast %cst_117 : f32 to vector<8x1xf32>
    %200 = arith.mulf %198, %199 : vector<8x1xf32>
    %201 = vector.broadcast %200 : vector<8x1xf32> to vector<8x160xf32>
    %202 = arith.subf %196, %201 : vector<8x160xf32>
    %203 = arith.mulf %202, %202 : vector<8x160xf32>
    %cst_118 = arith.constant dense<0.000000e+00> : vector<8xf32>
    %204 = vector.multi_reduction <add>, %203, %cst_118 [1] : vector<8x160xf32> to vector<8xf32>
    %205 = vector.shape_cast %204 : vector<8xf32> to vector<8x1xf32>
    %cst_119 = arith.constant 6.250000e-03 : f32
    %206 = vector.broadcast %cst_119 : f32 to vector<8x1xf32>
    %207 = arith.mulf %205, %206 : vector<8x1xf32>
    %cst_120 = arith.constant 9.99999974E-6 : f32
    %208 = vector.broadcast %cst_120 : f32 to vector<8x1xf32>
    %209 = arith.addf %207, %208 : vector<8x1xf32>
    %210 = math.rsqrt %209 : vector<8x1xf32>
    %211 = vector.broadcast %210 : vector<8x1xf32> to vector<8x160xf32>
    %212 = arith.mulf %202, %211 : vector<8x160xf32>
    %213 = vector.broadcast %173 : vector<8x1xf32> to vector<8x160xf32>
    %214 = arith.mulf %212, %213 : vector<8x160xf32>
    %215 = vector.broadcast %174 : vector<8x1xf32> to vector<8x160xf32>
    %216 = arith.addf %214, %215 : vector<8x160xf32>
    %cst_121 = arith.constant 0.000000e+00 : f32
    %217 = vector.broadcast %cst_121 : f32 to vector<8x160xf32>
    %218 = arith.maximumf %216, %217 : vector<8x160xf32>
    %c0_122 = arith.constant 0 : index
    %c0_123 = arith.constant 0 : index
    %219 = vector.load %arg35[%c0_122, %c0_123] : memref<16x8xf32, #tpu.memory_space<vmem>>, vector<16x8xf32>
    %c0_124 = arith.constant 0 : index
    %c0_125 = arith.constant 0 : index
    %220 = vector.load %arg36[%c0_124, %c0_125] : memref<4x1xf32, #tpu.memory_space<vmem>>, vector<4x1xf32>
    %c0_126 = arith.constant 0 : index
    %c0_127 = arith.constant 0 : index
    %221 = vector.load %arg37[%c0_126, %c0_127] : memref<4x1xf32, #tpu.memory_space<vmem>>, vector<4x1xf32>
    %cst_128 = arith.constant dense<0.000000e+00> : vector<16x160xf32>
    %222 = tpu.matmul %219, %218, %cst_128 {dimension_numbers = #tpu.dot_dimension_numbers<[1], [0], [0], [1], [0, 0, 1, 1], [], []>} : vector<16x8xf32>, vector<8x160xf32>, vector<16x160xf32> -> vector<16x160xf32>
    %cst_129 = arith.constant 0.000000e+00 : f32
    %223 = vector.broadcast %cst_129 : f32 to vector<4x320xf32>
    %c0_130 = arith.constant 0 : index
    %c0_131 = arith.constant 0 : index
    %224 = vector.load %arg38[%c0_130, %c0_131] : memref<160x320xbf16, #tpu.memory_space<vmem>>, vector<160x320xbf16>
    %225 = arith.extf %224 : vector<160x320xbf16> to vector<160x320xf32>
    %226 = vector.extract_strided_slice %222 {offsets = [0, 0], sizes = [4, 160], strides = [1, 1]} : vector<16x160xf32> to vector<4x160xf32>
    %cst_132 = arith.constant dense<0.000000e+00> : vector<4x320xf32>
    %227 = tpu.matmul %226, %225, %cst_132 {dimension_numbers = #tpu.dot_dimension_numbers<[1], [0], [0], [1], [0, 0, 1, 1], [], []>} : vector<4x160xf32>, vector<160x320xf32>, vector<4x320xf32> -> vector<4x320xf32>
    %228 = arith.addf %223, %227 : vector<4x320xf32>
    %c0_133 = arith.constant 0 : index
    %c0_134 = arith.constant 0 : index
    %229 = vector.load %arg39[%c0_133, %c0_134] : memref<160x320xbf16, #tpu.memory_space<vmem>>, vector<160x320xbf16>
    %230 = arith.extf %229 : vector<160x320xbf16> to vector<160x320xf32>
    %231 = vector.extract_strided_slice %222 {offsets = [4, 0], sizes = [4, 160], strides = [1, 1]} : vector<16x160xf32> to vector<4x160xf32>
    %cst_135 = arith.constant dense<0.000000e+00> : vector<4x320xf32>
    %232 = tpu.matmul %231, %230, %cst_135 {dimension_numbers = #tpu.dot_dimension_numbers<[1], [0], [0], [1], [0, 0, 1, 1], [], []>} : vector<4x160xf32>, vector<160x320xf32>, vector<4x320xf32> -> vector<4x320xf32>
    %233 = arith.addf %228, %232 : vector<4x320xf32>
    %c0_136 = arith.constant 0 : index
    %c0_137 = arith.constant 0 : index
    %234 = vector.load %arg40[%c0_136, %c0_137] : memref<160x320xbf16, #tpu.memory_space<vmem>>, vector<160x320xbf16>
    %235 = arith.extf %234 : vector<160x320xbf16> to vector<160x320xf32>
    %236 = vector.extract_strided_slice %222 {offsets = [8, 0], sizes = [4, 160], strides = [1, 1]} : vector<16x160xf32> to vector<4x160xf32>
    %cst_138 = arith.constant dense<0.000000e+00> : vector<4x320xf32>
    %237 = tpu.matmul %236, %235, %cst_138 {dimension_numbers = #tpu.dot_dimension_numbers<[1], [0], [0], [1], [0, 0, 1, 1], [], []>} : vector<4x160xf32>, vector<160x320xf32>, vector<4x320xf32> -> vector<4x320xf32>
    %238 = arith.addf %233, %237 : vector<4x320xf32>
    %c0_139 = arith.constant 0 : index
    %c0_140 = arith.constant 0 : index
    %239 = vector.load %arg41[%c0_139, %c0_140] : memref<160x320xbf16, #tpu.memory_space<vmem>>, vector<160x320xbf16>
    %240 = arith.extf %239 : vector<160x320xbf16> to vector<160x320xf32>
    %241 = vector.extract_strided_slice %222 {offsets = [12, 0], sizes = [4, 160], strides = [1, 1]} : vector<16x160xf32> to vector<4x160xf32>
    %cst_141 = arith.constant dense<0.000000e+00> : vector<4x320xf32>
    %242 = tpu.matmul %241, %240, %cst_141 {dimension_numbers = #tpu.dot_dimension_numbers<[1], [0], [0], [1], [0, 0, 1, 1], [], []>} : vector<4x160xf32>, vector<160x320xf32>, vector<4x320xf32> -> vector<4x320xf32>
    %243 = arith.addf %238, %242 : vector<4x320xf32>
    %cst_142 = arith.constant dense<0.000000e+00> : vector<4xf32>
    %244 = vector.multi_reduction <add>, %243, %cst_142 [1] : vector<4x320xf32> to vector<4xf32>
    %245 = vector.shape_cast %244 : vector<4xf32> to vector<4x1xf32>
    %cst_143 = arith.constant 3.125000e-03 : f32
    %246 = vector.broadcast %cst_143 : f32 to vector<4x1xf32>
    %247 = arith.mulf %245, %246 : vector<4x1xf32>
    %248 = vector.broadcast %247 : vector<4x1xf32> to vector<4x320xf32>
    %249 = arith.subf %243, %248 : vector<4x320xf32>
    %250 = arith.mulf %249, %249 : vector<4x320xf32>
    %cst_144 = arith.constant dense<0.000000e+00> : vector<4xf32>
    %251 = vector.multi_reduction <add>, %250, %cst_144 [1] : vector<4x320xf32> to vector<4xf32>
    %252 = vector.shape_cast %251 : vector<4xf32> to vector<4x1xf32>
    %cst_145 = arith.constant 3.125000e-03 : f32
    %253 = vector.broadcast %cst_145 : f32 to vector<4x1xf32>
    %254 = arith.mulf %252, %253 : vector<4x1xf32>
    %cst_146 = arith.constant 9.99999974E-6 : f32
    %255 = vector.broadcast %cst_146 : f32 to vector<4x1xf32>
    %256 = arith.addf %254, %255 : vector<4x1xf32>
    %257 = math.rsqrt %256 : vector<4x1xf32>
    %258 = vector.broadcast %257 : vector<4x1xf32> to vector<4x320xf32>
    %259 = arith.mulf %249, %258 : vector<4x320xf32>
    %260 = vector.broadcast %220 : vector<4x1xf32> to vector<4x320xf32>
    %261 = arith.mulf %259, %260 : vector<4x320xf32>
    %262 = vector.broadcast %221 : vector<4x1xf32> to vector<4x320xf32>
    %263 = arith.addf %261, %262 : vector<4x320xf32>
    %cst_147 = arith.constant 0.000000e+00 : f32
    %264 = vector.broadcast %cst_147 : f32 to vector<4x320xf32>
    %265 = arith.maximumf %263, %264 : vector<4x320xf32>
    %c0_148 = arith.constant 0 : index
    %c0_149 = arith.constant 0 : index
    %266 = vector.load %arg42[%c0_148, %c0_149] : memref<4x4xf32, #tpu.memory_space<vmem>>, vector<4x4xf32>
    %cst_150 = arith.constant dense<0.000000e+00> : vector<4x320xf32>
    %267 = tpu.matmul %266, %265, %cst_150 {dimension_numbers = #tpu.dot_dimension_numbers<[1], [0], [0], [1], [0, 0, 1, 1], [], []>} : vector<4x4xf32>, vector<4x320xf32>, vector<4x320xf32> -> vector<4x320xf32>
    %cst_151 = arith.constant 0.000000e+00 : f32
    %268 = vector.broadcast %cst_151 : f32 to vector<1x640xf32>
    %c0_152 = arith.constant 0 : index
    %c0_153 = arith.constant 0 : index
    %269 = vector.load %arg43[%c0_152, %c0_153] : memref<320x640xbf16, #tpu.memory_space<vmem>>, vector<320x640xbf16>
    %270 = arith.extf %269 : vector<320x640xbf16> to vector<320x640xf32>
    %271 = vector.extract_strided_slice %267 {offsets = [0, 0], sizes = [1, 320], strides = [1, 1]} : vector<4x320xf32> to vector<1x320xf32>
    %cst_154 = arith.constant dense<0.000000e+00> : vector<1x640xf32>
    %272 = tpu.matmul %271, %270, %cst_154 {dimension_numbers = #tpu.dot_dimension_numbers<[1], [0], [0], [1], [0, 0, 1, 1], [], []>} : vector<1x320xf32>, vector<320x640xf32>, vector<1x640xf32> -> vector<1x640xf32>
    %273 = arith.addf %268, %272 : vector<1x640xf32>
    %c0_155 = arith.constant 0 : index
    %c0_156 = arith.constant 0 : index
    %274 = vector.load %arg44[%c0_155, %c0_156] : memref<320x640xbf16, #tpu.memory_space<vmem>>, vector<320x640xbf16>
    %275 = arith.extf %274 : vector<320x640xbf16> to vector<320x640xf32>
    %276 = vector.extract_strided_slice %267 {offsets = [1, 0], sizes = [1, 320], strides = [1, 1]} : vector<4x320xf32> to vector<1x320xf32>
    %cst_157 = arith.constant dense<0.000000e+00> : vector<1x640xf32>
    %277 = tpu.matmul %276, %275, %cst_157 {dimension_numbers = #tpu.dot_dimension_numbers<[1], [0], [0], [1], [0, 0, 1, 1], [], []>} : vector<1x320xf32>, vector<320x640xf32>, vector<1x640xf32> -> vector<1x640xf32>
    %278 = arith.addf %273, %277 : vector<1x640xf32>
    %c0_158 = arith.constant 0 : index
    %c0_159 = arith.constant 0 : index
    %279 = vector.load %arg45[%c0_158, %c0_159] : memref<320x640xbf16, #tpu.memory_space<vmem>>, vector<320x640xbf16>
    %280 = arith.extf %279 : vector<320x640xbf16> to vector<320x640xf32>
    %281 = vector.extract_strided_slice %267 {offsets = [2, 0], sizes = [1, 320], strides = [1, 1]} : vector<4x320xf32> to vector<1x320xf32>
    %cst_160 = arith.constant dense<0.000000e+00> : vector<1x640xf32>
    %282 = tpu.matmul %281, %280, %cst_160 {dimension_numbers = #tpu.dot_dimension_numbers<[1], [0], [0], [1], [0, 0, 1, 1], [], []>} : vector<1x320xf32>, vector<320x640xf32>, vector<1x640xf32> -> vector<1x640xf32>
    %283 = arith.addf %278, %282 : vector<1x640xf32>
    %c0_161 = arith.constant 0 : index
    %c0_162 = arith.constant 0 : index
    %284 = vector.load %arg46[%c0_161, %c0_162] : memref<320x640xbf16, #tpu.memory_space<vmem>>, vector<320x640xbf16>
    %285 = arith.extf %284 : vector<320x640xbf16> to vector<320x640xf32>
    %286 = vector.extract_strided_slice %267 {offsets = [3, 0], sizes = [1, 320], strides = [1, 1]} : vector<4x320xf32> to vector<1x320xf32>
    %cst_163 = arith.constant dense<0.000000e+00> : vector<1x640xf32>
    %287 = tpu.matmul %286, %285, %cst_163 {dimension_numbers = #tpu.dot_dimension_numbers<[1], [0], [0], [1], [0, 0, 1, 1], [], []>} : vector<1x320xf32>, vector<320x640xf32>, vector<1x640xf32> -> vector<1x640xf32>
    %288 = arith.addf %283, %287 : vector<1x640xf32>
    %289 = math.tanh %288 : vector<1x640xf32>
    %c0_164 = arith.constant 0 : index
    %c0_165 = arith.constant 0 : index
    %290 = vector.load %arg47[%c0_164, %c0_165] : memref<1x640xf32, #tpu.memory_space<vmem>>, vector<1x640xf32>
    tpu.vector_store %arg47[%c0_164, %c0_165], %289 {strides = array<i32>} : memref<1x640xf32, #tpu.memory_space<vmem>>, vector<1x640xf32>,
    return
  }
}

</mosaic_0001>

<llo_original>
// kernel: tpu_custom_call.1
$region0: #{tpu_custom_call.1}
  #allocation0 [shape = 'u32[]', space=smem, size = 0x4, offset = 0x4, fixed_abs, tag = 'smem constant byte address 0x4 - core index']
  #allocation1 [shape = 'u32[144,128]{1,0:T(1,128)}', space=vmem, size = 0x12000, scoped, tag = 'internal scratch']
  %s0 = inlined_call_operand.smem [shape: u32[48], index: -1, kind: input, shape index: {}]
  %s1 = sld [smem:[%s0]]
  %s2 = scalar_lea.smem %s0, 1
  %s3 = sld [smem:[%s2]]
  %s4 = scalar_lea.smem %s0, 2
  %s5 = sld [smem:[%s4]]
  %s6 = scalar_lea.smem %s0, 3
  %s7 = sld [smem:[%s6]]
  %s8 = scalar_lea.smem %s0, 4
  %s9 = sld [smem:[%s8]]
  %s10 = scalar_lea.smem %s0, 5
  %s11 = sld [smem:[%s10]]
  %s12 = scalar_lea.smem %s0, 6
  %s13 = sld [smem:[%s12]]
  %s14 = scalar_lea.smem %s0, 7
  %s15 = sld [smem:[%s14]]
  %s16 = scalar_lea.smem %s0, 8
  %s17 = sld [smem:[%s16]]
  %s18 = scalar_lea.smem %s0, 9
  %s19 = sld [smem:[%s18]]
  %s20 = scalar_lea.smem %s0, 10
  %s21 = sld [smem:[%s20]]
  %s22 = scalar_lea.smem %s0, 11
  %s23 = sld [smem:[%s22]]
  %s24 = scalar_lea.smem %s0, 12
  %s25 = sld [smem:[%s24]]
  %s26 = scalar_lea.smem %s0, 13
  %s27 = sld [smem:[%s26]]
  %s28 = scalar_lea.smem %s0, 14
  %s29 = sld [smem:[%s28]]
  %s30 = scalar_lea.smem %s0, 15
  %s31 = sld [smem:[%s30]]
  %s32 = scalar_lea.smem %s0, 16
  %s33 = sld [smem:[%s32]]
  %s34 = scalar_lea.smem %s0, 17
  %s35 = sld [smem:[%s34]]
  %s36 = scalar_lea.smem %s0, 18
  %s37 = sld [smem:[%s36]]
  %s38 = scalar_lea.smem %s0, 19
  %s39 = sld [smem:[%s38]]
  %s40 = scalar_lea.smem %s0, 20
  %s41 = sld [smem:[%s40]]
  %s42 = scalar_lea.smem %s0, 21
  %s43 = sld [smem:[%s42]]
  %s44 = scalar_lea.smem %s0, 22
  %s45 = sld [smem:[%s44]]
  %s46 = scalar_lea.smem %s0, 23
  %s47 = sld [smem:[%s46]]
  %s48 = scalar_lea.smem %s0, 24
  %s49 = sld [smem:[%s48]]
  %s50 = scalar_lea.smem %s0, 25
  %s51 = sld [smem:[%s50]]
  %s52 = scalar_lea.smem %s0, 26
  %s53 = sld [smem:[%s52]]
  %s54 = scalar_lea.smem %s0, 27
  %s55 = sld [smem:[%s54]]
  %s56 = scalar_lea.smem %s0, 28
  %s57 = sld [smem:[%s56]]
  %s58 = scalar_lea.smem %s0, 29
  %s59 = sld [smem:[%s58]]
  %s60 = scalar_lea.smem %s0, 30
  %s61 = sld [smem:[%s60]]
  %s62 = scalar_lea.smem %s0, 31
  %s63 = sld [smem:[%s62]]
  %s64 = scalar_lea.smem %s0, 32
  %s65 = sld [smem:[%s64]]
  %s66 = scalar_lea.smem %s0, 33
  %s67 = sld [smem:[%s66]]
  %s68 = scalar_lea.smem %s0, 34
  %s69 = sld [smem:[%s68]]
  %s70 = scalar_lea.smem %s0, 35
  %s71 = sld [smem:[%s70]]
  %s72 = scalar_lea.smem %s0, 36
  %s73 = sld [smem:[%s72]]
  %s74 = scalar_lea.smem %s0, 37
  %s75 = sld [smem:[%s74]]
  %s76 = scalar_lea.smem %s0, 38
  %s77 = sld [smem:[%s76]]
  %s78 = scalar_lea.smem %s0, 39
  %s79 = sld [smem:[%s78]]
  %s80 = scalar_lea.smem %s0, 40
  %s81 = sld [smem:[%s80]]
  %s82 = scalar_lea.smem %s0, 41
  %s83 = sld [smem:[%s82]]
  %s84 = scalar_lea.smem %s0, 42
  %s85 = sld [smem:[%s84]]
  %s86 = scalar_lea.smem %s0, 43
  %s87 = sld [smem:[%s86]]
  %s88 = scalar_lea.smem %s0, 44
  %s89 = sld [smem:[%s88]]
  %s90 = scalar_lea.smem %s0, 45
  %s91 = sld [smem:[%s90]]
  %s92 = scalar_lea.smem %s0, 46
  %s93 = sld [smem:[%s92]]
  %s94 = scalar_lea.smem %s0, 47
  %s95 = sld [smem:[%s94]]
  %s96 = sld [smem:[#allocation0]]
  $region270: #{tpu_custom_call.1} parent=0
    _
  %s98 = ssub.s32 1, %s96
  %s99 = scalar_select 0, %s98, %s96
  $region1: #{tpu_custom_call.1} parent=0
    #allocation2 [shape = 'u8[512]{0}', space=vmem, size = 0x400, scoped, tag = 'input window, operand 10, single buffered']
    #allocation3 [shape = 's32[1]{0}', space=sflag, size = 0x4, scoped, tag = 'scoped memory for tpu_custom_call.1']
    #allocation4 [shape = 's32[1]{0}', space=sflag, size = 0x4, scoped, tag = 'scoped memory for tpu_custom_call.1']
    #allocation5 [shape = 'u8[512]{0}', space=vmem, size = 0x400, scoped, tag = 'input window, operand 11, single buffered']
    #allocation6 [shape = 's32[1]{0}', space=sflag, size = 0x4, scoped, tag = 'scoped memory for tpu_custom_call.1']
    #allocation7 [shape = 'u8[512]{0}', space=vmem, size = 0x400, scoped, tag = 'input window, operand 12, single buffered']
    #allocation8 [shape = 'u8[512]{0}', space=vmem, size = 0x400, scoped, tag = 'input window, operand 13, single buffered']
    #allocation9 [shape = 's32[1]{0}', space=sflag, size = 0x4, scoped, tag = 'scoped memory for tpu_custom_call.1']
    #allocation10 [shape = 'u8[6144]{0}', space=vmem, size = 0x1800, scoped, tag = 'input window, operand 17, single buffered']
    #allocation11 [shape = 'u8[6144]{0}', space=vmem, size = 0x1800, scoped, tag = 'input window, operand 18, single buffered']
    #allocation12 [shape = 's32[1]{0}', space=sflag, size = 0x4, scoped, tag = 'scoped memory for tpu_custom_call.1']
    #allocation13 [shape = 'u8[6144]{0}', space=vmem, size = 0x1800, scoped, tag = 'input window, operand 19, single buffered']
    #allocation14 [shape = 'u8[6144]{0}', space=vmem, size = 0x1800, scoped, tag = 'input window, operand 20, single buffered']
    #allocation15 [shape = 's32[1]{0}', space=sflag, size = 0x4, scoped, tag = 'scoped memory for tpu_custom_call.1']
    #allocation16 [shape = 'u8[10240]{0}', space=vmem, size = 0x2800, scoped, tag = 'input window, operand 25, single buffered']
    #allocation17 [shape = 'u8[10240]{0}', space=vmem, size = 0x2800, scoped, tag = 'input window, operand 26, single buffered']
    #allocation18 [shape = 's32[1]{0}', space=sflag, size = 0x4, scoped, tag = 'scoped memory for tpu_custom_call.1']
    #allocation19 [shape = 'u8[10240]{0}', space=vmem, size = 0x2800, scoped, tag = 'input window, operand 27, single buffered']
    #allocation20 [shape = 'u8[40960]{0}', space=vmem, size = 0xa000, scoped, tag = 'input window, operand 33, single buffered']
    #allocation21 [shape = 's32[1]{0}', space=sflag, size = 0x4, scoped, tag = 'scoped memory for tpu_custom_call.1']
    #allocation22 [shape = 'u8[40960]{0}', space=vmem, size = 0xa000, scoped, tag = 'input window, operand 34, single buffered']
    #allocation23 [shape = 'u8[122880]{0}', space=vmem, size = 0x1e000, scoped, tag = 'input window, operand 40, single buffered']
    #allocation24 [shape = 's32[1]{0}', space=sflag, size = 0x4, scoped, tag = 'scoped memory for tpu_custom_call.1']
    #allocation25 [shape = 'u8[122880]{0}', space=vmem, size = 0x1e000, scoped, tag = 'input window, operand 41, single buffered']
    #allocation26 [shape = 'u8[409600]{0}', space=vmem, size = 0x64000, scoped, tag = 'input window, operand 44, single buffered']
    #allocation27 [shape = 's32[1]{0}', space=sflag, size = 0x4, scoped, tag = 'scoped memory for tpu_custom_call.1']
    #allocation28 [shape = 'u8[409600]{0}', space=vmem, size = 0x64000, scoped, tag = 'input window, operand 45, single buffered']
    #allocation29 [shape = 'u8[409600]{0}', space=vmem, size = 0x64000, scoped, tag = 'input window, operand 46, single buffered']
    #allocation30 [shape = 's32[1]{0}', space=sflag, size = 0x4, scoped, tag = 'scoped memory for tpu_custom_call.1']
    #allocation31 [shape = 'u8[2560]{0}', space=vmem, size = 0xc00, scoped, tag = 'output window, operand 0, single buffered']
    %100 = vsyncpa [#allocation3], 0
    %101 = vsyncpa [#allocation6], 0
    %102 = vsyncpa [#allocation9], 0
    %103 = vsyncpa [#allocation12], 0
    %104 = vsyncpa [#allocation15], 0
    %105 = vsyncpa [#allocation18], 0
    %106 = vsyncpa [#allocation21], 0
    %107 = vsyncpa [#allocation24], 0
    %108 = vsyncpa [#allocation27], 0
    %109 = vsyncpa [#allocation30], 0
    %110 = vsyncpa [#allocation4], 0
    // Predicated region
    $region2: #{tpu_custom_call.1} parent=1 // pred_check
      _
    $region3: #{tpu_custom_call.1} parent=1 // pred_check_branch
      %112 = sbr.rel (0) target = $region5
    $region4: #{tpu_custom_call.1} parent=1 // pred_region
      _
    $region5: #{tpu_custom_call.1} parent=1 // pred_fallthru
      _
    // Predicated region
    $region6: #{tpu_custom_call.1} parent=1 // pred_check
      _
    $region7: #{tpu_custom_call.1} parent=1 // pred_check_branch
      %114 = sbr.rel (0) target = $region9
    $region8: #{tpu_custom_call.1} parent=1 // pred_region
      _
    $region9: #{tpu_custom_call.1} parent=1 // pred_fallthru
      _
    // Predicated region
    $region10: #{tpu_custom_call.1} parent=1 // pred_check
      _
    $region11: #{tpu_custom_call.1} parent=1 // pred_check_branch
      %116 = sbr.rel (0) target = $region13
    $region12: #{tpu_custom_call.1} parent=1 // pred_region
      _
    $region13: #{tpu_custom_call.1} parent=1 // pred_fallthru
      _
    // Predicated region
    $region14: #{tpu_custom_call.1} parent=1 // pred_check
      _
    $region15: #{tpu_custom_call.1} parent=1 // pred_check_branch
      %118 = sbr.rel (0) target = $region17
    $region16: #{tpu_custom_call.1} parent=1 // pred_region
      _
    $region17: #{tpu_custom_call.1} parent=1 // pred_fallthru
      _
    // Predicated region
    $region18: #{tpu_custom_call.1} parent=1 // pred_check
      _
    $region19: #{tpu_custom_call.1} parent=1 // pred_check_branch
      %120 = sbr.rel (0) target = $region21
    $region20: #{tpu_custom_call.1} parent=1 // pred_region
      _
    $region21: #{tpu_custom_call.1} parent=1 // pred_fallthru
      _
    // Predicated region
    $region22: #{tpu_custom_call.1} parent=1 // pred_check
      _
    $region23: #{tpu_custom_call.1} parent=1 // pred_check_branch
      %122 = sbr.rel (0) target = $region25
    $region24: #{tpu_custom_call.1} parent=1 // pred_region
      _
    $region25: #{tpu_custom_call.1} parent=1 // pred_fallthru
      _
    // Predicated region
    $region26: #{tpu_custom_call.1} parent=1 // pred_check
      _
    $region27: #{tpu_custom_call.1} parent=1 // pred_check_branch
      %124 = sbr.rel (0) target = $region29
    $region28: #{tpu_custom_call.1} parent=1 // pred_region
      _
    $region29: #{tpu_custom_call.1} parent=1 // pred_fallthru
      _
    // Predicated region
    $region30: #{tpu_custom_call.1} parent=1 // pred_check
      _
    $region31: #{tpu_custom_call.1} parent=1 // pred_check_branch
      %126 = sbr.rel (0) target = $region33
    $region32: #{tpu_custom_call.1} parent=1 // pred_region
      _
    $region33: #{tpu_custom_call.1} parent=1 // pred_fallthru
      _
    // Predicated region
    $region34: #{tpu_custom_call.1} parent=1 // pred_check
      _
    $region35: #{tpu_custom_call.1} parent=1 // pred_check_branch
      %128 = sbr.rel (0) target = $region37
    $region36: #{tpu_custom_call.1} parent=1 // pred_region
      _
    $region37: #{tpu_custom_call.1} parent=1 // pred_fallthru
      _
    // Predicated region
    $region38: #{tpu_custom_call.1} parent=1 // pred_check
      _
    $region39: #{tpu_custom_call.1} parent=1 // pred_check_branch
      %130 = sbr.rel (0) target = $region41
    $region40: #{tpu_custom_call.1} parent=1 // pred_region
      _
    $region41: #{tpu_custom_call.1} parent=1 // pred_fallthru
      _
    // Predicated region
    $region42: #{tpu_custom_call.1} parent=1 // pred_check
      _
    $region43: #{tpu_custom_call.1} parent=1 // pred_check_branch
      %132 = sbr.rel (0) target = $region45
    $region44: #{tpu_custom_call.1} parent=1 // pred_region
      %s134 = ssub.s32 16, 16
      %135 = vsyncadd [#allocation3], %s134
      %s137 = sshll.u32 [#allocation2], 4
      %s138 = int_to_ptr.vmem [resolvable:$true] %s137
      %140 = dma.hbm_to_vmem [thread:$0]  %s21, 16, %s138, [#allocation3]
    $region45: #{tpu_custom_call.1} parent=1 // pred_fallthru
      _
    // Predicated region
    $region46: #{tpu_custom_call.1} parent=1 // pred_check
      _
    $region47: #{tpu_custom_call.1} parent=1 // pred_check_branch
      %142 = sbr.rel (0) target = $region49
    $region48: #{tpu_custom_call.1} parent=1 // pred_region
      %s144 = ssub.s32 16, 16
      %145 = vsyncadd [#allocation6], %s144
      %s147 = sshll.u32 [#allocation5], 4
      %s148 = int_to_ptr.vmem [resolvable:$true] %s147
      %150 = dma.hbm_to_vmem [thread:$0]  %s23, 16, %s148, [#allocation6]
    $region49: #{tpu_custom_call.1} parent=1 // pred_fallthru
      _
    // Predicated region
    $region50: #{tpu_custom_call.1} parent=1 // pred_check
      _
    $region51: #{tpu_custom_call.1} parent=1 // pred_check_branch
      %152 = sbr.rel (0) target = $region53
    $region52: #{tpu_custom_call.1} parent=1 // pred_region
      %s154 = ssub.s32 16, 16
      %155 = vsyncadd [#allocation6], %s154
      %s157 = sshll.u32 [#allocation7], 4
      %s158 = int_to_ptr.vmem [resolvable:$true] %s157
      %160 = dma.hbm_to_vmem [thread:$0]  %s25, 16, %s158, [#allocation6]
    $region53: #{tpu_custom_call.1} parent=1 // pred_fallthru
      _
    // Predicated region
    $region54: #{tpu_custom_call.1} parent=1 // pred_check
      _
    $region55: #{tpu_custom_call.1} parent=1 // pred_check_branch
      %162 = sbr.rel (0) target = $region57
    $region56: #{tpu_custom_call.1} parent=1 // pred_region
      %s164 = ssub.s32 16, 16
      %165 = vsyncadd [#allocation9], %s164
      %s167 = sshll.u32 [#allocation8], 4
      %s168 = int_to_ptr.vmem [resolvable:$true] %s167
      %170 = dma.hbm_to_vmem [thread:$0]  %s27, 16, %s168, [#allocation9]
    $region57: #{tpu_custom_call.1} parent=1 // pred_fallthru
      _
    // Predicated region
    $region58: #{tpu_custom_call.1} parent=1 // pred_check
      _
    $region59: #{tpu_custom_call.1} parent=1 // pred_check_branch
      %172 = sbr.rel (0) target = $region61
    $region60: #{tpu_custom_call.1} parent=1 // pred_region
      _
    $region61: #{tpu_custom_call.1} parent=1 // pred_fallthru
      _
    // Predicated region
    $region62: #{tpu_custom_call.1} parent=1 // pred_check
      _
    $region63: #{tpu_custom_call.1} parent=1 // pred_check_branch
      %174 = sbr.rel (0) target = $region65
    $region64: #{tpu_custom_call.1} parent=1 // pred_region
      _
    $region65: #{tpu_custom_call.1} parent=1 // pred_fallthru
      _
    // Predicated region
    $region66: #{tpu_custom_call.1} parent=1 // pred_check
      _
    $region67: #{tpu_custom_call.1} parent=1 // pred_check_branch
      %176 = sbr.rel (0) target = $region69
    $region68: #{tpu_custom_call.1} parent=1 // pred_region
      _
    $region69: #{tpu_custom_call.1} parent=1 // pred_fallthru
      _
    // Predicated region
    $region70: #{tpu_custom_call.1} parent=1 // pred_check
      _
    $region71: #{tpu_custom_call.1} parent=1 // pred_check_branch
      %178 = sbr.rel (0) target = $region73
    $region72: #{tpu_custom_call.1} parent=1 // pred_region
      %s180 = ssub.s32 192, 192
      %181 = vsyncadd [#allocation9], %s180
      %s182 = sshll.u32 [#allocation10], 4
      %s183 = int_to_ptr.vmem [resolvable:$true] %s182
      %188 = dma.hbm_to_vmem [thread:$0]  %s35, 192, %s183, [#allocation9], 64, 64, 4
    $region73: #{tpu_custom_call.1} parent=1 // pred_fallthru
      _
    // Predicated region
    $region74: #{tpu_custom_call.1} parent=1 // pred_check
      _
    $region75: #{tpu_custom_call.1} parent=1 // pred_check_branch
      %190 = sbr.rel (0) target = $region77
    $region76: #{tpu_custom_call.1} parent=1 // pred_region
      %s192 = ssub.s32 192, 192
      %193 = vsyncadd [#allocation12], %s192
      %s194 = sshll.u32 [#allocation11], 4
      %s195 = int_to_ptr.vmem [resolvable:$true] %s194
      %200 = dma.hbm_to_vmem [thread:$0]  %s37, 192, %s195, [#allocation12], 64, 64, 4
    $region77: #{tpu_custom_call.1} parent=1 // pred_fallthru
      _
    // Predicated region
    $region78: #{tpu_custom_call.1} parent=1 // pred_check
      _
    $region79: #{tpu_custom_call.1} parent=1 // pred_check_branch
      %202 = sbr.rel (0) target = $region81
    $region80: #{tpu_custom_call.1} parent=1 // pred_region
      %s204 = ssub.s32 192, 192
      %205 = vsyncadd [#allocation12], %s204
      %s206 = sshll.u32 [#allocation13], 4
      %s207 = int_to_ptr.vmem [resolvable:$true] %s206
      %212 = dma.hbm_to_vmem [thread:$0]  %s39, 192, %s207, [#allocation12], 64, 64, 4
    $region81: #{tpu_custom_call.1} parent=1 // pred_fallthru
      _
    // Predicated region
    $region82: #{tpu_custom_call.1} parent=1 // pred_check
      _
    $region83: #{tpu_custom_call.1} parent=1 // pred_check_branch
      %214 = sbr.rel (0) target = $region85
    $region84: #{tpu_custom_call.1} parent=1 // pred_region
      %s216 = ssub.s32 192, 192
      %217 = vsyncadd [#allocation15], %s216
      %s218 = sshll.u32 [#allocation14], 4
      %s219 = int_to_ptr.vmem [resolvable:$true] %s218
      %224 = dma.hbm_to_vmem [thread:$0]  %s41, 192, %s219, [#allocation15], 64, 64, 4
    $region85: #{tpu_custom_call.1} parent=1 // pred_fallthru
      _
    // Predicated region
    $region86: #{tpu_custom_call.1} parent=1 // pred_check
      _
    $region87: #{tpu_custom_call.1} parent=1 // pred_check_branch
      %226 = sbr.rel (0) target = $region89
    $region88: #{tpu_custom_call.1} parent=1 // pred_region
      _
    $region89: #{tpu_custom_call.1} parent=1 // pred_fallthru
      _
    // Predicated region
    $region90: #{tpu_custom_call.1} parent=1 // pred_check
      _
    $region91: #{tpu_custom_call.1} parent=1 // pred_check_branch
      %228 = sbr.rel (0) target = $region93
    $region92: #{tpu_custom_call.1} parent=1 // pred_region
      _
    $region93: #{tpu_custom_call.1} parent=1 // pred_fallthru
      _
    // Predicated region
    $region94: #{tpu_custom_call.1} parent=1 // pred_check
      _
    $region95: #{tpu_custom_call.1} parent=1 // pred_check_branch
      %230 = sbr.rel (0) target = $region97
    $region96: #{tpu_custom_call.1} parent=1 // pred_region
      _
    $region97: #{tpu_custom_call.1} parent=1 // pred_fallthru
      _
    // Predicated region
    $region98: #{tpu_custom_call.1} parent=1 // pred_check
      _
    $region99: #{tpu_custom_call.1} parent=1 // pred_check_branch
      %232 = sbr.rel (0) target = $region101
    $region100: #{tpu_custom_call.1} parent=1 // pred_region
      _
    $region101: #{tpu_custom_call.1} parent=1 // pred_fallthru
      _
    // Predicated region
    $region102: #{tpu_custom_call.1} parent=1 // pred_check
      _
    $region103: #{tpu_custom_call.1} parent=1 // pred_check_branch
      %234 = sbr.rel (0) target = $region105
    $region104: #{tpu_custom_call.1} parent=1 // pred_region
      %s236 = ssub.s32 320, 320
      %237 = vsyncadd [#allocation15], %s236
      %s238 = sshll.u32 [#allocation16], 4
      %s239 = int_to_ptr.vmem [resolvable:$true] %s238
      %244 = dma.hbm_to_vmem [thread:$0]  %s51, 320, %s239, [#allocation15], 64, 64, 4
    $region105: #{tpu_custom_call.1} parent=1 // pred_fallthru
      _
    // Predicated region
    $region106: #{tpu_custom_call.1} parent=1 // pred_check
      _
    $region107: #{tpu_custom_call.1} parent=1 // pred_check_branch
      %246 = sbr.rel (0) target = $region109
    $region108: #{tpu_custom_call.1} parent=1 // pred_region
      %s248 = ssub.s32 320, 320
      %249 = vsyncadd [#allocation18], %s248
      %s250 = sshll.u32 [#allocation17], 4
      %s251 = int_to_ptr.vmem [resolvable:$true] %s250
      %256 = dma.hbm_to_vmem [thread:$0]  %s53, 320, %s251, [#allocation18], 64, 64, 4
    $region109: #{tpu_custom_call.1} parent=1 // pred_fallthru
      _
    // Predicated region
    $region110: #{tpu_custom_call.1} parent=1 // pred_check
      _
    $region111: #{tpu_custom_call.1} parent=1 // pred_check_branch
      %258 = sbr.rel (0) target = $region113
    $region112: #{tpu_custom_call.1} parent=1 // pred_region
      %s260 = ssub.s32 320, 320
      %261 = vsyncadd [#allocation18], %s260
      %s262 = sshll.u32 [#allocation19], 4
      %s263 = int_to_ptr.vmem [resolvable:$true] %s262
      %268 = dma.hbm_to_vmem [thread:$0]  %s55, 320, %s263, [#allocation18], 64, 64, 4
    $region113: #{tpu_custom_call.1} parent=1 // pred_fallthru
      _
    // Predicated region
    $region114: #{tpu_custom_call.1} parent=1 // pred_check
      _
    $region115: #{tpu_custom_call.1} parent=1 // pred_check_branch
      %270 = sbr.rel (0) target = $region117
    $region116: #{tpu_custom_call.1} parent=1 // pred_region
      _
    $region117: #{tpu_custom_call.1} parent=1 // pred_fallthru
      _
    // Predicated region
    $region118: #{tpu_custom_call.1} parent=1 // pred_check
      _
    $region119: #{tpu_custom_call.1} parent=1 // pred_check_branch
      %272 = sbr.rel (0) target = $region121
    $region120: #{tpu_custom_call.1} parent=1 // pred_region
      _
    $region121: #{tpu_custom_call.1} parent=1 // pred_fallthru
      _
    // Predicated region
    $region122: #{tpu_custom_call.1} parent=1 // pred_check
      _
    $region123: #{tpu_custom_call.1} parent=1 // pred_check_branch
      %274 = sbr.rel (0) target = $region125
    $region124: #{tpu_custom_call.1} parent=1 // pred_region
      _
    $region125: #{tpu_custom_call.1} parent=1 // pred_fallthru
      _
    // Predicated region
    $region126: #{tpu_custom_call.1} parent=1 // pred_check
      _
    $region127: #{tpu_custom_call.1} parent=1 // pred_check_branch
      %276 = sbr.rel (0) target = $region129
    $region128: #{tpu_custom_call.1} parent=1 // pred_region
      _
    $region129: #{tpu_custom_call.1} parent=1 // pred_fallthru
      _
    // Predicated region
    $region130: #{tpu_custom_call.1} parent=1 // pred_check
      _
    $region131: #{tpu_custom_call.1} parent=1 // pred_check_branch
      %278 = sbr.rel (0) target = $region133
    $region132: #{tpu_custom_call.1} parent=1 // pred_region
      _
    $region133: #{tpu_custom_call.1} parent=1 // pred_fallthru
      _
    // Predicated region
    $region134: #{tpu_custom_call.1} parent=1 // pred_check
      _
    $region135: #{tpu_custom_call.1} parent=1 // pred_check_branch
      %280 = sbr.rel (0) target = $region137
    $region136: #{tpu_custom_call.1} parent=1 // pred_region
      %s282 = ssub.s32 1280, 1280
      %283 = vsyncadd [#allocation21], %s282
      %s284 = sshll.u32 [#allocation20], 4
      %s285 = int_to_ptr.vmem [resolvable:$true] %s284
      %290 = dma.hbm_to_vmem [thread:$0]  %s67, 1280, %s285, [#allocation21], 128, 128, 8
    $region137: #{tpu_custom_call.1} parent=1 // pred_fallthru
      _
    // Predicated region
    $region138: #{tpu_custom_call.1} parent=1 // pred_check
      _
    $region139: #{tpu_custom_call.1} parent=1 // pred_check_branch
      %292 = sbr.rel (0) target = $region141
    $region140: #{tpu_custom_call.1} parent=1 // pred_region
      %s294 = ssub.s32 1280, 1280
      %295 = vsyncadd [#allocation21], %s294
      %s296 = sshll.u32 [#allocation22], 4
      %s297 = int_to_ptr.vmem [resolvable:$true] %s296
      %302 = dma.hbm_to_vmem [thread:$0]  %s69, 1280, %s297, [#allocation21], 128, 128, 8
    $region141: #{tpu_custom_call.1} parent=1 // pred_fallthru
      _
    // Predicated region
    $region142: #{tpu_custom_call.1} parent=1 // pred_check
      _
    $region143: #{tpu_custom_call.1} parent=1 // pred_check_branch
      %304 = sbr.rel (0) target = $region145
    $region144: #{tpu_custom_call.1} parent=1 // pred_region
      _
    $region145: #{tpu_custom_call.1} parent=1 // pred_fallthru
      _
    // Predicated region
    $region146: #{tpu_custom_call.1} parent=1 // pred_check
      _
    $region147: #{tpu_custom_call.1} parent=1 // pred_check_branch
      %306 = sbr.rel (0) target = $region149
    $region148: #{tpu_custom_call.1} parent=1 // pred_region
      _
    $region149: #{tpu_custom_call.1} parent=1 // pred_fallthru
      _
    // Predicated region
    $region150: #{tpu_custom_call.1} parent=1 // pred_check
      _
    $region151: #{tpu_custom_call.1} parent=1 // pred_check_branch
      %308 = sbr.rel (0) target = $region153
    $region152: #{tpu_custom_call.1} parent=1 // pred_region
      _
    $region153: #{tpu_custom_call.1} parent=1 // pred_fallthru
      _
    // Predicated region
    $region154: #{tpu_custom_call.1} parent=1 // pred_check
      _
    $region155: #{tpu_custom_call.1} parent=1 // pred_check_branch
      %310 = sbr.rel (0) target = $region157
    $region156: #{tpu_custom_call.1} parent=1 // pred_region
      _
    $region157: #{tpu_custom_call.1} parent=1 // pred_fallthru
      _
    // Predicated region
    $region158: #{tpu_custom_call.1} parent=1 // pred_check
      _
    $region159: #{tpu_custom_call.1} parent=1 // pred_check_branch
      %312 = sbr.rel (0) target = $region161
    $region160: #{tpu_custom_call.1} parent=1 // pred_region
      _
    $region161: #{tpu_custom_call.1} parent=1 // pred_fallthru
      _
    // Predicated region
    $region162: #{tpu_custom_call.1} parent=1 // pred_check
      _
    $region163: #{tpu_custom_call.1} parent=1 // pred_check_branch
      %314 = sbr.rel (0) target = $region165
    $region164: #{tpu_custom_call.1} parent=1 // pred_region
      %s316 = ssub.s32 3840, 3840
      %317 = vsyncadd [#allocation24], %s316
      %s318 = sshll.u32 [#allocation23], 4
      %s319 = int_to_ptr.vmem [resolvable:$true] %s318
      %324 = dma.hbm_to_vmem [thread:$0]  %s81, 3840, %s319, [#allocation24], 192, 192, 12
    $region165: #{tpu_custom_call.1} parent=1 // pred_fallthru
      _
    // Predicated region
    $region166: #{tpu_custom_call.1} parent=1 // pred_check
      _
    $region167: #{tpu_custom_call.1} parent=1 // pred_check_branch
      %326 = sbr.rel (0) target = $region169
    $region168: #{tpu_custom_call.1} parent=1 // pred_region
      %s328 = ssub.s32 3840, 3840
      %329 = vsyncadd [#allocation24], %s328
      %s330 = sshll.u32 [#allocation25], 4
      %s331 = int_to_ptr.vmem [resolvable:$true] %s330
      %336 = dma.hbm_to_vmem [thread:$0]  %s83, 3840, %s331, [#allocation24], 192, 192, 12
    $region169: #{tpu_custom_call.1} parent=1 // pred_fallthru
      _
    // Predicated region
    $region170: #{tpu_custom_call.1} parent=1 // pred_check
      _
    $region171: #{tpu_custom_call.1} parent=1 // pred_check_branch
      %338 = sbr.rel (0) target = $region173
    $region172: #{tpu_custom_call.1} parent=1 // pred_region
      _
    $region173: #{tpu_custom_call.1} parent=1 // pred_fallthru
      _
    // Predicated region
    $region174: #{tpu_custom_call.1} parent=1 // pred_check
      _
    $region175: #{tpu_custom_call.1} parent=1 // pred_check_branch
      %340 = sbr.rel (0) target = $region177
    $region176: #{tpu_custom_call.1} parent=1 // pred_region
      _
    $region177: #{tpu_custom_call.1} parent=1 // pred_fallthru
      _
    // Predicated region
    $region178: #{tpu_custom_call.1} parent=1 // pred_check
      _
    $region179: #{tpu_custom_call.1} parent=1 // pred_check_branch
      %342 = sbr.rel (0) target = $region181
    $region180: #{tpu_custom_call.1} parent=1 // pred_region
      %s344 = ssub.s32 12800, 12800
      %345 = vsyncadd [#allocation27], %s344
      %s346 = sshll.u32 [#allocation26], 4
      %s347 = int_to_ptr.vmem [resolvable:$true] %s346
      %352 = dma.hbm_to_vmem [thread:$0]  %s89, 12800, %s347, [#allocation27], 320, 320, 20
    $region181: #{tpu_custom_call.1} parent=1 // pred_fallthru
      _
    // Predicated region
    $region182: #{tpu_custom_call.1} parent=1 // pred_check
      _
    $region183: #{tpu_custom_call.1} parent=1 // pred_check_branch
      %354 = sbr.rel (0) target = $region185
    $region184: #{tpu_custom_call.1} parent=1 // pred_region
      %s356 = ssub.s32 12800, 12800
      %357 = vsyncadd [#allocation27], %s356
      %s358 = sshll.u32 [#allocation28], 4
      %s359 = int_to_ptr.vmem [resolvable:$true] %s358
      %364 = dma.hbm_to_vmem [thread:$0]  %s91, 12800, %s359, [#allocation27], 320, 320, 20
    $region185: #{tpu_custom_call.1} parent=1 // pred_fallthru
      _
    // Predicated region
    $region186: #{tpu_custom_call.1} parent=1 // pred_check
      _
    $region187: #{tpu_custom_call.1} parent=1 // pred_check_branch
      %366 = sbr.rel (0) target = $region189
    $region188: #{tpu_custom_call.1} parent=1 // pred_region
      %s368 = ssub.s32 12800, 12800
      %369 = vsyncadd [#allocation30], %s368
      %s370 = sshll.u32 [#allocation29], 4
      %s371 = int_to_ptr.vmem [resolvable:$true] %s370
      %376 = dma.hbm_to_vmem [thread:$0]  %s93, 12800, %s371, [#allocation30], 320, 320, 20
    $region189: #{tpu_custom_call.1} parent=1 // pred_fallthru
      _
    // Predicated region
    $region190: #{tpu_custom_call.1} parent=1 // pred_check
      _
    $region191: #{tpu_custom_call.1} parent=1 // pred_check_branch
      %378 = sbr.rel (0) target = $region193
    $region192: #{tpu_custom_call.1} parent=1 // pred_region
      %379 = dma.done [#allocation3], 16
    $region193: #{tpu_custom_call.1} parent=1 // pred_fallthru
      _
    // Predicated region
    $region194: #{tpu_custom_call.1} parent=1 // pred_check
      _
    $region195: #{tpu_custom_call.1} parent=1 // pred_check_branch
      %381 = sbr.rel (0) target = $region197
    $region196: #{tpu_custom_call.1} parent=1 // pred_region
      %382 = dma.done [#allocation6], 16
    $region197: #{tpu_custom_call.1} parent=1 // pred_fallthru
      _
    // Predicated region
    $region198: #{tpu_custom_call.1} parent=1 // pred_check
      _
    $region199: #{tpu_custom_call.1} parent=1 // pred_check_branch
      %384 = sbr.rel (0) target = $region201
    $region200: #{tpu_custom_call.1} parent=1 // pred_region
      %385 = dma.done [#allocation6], 16
    $region201: #{tpu_custom_call.1} parent=1 // pred_fallthru
      _
    // Predicated region
    $region202: #{tpu_custom_call.1} parent=1 // pred_check
      _
    $region203: #{tpu_custom_call.1} parent=1 // pred_check_branch
      %387 = sbr.rel (0) target = $region205
    $region204: #{tpu_custom_call.1} parent=1 // pred_region
      %388 = dma.done [#allocation9], 16
    $region205: #{tpu_custom_call.1} parent=1 // pred_fallthru
      _
    // Predicated region
    $region206: #{tpu_custom_call.1} parent=1 // pred_check
      _
    $region207: #{tpu_custom_call.1} parent=1 // pred_check_branch
      %390 = sbr.rel (0) target = $region209
    $region208: #{tpu_custom_call.1} parent=1 // pred_region
      %391 = dma.done [#allocation9], 192
    $region209: #{tpu_custom_call.1} parent=1 // pred_fallthru
      _
    // Predicated region
    $region210: #{tpu_custom_call.1} parent=1 // pred_check
      _
    $region211: #{tpu_custom_call.1} parent=1 // pred_check_branch
      %393 = sbr.rel (0) target = $region213
    $region212: #{tpu_custom_call.1} parent=1 // pred_region
      %394 = dma.done [#allocation12], 192
    $region213: #{tpu_custom_call.1} parent=1 // pred_fallthru
      _
    // Predicated region
    $region214: #{tpu_custom_call.1} parent=1 // pred_check
      _
    $region215: #{tpu_custom_call.1} parent=1 // pred_check_branch
      %396 = sbr.rel (0) target = $region217
    $region216: #{tpu_custom_call.1} parent=1 // pred_region
      %397 = dma.done [#allocation12], 192
    $region217: #{tpu_custom_call.1} parent=1 // pred_fallthru
      _
    // Predicated region
    $region218: #{tpu_custom_call.1} parent=1 // pred_check
      _
    $region219: #{tpu_custom_call.1} parent=1 // pred_check_branch
      %399 = sbr.rel (0) target = $region221
    $region220: #{tpu_custom_call.1} parent=1 // pred_region
      %400 = dma.done [#allocation15], 192
    $region221: #{tpu_custom_call.1} parent=1 // pred_fallthru
      _
    // Predicated region
    $region222: #{tpu_custom_call.1} parent=1 // pred_check
      _
    $region223: #{tpu_custom_call.1} parent=1 // pred_check_branch
      %402 = sbr.rel (0) target = $region225
    $region224: #{tpu_custom_call.1} parent=1 // pred_region
      %403 = dma.done [#allocation15], 320
    $region225: #{tpu_custom_call.1} parent=1 // pred_fallthru
      _
    // Predicated region
    $region226: #{tpu_custom_call.1} parent=1 // pred_check
      _
    $region227: #{tpu_custom_call.1} parent=1 // pred_check_branch
      %405 = sbr.rel (0) target = $region229
    $region228: #{tpu_custom_call.1} parent=1 // pred_region
      %406 = dma.done [#allocation18], 320
    $region229: #{tpu_custom_call.1} parent=1 // pred_fallthru
      _
    // Predicated region
    $region230: #{tpu_custom_call.1} parent=1 // pred_check
      _
    $region231: #{tpu_custom_call.1} parent=1 // pred_check_branch
      %408 = sbr.rel (0) target = $region233
    $region232: #{tpu_custom_call.1} parent=1 // pred_region
      %409 = dma.done [#allocation18], 320
    $region233: #{tpu_custom_call.1} parent=1 // pred_fallthru
      _
    // Predicated region
    $region234: #{tpu_custom_call.1} parent=1 // pred_check
      _
    $region235: #{tpu_custom_call.1} parent=1 // pred_check_branch
      %411 = sbr.rel (0) target = $region237
    $region236: #{tpu_custom_call.1} parent=1 // pred_region
      %412 = dma.done [#allocation21], 1280
    $region237: #{tpu_custom_call.1} parent=1 // pred_fallthru
      _
    // Predicated region
    $region238: #{tpu_custom_call.1} parent=1 // pred_check
      _
    $region239: #{tpu_custom_call.1} parent=1 // pred_check_branch
      %414 = sbr.rel (0) target = $region241
    $region240: #{tpu_custom_call.1} parent=1 // pred_region
      %415 = dma.done [#allocation21], 1280
    $region241: #{tpu_custom_call.1} parent=1 // pred_fallthru
      _
    // Predicated region
    $region242: #{tpu_custom_call.1} parent=1 // pred_check
      _
    $region243: #{tpu_custom_call.1} parent=1 // pred_check_branch
      %417 = sbr.rel (0) target = $region245
    $region244: #{tpu_custom_call.1} parent=1 // pred_region
      %418 = dma.done [#allocation24], 3840
    $region245: #{tpu_custom_call.1} parent=1 // pred_fallthru
      _
    // Predicated region
    $region246: #{tpu_custom_call.1} parent=1 // pred_check
      _
    $region247: #{tpu_custom_call.1} parent=1 // pred_check_branch
      %420 = sbr.rel (0) target = $region249
    $region248: #{tpu_custom_call.1} parent=1 // pred_region
      %421 = dma.done [#allocation24], 3840
    $region249: #{tpu_custom_call.1} parent=1 // pred_fallthru
      _
    // Predicated region
    $region250: #{tpu_custom_call.1} parent=1 // pred_check
      _
    $region251: #{tpu_custom_call.1} parent=1 // pred_check_branch
      %423 = sbr.rel (0) target = $region253
    $region252: #{tpu_custom_call.1} parent=1 // pred_region
      %424 = dma.done [#allocation27], 12800
    $region253: #{tpu_custom_call.1} parent=1 // pred_fallthru
      _
    // Predicated region
    $region254: #{tpu_custom_call.1} parent=1 // pred_check
      _
    $region255: #{tpu_custom_call.1} parent=1 // pred_check_branch
      %426 = sbr.rel (0) target = $region257
    $region256: #{tpu_custom_call.1} parent=1 // pred_region
      %427 = dma.done [#allocation27], 12800
    $region257: #{tpu_custom_call.1} parent=1 // pred_fallthru
      _
    // Predicated region
    $region258: #{tpu_custom_call.1} parent=1 // pred_check
      _
    $region259: #{tpu_custom_call.1} parent=1 // pred_check_branch
      %429 = sbr.rel (0) target = $region261
    $region260: #{tpu_custom_call.1} parent=1 // pred_region
      %430 = dma.done [#allocation30], 12800
    $region261: #{tpu_custom_call.1} parent=1 // pred_fallthru
      _
    %v431 = vld [vmem:[%s1] sm:$0xff]
    %v432 = vld [vmem:[%s3] sm:$0xff]
    %v433 = vld [vmem:[%s3 + $0x8] sm:$0xff]
    %v434 = vld [vmem:[%s3 + $0x10] sm:$0xff]
    %v435 = vld [vmem:[%s3 + $0x18] sm:$0xff]
    %v436 = vld [vmem:[%s3 + $0x20] sm:$0xff]
    %v437 = vld [vmem:[%s3 + $0x28] sm:$0xff]
    %v438 = vld [vmem:[%s3 + $0x30] sm:$0xff]
    %v439 = vld [vmem:[%s3 + $0x38] sm:$0xff]
    %v440 = vld [vmem:[%s3 + $0x40] sm:$0xff]
    %v441 = vld [vmem:[%s3 + $0x48] sm:$0xff]
    %v442 = vld [vmem:[%s3 + $0x50] sm:$0xff]
    %v443 = vld [vmem:[%s3 + $0x58] sm:$0xff]
    %v444 = vld [vmem:[%s3 + $0x60] sm:$0xff]
    %v445 = vld [vmem:[%s3 + $0x68] sm:$0xff]
    %v446 = vld [vmem:[%s3 + $0x70] sm:$0xff]
    %v447 = vld [vmem:[%s3 + $0x78] sm:$0xff]
    %v448 = vld [vmem:[%s3 + $0x80] sm:$0xff]
    %v449 = vld [vmem:[%s3 + $0x88] sm:$0xff]
    %v450 = vld [vmem:[%s3 + $0x90] sm:$0xff]
    %v451 = vld [vmem:[%s3 + $0x98] sm:$0xff]
    %v452 = vld [vmem:[%s3 + $0xa0] sm:$0xff]
    %v453 = vld [vmem:[%s3 + $0xa8] sm:$0xff]
    %v454 = vld [vmem:[%s3 + $0xb0] sm:$0xff]
    %v455 = vld [vmem:[%s3 + $0xb8] sm:$0xff]
    %v456 = vld [vmem:[%s3 + $0xc0] sm:$0xff]
    %v457 = vld [vmem:[%s3 + $0xc8] sm:$0xff]
    %v458 = vld [vmem:[%s3 + $0xd0] sm:$0xff]
    %v459 = vld [vmem:[%s3 + $0xd8] sm:$0xff]
    %v460 = vld [vmem:[%s3 + $0xe0] sm:$0xff]
    %v461 = vld [vmem:[%s3 + $0xe8] sm:$0xff]
    %v462 = vld [vmem:[%s3 + $0xf0] sm:$0xff]
    %v463 = vld [vmem:[%s3 + $0xf8] sm:$0xff]
    %v464 = vld [vmem:[%s3 + $0x100] sm:$0xff]
    %v465 = vld [vmem:[%s3 + $0x108] sm:$0xff]
    %v466 = vld [vmem:[%s3 + $0x110] sm:$0xff]
    %v467 = vld [vmem:[%s3 + $0x118] sm:$0xff]
    %v468 = vld [vmem:[%s3 + $0x120] sm:$0xff]
    %v469 = vld [vmem:[%s3 + $0x128] sm:$0xff]
    %v470 = vld [vmem:[%s3 + $0x130] sm:$0xff]
    %v471 = vld [vmem:[%s3 + $0x138] sm:$0xff]
    %v472 = vld [vmem:[%s3 + $0x140] sm:$0xff]
    %v473 = vld [vmem:[%s3 + $0x148] sm:$0xff]
    %v474 = vld [vmem:[%s3 + $0x150] sm:$0xff]
    %v475 = vld [vmem:[%s3 + $0x158] sm:$0xff]
    %v476 = vld [vmem:[%s3 + $0x160] sm:$0xff]
    %v477 = vld [vmem:[%s3 + $0x168] sm:$0xff]
    %v478 = vld [vmem:[%s3 + $0x170] sm:$0xff]
    %v479 = vld [vmem:[%s3 + $0x178] sm:$0xff]
    %v480 = vld [vmem:[%s3 + $0x180] sm:$0xff]
    %v481 = vld [vmem:[%s3 + $0x188] sm:$0xff]
    %v482 = vld [vmem:[%s3 + $0x190] sm:$0xff]
    %v483 = vld [vmem:[%s3 + $0x198] sm:$0xff]
    %v484 = vld [vmem:[%s3 + $0x1a0] sm:$0xff]
    %v485 = vld [vmem:[%s3 + $0x1a8] sm:$0xff]
    %v486 = vld [vmem:[%s3 + $0x1b0] sm:$0xff]
    %v487 = vld [vmem:[%s3 + $0x1b8] sm:$0xff]
    %v488 = vld [vmem:[%s3 + $0x1c0] sm:$0xff]
    %v489 = vld [vmem:[%s3 + $0x1c8] sm:$0xff]
    %v490 = vld [vmem:[%s3 + $0x1d0] sm:$0xff]
    %v491 = vld [vmem:[%s3 + $0x1d8] sm:$0xff]
    %v492 = vld [vmem:[%s3 + $0x1e0] sm:$0xff]
    %v493 = vld [vmem:[%s3 + $0x1e8] sm:$0xff]
    %v494 = vld [vmem:[%s3 + $0x1f0] sm:$0xff]
    %v495 = vld [vmem:[%s3 + $0x1f8] sm:$0xff]
    %v496 = vld [vmem:[%s3 + $0x200] sm:$0xff]
    %v497 = vld [vmem:[%s3 + $0x208] sm:$0xff]
    %v498 = vld [vmem:[%s3 + $0x210] sm:$0xff]
    %v499 = vld [vmem:[%s3 + $0x218] sm:$0xff]
    %v500 = vld [vmem:[%s3 + $0x220] sm:$0xff]
    %v501 = vld [vmem:[%s3 + $0x228] sm:$0xff]
    %v502 = vld [vmem:[%s3 + $0x230] sm:$0xff]
    %v503 = vld [vmem:[%s3 + $0x238] sm:$0xff]
    %v504 = vld [vmem:[%s3 + $0x240] sm:$0xff]
    %v505 = vld [vmem:[%s3 + $0x248] sm:$0xff]
    %v506 = vld [vmem:[%s3 + $0x250] sm:$0xff]
    %v507 = vld [vmem:[%s3 + $0x258] sm:$0xff]
    %v508 = vld [vmem:[%s3 + $0x260] sm:$0xff]
    %v509 = vld [vmem:[%s3 + $0x268] sm:$0xff]
    %v510 = vld [vmem:[%s3 + $0x270] sm:$0xff]
    %v511 = vld [vmem:[%s3 + $0x278] sm:$0xff]
    %v512 = vld [vmem:[%s5] sm:$0xff]
    %v513 = vld [vmem:[%s5 + $0x8] sm:$0xff]
    %v514 = vld [vmem:[%s5 + $0x10] sm:$0xff]
    %v515 = vld [vmem:[%s5 + $0x18] sm:$0xff]
    %v516 = vld [vmem:[%s5 + $0x20] sm:$0xff]
    %v517 = vld [vmem:[%s5 + $0x28] sm:$0xff]
    %v518 = vld [vmem:[%s5 + $0x30] sm:$0xff]
    %v519 = vld [vmem:[%s5 + $0x38] sm:$0xff]
    %v520 = vld [vmem:[%s7] sm:$0xff]
    %v521 = vld [vmem:[%s7 + $0x8] sm:$0xff]
    %v522 = vld [vmem:[%s7 + $0x10] sm:$0xff]
    %v523 = vld [vmem:[%s7 + $0x18] sm:$0xff]
    %v524 = vld [vmem:[%s7 + $0x20] sm:$0xff]
    %v525 = vld [vmem:[%s7 + $0x28] sm:$0xff]
    %v526 = vld [vmem:[%s7 + $0x30] sm:$0xff]
    %v527 = vld [vmem:[%s7 + $0x38] sm:$0xff]
    %vm528 = vcmask 64512
    %v530 = vsel %vm528, %v432, 0
    %v533 = vsel %vm528, %v433, 0
    %v536 = vsel %vm528, %v434, 0
    %v539 = vsel %vm528, %v435, 0
    %v542 = vsel %vm528, %v436, 0
    %v545 = vsel %vm528, %v437, 0
    %v548 = vsel %vm528, %v438, 0
    %v551 = vsel %vm528, %v439, 0
    %v554 = vsel %vm528, %v440, 0
    %v557 = vsel %vm528, %v441, 0
    %v560 = vsel %vm528, %v442, 0
    %v563 = vsel %vm528, %v443, 0
    %v566 = vsel %vm528, %v444, 0
    %v569 = vsel %vm528, %v445, 0
    %v572 = vsel %vm528, %v446, 0
    %v575 = vsel %vm528, %v447, 0
    %v578 = vsel %vm528, %v448, 0
    %v581 = vsel %vm528, %v449, 0
    %v584 = vsel %vm528, %v450, 0
    %v587 = vsel %vm528, %v451, 0
    %v590 = vsel %vm528, %v452, 0
    %v593 = vsel %vm528, %v453, 0
    %v596 = vsel %vm528, %v454, 0
    %v599 = vsel %vm528, %v455, 0
    %v602 = vsel %vm528, %v456, 0
    %v605 = vsel %vm528, %v457, 0
    %v608 = vsel %vm528, %v458, 0
    %v611 = vsel %vm528, %v459, 0
    %v614 = vsel %vm528, %v460, 0
    %v617 = vsel %vm528, %v461, 0
    %v620 = vsel %vm528, %v462, 0
    %v623 = vsel %vm528, %v463, 0
    %v626 = vsel %vm528, %v464, 0
    %v629 = vsel %vm528, %v465, 0
    %v632 = vsel %vm528, %v466, 0
    %v635 = vsel %vm528, %v467, 0
    %v638 = vsel %vm528, %v468, 0
    %v641 = vsel %vm528, %v469, 0
    %v644 = vsel %vm528, %v470, 0
    %v647 = vsel %vm528, %v471, 0
    %v650 = vsel %vm528, %v472, 0
    %v653 = vsel %vm528, %v473, 0
    %v656 = vsel %vm528, %v474, 0
    %v659 = vsel %vm528, %v475, 0
    %v662 = vsel %vm528, %v476, 0
    %v665 = vsel %vm528, %v477, 0
    %v668 = vsel %vm528, %v478, 0
    %v671 = vsel %vm528, %v479, 0
    %v674 = vsel %vm528, %v480, 0
    %v677 = vsel %vm528, %v481, 0
    %v680 = vsel %vm528, %v482, 0
    %v683 = vsel %vm528, %v483, 0
    %v686 = vsel %vm528, %v484, 0
    %v689 = vsel %vm528, %v485, 0
    %v692 = vsel %vm528, %v486, 0
    %v695 = vsel %vm528, %v487, 0
    %v698 = vsel %vm528, %v488, 0
    %v701 = vsel %vm528, %v489, 0
    %v704 = vsel %vm528, %v490, 0
    %v707 = vsel %vm528, %v491, 0
    %v710 = vsel %vm528, %v492, 0
    %v713 = vsel %vm528, %v493, 0
    %v716 = vsel %vm528, %v494, 0
    %v719 = vsel %vm528, %v495, 0
    %v722 = vsel %vm528, %v496, 0
    %v725 = vsel %vm528, %v497, 0
    %v728 = vsel %vm528, %v498, 0
    %v731 = vsel %vm528, %v499, 0
    %v734 = vsel %vm528, %v500, 0
    %v737 = vsel %vm528, %v501, 0
    %v740 = vsel %vm528, %v502, 0
    %v743 = vsel %vm528, %v503, 0
    %v746 = vsel %vm528, %v504, 0
    %v749 = vsel %vm528, %v505, 0
    %v752 = vsel %vm528, %v506, 0
    %v755 = vsel %vm528, %v507, 0
    %v758 = vsel %vm528, %v508, 0
    %v761 = vsel %vm528, %v509, 0
    %v764 = vsel %vm528, %v510, 0
    %v767 = vsel %vm528, %v511, 0
    %769 = vmatprep.subr.mxu0 0.0
    %770 = vmatpush1.msra.mxu0 %v431
    %771 = vmatprep.subr.mxu0 0.0
    %772 = vmatpush1.msra.mxu0 0.0
    %773 = vmatprep.subr.mxu0 0.0
    %774 = vmatpush1.msra.mxu0 0.0
    %775 = vmatprep.subr.mxu0 0.0
    %776 = vmatpush1.msra.mxu0 0.0
    %777 = vmatprep.subr.mxu0 0.0
    %778 = vmatpush1.msra.mxu0 0.0
    %779 = vmatprep.subr.mxu0 0.0
    %780 = vmatpush1.msra.mxu0 0.0
    %781 = vmatprep.subr.mxu0 0.0
    %782 = vmatpush1.msra.mxu0 0.0
    %783 = vmatprep.subr.mxu0 0.0
    %784 = vmatpush1.msra.mxu0 0.0
    %785 = vmatprep.subr.mxu0 0.0
    %786 = vmatpush1.msra.mxu0 0.0
    %787 = vmatprep.subr.mxu0 0.0
    %788 = vmatpush1.msra.mxu0 0.0
    %789 = vmatprep.subr.mxu0 0.0
    %790 = vmatpush1.msra.mxu0 0.0
    %791 = vmatprep.subr.mxu0 0.0
    %792 = vmatpush1.msra.mxu0 0.0
    %793 = vmatprep.subr.mxu0 0.0
    %794 = vmatpush1.msra.mxu0 0.0
    %795 = vmatprep.subr.mxu0 0.0
    %796 = vmatpush1.msra.mxu0 0.0
    %797 = vmatprep.subr.mxu0 0.0
    %798 = vmatpush1.msra.mxu0 0.0
    %799 = vmatprep.subr.mxu0 0.0
    %800 = vmatpush1.msra.mxu0 0.0
    %801 = vmatprep.subr.mxu0 0.0
    %802 = vmatpush1.msra.mxu0 0.0
    %803 = vmatprep.subr.mxu0 0.0
    %804 = vmatpush1.msra.mxu0 0.0
    %805 = vmatprep.subr.mxu0 0.0
    %806 = vmatpush1.msra.mxu0 0.0
    %807 = vmatprep.subr.mxu0 0.0
    %808 = vmatpush1.msra.mxu0 0.0
    %809 = vmatprep.subr.mxu0 0.0
    %810 = vmatpush1.msra.mxu0 0.0
    %811 = vmatprep.subr.mxu0 0.0
    %812 = vmatpush1.msra.mxu0 0.0
    %813 = vmatprep.subr.mxu0 0.0
    %814 = vmatpush1.msra.mxu0 0.0
    %815 = vmatprep.subr.mxu0 0.0
    %816 = vmatpush1.msra.mxu0 0.0
    %817 = vmatprep.subr.mxu0 0.0
    %818 = vmatpush1.msra.mxu0 0.0
    %819 = vmatprep.subr.mxu0 0.0
    %820 = vmatpush1.msra.mxu0 0.0
    %821 = vmatprep.subr.mxu0 0.0
    %822 = vmatpush1.msra.mxu0 0.0
    %823 = vmatprep.subr.mxu0 0.0
    %824 = vmatpush1.msra.mxu0 0.0
    %825 = vmatprep.subr.mxu0 0.0
    %826 = vmatpush1.msra.mxu0 0.0
    %827 = vmatprep.subr.mxu0 0.0
    %828 = vmatpush1.msra.mxu0 0.0
    %829 = vmatprep.subr.mxu0 0.0
    %830 = vmatpush1.msra.mxu0 0.0
    %831 = vmatprep.subr.mxu0 0.0
    %832 = vmatpush1.msra.mxu0 0.0
    %833 = vmatprep.mubr.f32.mxu0 0.0
    %834 = vmatmul.mubr.f32.gmra.mrb[0].mxu0 %v530
    %v835 = vpop.f32.mrb[0].mxu0
    %v836 = vadd.f32 0.0, %v835
    %v837 = vpop.f32.mrb[0].mxu0
    %838 = vmatprep.mubr.f32.mxu0 0.0
    %839 = vmatmul.mubr.f32.gmra.mrb[0].mxu0 %v533
    %v840 = vpop.f32.mrb[0].mxu0
    %v841 = vadd.f32 0.0, %v840
    %v842 = vpop.f32.mrb[0].mxu0
    %843 = vmatprep.mubr.f32.mxu0 0.0
    %844 = vmatmul.mubr.f32.gmra.mrb[0].mxu0 %v536
    %v845 = vpop.f32.mrb[0].mxu0
    %v846 = vadd.f32 0.0, %v845
    %v847 = vpop.f32.mrb[0].mxu0
    %848 = vmatprep.mubr.f32.mxu0 0.0
    %849 = vmatmul.mubr.f32.gmra.mrb[0].mxu0 %v539
    %v850 = vpop.f32.mrb[0].mxu0
    %v851 = vadd.f32 0.0, %v850
    %v852 = vpop.f32.mrb[0].mxu0
    %853 = vmatprep.mubr.f32.mxu0 0.0
    %854 = vmatmul.mubr.f32.gmra.mrb[0].mxu0 %v542
    %v855 = vpop.f32.mrb[0].mxu0
    %v856 = vadd.f32 0.0, %v855
    %v857 = vpop.f32.mrb[0].mxu0
    %858 = vmatprep.mubr.f32.mxu0 0.0
    %859 = vmatmul.mubr.f32.gmra.mrb[0].mxu0 %v545
    %v860 = vpop.f32.mrb[0].mxu0
    %v861 = vadd.f32 0.0, %v860
    %v862 = vpop.f32.mrb[0].mxu0
    %863 = vmatprep.mubr.f32.mxu0 0.0
    %864 = vmatmul.mubr.f32.gmra.mrb[0].mxu0 %v548
    %v865 = vpop.f32.mrb[0].mxu0
    %v866 = vadd.f32 0.0, %v865
    %v867 = vpop.f32.mrb[0].mxu0
    %868 = vmatprep.mubr.f32.mxu0 0.0
    %869 = vmatmul.mubr.f32.gmra.mrb[0].mxu0 %v551
    %v870 = vpop.f32.mrb[0].mxu0
    %v871 = vadd.f32 0.0, %v870
    %v872 = vpop.f32.mrb[0].mxu0
    %873 = vmatprep.mubr.f32.mxu0 0.0
    %874 = vmatmul.mubr.f32.gmra.mrb[0].mxu0 %v554
    %v875 = vpop.f32.mrb[0].mxu0
    %v876 = vadd.f32 0.0, %v875
    %v877 = vpop.f32.mrb[0].mxu0
    %878 = vmatprep.mubr.f32.mxu0 0.0
    %879 = vmatmul.mubr.f32.gmra.mrb[0].mxu0 %v557
    %v880 = vpop.f32.mrb[0].mxu0
    %v881 = vadd.f32 0.0, %v880
    %v882 = vpop.f32.mrb[0].mxu0
    %883 = vmatprep.mubr.f32.mxu0 0.0
    %884 = vmatmul.mubr.f32.gmra.mrb[0].mxu0 %v560
    %v885 = vpop.f32.mrb[0].mxu0
    %v886 = vadd.f32 0.0, %v885
    %v887 = vpop.f32.mrb[0].mxu0
    %888 = vmatprep.mubr.f32.mxu0 0.0
    %889 = vmatmul.mubr.f32.gmra.mrb[0].mxu0 %v563
    %v890 = vpop.f32.mrb[0].mxu0
    %v891 = vadd.f32 0.0, %v890
    %v892 = vpop.f32.mrb[0].mxu0
    %893 = vmatprep.mubr.f32.mxu0 0.0
    %894 = vmatmul.mubr.f32.gmra.mrb[0].mxu0 %v566
    %v895 = vpop.f32.mrb[0].mxu0
    %v896 = vadd.f32 0.0, %v895
    %v897 = vpop.f32.mrb[0].mxu0
    %898 = vmatprep.mubr.f32.mxu0 0.0
    %899 = vmatmul.mubr.f32.gmra.mrb[0].mxu0 %v569
    %v900 = vpop.f32.mrb[0].mxu0
    %v901 = vadd.f32 0.0, %v900
    %v902 = vpop.f32.mrb[0].mxu0
    %903 = vmatprep.mubr.f32.mxu0 0.0
    %904 = vmatmul.mubr.f32.gmra.mrb[0].mxu0 %v572
    %v905 = vpop.f32.mrb[0].mxu0
    %v906 = vadd.f32 0.0, %v905
    %v907 = vpop.f32.mrb[0].mxu0
    %908 = vmatprep.mubr.f32.mxu0 0.0
    %909 = vmatmul.mubr.f32.gmra.mrb[0].mxu0 %v575
    %v910 = vpop.f32.mrb[0].mxu0
    %v911 = vadd.f32 0.0, %v910
    %v912 = vpop.f32.mrb[0].mxu0
    %913 = vmatprep.mubr.f32.mxu0 0.0
    %914 = vmatmul.mubr.f32.gmra.mrb[0].mxu0 %v578
    %v915 = vpop.f32.mrb[0].mxu0
    %v916 = vadd.f32 0.0, %v915
    %v917 = vpop.f32.mrb[0].mxu0
    %918 = vmatprep.mubr.f32.mxu0 0.0
    %919 = vmatmul.mubr.f32.gmra.mrb[0].mxu0 %v581
    %v920 = vpop.f32.mrb[0].mxu0
    %v921 = vadd.f32 0.0, %v920
    %v922 = vpop.f32.mrb[0].mxu0
    %923 = vmatprep.mubr.f32.mxu0 0.0
    %924 = vmatmul.mubr.f32.gmra.mrb[0].mxu0 %v584
    %v925 = vpop.f32.mrb[0].mxu0
    %v926 = vadd.f32 0.0, %v925
    %v927 = vpop.f32.mrb[0].mxu0
    %928 = vmatprep.mubr.f32.mxu0 0.0
    %929 = vmatmul.mubr.f32.gmra.mrb[0].mxu0 %v587
    %v930 = vpop.f32.mrb[0].mxu0
    %v931 = vadd.f32 0.0, %v930
    %v932 = vpop.f32.mrb[0].mxu0
    %933 = vmatprep.mubr.f32.mxu0 0.0
    %934 = vmatmul.mubr.f32.gmra.mrb[0].mxu0 %v590
    %v935 = vpop.f32.mrb[0].mxu0
    %v936 = vadd.f32 0.0, %v935
    %v937 = vpop.f32.mrb[0].mxu0
    %938 = vmatprep.mubr.f32.mxu0 0.0
    %939 = vmatmul.mubr.f32.gmra.mrb[0].mxu0 %v593
    %v940 = vpop.f32.mrb[0].mxu0
    %v941 = vadd.f32 0.0, %v940
    %v942 = vpop.f32.mrb[0].mxu0
    %943 = vmatprep.mubr.f32.mxu0 0.0
    %944 = vmatmul.mubr.f32.gmra.mrb[0].mxu0 %v596
    %v945 = vpop.f32.mrb[0].mxu0
    %v946 = vadd.f32 0.0, %v945
    %v947 = vpop.f32.mrb[0].mxu0
    %948 = vmatprep.mubr.f32.mxu0 0.0
    %949 = vmatmul.mubr.f32.gmra.mrb[0].mxu0 %v599
    %v950 = vpop.f32.mrb[0].mxu0
    %v951 = vadd.f32 0.0, %v950
    %v952 = vpop.f32.mrb[0].mxu0
    %953 = vmatprep.mubr.f32.mxu0 0.0
    %954 = vmatmul.mubr.f32.gmra.mrb[0].mxu0 %v602
    %v955 = vpop.f32.mrb[0].mxu0
    %v956 = vadd.f32 0.0, %v955
    %v957 = vpop.f32.mrb[0].mxu0
    %958 = vmatprep.mubr.f32.mxu0 0.0
    %959 = vmatmul.mubr.f32.gmra.mrb[0].mxu0 %v605
    %v960 = vpop.f32.mrb[0].mxu0
    %v961 = vadd.f32 0.0, %v960
    %v962 = vpop.f32.mrb[0].mxu0
    %963 = vmatprep.mubr.f32.mxu0 0.0
    %964 = vmatmul.mubr.f32.gmra.mrb[0].mxu0 %v608
    %v965 = vpop.f32.mrb[0].mxu0
    %v966 = vadd.f32 0.0, %v965
    %v967 = vpop.f32.mrb[0].mxu0
    %968 = vmatprep.mubr.f32.mxu0 0.0
    %969 = vmatmul.mubr.f32.gmra.mrb[0].mxu0 %v611
    %v970 = vpop.f32.mrb[0].mxu0
    %v971 = vadd.f32 0.0, %v970
    %v972 = vpop.f32.mrb[0].mxu0
    %973 = vmatprep.mubr.f32.mxu0 0.0
    %974 = vmatmul.mubr.f32.gmra.mrb[0].mxu0 %v614
    %v975 = vpop.f32.mrb[0].mxu0
    %v976 = vadd.f32 0.0, %v975
    %v977 = vpop.f32.mrb[0].mxu0
    %978 = vmatprep.mubr.f32.mxu0 0.0
    %979 = vmatmul.mubr.f32.gmra.mrb[0].mxu0 %v617
    %v980 = vpop.f32.mrb[0].mxu0
    %v981 = vadd.f32 0.0, %v980
    %v982 = vpop.f32.mrb[0].mxu0
    %983 = vmatprep.mubr.f32.mxu0 0.0
    %984 = vmatmul.mubr.f32.gmra.mrb[0].mxu0 %v620
    %v985 = vpop.f32.mrb[0].mxu0
    %v986 = vadd.f32 0.0, %v985
    %v987 = vpop.f32.mrb[0].mxu0
    %988 = vmatprep.mubr.f32.mxu0 0.0
    %989 = vmatmul.mubr.f32.gmra.mrb[0].mxu0 %v623
    %v990 = vpop.f32.mrb[0].mxu0
    %v991 = vadd.f32 0.0, %v990
    %v992 = vpop.f32.mrb[0].mxu0
    %993 = vmatprep.mubr.f32.mxu0 0.0
    %994 = vmatmul.mubr.f32.gmra.mrb[0].mxu0 %v626
    %v995 = vpop.f32.mrb[0].mxu0
    %v996 = vadd.f32 0.0, %v995
    %v997 = vpop.f32.mrb[0].mxu0
    %998 = vmatprep.mubr.f32.mxu0 0.0
    %999 = vmatmul.mubr.f32.gmra.mrb[0].mxu0 %v629
    %v1000 = vpop.f32.mrb[0].mxu0
    %v1001 = vadd.f32 0.0, %v1000
    %v1002 = vpop.f32.mrb[0].mxu0
    %1003 = vmatprep.mubr.f32.mxu0 0.0
    %1004 = vmatmul.mubr.f32.gmra.mrb[0].mxu0 %v632
    %v1005 = vpop.f32.mrb[0].mxu0
    %v1006 = vadd.f32 0.0, %v1005
    %v1007 = vpop.f32.mrb[0].mxu0
    %1008 = vmatprep.mubr.f32.mxu0 0.0
    %1009 = vmatmul.mubr.f32.gmra.mrb[0].mxu0 %v635
    %v1010 = vpop.f32.mrb[0].mxu0
    %v1011 = vadd.f32 0.0, %v1010
    %v1012 = vpop.f32.mrb[0].mxu0
    %1013 = vmatprep.mubr.f32.mxu0 0.0
    %1014 = vmatmul.mubr.f32.gmra.mrb[0].mxu0 %v638
    %v1015 = vpop.f32.mrb[0].mxu0
    %v1016 = vadd.f32 0.0, %v1015
    %v1017 = vpop.f32.mrb[0].mxu0
    %1018 = vmatprep.mubr.f32.mxu0 0.0
    %1019 = vmatmul.mubr.f32.gmra.mrb[0].mxu0 %v641
    %v1020 = vpop.f32.mrb[0].mxu0
    %v1021 = vadd.f32 0.0, %v1020
    %v1022 = vpop.f32.mrb[0].mxu0
    %1023 = vmatprep.mubr.f32.mxu0 0.0
    %1024 = vmatmul.mubr.f32.gmra.mrb[0].mxu0 %v644
    %v1025 = vpop.f32.mrb[0].mxu0
    %v1026 = vadd.f32 0.0, %v1025
    %v1027 = vpop.f32.mrb[0].mxu0
    %1028 = vmatprep.mubr.f32.mxu0 0.0
    %1029 = vmatmul.mubr.f32.gmra.mrb[0].mxu0 %v647
    %v1030 = vpop.f32.mrb[0].mxu0
    %v1031 = vadd.f32 0.0, %v1030
    %v1032 = vpop.f32.mrb[0].mxu0
    %1033 = vmatprep.mubr.f32.mxu0 0.0
    %1034 = vmatmul.mubr.f32.gmra.mrb[0].mxu0 %v650
    %v1035 = vpop.f32.mrb[0].mxu0
    %v1036 = vadd.f32 0.0, %v1035
    %v1037 = vpop.f32.mrb[0].mxu0
    %1038 = vmatprep.mubr.f32.mxu0 0.0
    %1039 = vmatmul.mubr.f32.gmra.mrb[0].mxu0 %v653
    %v1040 = vpop.f32.mrb[0].mxu0
    %v1041 = vadd.f32 0.0, %v1040
    %v1042 = vpop.f32.mrb[0].mxu0
    %1043 = vmatprep.mubr.f32.mxu0 0.0
    %1044 = vmatmul.mubr.f32.gmra.mrb[0].mxu0 %v656
    %v1045 = vpop.f32.mrb[0].mxu0
    %v1046 = vadd.f32 0.0, %v1045
    %v1047 = vpop.f32.mrb[0].mxu0
    %1048 = vmatprep.mubr.f32.mxu0 0.0
    %1049 = vmatmul.mubr.f32.gmra.mrb[0].mxu0 %v659
    %v1050 = vpop.f32.mrb[0].mxu0
    %v1051 = vadd.f32 0.0, %v1050
    %v1052 = vpop.f32.mrb[0].mxu0
    %1053 = vmatprep.mubr.f32.mxu0 0.0
    %1054 = vmatmul.mubr.f32.gmra.mrb[0].mxu0 %v662
    %v1055 = vpop.f32.mrb[0].mxu0
    %v1056 = vadd.f32 0.0, %v1055
    %v1057 = vpop.f32.mrb[0].mxu0
    %1058 = vmatprep.mubr.f32.mxu0 0.0
    %1059 = vmatmul.mubr.f32.gmra.mrb[0].mxu0 %v665
    %v1060 = vpop.f32.mrb[0].mxu0
    %v1061 = vadd.f32 0.0, %v1060
    %v1062 = vpop.f32.mrb[0].mxu0
    %1063 = vmatprep.mubr.f32.mxu0 0.0
    %1064 = vmatmul.mubr.f32.gmra.mrb[0].mxu0 %v668
    %v1065 = vpop.f32.mrb[0].mxu0
    %v1066 = vadd.f32 0.0, %v1065
    %v1067 = vpop.f32.mrb[0].mxu0
    %1068 = vmatprep.mubr.f32.mxu0 0.0
    %1069 = vmatmul.mubr.f32.gmra.mrb[0].mxu0 %v671
    %v1070 = vpop.f32.mrb[0].mxu0
    %v1071 = vadd.f32 0.0, %v1070
    %v1072 = vpop.f32.mrb[0].mxu0
    %1073 = vmatprep.mubr.f32.mxu0 0.0
    %1074 = vmatmul.mubr.f32.gmra.mrb[0].mxu0 %v674
    %v1075 = vpop.f32.mrb[0].mxu0
    %v1076 = vadd.f32 0.0, %v1075
    %v1077 = vpop.f32.mrb[0].mxu0
    %1078 = vmatprep.mubr.f32.mxu0 0.0
    %1079 = vmatmul.mubr.f32.gmra.mrb[0].mxu0 %v677
    %v1080 = vpop.f32.mrb[0].mxu0
    %v1081 = vadd.f32 0.0, %v1080
    %v1082 = vpop.f32.mrb[0].mxu0
    %1083 = vmatprep.mubr.f32.mxu0 0.0
    %1084 = vmatmul.mubr.f32.gmra.mrb[0].mxu0 %v680
    %v1085 = vpop.f32.mrb[0].mxu0
    %v1086 = vadd.f32 0.0, %v1085
    %v1087 = vpop.f32.mrb[0].mxu0
    %1088 = vmatprep.mubr.f32.mxu0 0.0
    %1089 = vmatmul.mubr.f32.gmra.mrb[0].mxu0 %v683
    %v1090 = vpop.f32.mrb[0].mxu0
    %v1091 = vadd.f32 0.0, %v1090
    %v1092 = vpop.f32.mrb[0].mxu0
    %1093 = vmatprep.mubr.f32.mxu0 0.0
    %1094 = vmatmul.mubr.f32.gmra.mrb[0].mxu0 %v686
    %v1095 = vpop.f32.mrb[0].mxu0
    %v1096 = vadd.f32 0.0, %v1095
    %v1097 = vpop.f32.mrb[0].mxu0
    %1098 = vmatprep.mubr.f32.mxu0 0.0
    %1099 = vmatmul.mubr.f32.gmra.mrb[0].mxu0 %v689
    %v1100 = vpop.f32.mrb[0].mxu0
    %v1101 = vadd.f32 0.0, %v1100
    %v1102 = vpop.f32.mrb[0].mxu0
    %1103 = vmatprep.mubr.f32.mxu0 0.0
    %1104 = vmatmul.mubr.f32.gmra.mrb[0].mxu0 %v692
    %v1105 = vpop.f32.mrb[0].mxu0
    %v1106 = vadd.f32 0.0, %v1105
    %v1107 = vpop.f32.mrb[0].mxu0
    %1108 = vmatprep.mubr.f32.mxu0 0.0
    %1109 = vmatmul.mubr.f32.gmra.mrb[0].mxu0 %v695
    %v1110 = vpop.f32.mrb[0].mxu0
    %v1111 = vadd.f32 0.0, %v1110
    %v1112 = vpop.f32.mrb[0].mxu0
    %1113 = vmatprep.mubr.f32.mxu0 0.0
    %1114 = vmatmul.mubr.f32.gmra.mrb[0].mxu0 %v698
    %v1115 = vpop.f32.mrb[0].mxu0
    %v1116 = vadd.f32 0.0, %v1115
    %v1117 = vpop.f32.mrb[0].mxu0
    %1118 = vmatprep.mubr.f32.mxu0 0.0
    %1119 = vmatmul.mubr.f32.gmra.mrb[0].mxu0 %v701
    %v1120 = vpop.f32.mrb[0].mxu0
    %v1121 = vadd.f32 0.0, %v1120
    %v1122 = vpop.f32.mrb[0].mxu0
    %1123 = vmatprep.mubr.f32.mxu0 0.0
    %1124 = vmatmul.mubr.f32.gmra.mrb[0].mxu0 %v704
    %v1125 = vpop.f32.mrb[0].mxu0
    %v1126 = vadd.f32 0.0, %v1125
    %v1127 = vpop.f32.mrb[0].mxu0
    %1128 = vmatprep.mubr.f32.mxu0 0.0
    %1129 = vmatmul.mubr.f32.gmra.mrb[0].mxu0 %v707
    %v1130 = vpop.f32.mrb[0].mxu0
    %v1131 = vadd.f32 0.0, %v1130
    %v1132 = vpop.f32.mrb[0].mxu0
    %1133 = vmatprep.mubr.f32.mxu0 0.0
    %1134 = vmatmul.mubr.f32.gmra.mrb[0].mxu0 %v710
    %v1135 = vpop.f32.mrb[0].mxu0
    %v1136 = vadd.f32 0.0, %v1135
    %v1137 = vpop.f32.mrb[0].mxu0
    %1138 = vmatprep.mubr.f32.mxu0 0.0
    %1139 = vmatmul.mubr.f32.gmra.mrb[0].mxu0 %v713
    %v1140 = vpop.f32.mrb[0].mxu0
    %v1141 = vadd.f32 0.0, %v1140
    %v1142 = vpop.f32.mrb[0].mxu0
    %1143 = vmatprep.mubr.f32.mxu0 0.0
    %1144 = vmatmul.mubr.f32.gmra.mrb[0].mxu0 %v716
    %v1145 = vpop.f32.mrb[0].mxu0
    %v1146 = vadd.f32 0.0, %v1145
    %v1147 = vpop.f32.mrb[0].mxu0
    %1148 = vmatprep.mubr.f32.mxu0 0.0
    %1149 = vmatmul.mubr.f32.gmra.mrb[0].mxu0 %v719
    %v1150 = vpop.f32.mrb[0].mxu0
    %v1151 = vadd.f32 0.0, %v1150
    %v1152 = vpop.f32.mrb[0].mxu0
    %1153 = vmatprep.mubr.f32.mxu0 0.0
    %1154 = vmatmul.mubr.f32.gmra.mrb[0].mxu0 %v722
    %v1155 = vpop.f32.mrb[0].mxu0
    %v1156 = vadd.f32 0.0, %v1155
    %v1157 = vpop.f32.mrb[0].mxu0
    %1158 = vmatprep.mubr.f32.mxu0 0.0
    %1159 = vmatmul.mubr.f32.gmra.mrb[0].mxu0 %v725
    %v1160 = vpop.f32.mrb[0].mxu0
    %v1161 = vadd.f32 0.0, %v1160
    %v1162 = vpop.f32.mrb[0].mxu0
    %1163 = vmatprep.mubr.f32.mxu0 0.0
    %1164 = vmatmul.mubr.f32.gmra.mrb[0].mxu0 %v728
    %v1165 = vpop.f32.mrb[0].mxu0
    %v1166 = vadd.f32 0.0, %v1165
    %v1167 = vpop.f32.mrb[0].mxu0
    %1168 = vmatprep.mubr.f32.mxu0 0.0
    %1169 = vmatmul.mubr.f32.gmra.mrb[0].mxu0 %v731
    %v1170 = vpop.f32.mrb[0].mxu0
    %v1171 = vadd.f32 0.0, %v1170
    %v1172 = vpop.f32.mrb[0].mxu0
    %1173 = vmatprep.mubr.f32.mxu0 0.0
    %1174 = vmatmul.mubr.f32.gmra.mrb[0].mxu0 %v734
    %v1175 = vpop.f32.mrb[0].mxu0
    %v1176 = vadd.f32 0.0, %v1175
    %v1177 = vpop.f32.mrb[0].mxu0
    %1178 = vmatprep.mubr.f32.mxu0 0.0
    %1179 = vmatmul.mubr.f32.gmra.mrb[0].mxu0 %v737
    %v1180 = vpop.f32.mrb[0].mxu0
    %v1181 = vadd.f32 0.0, %v1180
    %v1182 = vpop.f32.mrb[0].mxu0
    %1183 = vmatprep.mubr.f32.mxu0 0.0
    %1184 = vmatmul.mubr.f32.gmra.mrb[0].mxu0 %v740
    %v1185 = vpop.f32.mrb[0].mxu0
    %v1186 = vadd.f32 0.0, %v1185
    %v1187 = vpop.f32.mrb[0].mxu0
    %1188 = vmatprep.mubr.f32.mxu0 0.0
    %1189 = vmatmul.mubr.f32.gmra.mrb[0].mxu0 %v743
    %v1190 = vpop.f32.mrb[0].mxu0
    %v1191 = vadd.f32 0.0, %v1190
    %v1192 = vpop.f32.mrb[0].mxu0
    %1193 = vmatprep.mubr.f32.mxu0 0.0
    %1194 = vmatmul.mubr.f32.gmra.mrb[0].mxu0 %v746
    %v1195 = vpop.f32.mrb[0].mxu0
    %v1196 = vadd.f32 0.0, %v1195
    %v1197 = vpop.f32.mrb[0].mxu0
    %1198 = vmatprep.mubr.f32.mxu0 0.0
    %1199 = vmatmul.mubr.f32.gmra.mrb[0].mxu0 %v749
    %v1200 = vpop.f32.mrb[0].mxu0
    %v1201 = vadd.f32 0.0, %v1200
    %v1202 = vpop.f32.mrb[0].mxu0
    %1203 = vmatprep.mubr.f32.mxu0 0.0
    %1204 = vmatmul.mubr.f32.gmra.mrb[0].mxu0 %v752
    %v1205 = vpop.f32.mrb[0].mxu0
    %v1206 = vadd.f32 0.0, %v1205
    %v1207 = vpop.f32.mrb[0].mxu0
    %1208 = vmatprep.mubr.f32.mxu0 0.0
    %1209 = vmatmul.mubr.f32.gmra.mrb[0].mxu0 %v755
    %v1210 = vpop.f32.mrb[0].mxu0
    %v1211 = vadd.f32 0.0, %v1210
    %v1212 = vpop.f32.mrb[0].mxu0
    %1213 = vmatprep.mubr.f32.mxu0 0.0
    %1214 = vmatmul.mubr.f32.gmra.mrb[0].mxu0 %v758
    %v1215 = vpop.f32.mrb[0].mxu0
    %v1216 = vadd.f32 0.0, %v1215
    %v1217 = vpop.f32.mrb[0].mxu0
    %1218 = vmatprep.mubr.f32.mxu0 0.0
    %1219 = vmatmul.mubr.f32.gmra.mrb[0].mxu0 %v761
    %v1220 = vpop.f32.mrb[0].mxu0
    %v1221 = vadd.f32 0.0, %v1220
    %v1222 = vpop.f32.mrb[0].mxu0
    %1223 = vmatprep.mubr.f32.mxu0 0.0
    %1224 = vmatmul.mubr.f32.gmra.mrb[0].mxu0 %v764
    %v1225 = vpop.f32.mrb[0].mxu0
    %v1226 = vadd.f32 0.0, %v1225
    %v1227 = vpop.f32.mrb[0].mxu0
    %1228 = vmatprep.mubr.f32.mxu0 0.0
    %1229 = vmatmul.mubr.f32.gmra.mrb[0].mxu0 %v767
    %v1230 = vpop.f32.mrb[0].mxu0
    %v1231 = vadd.f32 0.0, %v1230
    %v1232 = vpop.f32.mrb[0].mxu0
    %1233 = vdwg.mxu0
    %v1234 = vld [vmem:[%s9] sm:$0x1]
    %v1235 = vunpack.c.l.bf16 %v1234
    %v1236 = vld [vmem:[%s11] sm:$0x1]
    %v1237 = vunpack.c.l.bf16 %v1236
    %vm1238 = vcmask 15360
    %v1240 = vsel %vm1238, %v876, 0
    %v1243 = vsel %vm1238, %v881, 0
    %v1246 = vsel %vm1238, %v886, 0
    %v1249 = vsel %vm1238, %v891, 0
    %v1252 = vsel %vm1238, %v896, 0
    %v1255 = vsel %vm1238, %v901, 0
    %v1258 = vsel %vm1238, %v906, 0
    %v1261 = vsel %vm1238, %v911, 0
    %vm1263 = vcmask 1041408
    %v1265 = vsel %vm1263, %v1237, 0
    %1267 = vmatprep.subr.mxu0 0.0
    %1268 = vmatpush1.msra.mxu0 %v1265
    %1269 = vmatprep.subr.mxu0 0.0
    %1270 = vmatpush1.msra.mxu0 0.0
    %1271 = vmatprep.subr.mxu0 0.0
    %1272 = vmatpush1.msra.mxu0 0.0
    %1273 = vmatprep.subr.mxu0 0.0
    %1274 = vmatpush1.msra.mxu0 0.0
    %1275 = vmatprep.subr.mxu0 0.0
    %1276 = vmatpush1.msra.mxu0 0.0
    %1277 = vmatprep.subr.mxu0 0.0
    %1278 = vmatpush1.msra.mxu0 0.0
    %1279 = vmatprep.subr.mxu0 0.0
    %1280 = vmatpush1.msra.mxu0 0.0
    %1281 = vmatprep.subr.mxu0 0.0
    %1282 = vmatpush1.msra.mxu0 0.0
    %1283 = vmatprep.subr.mxu0 0.0
    %1284 = vmatpush1.msra.mxu0 0.0
    %1285 = vmatprep.subr.mxu0 0.0
    %1286 = vmatpush1.msra.mxu0 0.0
    %1287 = vmatprep.subr.mxu0 0.0
    %1288 = vmatpush1.msra.mxu0 0.0
    %1289 = vmatprep.subr.mxu0 0.0
    %1290 = vmatpush1.msra.mxu0 0.0
    %1291 = vmatprep.subr.mxu0 0.0
    %1292 = vmatpush1.msra.mxu0 0.0
    %1293 = vmatprep.subr.mxu0 0.0
    %1294 = vmatpush1.msra.mxu0 0.0
    %1295 = vmatprep.subr.mxu0 0.0
    %1296 = vmatpush1.msra.mxu0 0.0
    %1297 = vmatprep.subr.mxu0 0.0
    %1298 = vmatpush1.msra.mxu0 0.0
    %1299 = vmatprep.subr.mxu0 0.0
    %1300 = vmatpush1.msra.mxu0 0.0
    %1301 = vmatprep.subr.mxu0 0.0
    %1302 = vmatpush1.msra.mxu0 0.0
    %1303 = vmatprep.subr.mxu0 0.0
    %1304 = vmatpush1.msra.mxu0 0.0
    %1305 = vmatprep.subr.mxu0 0.0
    %1306 = vmatpush1.msra.mxu0 0.0
    %1307 = vmatprep.subr.mxu0 0.0
    %1308 = vmatpush1.msra.mxu0 0.0
    %1309 = vmatprep.subr.mxu0 0.0
    %1310 = vmatpush1.msra.mxu0 0.0
    %1311 = vmatprep.subr.mxu0 0.0
    %1312 = vmatpush1.msra.mxu0 0.0
    %1313 = vmatprep.subr.mxu0 0.0
    %1314 = vmatpush1.msra.mxu0 0.0
    %1315 = vmatprep.subr.mxu0 0.0
    %1316 = vmatpush1.msra.mxu0 0.0
    %1317 = vmatprep.subr.mxu0 0.0
    %1318 = vmatpush1.msra.mxu0 0.0
    %1319 = vmatprep.subr.mxu0 0.0
    %1320 = vmatpush1.msra.mxu0 0.0
    %1321 = vmatprep.subr.mxu0 0.0
    %1322 = vmatpush1.msra.mxu0 0.0
    %1323 = vmatprep.subr.mxu0 0.0
    %1324 = vmatpush1.msra.mxu0 0.0
    %1325 = vmatprep.subr.mxu0 0.0
    %1326 = vmatpush1.msra.mxu0 0.0
    %1327 = vmatprep.subr.mxu0 0.0
    %1328 = vmatpush1.msra.mxu0 0.0
    %1329 = vmatprep.subr.mxu0 0.0
    %1330 = vmatpush1.msra.mxu0 0.0
    %1331 = vmatprep.mubr.f32.mxu0 0.0
    %1332 = vmatmul.mubr.f32.gmra.mrb[0].mxu0 %v1240
    %v1333 = vpop.f32.mrb[0].mxu0
    %v1334 = vadd.f32 0.0, %v1333
    %v1335 = vpop.f32.mrb[0].mxu0
    %1336 = vmatprep.mubr.f32.mxu0 0.0
    %1337 = vmatmul.mubr.f32.gmra.mrb[0].mxu0 %v1243
    %v1338 = vpop.f32.mrb[0].mxu0
    %v1339 = vadd.f32 0.0, %v1338
    %v1340 = vpop.f32.mrb[0].mxu0
    %1341 = vmatprep.mubr.f32.mxu0 0.0
    %1342 = vmatmul.mubr.f32.gmra.mrb[0].mxu0 %v1246
    %v1343 = vpop.f32.mrb[0].mxu0
    %v1344 = vadd.f32 0.0, %v1343
    %v1345 = vpop.f32.mrb[0].mxu0
    %1346 = vmatprep.mubr.f32.mxu0 0.0
    %1347 = vmatmul.mubr.f32.gmra.mrb[0].mxu0 %v1249
    %v1348 = vpop.f32.mrb[0].mxu0
    %v1349 = vadd.f32 0.0, %v1348
    %v1350 = vpop.f32.mrb[0].mxu0
    %1351 = vmatprep.mubr.f32.mxu0 0.0
    %1352 = vmatmul.mubr.f32.gmra.mrb[0].mxu0 %v1252
    %v1353 = vpop.f32.mrb[0].mxu0
    %v1354 = vadd.f32 0.0, %v1353
    %v1355 = vpop.f32.mrb[0].mxu0
    %1356 = vmatprep.mubr.f32.mxu0 0.0
    %1357 = vmatmul.mubr.f32.gmra.mrb[0].mxu0 %v1255
    %v1358 = vpop.f32.mrb[0].mxu0
    %v1359 = vadd.f32 0.0, %v1358
    %v1360 = vpop.f32.mrb[0].mxu0
    %1361 = vmatprep.mubr.f32.mxu0 0.0
    %1362 = vmatmul.mubr.f32.gmra.mrb[0].mxu0 %v1258
    %v1363 = vpop.f32.mrb[0].mxu0
    %v1364 = vadd.f32 0.0, %v1363
    %v1365 = vpop.f32.mrb[0].mxu0
    %1366 = vmatprep.mubr.f32.mxu0 0.0
    %1367 = vmatmul.mubr.f32.gmra.mrb[0].mxu0 %v1261
    %v1368 = vpop.f32.mrb[0].mxu0
    %v1369 = vadd.f32 0.0, %v1368
    %v1370 = vpop.f32.mrb[0].mxu0
    %1371 = vdwg.mxu0
    %v1373 = vsel %vm1238, %v836, 0
    %v1376 = vsel %vm1238, %v841, 0
    %v1379 = vsel %vm1238, %v846, 0
    %v1382 = vsel %vm1238, %v851, 0
    %v1385 = vsel %vm1238, %v856, 0
    %v1388 = vsel %vm1238, %v861, 0
    %v1391 = vsel %vm1238, %v866, 0
    %v1394 = vsel %vm1238, %v871, 0
    %v1397 = vsel %vm1263, %v1235, 0
    %1399 = vmatprep.subr.mxu0 0.0
    %1400 = vmatpush1.msra.mxu0 %v1397
    %1401 = vmatprep.subr.mxu0 0.0
    %1402 = vmatpush1.msra.mxu0 0.0
    %1403 = vmatprep.subr.mxu0 0.0
    %1404 = vmatpush1.msra.mxu0 0.0
    %1405 = vmatprep.subr.mxu0 0.0
    %1406 = vmatpush1.msra.mxu0 0.0
    %1407 = vmatprep.subr.mxu0 0.0
    %1408 = vmatpush1.msra.mxu0 0.0
    %1409 = vmatprep.subr.mxu0 0.0
    %1410 = vmatpush1.msra.mxu0 0.0
    %1411 = vmatprep.subr.mxu0 0.0
    %1412 = vmatpush1.msra.mxu0 0.0
    %1413 = vmatprep.subr.mxu0 0.0
    %1414 = vmatpush1.msra.mxu0 0.0
    %1415 = vmatprep.subr.mxu0 0.0
    %1416 = vmatpush1.msra.mxu0 0.0
    %1417 = vmatprep.subr.mxu0 0.0
    %1418 = vmatpush1.msra.mxu0 0.0
    %1419 = vmatprep.subr.mxu0 0.0
    %1420 = vmatpush1.msra.mxu0 0.0
    %1421 = vmatprep.subr.mxu0 0.0
    %1422 = vmatpush1.msra.mxu0 0.0
    %1423 = vmatprep.subr.mxu0 0.0
    %1424 = vmatpush1.msra.mxu0 0.0
    %1425 = vmatprep.subr.mxu0 0.0
    %1426 = vmatpush1.msra.mxu0 0.0
    %1427 = vmatprep.subr.mxu0 0.0
    %1428 = vmatpush1.msra.mxu0 0.0
    %1429 = vmatprep.subr.mxu0 0.0
    %1430 = vmatpush1.msra.mxu0 0.0
    %1431 = vmatprep.subr.mxu0 0.0
    %1432 = vmatpush1.msra.mxu0 0.0
    %1433 = vmatprep.subr.mxu0 0.0
    %1434 = vmatpush1.msra.mxu0 0.0
    %1435 = vmatprep.subr.mxu0 0.0
    %1436 = vmatpush1.msra.mxu0 0.0
    %1437 = vmatprep.subr.mxu0 0.0
    %1438 = vmatpush1.msra.mxu0 0.0
    %1439 = vmatprep.subr.mxu0 0.0
    %1440 = vmatpush1.msra.mxu0 0.0
    %1441 = vmatprep.subr.mxu0 0.0
    %1442 = vmatpush1.msra.mxu0 0.0
    %1443 = vmatprep.subr.mxu0 0.0
    %1444 = vmatpush1.msra.mxu0 0.0
    %1445 = vmatprep.subr.mxu0 0.0
    %1446 = vmatpush1.msra.mxu0 0.0
    %1447 = vmatprep.subr.mxu0 0.0
    %1448 = vmatpush1.msra.mxu0 0.0
    %1449 = vmatprep.subr.mxu0 0.0
    %1450 = vmatpush1.msra.mxu0 0.0
    %1451 = vmatprep.subr.mxu0 0.0
    %1452 = vmatpush1.msra.mxu0 0.0
    %1453 = vmatprep.subr.mxu0 0.0
    %1454 = vmatpush1.msra.mxu0 0.0
    %1455 = vmatprep.subr.mxu0 0.0
    %1456 = vmatpush1.msra.mxu0 0.0
    %1457 = vmatprep.subr.mxu0 0.0
    %1458 = vmatpush1.msra.mxu0 0.0
    %1459 = vmatprep.subr.mxu0 0.0
    %1460 = vmatpush1.msra.mxu0 0.0
    %1461 = vmatprep.subr.mxu0 0.0
    %1462 = vmatpush1.msra.mxu0 0.0
    %1463 = vmatprep.mubr.f32.mxu0 0.0
    %1464 = vmatmul.mubr.f32.gmra.mrb[0].mxu0 %v1373
    %v1465 = vpop.f32.mrb[0].mxu0
    %v1466 = vadd.f32 %v1334, %v1465
    %v1467 = vpop.f32.mrb[0].mxu0
    %1468 = vmatprep.mubr.f32.mxu0 0.0
    %1469 = vmatmul.mubr.f32.gmra.mrb[0].mxu0 %v1376
    %v1470 = vpop.f32.mrb[0].mxu0
    %v1471 = vadd.f32 %v1339, %v1470
    %v1472 = vpop.f32.mrb[0].mxu0
    %1473 = vmatprep.mubr.f32.mxu0 0.0
    %1474 = vmatmul.mubr.f32.gmra.mrb[0].mxu0 %v1379
    %v1475 = vpop.f32.mrb[0].mxu0
    %v1476 = vadd.f32 %v1344, %v1475
    %v1477 = vpop.f32.mrb[0].mxu0
    %1478 = vmatprep.mubr.f32.mxu0 0.0
    %1479 = vmatmul.mubr.f32.gmra.mrb[0].mxu0 %v1382
    %v1480 = vpop.f32.mrb[0].mxu0
    %v1481 = vadd.f32 %v1349, %v1480
    %v1482 = vpop.f32.mrb[0].mxu0
    %1483 = vmatprep.mubr.f32.mxu0 0.0
    %1484 = vmatmul.mubr.f32.gmra.mrb[0].mxu0 %v1385
    %v1485 = vpop.f32.mrb[0].mxu0
    %v1486 = vadd.f32 %v1354, %v1485
    %v1487 = vpop.f32.mrb[0].mxu0
    %1488 = vmatprep.mubr.f32.mxu0 0.0
    %1489 = vmatmul.mubr.f32.gmra.mrb[0].mxu0 %v1388
    %v1490 = vpop.f32.mrb[0].mxu0
    %v1491 = vadd.f32 %v1359, %v1490
    %v1492 = vpop.f32.mrb[0].mxu0
    %1493 = vmatprep.mubr.f32.mxu0 0.0
    %1494 = vmatmul.mubr.f32.gmra.mrb[0].mxu0 %v1391
    %v1495 = vpop.f32.mrb[0].mxu0
    %v1496 = vadd.f32 %v1364, %v1495
    %v1497 = vpop.f32.mrb[0].mxu0
    %1498 = vmatprep.mubr.f32.mxu0 0.0
    %1499 = vmatmul.mubr.f32.gmra.mrb[0].mxu0 %v1394
    %v1500 = vpop.f32.mrb[0].mxu0
    %v1501 = vadd.f32 %v1369, %v1500
    %v1502 = vpop.f32.mrb[0].mxu0
    %1503 = vdwg.mxu0
    %v1504 = vld [vmem:[%s13] sm:$0x1]
    %v1505 = vunpack.c.l.bf16 %v1504
    %v1507 = vsel %vm1238, %v916, 0
    %v1510 = vsel %vm1238, %v921, 0
    %v1513 = vsel %vm1238, %v926, 0
    %v1516 = vsel %vm1238, %v931, 0
    %v1519 = vsel %vm1238, %v936, 0
    %v1522 = vsel %vm1238, %v941, 0
    %v1525 = vsel %vm1238, %v946, 0
    %v1528 = vsel %vm1238, %v951, 0
    %v1531 = vsel %vm1263, %v1505, 0
    %1533 = vmatprep.subr.mxu0 0.0
    %1534 = vmatpush1.msra.mxu0 %v1531
    %1535 = vmatprep.subr.mxu0 0.0
    %1536 = vmatpush1.msra.mxu0 0.0
    %1537 = vmatprep.subr.mxu0 0.0
    %1538 = vmatpush1.msra.mxu0 0.0
    %1539 = vmatprep.subr.mxu0 0.0
    %1540 = vmatpush1.msra.mxu0 0.0
    %1541 = vmatprep.subr.mxu0 0.0
    %1542 = vmatpush1.msra.mxu0 0.0
    %1543 = vmatprep.subr.mxu0 0.0
    %1544 = vmatpush1.msra.mxu0 0.0
    %1545 = vmatprep.subr.mxu0 0.0
    %1546 = vmatpush1.msra.mxu0 0.0
    %1547 = vmatprep.subr.mxu0 0.0
    %1548 = vmatpush1.msra.mxu0 0.0
    %1549 = vmatprep.subr.mxu0 0.0
    %1550 = vmatpush1.msra.mxu0 0.0
    %1551 = vmatprep.subr.mxu0 0.0
    %1552 = vmatpush1.msra.mxu0 0.0
    %1553 = vmatprep.subr.mxu0 0.0
    %1554 = vmatpush1.msra.mxu0 0.0
    %1555 = vmatprep.subr.mxu0 0.0
    %1556 = vmatpush1.msra.mxu0 0.0
    %1557 = vmatprep.subr.mxu0 0.0
    %1558 = vmatpush1.msra.mxu0 0.0
    %1559 = vmatprep.subr.mxu0 0.0
    %1560 = vmatpush1.msra.mxu0 0.0
    %1561 = vmatprep.subr.mxu0 0.0
    %1562 = vmatpush1.msra.mxu0 0.0
    %1563 = vmatprep.subr.mxu0 0.0
    %1564 = vmatpush1.msra.mxu0 0.0
    %1565 = vmatprep.subr.mxu0 0.0
    %1566 = vmatpush1.msra.mxu0 0.0
    %1567 = vmatprep.subr.mxu0 0.0
    %1568 = vmatpush1.msra.mxu0 0.0
    %1569 = vmatprep.subr.mxu0 0.0
    %1570 = vmatpush1.msra.mxu0 0.0
    %1571 = vmatprep.subr.mxu0 0.0
    %1572 = vmatpush1.msra.mxu0 0.0
    %1573 = vmatprep.subr.mxu0 0.0
    %1574 = vmatpush1.msra.mxu0 0.0
    %1575 = vmatprep.subr.mxu0 0.0
    %1576 = vmatpush1.msra.mxu0 0.0
    %1577 = vmatprep.subr.mxu0 0.0
    %1578 = vmatpush1.msra.mxu0 0.0
    %1579 = vmatprep.subr.mxu0 0.0
    %1580 = vmatpush1.msra.mxu0 0.0
    %1581 = vmatprep.subr.mxu0 0.0
    %1582 = vmatpush1.msra.mxu0 0.0
    %1583 = vmatprep.subr.mxu0 0.0
    %1584 = vmatpush1.msra.mxu0 0.0
    %1585 = vmatprep.subr.mxu0 0.0
    %1586 = vmatpush1.msra.mxu0 0.0
    %1587 = vmatprep.subr.mxu0 0.0
    %1588 = vmatpush1.msra.mxu0 0.0
    %1589 = vmatprep.subr.mxu0 0.0
    %1590 = vmatpush1.msra.mxu0 0.0
    %1591 = vmatprep.subr.mxu0 0.0
    %1592 = vmatpush1.msra.mxu0 0.0
    %1593 = vmatprep.subr.mxu0 0.0
    %1594 = vmatpush1.msra.mxu0 0.0
    %1595 = vmatprep.subr.mxu0 0.0
    %1596 = vmatpush1.msra.mxu0 0.0
    %1597 = vmatprep.mubr.f32.mxu0 0.0
    %1598 = vmatmul.mubr.f32.gmra.mrb[0].mxu0 %v1507
    %v1599 = vpop.f32.mrb[0].mxu0
    %v1600 = vadd.f32 0.0, %v1599
    %v1601 = vpop.f32.mrb[0].mxu0
    %1602 = vmatprep.mubr.f32.mxu0 0.0
    %1603 = vmatmul.mubr.f32.gmra.mrb[0].mxu0 %v1510
    %v1604 = vpop.f32.mrb[0].mxu0
    %v1605 = vadd.f32 0.0, %v1604
    %v1606 = vpop.f32.mrb[0].mxu0
    %1607 = vmatprep.mubr.f32.mxu0 0.0
    %1608 = vmatmul.mubr.f32.gmra.mrb[0].mxu0 %v1513
    %v1609 = vpop.f32.mrb[0].mxu0
    %v1610 = vadd.f32 0.0, %v1609
    %v1611 = vpop.f32.mrb[0].mxu0
    %1612 = vmatprep.mubr.f32.mxu0 0.0
    %1613 = vmatmul.mubr.f32.gmra.mrb[0].mxu0 %v1516
    %v1614 = vpop.f32.mrb[0].mxu0
    %v1615 = vadd.f32 0.0, %v1614
    %v1616 = vpop.f32.mrb[0].mxu0
    %1617 = vmatprep.mubr.f32.mxu0 0.0
    %1618 = vmatmul.mubr.f32.gmra.mrb[0].mxu0 %v1519
    %v1619 = vpop.f32.mrb[0].mxu0
    %v1620 = vadd.f32 0.0, %v1619
    %v1621 = vpop.f32.mrb[0].mxu0
    %1622 = vmatprep.mubr.f32.mxu0 0.0
    %1623 = vmatmul.mubr.f32.gmra.mrb[0].mxu0 %v1522
    %v1624 = vpop.f32.mrb[0].mxu0
    %v1625 = vadd.f32 0.0, %v1624
    %v1626 = vpop.f32.mrb[0].mxu0
    %1627 = vmatprep.mubr.f32.mxu0 0.0
    %1628 = vmatmul.mubr.f32.gmra.mrb[0].mxu0 %v1525
    %v1629 = vpop.f32.mrb[0].mxu0
    %v1630 = vadd.f32 0.0, %v1629
    %v1631 = vpop.f32.mrb[0].mxu0
    %1632 = vmatprep.mubr.f32.mxu0 0.0
    %1633 = vmatmul.mubr.f32.gmra.mrb[0].mxu0 %v1528
    %v1634 = vpop.f32.mrb[0].mxu0
    %v1635 = vadd.f32 0.0, %v1634
    %v1636 = vpop.f32.mrb[0].mxu0
    %1637 = vdwg.mxu0
    %v1638 = vadd.f32 %v1466, %v1600
    %v1639 = vadd.f32 %v1471, %v1605
    %v1640 = vadd.f32 %v1476, %v1610
    %v1641 = vadd.f32 %v1481, %v1615
    %v1642 = vadd.f32 %v1486, %v1620
    %v1643 = vadd.f32 %v1491, %v1625
    %v1644 = vadd.f32 %v1496, %v1630
    %v1645 = vadd.f32 %v1501, %v1635
    %v1646 = vld [vmem:[%s15] sm:$0x1]
    %v1647 = vunpack.c.l.bf16 %v1646
    %v1649 = vsel %vm1238, %v956, 0
    %v1652 = vsel %vm1238, %v961, 0
    %v1655 = vsel %vm1238, %v966, 0
    %v1658 = vsel %vm1238, %v971, 0
    %v1661 = vsel %vm1238, %v976, 0
    %v1664 = vsel %vm1238, %v981, 0
    %v1667 = vsel %vm1238, %v986, 0
    %v1670 = vsel %vm1238, %v991, 0
    %v1673 = vsel %vm1263, %v1647, 0
    %1675 = vmatprep.subr.mxu0 0.0
    %1676 = vmatpush1.msra.mxu0 %v1673
    %1677 = vmatprep.subr.mxu0 0.0
    %1678 = vmatpush1.msra.mxu0 0.0
    %1679 = vmatprep.subr.mxu0 0.0
    %1680 = vmatpush1.msra.mxu0 0.0
    %1681 = vmatprep.subr.mxu0 0.0
    %1682 = vmatpush1.msra.mxu0 0.0
    %1683 = vmatprep.subr.mxu0 0.0
    %1684 = vmatpush1.msra.mxu0 0.0
    %1685 = vmatprep.subr.mxu0 0.0
    %1686 = vmatpush1.msra.mxu0 0.0
    %1687 = vmatprep.subr.mxu0 0.0
    %1688 = vmatpush1.msra.mxu0 0.0
    %1689 = vmatprep.subr.mxu0 0.0
    %1690 = vmatpush1.msra.mxu0 0.0
    %1691 = vmatprep.subr.mxu0 0.0
    %1692 = vmatpush1.msra.mxu0 0.0
    %1693 = vmatprep.subr.mxu0 0.0
    %1694 = vmatpush1.msra.mxu0 0.0
    %1695 = vmatprep.subr.mxu0 0.0
    %1696 = vmatpush1.msra.mxu0 0.0
    %1697 = vmatprep.subr.mxu0 0.0
    %1698 = vmatpush1.msra.mxu0 0.0
    %1699 = vmatprep.subr.mxu0 0.0
    %1700 = vmatpush1.msra.mxu0 0.0
    %1701 = vmatprep.subr.mxu0 0.0
    %1702 = vmatpush1.msra.mxu0 0.0
    %1703 = vmatprep.subr.mxu0 0.0
    %1704 = vmatpush1.msra.mxu0 0.0
    %1705 = vmatprep.subr.mxu0 0.0
    %1706 = vmatpush1.msra.mxu0 0.0
    %1707 = vmatprep.subr.mxu0 0.0
    %1708 = vmatpush1.msra.mxu0 0.0
    %1709 = vmatprep.subr.mxu0 0.0
    %1710 = vmatpush1.msra.mxu0 0.0
    %1711 = vmatprep.subr.mxu0 0.0
    %1712 = vmatpush1.msra.mxu0 0.0
    %1713 = vmatprep.subr.mxu0 0.0
    %1714 = vmatpush1.msra.mxu0 0.0
    %1715 = vmatprep.subr.mxu0 0.0
    %1716 = vmatpush1.msra.mxu0 0.0
    %1717 = vmatprep.subr.mxu0 0.0
    %1718 = vmatpush1.msra.mxu0 0.0
    %1719 = vmatprep.subr.mxu0 0.0
    %1720 = vmatpush1.msra.mxu0 0.0
    %1721 = vmatprep.subr.mxu0 0.0
    %1722 = vmatpush1.msra.mxu0 0.0
    %1723 = vmatprep.subr.mxu0 0.0
    %1724 = vmatpush1.msra.mxu0 0.0
    %1725 = vmatprep.subr.mxu0 0.0
    %1726 = vmatpush1.msra.mxu0 0.0
    %1727 = vmatprep.subr.mxu0 0.0
    %1728 = vmatpush1.msra.mxu0 0.0
    %1729 = vmatprep.subr.mxu0 0.0
    %1730 = vmatpush1.msra.mxu0 0.0
    %1731 = vmatprep.subr.mxu0 0.0
    %1732 = vmatpush1.msra.mxu0 0.0
    %1733 = vmatprep.subr.mxu0 0.0
    %1734 = vmatpush1.msra.mxu0 0.0
    %1735 = vmatprep.subr.mxu0 0.0
    %1736 = vmatpush1.msra.mxu0 0.0
    %1737 = vmatprep.subr.mxu0 0.0
    %1738 = vmatpush1.msra.mxu0 0.0
    %1739 = vmatprep.mubr.f32.mxu0 0.0
    %1740 = vmatmul.mubr.f32.gmra.mrb[0].mxu0 %v1649
    %v1741 = vpop.f32.mrb[0].mxu0
    %v1742 = vadd.f32 0.0, %v1741
    %v1743 = vpop.f32.mrb[0].mxu0
    %1744 = vmatprep.mubr.f32.mxu0 0.0
    %1745 = vmatmul.mubr.f32.gmra.mrb[0].mxu0 %v1652
    %v1746 = vpop.f32.mrb[0].mxu0
    %v1747 = vadd.f32 0.0, %v1746
    %v1748 = vpop.f32.mrb[0].mxu0
    %1749 = vmatprep.mubr.f32.mxu0 0.0
    %1750 = vmatmul.mubr.f32.gmra.mrb[0].mxu0 %v1655
    %v1751 = vpop.f32.mrb[0].mxu0
    %v1752 = vadd.f32 0.0, %v1751
    %v1753 = vpop.f32.mrb[0].mxu0
    %1754 = vmatprep.mubr.f32.mxu0 0.0
    %1755 = vmatmul.mubr.f32.gmra.mrb[0].mxu0 %v1658
    %v1756 = vpop.f32.mrb[0].mxu0
    %v1757 = vadd.f32 0.0, %v1756
    %v1758 = vpop.f32.mrb[0].mxu0
    %1759 = vmatprep.mubr.f32.mxu0 0.0
    %1760 = vmatmul.mubr.f32.gmra.mrb[0].mxu0 %v1661
    %v1761 = vpop.f32.mrb[0].mxu0
    %v1762 = vadd.f32 0.0, %v1761
    %v1763 = vpop.f32.mrb[0].mxu0
    %1764 = vmatprep.mubr.f32.mxu0 0.0
    %1765 = vmatmul.mubr.f32.gmra.mrb[0].mxu0 %v1664
    %v1766 = vpop.f32.mrb[0].mxu0
    %v1767 = vadd.f32 0.0, %v1766
    %v1768 = vpop.f32.mrb[0].mxu0
    %1769 = vmatprep.mubr.f32.mxu0 0.0
    %1770 = vmatmul.mubr.f32.gmra.mrb[0].mxu0 %v1667
    %v1771 = vpop.f32.mrb[0].mxu0
    %v1772 = vadd.f32 0.0, %v1771
    %v1773 = vpop.f32.mrb[0].mxu0
    %1774 = vmatprep.mubr.f32.mxu0 0.0
    %1775 = vmatmul.mubr.f32.gmra.mrb[0].mxu0 %v1670
    %v1776 = vpop.f32.mrb[0].mxu0
    %v1777 = vadd.f32 0.0, %v1776
    %v1778 = vpop.f32.mrb[0].mxu0
    %1779 = vdwg.mxu0
    %v1780 = vadd.f32 %v1638, %v1742
    %v1781 = vadd.f32 %v1639, %v1747
    %v1782 = vadd.f32 %v1640, %v1752
    %v1783 = vadd.f32 %v1641, %v1757
    %v1784 = vadd.f32 %v1642, %v1762
    %v1785 = vadd.f32 %v1643, %v1767
    %v1786 = vadd.f32 %v1644, %v1772
    %v1787 = vadd.f32 %v1645, %v1777
    %v1788 = vld [vmem:[%s17] sm:$0x1]
    %v1789 = vunpack.c.l.bf16 %v1788
    %v1791 = vsel %vm1238, %v996, 0
    %v1794 = vsel %vm1238, %v1001, 0
    %v1797 = vsel %vm1238, %v1006, 0
    %v1800 = vsel %vm1238, %v1011, 0
    %v1803 = vsel %vm1238, %v1016, 0
    %v1806 = vsel %vm1238, %v1021, 0
    %v1809 = vsel %vm1238, %v1026, 0
    %v1812 = vsel %vm1238, %v1031, 0
    %v1815 = vsel %vm1263, %v1789, 0
    %1817 = vmatprep.subr.mxu0 0.0
    %1818 = vmatpush1.msra.mxu0 %v1815
    %1819 = vmatprep.subr.mxu0 0.0
    %1820 = vmatpush1.msra.mxu0 0.0
    %1821 = vmatprep.subr.mxu0 0.0
    %1822 = vmatpush1.msra.mxu0 0.0
    %1823 = vmatprep.subr.mxu0 0.0
    %1824 = vmatpush1.msra.mxu0 0.0
    %1825 = vmatprep.subr.mxu0 0.0
    %1826 = vmatpush1.msra.mxu0 0.0
    %1827 = vmatprep.subr.mxu0 0.0
    %1828 = vmatpush1.msra.mxu0 0.0
    %1829 = vmatprep.subr.mxu0 0.0
    %1830 = vmatpush1.msra.mxu0 0.0
    %1831 = vmatprep.subr.mxu0 0.0
    %1832 = vmatpush1.msra.mxu0 0.0
    %1833 = vmatprep.subr.mxu0 0.0
    %1834 = vmatpush1.msra.mxu0 0.0
    %1835 = vmatprep.subr.mxu0 0.0
    %1836 = vmatpush1.msra.mxu0 0.0
    %1837 = vmatprep.subr.mxu0 0.0
    %1838 = vmatpush1.msra.mxu0 0.0
    %1839 = vmatprep.subr.mxu0 0.0
    %1840 = vmatpush1.msra.mxu0 0.0
    %1841 = vmatprep.subr.mxu0 0.0
    %1842 = vmatpush1.msra.mxu0 0.0
    %1843 = vmatprep.subr.mxu0 0.0
    %1844 = vmatpush1.msra.mxu0 0.0
    %1845 = vmatprep.subr.mxu0 0.0
    %1846 = vmatpush1.msra.mxu0 0.0
    %1847 = vmatprep.subr.mxu0 0.0
    %1848 = vmatpush1.msra.mxu0 0.0
    %1849 = vmatprep.subr.mxu0 0.0
    %1850 = vmatpush1.msra.mxu0 0.0
    %1851 = vmatprep.subr.mxu0 0.0
    %1852 = vmatpush1.msra.mxu0 0.0
    %1853 = vmatprep.subr.mxu0 0.0
    %1854 = vmatpush1.msra.mxu0 0.0
    %1855 = vmatprep.subr.mxu0 0.0
    %1856 = vmatpush1.msra.mxu0 0.0
    %1857 = vmatprep.subr.mxu0 0.0
    %1858 = vmatpush1.msra.mxu0 0.0
    %1859 = vmatprep.subr.mxu0 0.0
    %1860 = vmatpush1.msra.mxu0 0.0
    %1861 = vmatprep.subr.mxu0 0.0
    %1862 = vmatpush1.msra.mxu0 0.0
    %1863 = vmatprep.subr.mxu0 0.0
    %1864 = vmatpush1.msra.mxu0 0.0
    %1865 = vmatprep.subr.mxu0 0.0
    %1866 = vmatpush1.msra.mxu0 0.0
    %1867 = vmatprep.subr.mxu0 0.0
    %1868 = vmatpush1.msra.mxu0 0.0
    %1869 = vmatprep.subr.mxu0 0.0
    %1870 = vmatpush1.msra.mxu0 0.0
    %1871 = vmatprep.subr.mxu0 0.0
    %1872 = vmatpush1.msra.mxu0 0.0
    %1873 = vmatprep.subr.mxu0 0.0
    %1874 = vmatpush1.msra.mxu0 0.0
    %1875 = vmatprep.subr.mxu0 0.0
    %1876 = vmatpush1.msra.mxu0 0.0
    %1877 = vmatprep.subr.mxu0 0.0
    %1878 = vmatpush1.msra.mxu0 0.0
    %1879 = vmatprep.subr.mxu0 0.0
    %1880 = vmatpush1.msra.mxu0 0.0
    %1881 = vmatprep.mubr.f32.mxu0 0.0
    %1882 = vmatmul.mubr.f32.gmra.mrb[0].mxu0 %v1791
    %v1883 = vpop.f32.mrb[0].mxu0
    %v1884 = vadd.f32 0.0, %v1883
    %v1885 = vpop.f32.mrb[0].mxu0
    %1886 = vmatprep.mubr.f32.mxu0 0.0
    %1887 = vmatmul.mubr.f32.gmra.mrb[0].mxu0 %v1794
    %v1888 = vpop.f32.mrb[0].mxu0
    %v1889 = vadd.f32 0.0, %v1888
    %v1890 = vpop.f32.mrb[0].mxu0
    %1891 = vmatprep.mubr.f32.mxu0 0.0
    %1892 = vmatmul.mubr.f32.gmra.mrb[0].mxu0 %v1797
    %v1893 = vpop.f32.mrb[0].mxu0
    %v1894 = vadd.f32 0.0, %v1893
    %v1895 = vpop.f32.mrb[0].mxu0
    %1896 = vmatprep.mubr.f32.mxu0 0.0
    %1897 = vmatmul.mubr.f32.gmra.mrb[0].mxu0 %v1800
    %v1898 = vpop.f32.mrb[0].mxu0
    %v1899 = vadd.f32 0.0, %v1898
    %v1900 = vpop.f32.mrb[0].mxu0
    %1901 = vmatprep.mubr.f32.mxu0 0.0
    %1902 = vmatmul.mubr.f32.gmra.mrb[0].mxu0 %v1803
    %v1903 = vpop.f32.mrb[0].mxu0
    %v1904 = vadd.f32 0.0, %v1903
    %v1905 = vpop.f32.mrb[0].mxu0
    %1906 = vmatprep.mubr.f32.mxu0 0.0
    %1907 = vmatmul.mubr.f32.gmra.mrb[0].mxu0 %v1806
    %v1908 = vpop.f32.mrb[0].mxu0
    %v1909 = vadd.f32 0.0, %v1908
    %v1910 = vpop.f32.mrb[0].mxu0
    %1911 = vmatprep.mubr.f32.mxu0 0.0
    %1912 = vmatmul.mubr.f32.gmra.mrb[0].mxu0 %v1809
    %v1913 = vpop.f32.mrb[0].mxu0
    %v1914 = vadd.f32 0.0, %v1913
    %v1915 = vpop.f32.mrb[0].mxu0
    %1916 = vmatprep.mubr.f32.mxu0 0.0
    %1917 = vmatmul.mubr.f32.gmra.mrb[0].mxu0 %v1812
    %v1918 = vpop.f32.mrb[0].mxu0
    %v1919 = vadd.f32 0.0, %v1918
    %v1920 = vpop.f32.mrb[0].mxu0
    %1921 = vdwg.mxu0
    %v1922 = vadd.f32 %v1780, %v1884
    %v1923 = vadd.f32 %v1781, %v1889
    %v1924 = vadd.f32 %v1782, %v1894
    %v1925 = vadd.f32 %v1783, %v1899
    %v1926 = vadd.f32 %v1784, %v1904
    %v1927 = vadd.f32 %v1785, %v1909
    %v1928 = vadd.f32 %v1786, %v1914
    %v1929 = vadd.f32 %v1787, %v1919
    %v1930 = vld [vmem:[%s19] sm:$0x1]
    %v1931 = vunpack.c.l.bf16 %v1930
    %v1933 = vsel %vm1238, %v1036, 0
    %v1936 = vsel %vm1238, %v1041, 0
    %v1939 = vsel %vm1238, %v1046, 0
    %v1942 = vsel %vm1238, %v1051, 0
    %v1945 = vsel %vm1238, %v1056, 0
    %v1948 = vsel %vm1238, %v1061, 0
    %v1951 = vsel %vm1238, %v1066, 0
    %v1954 = vsel %vm1238, %v1071, 0
    %v1957 = vsel %vm1263, %v1931, 0
    %1959 = vmatprep.subr.mxu0 0.0
    %1960 = vmatpush1.msra.mxu0 %v1957
    %1961 = vmatprep.subr.mxu0 0.0
    %1962 = vmatpush1.msra.mxu0 0.0
    %1963 = vmatprep.subr.mxu0 0.0
    %1964 = vmatpush1.msra.mxu0 0.0
    %1965 = vmatprep.subr.mxu0 0.0
    %1966 = vmatpush1.msra.mxu0 0.0
    %1967 = vmatprep.subr.mxu0 0.0
    %1968 = vmatpush1.msra.mxu0 0.0
    %1969 = vmatprep.subr.mxu0 0.0
    %1970 = vmatpush1.msra.mxu0 0.0
    %1971 = vmatprep.subr.mxu0 0.0
    %1972 = vmatpush1.msra.mxu0 0.0
    %1973 = vmatprep.subr.mxu0 0.0
    %1974 = vmatpush1.msra.mxu0 0.0
    %1975 = vmatprep.subr.mxu0 0.0
    %1976 = vmatpush1.msra.mxu0 0.0
    %1977 = vmatprep.subr.mxu0 0.0
    %1978 = vmatpush1.msra.mxu0 0.0
    %1979 = vmatprep.subr.mxu0 0.0
    %1980 = vmatpush1.msra.mxu0 0.0
    %1981 = vmatprep.subr.mxu0 0.0
    %1982 = vmatpush1.msra.mxu0 0.0
    %1983 = vmatprep.subr.mxu0 0.0
    %1984 = vmatpush1.msra.mxu0 0.0
    %1985 = vmatprep.subr.mxu0 0.0
    %1986 = vmatpush1.msra.mxu0 0.0
    %1987 = vmatprep.subr.mxu0 0.0
    %1988 = vmatpush1.msra.mxu0 0.0
    %1989 = vmatprep.subr.mxu0 0.0
    %1990 = vmatpush1.msra.mxu0 0.0
    %1991 = vmatprep.subr.mxu0 0.0
    %1992 = vmatpush1.msra.mxu0 0.0
    %1993 = vmatprep.subr.mxu0 0.0
    %1994 = vmatpush1.msra.mxu0 0.0
    %1995 = vmatprep.subr.mxu0 0.0
    %1996 = vmatpush1.msra.mxu0 0.0
    %1997 = vmatprep.subr.mxu0 0.0
    %1998 = vmatpush1.msra.mxu0 0.0
    %1999 = vmatprep.subr.mxu0 0.0
    %2000 = vmatpush1.msra.mxu0 0.0
    %2001 = vmatprep.subr.mxu0 0.0
    %2002 = vmatpush1.msra.mxu0 0.0
    %2003 = vmatprep.subr.mxu0 0.0
    %2004 = vmatpush1.msra.mxu0 0.0
    %2005 = vmatprep.subr.mxu0 0.0
    %2006 = vmatpush1.msra.mxu0 0.0
    %2007 = vmatprep.subr.mxu0 0.0
    %2008 = vmatpush1.msra.mxu0 0.0
    %2009 = vmatprep.subr.mxu0 0.0
    %2010 = vmatpush1.msra.mxu0 0.0
    %2011 = vmatprep.subr.mxu0 0.0
    %2012 = vmatpush1.msra.mxu0 0.0
    %2013 = vmatprep.subr.mxu0 0.0
    %2014 = vmatpush1.msra.mxu0 0.0
    %2015 = vmatprep.subr.mxu0 0.0
    %2016 = vmatpush1.msra.mxu0 0.0
    %2017 = vmatprep.subr.mxu0 0.0
    %2018 = vmatpush1.msra.mxu0 0.0
    %2019 = vmatprep.subr.mxu0 0.0
    %2020 = vmatpush1.msra.mxu0 0.0
    %2021 = vmatprep.subr.mxu0 0.0
    %2022 = vmatpush1.msra.mxu0 0.0
    %2023 = vmatprep.mubr.f32.mxu0 0.0
    %2024 = vmatmul.mubr.f32.gmra.mrb[0].mxu0 %v1933
    %v2025 = vpop.f32.mrb[0].mxu0
    %v2026 = vadd.f32 0.0, %v2025
    %v2027 = vpop.f32.mrb[0].mxu0
    %2028 = vmatprep.mubr.f32.mxu0 0.0
    %2029 = vmatmul.mubr.f32.gmra.mrb[0].mxu0 %v1936
    %v2030 = vpop.f32.mrb[0].mxu0
    %v2031 = vadd.f32 0.0, %v2030
    %v2032 = vpop.f32.mrb[0].mxu0
    %2033 = vmatprep.mubr.f32.mxu0 0.0
    %2034 = vmatmul.mubr.f32.gmra.mrb[0].mxu0 %v1939
    %v2035 = vpop.f32.mrb[0].mxu0
    %v2036 = vadd.f32 0.0, %v2035
    %v2037 = vpop.f32.mrb[0].mxu0
    %2038 = vmatprep.mubr.f32.mxu0 0.0
    %2039 = vmatmul.mubr.f32.gmra.mrb[0].mxu0 %v1942
    %v2040 = vpop.f32.mrb[0].mxu0
    %v2041 = vadd.f32 0.0, %v2040
    %v2042 = vpop.f32.mrb[0].mxu0
    %2043 = vmatprep.mubr.f32.mxu0 0.0
    %2044 = vmatmul.mubr.f32.gmra.mrb[0].mxu0 %v1945
    %v2045 = vpop.f32.mrb[0].mxu0
    %v2046 = vadd.f32 0.0, %v2045
    %v2047 = vpop.f32.mrb[0].mxu0
    %2048 = vmatprep.mubr.f32.mxu0 0.0
    %2049 = vmatmul.mubr.f32.gmra.mrb[0].mxu0 %v1948
    %v2050 = vpop.f32.mrb[0].mxu0
    %v2051 = vadd.f32 0.0, %v2050
    %v2052 = vpop.f32.mrb[0].mxu0
    %2053 = vmatprep.mubr.f32.mxu0 0.0
    %2054 = vmatmul.mubr.f32.gmra.mrb[0].mxu0 %v1951
    %v2055 = vpop.f32.mrb[0].mxu0
    %v2056 = vadd.f32 0.0, %v2055
    %v2057 = vpop.f32.mrb[0].mxu0
    %2058 = vmatprep.mubr.f32.mxu0 0.0
    %2059 = vmatmul.mubr.f32.gmra.mrb[0].mxu0 %v1954
    %v2060 = vpop.f32.mrb[0].mxu0
    %v2061 = vadd.f32 0.0, %v2060
    %v2062 = vpop.f32.mrb[0].mxu0
    %2063 = vdwg.mxu0
    %v2064 = vadd.f32 %v1922, %v2026
    %v2065 = vadd.f32 %v1923, %v2031
    %v2066 = vadd.f32 %v1924, %v2036
    %v2067 = vadd.f32 %v1925, %v2041
    %v2068 = vadd.f32 %v1926, %v2046
    %v2069 = vadd.f32 %v1927, %v2051
    %v2070 = vadd.f32 %v1928, %v2056
    %v2071 = vadd.f32 %v1929, %v2061
    %v2072 = vld [vmem:[#allocation2] sm:$0x1]
    %v2073 = vunpack.c.l.bf16 %v2072
    %v2075 = vsel %vm1238, %v1076, 0
    %v2078 = vsel %vm1238, %v1081, 0
    %v2081 = vsel %vm1238, %v1086, 0
    %v2084 = vsel %vm1238, %v1091, 0
    %v2087 = vsel %vm1238, %v1096, 0
    %v2090 = vsel %vm1238, %v1101, 0
    %v2093 = vsel %vm1238, %v1106, 0
    %v2096 = vsel %vm1238, %v1111, 0
    %v2099 = vsel %vm1263, %v2073, 0
    %2101 = vmatprep.subr.mxu0 0.0
    %2102 = vmatpush1.msra.mxu0 %v2099
    %2103 = vmatprep.subr.mxu0 0.0
    %2104 = vmatpush1.msra.mxu0 0.0
    %2105 = vmatprep.subr.mxu0 0.0
    %2106 = vmatpush1.msra.mxu0 0.0
    %2107 = vmatprep.subr.mxu0 0.0
    %2108 = vmatpush1.msra.mxu0 0.0
    %2109 = vmatprep.subr.mxu0 0.0
    %2110 = vmatpush1.msra.mxu0 0.0
    %2111 = vmatprep.subr.mxu0 0.0
    %2112 = vmatpush1.msra.mxu0 0.0
    %2113 = vmatprep.subr.mxu0 0.0
    %2114 = vmatpush1.msra.mxu0 0.0
    %2115 = vmatprep.subr.mxu0 0.0
    %2116 = vmatpush1.msra.mxu0 0.0
    %2117 = vmatprep.subr.mxu0 0.0
    %2118 = vmatpush1.msra.mxu0 0.0
    %2119 = vmatprep.subr.mxu0 0.0
    %2120 = vmatpush1.msra.mxu0 0.0
    %2121 = vmatprep.subr.mxu0 0.0
    %2122 = vmatpush1.msra.mxu0 0.0
    %2123 = vmatprep.subr.mxu0 0.0
    %2124 = vmatpush1.msra.mxu0 0.0
    %2125 = vmatprep.subr.mxu0 0.0
    %2126 = vmatpush1.msra.mxu0 0.0
    %2127 = vmatprep.subr.mxu0 0.0
    %2128 = vmatpush1.msra.mxu0 0.0
    %2129 = vmatprep.subr.mxu0 0.0
    %2130 = vmatpush1.msra.mxu0 0.0
    %2131 = vmatprep.subr.mxu0 0.0
    %2132 = vmatpush1.msra.mxu0 0.0
    %2133 = vmatprep.subr.mxu0 0.0
    %2134 = vmatpush1.msra.mxu0 0.0
    %2135 = vmatprep.subr.mxu0 0.0
    %2136 = vmatpush1.msra.mxu0 0.0
    %2137 = vmatprep.subr.mxu0 0.0
    %2138 = vmatpush1.msra.mxu0 0.0
    %2139 = vmatprep.subr.mxu0 0.0
    %2140 = vmatpush1.msra.mxu0 0.0
    %2141 = vmatprep.subr.mxu0 0.0
    %2142 = vmatpush1.msra.mxu0 0.0
    %2143 = vmatprep.subr.mxu0 0.0
    %2144 = vmatpush1.msra.mxu0 0.0
    %2145 = vmatprep.subr.mxu0 0.0
    %2146 = vmatpush1.msra.mxu0 0.0
    %2147 = vmatprep.subr.mxu0 0.0
    %2148 = vmatpush1.msra.mxu0 0.0
    %2149 = vmatprep.subr.mxu0 0.0
    %2150 = vmatpush1.msra.mxu0 0.0
    %2151 = vmatprep.subr.mxu0 0.0
    %2152 = vmatpush1.msra.mxu0 0.0
    %2153 = vmatprep.subr.mxu0 0.0
    %2154 = vmatpush1.msra.mxu0 0.0
    %2155 = vmatprep.subr.mxu0 0.0
    %2156 = vmatpush1.msra.mxu0 0.0
    %2157 = vmatprep.subr.mxu0 0.0
    %2158 = vmatpush1.msra.mxu0 0.0
    %2159 = vmatprep.subr.mxu0 0.0
    %2160 = vmatpush1.msra.mxu0 0.0
    %2161 = vmatprep.subr.mxu0 0.0
    %2162 = vmatpush1.msra.mxu0 0.0
    %2163 = vmatprep.subr.mxu0 0.0
    %2164 = vmatpush1.msra.mxu0 0.0
    %2165 = vmatprep.mubr.f32.mxu0 0.0
    %2166 = vmatmul.mubr.f32.gmra.mrb[0].mxu0 %v2075
    %v2167 = vpop.f32.mrb[0].mxu0
    %v2168 = vadd.f32 0.0, %v2167
    %v2169 = vpop.f32.mrb[0].mxu0
    %2170 = vmatprep.mubr.f32.mxu0 0.0
    %2171 = vmatmul.mubr.f32.gmra.mrb[0].mxu0 %v2078
    %v2172 = vpop.f32.mrb[0].mxu0
    %v2173 = vadd.f32 0.0, %v2172
    %v2174 = vpop.f32.mrb[0].mxu0
    %2175 = vmatprep.mubr.f32.mxu0 0.0
    %2176 = vmatmul.mubr.f32.gmra.mrb[0].mxu0 %v2081
    %v2177 = vpop.f32.mrb[0].mxu0
    %v2178 = vadd.f32 0.0, %v2177
    %v2179 = vpop.f32.mrb[0].mxu0
    %2180 = vmatprep.mubr.f32.mxu0 0.0
    %2181 = vmatmul.mubr.f32.gmra.mrb[0].mxu0 %v2084
    %v2182 = vpop.f32.mrb[0].mxu0
    %v2183 = vadd.f32 0.0, %v2182
    %v2184 = vpop.f32.mrb[0].mxu0
    %2185 = vmatprep.mubr.f32.mxu0 0.0
    %2186 = vmatmul.mubr.f32.gmra.mrb[0].mxu0 %v2087
    %v2187 = vpop.f32.mrb[0].mxu0
    %v2188 = vadd.f32 0.0, %v2187
    %v2189 = vpop.f32.mrb[0].mxu0
    %2190 = vmatprep.mubr.f32.mxu0 0.0
    %2191 = vmatmul.mubr.f32.gmra.mrb[0].mxu0 %v2090
    %v2192 = vpop.f32.mrb[0].mxu0
    %v2193 = vadd.f32 0.0, %v2192
    %v2194 = vpop.f32.mrb[0].mxu0
    %2195 = vmatprep.mubr.f32.mxu0 0.0
    %2196 = vmatmul.mubr.f32.gmra.mrb[0].mxu0 %v2093
    %v2197 = vpop.f32.mrb[0].mxu0
    %v2198 = vadd.f32 0.0, %v2197
    %v2199 = vpop.f32.mrb[0].mxu0
    %2200 = vmatprep.mubr.f32.mxu0 0.0
    %2201 = vmatmul.mubr.f32.gmra.mrb[0].mxu0 %v2096
    %v2202 = vpop.f32.mrb[0].mxu0
    %v2203 = vadd.f32 0.0, %v2202
    %v2204 = vpop.f32.mrb[0].mxu0
    %2205 = vdwg.mxu0
    %v2206 = vadd.f32 %v2064, %v2168
    %v2207 = vadd.f32 %v2065, %v2173
    %v2208 = vadd.f32 %v2066, %v2178
    %v2209 = vadd.f32 %v2067, %v2183
    %v2210 = vadd.f32 %v2068, %v2188
    %v2211 = vadd.f32 %v2069, %v2193
    %v2212 = vadd.f32 %v2070, %v2198
    %v2213 = vadd.f32 %v2071, %v2203
    %v2214 = vld [vmem:[#allocation5] sm:$0x1]
    %v2215 = vunpack.c.l.bf16 %v2214
    %v2217 = vsel %vm1238, %v1116, 0
    %v2220 = vsel %vm1238, %v1121, 0
    %v2223 = vsel %vm1238, %v1126, 0
    %v2226 = vsel %vm1238, %v1131, 0
    %v2229 = vsel %vm1238, %v1136, 0
    %v2232 = vsel %vm1238, %v1141, 0
    %v2235 = vsel %vm1238, %v1146, 0
    %v2238 = vsel %vm1238, %v1151, 0
    %v2241 = vsel %vm1263, %v2215, 0
    %2243 = vmatprep.subr.mxu0 0.0
    %2244 = vmatpush1.msra.mxu0 %v2241
    %2245 = vmatprep.subr.mxu0 0.0
    %2246 = vmatpush1.msra.mxu0 0.0
    %2247 = vmatprep.subr.mxu0 0.0
    %2248 = vmatpush1.msra.mxu0 0.0
    %2249 = vmatprep.subr.mxu0 0.0
    %2250 = vmatpush1.msra.mxu0 0.0
    %2251 = vmatprep.subr.mxu0 0.0
    %2252 = vmatpush1.msra.mxu0 0.0
    %2253 = vmatprep.subr.mxu0 0.0
    %2254 = vmatpush1.msra.mxu0 0.0
    %2255 = vmatprep.subr.mxu0 0.0
    %2256 = vmatpush1.msra.mxu0 0.0
    %2257 = vmatprep.subr.mxu0 0.0
    %2258 = vmatpush1.msra.mxu0 0.0
    %2259 = vmatprep.subr.mxu0 0.0
    %2260 = vmatpush1.msra.mxu0 0.0
    %2261 = vmatprep.subr.mxu0 0.0
    %2262 = vmatpush1.msra.mxu0 0.0
    %2263 = vmatprep.subr.mxu0 0.0
    %2264 = vmatpush1.msra.mxu0 0.0
    %2265 = vmatprep.subr.mxu0 0.0
    %2266 = vmatpush1.msra.mxu0 0.0
    %2267 = vmatprep.subr.mxu0 0.0
    %2268 = vmatpush1.msra.mxu0 0.0
    %2269 = vmatprep.subr.mxu0 0.0
    %2270 = vmatpush1.msra.mxu0 0.0
    %2271 = vmatprep.subr.mxu0 0.0
    %2272 = vmatpush1.msra.mxu0 0.0
    %2273 = vmatprep.subr.mxu0 0.0
    %2274 = vmatpush1.msra.mxu0 0.0
    %2275 = vmatprep.subr.mxu0 0.0
    %2276 = vmatpush1.msra.mxu0 0.0
    %2277 = vmatprep.subr.mxu0 0.0
    %2278 = vmatpush1.msra.mxu0 0.0
    %2279 = vmatprep.subr.mxu0 0.0
    %2280 = vmatpush1.msra.mxu0 0.0
    %2281 = vmatprep.subr.mxu0 0.0
    %2282 = vmatpush1.msra.mxu0 0.0
    %2283 = vmatprep.subr.mxu0 0.0
    %2284 = vmatpush1.msra.mxu0 0.0
    %2285 = vmatprep.subr.mxu0 0.0
    %2286 = vmatpush1.msra.mxu0 0.0
    %2287 = vmatprep.subr.mxu0 0.0
    %2288 = vmatpush1.msra.mxu0 0.0
    %2289 = vmatprep.subr.mxu0 0.0
    %2290 = vmatpush1.msra.mxu0 0.0
    %2291 = vmatprep.subr.mxu0 0.0
    %2292 = vmatpush1.msra.mxu0 0.0
    %2293 = vmatprep.subr.mxu0 0.0
    %2294 = vmatpush1.msra.mxu0 0.0
    %2295 = vmatprep.subr.mxu0 0.0
    %2296 = vmatpush1.msra.mxu0 0.0
    %2297 = vmatprep.subr.mxu0 0.0
    %2298 = vmatpush1.msra.mxu0 0.0
    %2299 = vmatprep.subr.mxu0 0.0
    %2300 = vmatpush1.msra.mxu0 0.0
    %2301 = vmatprep.subr.mxu0 0.0
    %2302 = vmatpush1.msra.mxu0 0.0
    %2303 = vmatprep.subr.mxu0 0.0
    %2304 = vmatpush1.msra.mxu0 0.0
    %2305 = vmatprep.subr.mxu0 0.0
    %2306 = vmatpush1.msra.mxu0 0.0
    %2307 = vmatprep.mubr.f32.mxu0 0.0
    %2308 = vmatmul.mubr.f32.gmra.mrb[0].mxu0 %v2217
    %v2309 = vpop.f32.mrb[0].mxu0
    %v2310 = vadd.f32 0.0, %v2309
    %v2311 = vpop.f32.mrb[0].mxu0
    %2312 = vmatprep.mubr.f32.mxu0 0.0
    %2313 = vmatmul.mubr.f32.gmra.mrb[0].mxu0 %v2220
    %v2314 = vpop.f32.mrb[0].mxu0
    %v2315 = vadd.f32 0.0, %v2314
    %v2316 = vpop.f32.mrb[0].mxu0
    %2317 = vmatprep.mubr.f32.mxu0 0.0
    %2318 = vmatmul.mubr.f32.gmra.mrb[0].mxu0 %v2223
    %v2319 = vpop.f32.mrb[0].mxu0
    %v2320 = vadd.f32 0.0, %v2319
    %v2321 = vpop.f32.mrb[0].mxu0
    %2322 = vmatprep.mubr.f32.mxu0 0.0
    %2323 = vmatmul.mubr.f32.gmra.mrb[0].mxu0 %v2226
    %v2324 = vpop.f32.mrb[0].mxu0
    %v2325 = vadd.f32 0.0, %v2324
    %v2326 = vpop.f32.mrb[0].mxu0
    %2327 = vmatprep.mubr.f32.mxu0 0.0
    %2328 = vmatmul.mubr.f32.gmra.mrb[0].mxu0 %v2229
    %v2329 = vpop.f32.mrb[0].mxu0
    %v2330 = vadd.f32 0.0, %v2329
    %v2331 = vpop.f32.mrb[0].mxu0
    %2332 = vmatprep.mubr.f32.mxu0 0.0
    %2333 = vmatmul.mubr.f32.gmra.mrb[0].mxu0 %v2232
    %v2334 = vpop.f32.mrb[0].mxu0
    %v2335 = vadd.f32 0.0, %v2334
    %v2336 = vpop.f32.mrb[0].mxu0
    %2337 = vmatprep.mubr.f32.mxu0 0.0
    %2338 = vmatmul.mubr.f32.gmra.mrb[0].mxu0 %v2235
    %v2339 = vpop.f32.mrb[0].mxu0
    %v2340 = vadd.f32 0.0, %v2339
    %v2341 = vpop.f32.mrb[0].mxu0
    %2342 = vmatprep.mubr.f32.mxu0 0.0
    %2343 = vmatmul.mubr.f32.gmra.mrb[0].mxu0 %v2238
    %v2344 = vpop.f32.mrb[0].mxu0
    %v2345 = vadd.f32 0.0, %v2344
    %v2346 = vpop.f32.mrb[0].mxu0
    %2347 = vdwg.mxu0
    %v2348 = vadd.f32 %v2206, %v2310
    %v2349 = vadd.f32 %v2207, %v2315
    %v2350 = vadd.f32 %v2208, %v2320
    %v2351 = vadd.f32 %v2209, %v2325
    %v2352 = vadd.f32 %v2210, %v2330
    %v2353 = vadd.f32 %v2211, %v2335
    %v2354 = vadd.f32 %v2212, %v2340
    %v2355 = vadd.f32 %v2213, %v2345
    %v2356 = vld [vmem:[#allocation7] sm:$0x1]
    %v2357 = vunpack.c.l.bf16 %v2356
    %v2359 = vsel %vm1238, %v1156, 0
    %v2362 = vsel %vm1238, %v1161, 0
    %v2365 = vsel %vm1238, %v1166, 0
    %v2368 = vsel %vm1238, %v1171, 0
    %v2371 = vsel %vm1238, %v1176, 0
    %v2374 = vsel %vm1238, %v1181, 0
    %v2377 = vsel %vm1238, %v1186, 0
    %v2380 = vsel %vm1238, %v1191, 0
    %v2383 = vsel %vm1263, %v2357, 0
    %2385 = vmatprep.subr.mxu0 0.0
    %2386 = vmatpush1.msra.mxu0 %v2383
    %2387 = vmatprep.subr.mxu0 0.0
    %2388 = vmatpush1.msra.mxu0 0.0
    %2389 = vmatprep.subr.mxu0 0.0
    %2390 = vmatpush1.msra.mxu0 0.0
    %2391 = vmatprep.subr.mxu0 0.0
    %2392 = vmatpush1.msra.mxu0 0.0
    %2393 = vmatprep.subr.mxu0 0.0
    %2394 = vmatpush1.msra.mxu0 0.0
    %2395 = vmatprep.subr.mxu0 0.0
    %2396 = vmatpush1.msra.mxu0 0.0
    %2397 = vmatprep.subr.mxu0 0.0
    %2398 = vmatpush1.msra.mxu0 0.0
    %2399 = vmatprep.subr.mxu0 0.0
    %2400 = vmatpush1.msra.mxu0 0.0
    %2401 = vmatprep.subr.mxu0 0.0
    %2402 = vmatpush1.msra.mxu0 0.0
    %2403 = vmatprep.subr.mxu0 0.0
    %2404 = vmatpush1.msra.mxu0 0.0
    %2405 = vmatprep.subr.mxu0 0.0
    %2406 = vmatpush1.msra.mxu0 0.0
    %2407 = vmatprep.subr.mxu0 0.0
    %2408 = vmatpush1.msra.mxu0 0.0
    %2409 = vmatprep.subr.mxu0 0.0
    %2410 = vmatpush1.msra.mxu0 0.0
    %2411 = vmatprep.subr.mxu0 0.0
    %2412 = vmatpush1.msra.mxu0 0.0
    %2413 = vmatprep.subr.mxu0 0.0
    %2414 = vmatpush1.msra.mxu0 0.0
    %2415 = vmatprep.subr.mxu0 0.0
    %2416 = vmatpush1.msra.mxu0 0.0
    %2417 = vmatprep.subr.mxu0 0.0
    %2418 = vmatpush1.msra.mxu0 0.0
    %2419 = vmatprep.subr.mxu0 0.0
    %2420 = vmatpush1.msra.mxu0 0.0
    %2421 = vmatprep.subr.mxu0 0.0
    %2422 = vmatpush1.msra.mxu0 0.0
    %2423 = vmatprep.subr.mxu0 0.0
    %2424 = vmatpush1.msra.mxu0 0.0
    %2425 = vmatprep.subr.mxu0 0.0
    %2426 = vmatpush1.msra.mxu0 0.0
    %2427 = vmatprep.subr.mxu0 0.0
    %2428 = vmatpush1.msra.mxu0 0.0
    %2429 = vmatprep.subr.mxu0 0.0
    %2430 = vmatpush1.msra.mxu0 0.0
    %2431 = vmatprep.subr.mxu0 0.0
    %2432 = vmatpush1.msra.mxu0 0.0
    %2433 = vmatprep.subr.mxu0 0.0
    %2434 = vmatpush1.msra.mxu0 0.0
    %2435 = vmatprep.subr.mxu0 0.0
    %2436 = vmatpush1.msra.mxu0 0.0
    %2437 = vmatprep.subr.mxu0 0.0
    %2438 = vmatpush1.msra.mxu0 0.0
    %2439 = vmatprep.subr.mxu0 0.0
    %2440 = vmatpush1.msra.mxu0 0.0
    %2441 = vmatprep.subr.mxu0 0.0
    %2442 = vmatpush1.msra.mxu0 0.0
    %2443 = vmatprep.subr.mxu0 0.0
    %2444 = vmatpush1.msra.mxu0 0.0
    %2445 = vmatprep.subr.mxu0 0.0
    %2446 = vmatpush1.msra.mxu0 0.0
    %2447 = vmatprep.subr.mxu0 0.0
    %2448 = vmatpush1.msra.mxu0 0.0
    %2449 = vmatprep.mubr.f32.mxu0 0.0
    %2450 = vmatmul.mubr.f32.gmra.mrb[0].mxu0 %v2359
    %v2451 = vpop.f32.mrb[0].mxu0
    %v2452 = vadd.f32 0.0, %v2451
    %v2453 = vpop.f32.mrb[0].mxu0
    %2454 = vmatprep.mubr.f32.mxu0 0.0
    %2455 = vmatmul.mubr.f32.gmra.mrb[0].mxu0 %v2362
    %v2456 = vpop.f32.mrb[0].mxu0
    %v2457 = vadd.f32 0.0, %v2456
    %v2458 = vpop.f32.mrb[0].mxu0
    %2459 = vmatprep.mubr.f32.mxu0 0.0
    %2460 = vmatmul.mubr.f32.gmra.mrb[0].mxu0 %v2365
    %v2461 = vpop.f32.mrb[0].mxu0
    %v2462 = vadd.f32 0.0, %v2461
    %v2463 = vpop.f32.mrb[0].mxu0
    %2464 = vmatprep.mubr.f32.mxu0 0.0
    %2465 = vmatmul.mubr.f32.gmra.mrb[0].mxu0 %v2368
    %v2466 = vpop.f32.mrb[0].mxu0
    %v2467 = vadd.f32 0.0, %v2466
    %v2468 = vpop.f32.mrb[0].mxu0
    %2469 = vmatprep.mubr.f32.mxu0 0.0
    %2470 = vmatmul.mubr.f32.gmra.mrb[0].mxu0 %v2371
    %v2471 = vpop.f32.mrb[0].mxu0
    %v2472 = vadd.f32 0.0, %v2471
    %v2473 = vpop.f32.mrb[0].mxu0
    %2474 = vmatprep.mubr.f32.mxu0 0.0
    %2475 = vmatmul.mubr.f32.gmra.mrb[0].mxu0 %v2374
    %v2476 = vpop.f32.mrb[0].mxu0
    %v2477 = vadd.f32 0.0, %v2476
    %v2478 = vpop.f32.mrb[0].mxu0
    %2479 = vmatprep.mubr.f32.mxu0 0.0
    %2480 = vmatmul.mubr.f32.gmra.mrb[0].mxu0 %v2377
    %v2481 = vpop.f32.mrb[0].mxu0
    %v2482 = vadd.f32 0.0, %v2481
    %v2483 = vpop.f32.mrb[0].mxu0
    %2484 = vmatprep.mubr.f32.mxu0 0.0
    %2485 = vmatmul.mubr.f32.gmra.mrb[0].mxu0 %v2380
    %v2486 = vpop.f32.mrb[0].mxu0
    %v2487 = vadd.f32 0.0, %v2486
    %v2488 = vpop.f32.mrb[0].mxu0
    %2489 = vdwg.mxu0
    %v2490 = vadd.f32 %v2348, %v2452
    %v2491 = vadd.f32 %v2349, %v2457
    %v2492 = vadd.f32 %v2350, %v2462
    %v2493 = vadd.f32 %v2351, %v2467
    %v2494 = vadd.f32 %v2352, %v2472
    %v2495 = vadd.f32 %v2353, %v2477
    %v2496 = vadd.f32 %v2354, %v2482
    %v2497 = vadd.f32 %v2355, %v2487
    %v2498 = vld [vmem:[#allocation8] sm:$0x1]
    %v2499 = vunpack.c.l.bf16 %v2498
    %v2501 = vsel %vm1238, %v1196, 0
    %v2504 = vsel %vm1238, %v1201, 0
    %v2507 = vsel %vm1238, %v1206, 0
    %v2510 = vsel %vm1238, %v1211, 0
    %v2513 = vsel %vm1238, %v1216, 0
    %v2516 = vsel %vm1238, %v1221, 0
    %v2519 = vsel %vm1238, %v1226, 0
    %v2522 = vsel %vm1238, %v1231, 0
    %v2525 = vsel %vm1263, %v2499, 0
    %2527 = vmatprep.subr.mxu0 0.0
    %2528 = vmatpush1.msra.mxu0 %v2525
    %2529 = vmatprep.subr.mxu0 0.0
    %2530 = vmatpush1.msra.mxu0 0.0
    %2531 = vmatprep.subr.mxu0 0.0
    %2532 = vmatpush1.msra.mxu0 0.0
    %2533 = vmatprep.subr.mxu0 0.0
    %2534 = vmatpush1.msra.mxu0 0.0
    %2535 = vmatprep.subr.mxu0 0.0
    %2536 = vmatpush1.msra.mxu0 0.0
    %2537 = vmatprep.subr.mxu0 0.0
    %2538 = vmatpush1.msra.mxu0 0.0
    %2539 = vmatprep.subr.mxu0 0.0
    %2540 = vmatpush1.msra.mxu0 0.0
    %2541 = vmatprep.subr.mxu0 0.0
    %2542 = vmatpush1.msra.mxu0 0.0
    %2543 = vmatprep.subr.mxu0 0.0
    %2544 = vmatpush1.msra.mxu0 0.0
    %2545 = vmatprep.subr.mxu0 0.0
    %2546 = vmatpush1.msra.mxu0 0.0
    %2547 = vmatprep.subr.mxu0 0.0
    %2548 = vmatpush1.msra.mxu0 0.0
    %2549 = vmatprep.subr.mxu0 0.0
    %2550 = vmatpush1.msra.mxu0 0.0
    %2551 = vmatprep.subr.mxu0 0.0
    %2552 = vmatpush1.msra.mxu0 0.0
    %2553 = vmatprep.subr.mxu0 0.0
    %2554 = vmatpush1.msra.mxu0 0.0
    %2555 = vmatprep.subr.mxu0 0.0
    %2556 = vmatpush1.msra.mxu0 0.0
    %2557 = vmatprep.subr.mxu0 0.0
    %2558 = vmatpush1.msra.mxu0 0.0
    %2559 = vmatprep.subr.mxu0 0.0
    %2560 = vmatpush1.msra.mxu0 0.0
    %2561 = vmatprep.subr.mxu0 0.0
    %2562 = vmatpush1.msra.mxu0 0.0
    %2563 = vmatprep.subr.mxu0 0.0
    %2564 = vmatpush1.msra.mxu0 0.0
    %2565 = vmatprep.subr.mxu0 0.0
    %2566 = vmatpush1.msra.mxu0 0.0
    %2567 = vmatprep.subr.mxu0 0.0
    %2568 = vmatpush1.msra.mxu0 0.0
    %2569 = vmatprep.subr.mxu0 0.0
    %2570 = vmatpush1.msra.mxu0 0.0
    %2571 = vmatprep.subr.mxu0 0.0
    %2572 = vmatpush1.msra.mxu0 0.0
    %2573 = vmatprep.subr.mxu0 0.0
    %2574 = vmatpush1.msra.mxu0 0.0
    %2575 = vmatprep.subr.mxu0 0.0
    %2576 = vmatpush1.msra.mxu0 0.0
    %2577 = vmatprep.subr.mxu0 0.0
    %2578 = vmatpush1.msra.mxu0 0.0
    %2579 = vmatprep.subr.mxu0 0.0
    %2580 = vmatpush1.msra.mxu0 0.0
    %2581 = vmatprep.subr.mxu0 0.0
    %2582 = vmatpush1.msra.mxu0 0.0
    %2583 = vmatprep.subr.mxu0 0.0
    %2584 = vmatpush1.msra.mxu0 0.0
    %2585 = vmatprep.subr.mxu0 0.0
    %2586 = vmatpush1.msra.mxu0 0.0
    %2587 = vmatprep.subr.mxu0 0.0
    %2588 = vmatpush1.msra.mxu0 0.0
    %2589 = vmatprep.subr.mxu0 0.0
    %2590 = vmatpush1.msra.mxu0 0.0
    %2591 = vmatprep.mubr.f32.mxu0 0.0
    %2592 = vmatmul.mubr.f32.gmra.mrb[0].mxu0 %v2501
    %v2593 = vpop.f32.mrb[0].mxu0
    %v2594 = vadd.f32 0.0, %v2593
    %v2595 = vpop.f32.mrb[0].mxu0
    %2596 = vmatprep.mubr.f32.mxu0 0.0
    %2597 = vmatmul.mubr.f32.gmra.mrb[0].mxu0 %v2504
    %v2598 = vpop.f32.mrb[0].mxu0
    %v2599 = vadd.f32 0.0, %v2598
    %v2600 = vpop.f32.mrb[0].mxu0
    %2601 = vmatprep.mubr.f32.mxu0 0.0
    %2602 = vmatmul.mubr.f32.gmra.mrb[0].mxu0 %v2507
    %v2603 = vpop.f32.mrb[0].mxu0
    %v2604 = vadd.f32 0.0, %v2603
    %v2605 = vpop.f32.mrb[0].mxu0
    %2606 = vmatprep.mubr.f32.mxu0 0.0
    %2607 = vmatmul.mubr.f32.gmra.mrb[0].mxu0 %v2510
    %v2608 = vpop.f32.mrb[0].mxu0
    %v2609 = vadd.f32 0.0, %v2608
    %v2610 = vpop.f32.mrb[0].mxu0
    %2611 = vmatprep.mubr.f32.mxu0 0.0
    %2612 = vmatmul.mubr.f32.gmra.mrb[0].mxu0 %v2513
    %v2613 = vpop.f32.mrb[0].mxu0
    %v2614 = vadd.f32 0.0, %v2613
    %v2615 = vpop.f32.mrb[0].mxu0
    %2616 = vmatprep.mubr.f32.mxu0 0.0
    %2617 = vmatmul.mubr.f32.gmra.mrb[0].mxu0 %v2516
    %v2618 = vpop.f32.mrb[0].mxu0
    %v2619 = vadd.f32 0.0, %v2618
    %v2620 = vpop.f32.mrb[0].mxu0
    %2621 = vmatprep.mubr.f32.mxu0 0.0
    %2622 = vmatmul.mubr.f32.gmra.mrb[0].mxu0 %v2519
    %v2623 = vpop.f32.mrb[0].mxu0
    %v2624 = vadd.f32 0.0, %v2623
    %v2625 = vpop.f32.mrb[0].mxu0
    %2626 = vmatprep.mubr.f32.mxu0 0.0
    %2627 = vmatmul.mubr.f32.gmra.mrb[0].mxu0 %v2522
    %v2628 = vpop.f32.mrb[0].mxu0
    %v2629 = vadd.f32 0.0, %v2628
    %v2630 = vpop.f32.mrb[0].mxu0
    %2631 = vdwg.mxu0
    %v2632 = vadd.f32 %v2490, %v2594
    %v2633 = vadd.f32 %v2491, %v2599
    %v2634 = vadd.f32 %v2492, %v2604
    %v2635 = vadd.f32 %v2493, %v2609
    %v2636 = vadd.f32 %v2494, %v2614
    %v2637 = vadd.f32 %v2495, %v2619
    %v2638 = vadd.f32 %v2496, %v2624
    %v2639 = vadd.f32 %v2497, %v2629
    %vm2640 = vcmask 162816
    %v2641 = vsel %vm2640, %v2632, 0.0
    %2642 = vadd.xlane.f32.xlu0 %v2641
    %v2643 = vpop.xlane.xlu0 %2642
    %v2644 = vsel %vm2640, %v2633, 0.0
    %2645 = vadd.xlane.f32.xlu0 %v2644
    %v2646 = vpop.xlane.xlu0 %2645
    %v2647 = vsel %vm2640, %v2634, 0.0
    %2648 = vadd.xlane.f32.xlu0 %v2647
    %v2649 = vpop.xlane.xlu0 %2648
    %v2650 = vsel %vm2640, %v2635, 0.0
    %2651 = vadd.xlane.f32.xlu0 %v2650
    %v2652 = vpop.xlane.xlu0 %2651
    %v2653 = vsel %vm2640, %v2636, 0.0
    %2654 = vadd.xlane.f32.xlu0 %v2653
    %v2655 = vpop.xlane.xlu0 %2654
    %v2656 = vsel %vm2640, %v2637, 0.0
    %2657 = vadd.xlane.f32.xlu0 %v2656
    %v2658 = vpop.xlane.xlu0 %2657
    %v2659 = vsel %vm2640, %v2638, 0.0
    %2660 = vadd.xlane.f32.xlu0 %v2659
    %v2661 = vpop.xlane.xlu0 %2660
    %v2662 = vsel %vm2640, %v2639, 0.0
    %2663 = vadd.xlane.f32.xlu0 %v2662
    %v2664 = vpop.xlane.xlu0 %2663
    %v2665 = vmul.f32 %v2643, 0.05
    %v2666 = vmul.f32 %v2646, 0.05
    %v2667 = vmul.f32 %v2649, 0.05
    %v2668 = vmul.f32 %v2652, 0.05
    %v2669 = vmul.f32 %v2655, 0.05
    %v2670 = vmul.f32 %v2658, 0.05
    %v2671 = vmul.f32 %v2661, 0.05
    %v2672 = vmul.f32 %v2664, 0.05
    %v2673 = vsub.f32 %v2632, %v2665
    %v2674 = vsub.f32 %v2633, %v2666
    %v2675 = vsub.f32 %v2634, %v2667
    %v2676 = vsub.f32 %v2635, %v2668
    %v2677 = vsub.f32 %v2636, %v2669
    %v2678 = vsub.f32 %v2637, %v2670
    %v2679 = vsub.f32 %v2638, %v2671
    %v2680 = vsub.f32 %v2639, %v2672
    %v2681 = vmul.f32 %v2673, %v2673
    %v2682 = vmul.f32 %v2674, %v2674
    %v2683 = vmul.f32 %v2675, %v2675
    %v2684 = vmul.f32 %v2676, %v2676
    %v2685 = vmul.f32 %v2677, %v2677
    %v2686 = vmul.f32 %v2678, %v2678
    %v2687 = vmul.f32 %v2679, %v2679
    %v2688 = vmul.f32 %v2680, %v2680
    %v2689 = vsel %vm2640, %v2681, 0.0
    %2690 = vadd.xlane.f32.xlu0 %v2689
    %v2691 = vpop.xlane.xlu0 %2690
    %v2692 = vsel %vm2640, %v2682, 0.0
    %2693 = vadd.xlane.f32.xlu0 %v2692
    %v2694 = vpop.xlane.xlu0 %2693
    %v2695 = vsel %vm2640, %v2683, 0.0
    %2696 = vadd.xlane.f32.xlu0 %v2695
    %v2697 = vpop.xlane.xlu0 %2696
    %v2698 = vsel %vm2640, %v2684, 0.0
    %2699 = vadd.xlane.f32.xlu0 %v2698
    %v2700 = vpop.xlane.xlu0 %2699
    %v2701 = vsel %vm2640, %v2685, 0.0
    %2702 = vadd.xlane.f32.xlu0 %v2701
    %v2703 = vpop.xlane.xlu0 %2702
    %v2704 = vsel %vm2640, %v2686, 0.0
    %2705 = vadd.xlane.f32.xlu0 %v2704
    %v2706 = vpop.xlane.xlu0 %2705
    %v2707 = vsel %vm2640, %v2687, 0.0
    %2708 = vadd.xlane.f32.xlu0 %v2707
    %v2709 = vpop.xlane.xlu0 %2708
    %v2710 = vsel %vm2640, %v2688, 0.0
    %2711 = vadd.xlane.f32.xlu0 %v2710
    %v2712 = vpop.xlane.xlu0 %2711
    %v2713 = vmul.f32 %v2691, 0.05
    %v2714 = vmul.f32 %v2694, 0.05
    %v2715 = vmul.f32 %v2697, 0.05
    %v2716 = vmul.f32 %v2700, 0.05
    %v2717 = vmul.f32 %v2703, 0.05
    %v2718 = vmul.f32 %v2706, 0.05
    %v2719 = vmul.f32 %v2709, 0.05
    %v2720 = vmul.f32 %v2712, 0.05
    %v2721 = vadd.f32 %v2713, 1e-05
    %v2722 = vadd.f32 %v2714, 1e-05
    %v2723 = vadd.f32 %v2715, 1e-05
    %v2724 = vadd.f32 %v2716, 1e-05
    %v2725 = vadd.f32 %v2717, 1e-05
    %v2726 = vadd.f32 %v2718, 1e-05
    %v2727 = vadd.f32 %v2719, 1e-05
    %v2728 = vadd.f32 %v2720, 1e-05
    %v2729 = vrsqrt.pop %v2721
    %v2730 = vrsqrt.pop %v2722
    %v2731 = vrsqrt.pop %v2723
    %v2732 = vrsqrt.pop %v2724
    %v2733 = vrsqrt.pop %v2725
    %v2734 = vrsqrt.pop %v2726
    %v2735 = vrsqrt.pop %v2727
    %v2736 = vrsqrt.pop %v2728
    %v2737 = vmul.f32 %v2673, %v2729
    %v2738 = vmul.f32 %v2674, %v2730
    %v2739 = vmul.f32 %v2675, %v2731
    %v2740 = vmul.f32 %v2676, %v2732
    %v2741 = vmul.f32 %v2677, %v2733
    %v2742 = vmul.f32 %v2678, %v2734
    %v2743 = vmul.f32 %v2679, %v2735
    %v2744 = vmul.f32 %v2680, %v2736
    %2746 = vset.pattern.permute.xlu0 0
    %2747 = vperm.xlu0 %2746, %v512
    %v2748 = vpop.permute.xlu0 %2747
    %2751 = vset.pattern.permute.xlu0 0
    %2752 = vperm.xlu0 %2751, %v513
    %v2753 = vpop.permute.xlu0 %2752
    %2756 = vset.pattern.permute.xlu0 0
    %2757 = vperm.xlu0 %2756, %v514
    %v2758 = vpop.permute.xlu0 %2757
    %2761 = vset.pattern.permute.xlu0 0
    %2762 = vperm.xlu0 %2761, %v515
    %v2763 = vpop.permute.xlu0 %2762
    %2766 = vset.pattern.permute.xlu0 0
    %2767 = vperm.xlu0 %2766, %v516
    %v2768 = vpop.permute.xlu0 %2767
    %2771 = vset.pattern.permute.xlu0 0
    %2772 = vperm.xlu0 %2771, %v517
    %v2773 = vpop.permute.xlu0 %2772
    %2776 = vset.pattern.permute.xlu0 0
    %2777 = vperm.xlu0 %2776, %v518
    %v2778 = vpop.permute.xlu0 %2777
    %2781 = vset.pattern.permute.xlu0 0
    %2782 = vperm.xlu0 %2781, %v519
    %v2783 = vpop.permute.xlu0 %2782
    %v2785 = vmul.f32 %v2737, %v2748
    %v2786 = vmul.f32 %v2738, %v2753
    %v2787 = vmul.f32 %v2739, %v2758
    %v2788 = vmul.f32 %v2740, %v2763
    %v2789 = vmul.f32 %v2741, %v2768
    %v2790 = vmul.f32 %v2742, %v2773
    %v2791 = vmul.f32 %v2743, %v2778
    %v2792 = vmul.f32 %v2744, %v2783
    %2794 = vset.pattern.permute.xlu0 0
    %2795 = vperm.xlu0 %2794, %v520
    %v2796 = vpop.permute.xlu0 %2795
    %2799 = vset.pattern.permute.xlu0 0
    %2800 = vperm.xlu0 %2799, %v521
    %v2801 = vpop.permute.xlu0 %2800
    %2804 = vset.pattern.permute.xlu0 0
    %2805 = vperm.xlu0 %2804, %v522
    %v2806 = vpop.permute.xlu0 %2805
    %2809 = vset.pattern.permute.xlu0 0
    %2810 = vperm.xlu0 %2809, %v523
    %v2811 = vpop.permute.xlu0 %2810
    %2814 = vset.pattern.permute.xlu0 0
    %2815 = vperm.xlu0 %2814, %v524
    %v2816 = vpop.permute.xlu0 %2815
    %2819 = vset.pattern.permute.xlu0 0
    %2820 = vperm.xlu0 %2819, %v525
    %v2821 = vpop.permute.xlu0 %2820
    %2824 = vset.pattern.permute.xlu0 0
    %2825 = vperm.xlu0 %2824, %v526
    %v2826 = vpop.permute.xlu0 %2825
    %2829 = vset.pattern.permute.xlu0 0
    %2830 = vperm.xlu0 %2829, %v527
    %v2831 = vpop.permute.xlu0 %2830
    %v2833 = vadd.f32 %v2785, %v2796
    %v2834 = vadd.f32 %v2786, %v2801
    %v2835 = vadd.f32 %v2787, %v2806
    %v2836 = vadd.f32 %v2788, %v2811
    %v2837 = vadd.f32 %v2789, %v2816
    %v2838 = vadd.f32 %v2790, %v2821
    %v2839 = vadd.f32 %v2791, %v2826
    %v2840 = vadd.f32 %v2792, %v2831
    %v2841 = vmax.f32 %v2833, 0.0
    %v2842 = vmax.f32 %v2834, 0.0
    %v2843 = vmax.f32 %v2835, 0.0
    %v2844 = vmax.f32 %v2836, 0.0
    %v2845 = vmax.f32 %v2837, 0.0
    %v2846 = vmax.f32 %v2838, 0.0
    %v2847 = vmax.f32 %v2839, 0.0
    %v2848 = vmax.f32 %v2840, 0.0
    %v2849 = vld [vmem:[%s29] sm:$0xff]
    %v2850 = vld [vmem:[%s29 + $0x8] sm:$0xff]
    %v2851 = vld [vmem:[%s29 + $0x10] sm:$0xff]
    %v2852 = vld [vmem:[%s29 + $0x18] sm:$0xff]
    %v2853 = vld [vmem:[%s29 + $0x20] sm:$0xff]
    %v2854 = vld [vmem:[%s29 + $0x28] sm:$0xff]
    %v2855 = vld [vmem:[%s29 + $0x30] sm:$0xff]
    %v2856 = vld [vmem:[%s29 + $0x38] sm:$0xff]
    %v2857 = vld [vmem:[%s29 + $0x40] sm:$0xff]
    %v2858 = vld [vmem:[%s29 + $0x48] sm:$0xff]
    %v2859 = vld [vmem:[%s29 + $0x50] sm:$0xff]
    %v2860 = vld [vmem:[%s29 + $0x58] sm:$0xff]
    %v2861 = vld [vmem:[%s29 + $0x60] sm:$0xff]
    %v2862 = vld [vmem:[%s29 + $0x68] sm:$0xff]
    %v2863 = vld [vmem:[%s29 + $0x70] sm:$0xff]
    %v2864 = vld [vmem:[%s29 + $0x78] sm:$0xff]
    %v2865 = vld [vmem:[%s31] sm:$0xff]
    %v2866 = vld [vmem:[%s31 + $0x8] sm:$0xff]
    %v2867 = vld [vmem:[%s31 + $0x10] sm:$0xff]
    %v2868 = vld [vmem:[%s31 + $0x18] sm:$0xff]
    %v2869 = vld [vmem:[%s33] sm:$0xff]
    %v2870 = vld [vmem:[%s33 + $0x8] sm:$0xff]
    %v2871 = vld [vmem:[%s33 + $0x10] sm:$0xff]
    %v2872 = vld [vmem:[%s33 + $0x18] sm:$0xff]
    %vm2873 = vcmask 523264
    %v2875 = vsel %vm2873, %v2849, 0
    %v2878 = vsel %vm2873, %v2850, 0
    %v2881 = vsel %vm2873, %v2851, 0
    %v2884 = vsel %vm2873, %v2852, 0
    %v2887 = vsel %vm2873, %v2853, 0
    %v2890 = vsel %vm2873, %v2854, 0
    %v2893 = vsel %vm2873, %v2855, 0
    %v2896 = vsel %vm2873, %v2856, 0
    %v2899 = vsel %vm2873, %v2857, 0
    %v2902 = vsel %vm2873, %v2858, 0
    %v2905 = vsel %vm2873, %v2859, 0
    %v2908 = vsel %vm2873, %v2860, 0
    %v2911 = vsel %vm2873, %v2861, 0
    %v2914 = vsel %vm2873, %v2862, 0
    %v2917 = vsel %vm2873, %v2863, 0
    %v2920 = vsel %vm2873, %v2864, 0
    %2922 = vmatprep.subr.mxu0 0.0
    %2923 = vmatpush1.msra.mxu0 %v2841
    %2924 = vmatprep.subr.mxu0 0.0
    %2925 = vmatpush1.msra.mxu0 %v2842
    %2926 = vmatprep.subr.mxu0 0.0
    %2927 = vmatpush1.msra.mxu0 %v2843
    %2928 = vmatprep.subr.mxu0 0.0
    %2929 = vmatpush1.msra.mxu0 %v2844
    %2930 = vmatprep.subr.mxu0 0.0
    %2931 = vmatpush1.msra.mxu0 %v2845
    %2932 = vmatprep.subr.mxu0 0.0
    %2933 = vmatpush1.msra.mxu0 %v2846
    %2934 = vmatprep.subr.mxu0 0.0
    %2935 = vmatpush1.msra.mxu0 %v2847
    %2936 = vmatprep.subr.mxu0 0.0
    %2937 = vmatpush1.msra.mxu0 %v2848
    %2938 = vmatprep.subr.mxu0 0.0
    %2939 = vmatpush1.msra.mxu0 0.0
    %2940 = vmatprep.subr.mxu0 0.0
    %2941 = vmatpush1.msra.mxu0 0.0
    %2942 = vmatprep.subr.mxu0 0.0
    %2943 = vmatpush1.msra.mxu0 0.0
    %2944 = vmatprep.subr.mxu0 0.0
    %2945 = vmatpush1.msra.mxu0 0.0
    %2946 = vmatprep.subr.mxu0 0.0
    %2947 = vmatpush1.msra.mxu0 0.0
    %2948 = vmatprep.subr.mxu0 0.0
    %2949 = vmatpush1.msra.mxu0 0.0
    %2950 = vmatprep.subr.mxu0 0.0
    %2951 = vmatpush1.msra.mxu0 0.0
    %2952 = vmatprep.subr.mxu0 0.0
    %2953 = vmatpush1.msra.mxu0 0.0
    %2954 = vmatprep.subr.mxu0 0.0
    %2955 = vmatpush1.msra.mxu0 0.0
    %2956 = vmatprep.subr.mxu0 0.0
    %2957 = vmatpush1.msra.mxu0 0.0
    %2958 = vmatprep.subr.mxu0 0.0
    %2959 = vmatpush1.msra.mxu0 0.0
    %2960 = vmatprep.subr.mxu0 0.0
    %2961 = vmatpush1.msra.mxu0 0.0
    %2962 = vmatprep.subr.mxu0 0.0
    %2963 = vmatpush1.msra.mxu0 0.0
    %2964 = vmatprep.subr.mxu0 0.0
    %2965 = vmatpush1.msra.mxu0 0.0
    %2966 = vmatprep.subr.mxu0 0.0
    %2967 = vmatpush1.msra.mxu0 0.0
    %2968 = vmatprep.subr.mxu0 0.0
    %2969 = vmatpush1.msra.mxu0 0.0
    %2970 = vmatprep.subr.mxu0 0.0
    %2971 = vmatpush1.msra.mxu0 0.0
    %2972 = vmatprep.subr.mxu0 0.0
    %2973 = vmatpush1.msra.mxu0 0.0
    %2974 = vmatprep.subr.mxu0 0.0
    %2975 = vmatpush1.msra.mxu0 0.0
    %2976 = vmatprep.subr.mxu0 0.0
    %2977 = vmatpush1.msra.mxu0 0.0
    %2978 = vmatprep.subr.mxu0 0.0
    %2979 = vmatpush1.msra.mxu0 0.0
    %2980 = vmatprep.subr.mxu0 0.0
    %2981 = vmatpush1.msra.mxu0 0.0
    %2982 = vmatprep.subr.mxu0 0.0
    %2983 = vmatpush1.msra.mxu0 0.0
    %2984 = vmatprep.subr.mxu0 0.0
    %2985 = vmatpush1.msra.mxu0 0.0
    %2986 = vmatprep.mubr.f32.mxu0 0.0
    %2987 = vmatmul.mubr.f32.gmra.mrb[0].mxu0 %v2875
    %v2988 = vpop.f32.mrb[0].mxu0
    %v2989 = vadd.f32 0.0, %v2988
    %v2990 = vpop.f32.mrb[0].mxu0
    %2991 = vmatprep.mubr.f32.mxu0 0.0
    %2992 = vmatmul.mubr.f32.gmra.mrb[0].mxu0 %v2878
    %v2993 = vpop.f32.mrb[0].mxu0
    %v2994 = vadd.f32 0.0, %v2993
    %v2995 = vpop.f32.mrb[0].mxu0
    %2996 = vmatprep.mubr.f32.mxu0 0.0
    %2997 = vmatmul.mubr.f32.gmra.mrb[0].mxu0 %v2881
    %v2998 = vpop.f32.mrb[0].mxu0
    %v2999 = vadd.f32 0.0, %v2998
    %v3000 = vpop.f32.mrb[0].mxu0
    %3001 = vmatprep.mubr.f32.mxu0 0.0
    %3002 = vmatmul.mubr.f32.gmra.mrb[0].mxu0 %v2884
    %v3003 = vpop.f32.mrb[0].mxu0
    %v3004 = vadd.f32 0.0, %v3003
    %v3005 = vpop.f32.mrb[0].mxu0
    %3006 = vmatprep.mubr.f32.mxu0 0.0
    %3007 = vmatmul.mubr.f32.gmra.mrb[0].mxu0 %v2887
    %v3008 = vpop.f32.mrb[0].mxu0
    %v3009 = vadd.f32 0.0, %v3008
    %v3010 = vpop.f32.mrb[0].mxu0
    %3011 = vmatprep.mubr.f32.mxu0 0.0
    %3012 = vmatmul.mubr.f32.gmra.mrb[0].mxu0 %v2890
    %v3013 = vpop.f32.mrb[0].mxu0
    %v3014 = vadd.f32 0.0, %v3013
    %v3015 = vpop.f32.mrb[0].mxu0
    %3016 = vmatprep.mubr.f32.mxu0 0.0
    %3017 = vmatmul.mubr.f32.gmra.mrb[0].mxu0 %v2893
    %v3018 = vpop.f32.mrb[0].mxu0
    %v3019 = vadd.f32 0.0, %v3018
    %v3020 = vpop.f32.mrb[0].mxu0
    %3021 = vmatprep.mubr.f32.mxu0 0.0
    %3022 = vmatmul.mubr.f32.gmra.mrb[0].mxu0 %v2896
    %v3023 = vpop.f32.mrb[0].mxu0
    %v3024 = vadd.f32 0.0, %v3023
    %v3025 = vpop.f32.mrb[0].mxu0
    %3026 = vmatprep.mubr.f32.mxu0 0.0
    %3027 = vmatmul.mubr.f32.gmra.mrb[0].mxu0 %v2899
    %v3028 = vpop.f32.mrb[0].mxu0
    %v3029 = vadd.f32 0.0, %v3028
    %v3030 = vpop.f32.mrb[0].mxu0
    %3031 = vmatprep.mubr.f32.mxu0 0.0
    %3032 = vmatmul.mubr.f32.gmra.mrb[0].mxu0 %v2902
    %v3033 = vpop.f32.mrb[0].mxu0
    %v3034 = vadd.f32 0.0, %v3033
    %v3035 = vpop.f32.mrb[0].mxu0
    %3036 = vmatprep.mubr.f32.mxu0 0.0
    %3037 = vmatmul.mubr.f32.gmra.mrb[0].mxu0 %v2905
    %v3038 = vpop.f32.mrb[0].mxu0
    %v3039 = vadd.f32 0.0, %v3038
    %v3040 = vpop.f32.mrb[0].mxu0
    %3041 = vmatprep.mubr.f32.mxu0 0.0
    %3042 = vmatmul.mubr.f32.gmra.mrb[0].mxu0 %v2908
    %v3043 = vpop.f32.mrb[0].mxu0
    %v3044 = vadd.f32 0.0, %v3043
    %v3045 = vpop.f32.mrb[0].mxu0
    %3046 = vmatprep.mubr.f32.mxu0 0.0
    %3047 = vmatmul.mubr.f32.gmra.mrb[0].mxu0 %v2911
    %v3048 = vpop.f32.mrb[0].mxu0
    %v3049 = vadd.f32 0.0, %v3048
    %v3050 = vpop.f32.mrb[0].mxu0
    %3051 = vmatprep.mubr.f32.mxu0 0.0
    %3052 = vmatmul.mubr.f32.gmra.mrb[0].mxu0 %v2914
    %v3053 = vpop.f32.mrb[0].mxu0
    %v3054 = vadd.f32 0.0, %v3053
    %v3055 = vpop.f32.mrb[0].mxu0
    %3056 = vmatprep.mubr.f32.mxu0 0.0
    %3057 = vmatmul.mubr.f32.gmra.mrb[0].mxu0 %v2917
    %v3058 = vpop.f32.mrb[0].mxu0
    %v3059 = vadd.f32 0.0, %v3058
    %v3060 = vpop.f32.mrb[0].mxu0
    %3061 = vmatprep.mubr.f32.mxu0 0.0
    %3062 = vmatmul.mubr.f32.gmra.mrb[0].mxu0 %v2920
    %v3063 = vpop.f32.mrb[0].mxu0
    %v3064 = vadd.f32 0.0, %v3063
    %v3065 = vpop.f32.mrb[0].mxu0
    %3066 = vdwg.mxu0
    %v3067 = vld [vmem:[#allocation10] sm:$0xf]
    %v3068 = vld [vmem:[#allocation10 + $0x4] sm:$0xf]
    %v3069 = vld [vmem:[#allocation10 + $0x8] sm:$0x3]
    %v3070 = vunpack.c.l.bf16 %v3067
    %v3071 = vunpack.c.l.bf16 %v3068
    %v3072 = vunpack.c.l.bf16 %v3069
    %v3073 = vld [vmem:[#allocation11] sm:$0xf]
    %v3074 = vld [vmem:[#allocation11 + $0x4] sm:$0xf]
    %v3075 = vld [vmem:[#allocation11 + $0x8] sm:$0x3]
    %v3076 = vunpack.c.l.bf16 %v3073
    %v3077 = vunpack.c.l.bf16 %v3074
    %v3078 = vunpack.c.l.bf16 %v3075
    %v3080 = vsel %vm2640, %v3009, 0
    %v3083 = vsel %vm2640, %v3014, 0
    %v3086 = vsel %vm2640, %v3019, 0
    %v3089 = vsel %vm2640, %v3024, 0
    %vm3091 = vcmask 1043456
    %v3093 = vsel %vm3091, %v3078, 0
    %3095 = vmatprep.subr.mxu0 0.0
    %3096 = vmatpush1.msra.mxu0 %v3076
    %3097 = vmatprep.subr.mxu0 0.0
    %3098 = vmatpush1.msra.mxu0 %v3077
    %3099 = vmatprep.subr.mxu0 0.0
    %3100 = vmatpush1.msra.mxu0 %v3093
    %3101 = vmatprep.subr.mxu0 0.0
    %3102 = vmatpush1.msra.mxu0 0.0
    %3103 = vmatprep.subr.mxu0 0.0
    %3104 = vmatpush1.msra.mxu0 0.0
    %3105 = vmatprep.subr.mxu0 0.0
    %3106 = vmatpush1.msra.mxu0 0.0
    %3107 = vmatprep.subr.mxu0 0.0
    %3108 = vmatpush1.msra.mxu0 0.0
    %3109 = vmatprep.subr.mxu0 0.0
    %3110 = vmatpush1.msra.mxu0 0.0
    %3111 = vmatprep.subr.mxu0 0.0
    %3112 = vmatpush1.msra.mxu0 0.0
    %3113 = vmatprep.subr.mxu0 0.0
    %3114 = vmatpush1.msra.mxu0 0.0
    %3115 = vmatprep.subr.mxu0 0.0
    %3116 = vmatpush1.msra.mxu0 0.0
    %3117 = vmatprep.subr.mxu0 0.0
    %3118 = vmatpush1.msra.mxu0 0.0
    %3119 = vmatprep.subr.mxu0 0.0
    %3120 = vmatpush1.msra.mxu0 0.0
    %3121 = vmatprep.subr.mxu0 0.0
    %3122 = vmatpush1.msra.mxu0 0.0
    %3123 = vmatprep.subr.mxu0 0.0
    %3124 = vmatpush1.msra.mxu0 0.0
    %3125 = vmatprep.subr.mxu0 0.0
    %3126 = vmatpush1.msra.mxu0 0.0
    %3127 = vmatprep.subr.mxu0 0.0
    %3128 = vmatpush1.msra.mxu0 0.0
    %3129 = vmatprep.subr.mxu0 0.0
    %3130 = vmatpush1.msra.mxu0 0.0
    %3131 = vmatprep.subr.mxu0 0.0
    %3132 = vmatpush1.msra.mxu0 0.0
    %3133 = vmatprep.subr.mxu0 0.0
    %3134 = vmatpush1.msra.mxu0 0.0
    %3135 = vmatprep.subr.mxu0 0.0
    %3136 = vmatpush1.msra.mxu0 0.0
    %3137 = vmatprep.subr.mxu0 0.0
    %3138 = vmatpush1.msra.mxu0 0.0
    %3139 = vmatprep.subr.mxu0 0.0
    %3140 = vmatpush1.msra.mxu0 0.0
    %3141 = vmatprep.subr.mxu0 0.0
    %3142 = vmatpush1.msra.mxu0 0.0
    %3143 = vmatprep.subr.mxu0 0.0
    %3144 = vmatpush1.msra.mxu0 0.0
    %3145 = vmatprep.subr.mxu0 0.0
    %3146 = vmatpush1.msra.mxu0 0.0
    %3147 = vmatprep.subr.mxu0 0.0
    %3148 = vmatpush1.msra.mxu0 0.0
    %3149 = vmatprep.subr.mxu0 0.0
    %3150 = vmatpush1.msra.mxu0 0.0
    %3151 = vmatprep.subr.mxu0 0.0
    %3152 = vmatpush1.msra.mxu0 0.0
    %3153 = vmatprep.subr.mxu0 0.0
    %3154 = vmatpush1.msra.mxu0 0.0
    %3155 = vmatprep.subr.mxu0 0.0
    %3156 = vmatpush1.msra.mxu0 0.0
    %3157 = vmatprep.subr.mxu0 0.0
    %3158 = vmatpush1.msra.mxu0 0.0
    %3159 = vmatprep.mubr.f32.mxu0 0.0
    %3160 = vmatmul.mubr.f32.gmra.mrb[0].mxu0 %v3080
    %v3161 = vpop.f32.mrb[0].mxu0
    %v3162 = vadd.f32 0.0, %v3161
    %v3163 = vpop.f32.mrb[0].mxu0
    %3164 = vmatprep.mubr.f32.mxu0 0.0
    %3165 = vmatmul.mubr.f32.gmra.mrb[0].mxu0 %v3083
    %v3166 = vpop.f32.mrb[0].mxu0
    %v3167 = vadd.f32 0.0, %v3166
    %v3168 = vpop.f32.mrb[0].mxu0
    %3169 = vmatprep.mubr.f32.mxu0 0.0
    %3170 = vmatmul.mubr.f32.gmra.mrb[0].mxu0 %v3086
    %v3171 = vpop.f32.mrb[0].mxu0
    %v3172 = vadd.f32 0.0, %v3171
    %v3173 = vpop.f32.mrb[0].mxu0
    %3174 = vmatprep.mubr.f32.mxu0 0.0
    %3175 = vmatmul.mubr.f32.gmra.mrb[0].mxu0 %v3089
    %v3176 = vpop.f32.mrb[0].mxu0
    %v3177 = vadd.f32 0.0, %v3176
    %v3178 = vpop.f32.mrb[0].mxu0
    %3179 = vdwg.mxu0
    %v3181 = vsel %vm2640, %v2989, 0
    %v3184 = vsel %vm2640, %v2994, 0
    %v3187 = vsel %vm2640, %v2999, 0
    %v3190 = vsel %vm2640, %v3004, 0
    %v3193 = vsel %vm3091, %v3072, 0
    %3195 = vmatprep.subr.mxu0 0.0
    %3196 = vmatpush1.msra.mxu0 %v3070
    %3197 = vmatprep.subr.mxu0 0.0
    %3198 = vmatpush1.msra.mxu0 %v3071
    %3199 = vmatprep.subr.mxu0 0.0
    %3200 = vmatpush1.msra.mxu0 %v3193
    %3201 = vmatprep.subr.mxu0 0.0
    %3202 = vmatpush1.msra.mxu0 0.0
    %3203 = vmatprep.subr.mxu0 0.0
    %3204 = vmatpush1.msra.mxu0 0.0
    %3205 = vmatprep.subr.mxu0 0.0
    %3206 = vmatpush1.msra.mxu0 0.0
    %3207 = vmatprep.subr.mxu0 0.0
    %3208 = vmatpush1.msra.mxu0 0.0
    %3209 = vmatprep.subr.mxu0 0.0
    %3210 = vmatpush1.msra.mxu0 0.0
    %3211 = vmatprep.subr.mxu0 0.0
    %3212 = vmatpush1.msra.mxu0 0.0
    %3213 = vmatprep.subr.mxu0 0.0
    %3214 = vmatpush1.msra.mxu0 0.0
    %3215 = vmatprep.subr.mxu0 0.0
    %3216 = vmatpush1.msra.mxu0 0.0
    %3217 = vmatprep.subr.mxu0 0.0
    %3218 = vmatpush1.msra.mxu0 0.0
    %3219 = vmatprep.subr.mxu0 0.0
    %3220 = vmatpush1.msra.mxu0 0.0
    %3221 = vmatprep.subr.mxu0 0.0
    %3222 = vmatpush1.msra.mxu0 0.0
    %3223 = vmatprep.subr.mxu0 0.0
    %3224 = vmatpush1.msra.mxu0 0.0
    %3225 = vmatprep.subr.mxu0 0.0
    %3226 = vmatpush1.msra.mxu0 0.0
    %3227 = vmatprep.subr.mxu0 0.0
    %3228 = vmatpush1.msra.mxu0 0.0
    %3229 = vmatprep.subr.mxu0 0.0
    %3230 = vmatpush1.msra.mxu0 0.0
    %3231 = vmatprep.subr.mxu0 0.0
    %3232 = vmatpush1.msra.mxu0 0.0
    %3233 = vmatprep.subr.mxu0 0.0
    %3234 = vmatpush1.msra.mxu0 0.0
    %3235 = vmatprep.subr.mxu0 0.0
    %3236 = vmatpush1.msra.mxu0 0.0
    %3237 = vmatprep.subr.mxu0 0.0
    %3238 = vmatpush1.msra.mxu0 0.0
    %3239 = vmatprep.subr.mxu0 0.0
    %3240 = vmatpush1.msra.mxu0 0.0
    %3241 = vmatprep.subr.mxu0 0.0
    %3242 = vmatpush1.msra.mxu0 0.0
    %3243 = vmatprep.subr.mxu0 0.0
    %3244 = vmatpush1.msra.mxu0 0.0
    %3245 = vmatprep.subr.mxu0 0.0
    %3246 = vmatpush1.msra.mxu0 0.0
    %3247 = vmatprep.subr.mxu0 0.0
    %3248 = vmatpush1.msra.mxu0 0.0
    %3249 = vmatprep.subr.mxu0 0.0
    %3250 = vmatpush1.msra.mxu0 0.0
    %3251 = vmatprep.subr.mxu0 0.0
    %3252 = vmatpush1.msra.mxu0 0.0
    %3253 = vmatprep.subr.mxu0 0.0
    %3254 = vmatpush1.msra.mxu0 0.0
    %3255 = vmatprep.subr.mxu0 0.0
    %3256 = vmatpush1.msra.mxu0 0.0
    %3257 = vmatprep.subr.mxu0 0.0
    %3258 = vmatpush1.msra.mxu0 0.0
    %3259 = vmatprep.mubr.f32.mxu0 0.0
    %3260 = vmatmul.mubr.f32.gmra.mrb[0].mxu0 %v3181
    %v3261 = vpop.f32.mrb[0].mxu0
    %v3262 = vadd.f32 %v3162, %v3261
    %v3263 = vpop.f32.mrb[0].mxu0
    %3264 = vmatprep.mubr.f32.mxu0 0.0
    %3265 = vmatmul.mubr.f32.gmra.mrb[0].mxu0 %v3184
    %v3266 = vpop.f32.mrb[0].mxu0
    %v3267 = vadd.f32 %v3167, %v3266
    %v3268 = vpop.f32.mrb[0].mxu0
    %3269 = vmatprep.mubr.f32.mxu0 0.0
    %3270 = vmatmul.mubr.f32.gmra.mrb[0].mxu0 %v3187
    %v3271 = vpop.f32.mrb[0].mxu0
    %v3272 = vadd.f32 %v3172, %v3271
    %v3273 = vpop.f32.mrb[0].mxu0
    %3274 = vmatprep.mubr.f32.mxu0 0.0
    %3275 = vmatmul.mubr.f32.gmra.mrb[0].mxu0 %v3190
    %v3276 = vpop.f32.mrb[0].mxu0
    %v3277 = vadd.f32 %v3177, %v3276
    %v3278 = vpop.f32.mrb[0].mxu0
    %3279 = vdwg.mxu0
    %v3280 = vld [vmem:[#allocation13] sm:$0xf]
    %v3281 = vld [vmem:[#allocation13 + $0x4] sm:$0xf]
    %v3282 = vld [vmem:[#allocation13 + $0x8] sm:$0x3]
    %v3283 = vunpack.c.l.bf16 %v3280
    %v3284 = vunpack.c.l.bf16 %v3281
    %v3285 = vunpack.c.l.bf16 %v3282
    %v3287 = vsel %vm2640, %v3029, 0
    %v3290 = vsel %vm2640, %v3034, 0
    %v3293 = vsel %vm2640, %v3039, 0
    %v3296 = vsel %vm2640, %v3044, 0
    %v3299 = vsel %vm3091, %v3285, 0
    %3301 = vmatprep.subr.mxu0 0.0
    %3302 = vmatpush1.msra.mxu0 %v3283
    %3303 = vmatprep.subr.mxu0 0.0
    %3304 = vmatpush1.msra.mxu0 %v3284
    %3305 = vmatprep.subr.mxu0 0.0
    %3306 = vmatpush1.msra.mxu0 %v3299
    %3307 = vmatprep.subr.mxu0 0.0
    %3308 = vmatpush1.msra.mxu0 0.0
    %3309 = vmatprep.subr.mxu0 0.0
    %3310 = vmatpush1.msra.mxu0 0.0
    %3311 = vmatprep.subr.mxu0 0.0
    %3312 = vmatpush1.msra.mxu0 0.0
    %3313 = vmatprep.subr.mxu0 0.0
    %3314 = vmatpush1.msra.mxu0 0.0
    %3315 = vmatprep.subr.mxu0 0.0
    %3316 = vmatpush1.msra.mxu0 0.0
    %3317 = vmatprep.subr.mxu0 0.0
    %3318 = vmatpush1.msra.mxu0 0.0
    %3319 = vmatprep.subr.mxu0 0.0
    %3320 = vmatpush1.msra.mxu0 0.0
    %3321 = vmatprep.subr.mxu0 0.0
    %3322 = vmatpush1.msra.mxu0 0.0
    %3323 = vmatprep.subr.mxu0 0.0
    %3324 = vmatpush1.msra.mxu0 0.0
    %3325 = vmatprep.subr.mxu0 0.0
    %3326 = vmatpush1.msra.mxu0 0.0
    %3327 = vmatprep.subr.mxu0 0.0
    %3328 = vmatpush1.msra.mxu0 0.0
    %3329 = vmatprep.subr.mxu0 0.0
    %3330 = vmatpush1.msra.mxu0 0.0
    %3331 = vmatprep.subr.mxu0 0.0
    %3332 = vmatpush1.msra.mxu0 0.0
    %3333 = vmatprep.subr.mxu0 0.0
    %3334 = vmatpush1.msra.mxu0 0.0
    %3335 = vmatprep.subr.mxu0 0.0
    %3336 = vmatpush1.msra.mxu0 0.0
    %3337 = vmatprep.subr.mxu0 0.0
    %3338 = vmatpush1.msra.mxu0 0.0
    %3339 = vmatprep.subr.mxu0 0.0
    %3340 = vmatpush1.msra.mxu0 0.0
    %3341 = vmatprep.subr.mxu0 0.0
    %3342 = vmatpush1.msra.mxu0 0.0
    %3343 = vmatprep.subr.mxu0 0.0
    %3344 = vmatpush1.msra.mxu0 0.0
    %3345 = vmatprep.subr.mxu0 0.0
    %3346 = vmatpush1.msra.mxu0 0.0
    %3347 = vmatprep.subr.mxu0 0.0
    %3348 = vmatpush1.msra.mxu0 0.0
    %3349 = vmatprep.subr.mxu0 0.0
    %3350 = vmatpush1.msra.mxu0 0.0
    %3351 = vmatprep.subr.mxu0 0.0
    %3352 = vmatpush1.msra.mxu0 0.0
    %3353 = vmatprep.subr.mxu0 0.0
    %3354 = vmatpush1.msra.mxu0 0.0
    %3355 = vmatprep.subr.mxu0 0.0
    %3356 = vmatpush1.msra.mxu0 0.0
    %3357 = vmatprep.subr.mxu0 0.0
    %3358 = vmatpush1.msra.mxu0 0.0
    %3359 = vmatprep.subr.mxu0 0.0
    %3360 = vmatpush1.msra.mxu0 0.0
    %3361 = vmatprep.subr.mxu0 0.0
    %3362 = vmatpush1.msra.mxu0 0.0
    %3363 = vmatprep.subr.mxu0 0.0
    %3364 = vmatpush1.msra.mxu0 0.0
    %3365 = vmatprep.mubr.f32.mxu0 0.0
    %3366 = vmatmul.mubr.f32.gmra.mrb[0].mxu0 %v3287
    %v3367 = vpop.f32.mrb[0].mxu0
    %v3368 = vadd.f32 0.0, %v3367
    %v3369 = vpop.f32.mrb[0].mxu0
    %3370 = vmatprep.mubr.f32.mxu0 0.0
    %3371 = vmatmul.mubr.f32.gmra.mrb[0].mxu0 %v3290
    %v3372 = vpop.f32.mrb[0].mxu0
    %v3373 = vadd.f32 0.0, %v3372
    %v3374 = vpop.f32.mrb[0].mxu0
    %3375 = vmatprep.mubr.f32.mxu0 0.0
    %3376 = vmatmul.mubr.f32.gmra.mrb[0].mxu0 %v3293
    %v3377 = vpop.f32.mrb[0].mxu0
    %v3378 = vadd.f32 0.0, %v3377
    %v3379 = vpop.f32.mrb[0].mxu0
    %3380 = vmatprep.mubr.f32.mxu0 0.0
    %3381 = vmatmul.mubr.f32.gmra.mrb[0].mxu0 %v3296
    %v3382 = vpop.f32.mrb[0].mxu0
    %v3383 = vadd.f32 0.0, %v3382
    %v3384 = vpop.f32.mrb[0].mxu0
    %3385 = vdwg.mxu0
    %v3386 = vadd.f32 %v3262, %v3368
    %v3387 = vadd.f32 %v3267, %v3373
    %v3388 = vadd.f32 %v3272, %v3378
    %v3389 = vadd.f32 %v3277, %v3383
    %v3390 = vld [vmem:[#allocation14] sm:$0xf]
    %v3391 = vld [vmem:[#allocation14 + $0x4] sm:$0xf]
    %v3392 = vld [vmem:[#allocation14 + $0x8] sm:$0x3]
    %v3393 = vunpack.c.l.bf16 %v3390
    %v3394 = vunpack.c.l.bf16 %v3391
    %v3395 = vunpack.c.l.bf16 %v3392
    %v3397 = vsel %vm2640, %v3049, 0
    %v3400 = vsel %vm2640, %v3054, 0
    %v3403 = vsel %vm2640, %v3059, 0
    %v3406 = vsel %vm2640, %v3064, 0
    %v3409 = vsel %vm3091, %v3395, 0
    %3411 = vmatprep.subr.mxu0 0.0
    %3412 = vmatpush1.msra.mxu0 %v3393
    %3413 = vmatprep.subr.mxu0 0.0
    %3414 = vmatpush1.msra.mxu0 %v3394
    %3415 = vmatprep.subr.mxu0 0.0
    %3416 = vmatpush1.msra.mxu0 %v3409
    %3417 = vmatprep.subr.mxu0 0.0
    %3418 = vmatpush1.msra.mxu0 0.0
    %3419 = vmatprep.subr.mxu0 0.0
    %3420 = vmatpush1.msra.mxu0 0.0
    %3421 = vmatprep.subr.mxu0 0.0
    %3422 = vmatpush1.msra.mxu0 0.0
    %3423 = vmatprep.subr.mxu0 0.0
    %3424 = vmatpush1.msra.mxu0 0.0
    %3425 = vmatprep.subr.mxu0 0.0
    %3426 = vmatpush1.msra.mxu0 0.0
    %3427 = vmatprep.subr.mxu0 0.0
    %3428 = vmatpush1.msra.mxu0 0.0
    %3429 = vmatprep.subr.mxu0 0.0
    %3430 = vmatpush1.msra.mxu0 0.0
    %3431 = vmatprep.subr.mxu0 0.0
    %3432 = vmatpush1.msra.mxu0 0.0
    %3433 = vmatprep.subr.mxu0 0.0
    %3434 = vmatpush1.msra.mxu0 0.0
    %3435 = vmatprep.subr.mxu0 0.0
    %3436 = vmatpush1.msra.mxu0 0.0
    %3437 = vmatprep.subr.mxu0 0.0
    %3438 = vmatpush1.msra.mxu0 0.0
    %3439 = vmatprep.subr.mxu0 0.0
    %3440 = vmatpush1.msra.mxu0 0.0
    %3441 = vmatprep.subr.mxu0 0.0
    %3442 = vmatpush1.msra.mxu0 0.0
    %3443 = vmatprep.subr.mxu0 0.0
    %3444 = vmatpush1.msra.mxu0 0.0
    %3445 = vmatprep.subr.mxu0 0.0
    %3446 = vmatpush1.msra.mxu0 0.0
    %3447 = vmatprep.subr.mxu0 0.0
    %3448 = vmatpush1.msra.mxu0 0.0
    %3449 = vmatprep.subr.mxu0 0.0
    %3450 = vmatpush1.msra.mxu0 0.0
    %3451 = vmatprep.subr.mxu0 0.0
    %3452 = vmatpush1.msra.mxu0 0.0
    %3453 = vmatprep.subr.mxu0 0.0
    %3454 = vmatpush1.msra.mxu0 0.0
    %3455 = vmatprep.subr.mxu0 0.0
    %3456 = vmatpush1.msra.mxu0 0.0
    %3457 = vmatprep.subr.mxu0 0.0
    %3458 = vmatpush1.msra.mxu0 0.0
    %3459 = vmatprep.subr.mxu0 0.0
    %3460 = vmatpush1.msra.mxu0 0.0
    %3461 = vmatprep.subr.mxu0 0.0
    %3462 = vmatpush1.msra.mxu0 0.0
    %3463 = vmatprep.subr.mxu0 0.0
    %3464 = vmatpush1.msra.mxu0 0.0
    %3465 = vmatprep.subr.mxu0 0.0
    %3466 = vmatpush1.msra.mxu0 0.0
    %3467 = vmatprep.subr.mxu0 0.0
    %3468 = vmatpush1.msra.mxu0 0.0
    %3469 = vmatprep.subr.mxu0 0.0
    %3470 = vmatpush1.msra.mxu0 0.0
    %3471 = vmatprep.subr.mxu0 0.0
    %3472 = vmatpush1.msra.mxu0 0.0
    %3473 = vmatprep.subr.mxu0 0.0
    %3474 = vmatpush1.msra.mxu0 0.0
    %3475 = vmatprep.mubr.f32.mxu0 0.0
    %3476 = vmatmul.mubr.f32.gmra.mrb[0].mxu0 %v3397
    %v3477 = vpop.f32.mrb[0].mxu0
    %v3478 = vadd.f32 0.0, %v3477
    %v3479 = vpop.f32.mrb[0].mxu0
    %3480 = vmatprep.mubr.f32.mxu0 0.0
    %3481 = vmatmul.mubr.f32.gmra.mrb[0].mxu0 %v3400
    %v3482 = vpop.f32.mrb[0].mxu0
    %v3483 = vadd.f32 0.0, %v3482
    %v3484 = vpop.f32.mrb[0].mxu0
    %3485 = vmatprep.mubr.f32.mxu0 0.0
    %3486 = vmatmul.mubr.f32.gmra.mrb[0].mxu0 %v3403
    %v3487 = vpop.f32.mrb[0].mxu0
    %v3488 = vadd.f32 0.0, %v3487
    %v3489 = vpop.f32.mrb[0].mxu0
    %3490 = vmatprep.mubr.f32.mxu0 0.0
    %3491 = vmatmul.mubr.f32.gmra.mrb[0].mxu0 %v3406
    %v3492 = vpop.f32.mrb[0].mxu0
    %v3493 = vadd.f32 0.0, %v3492
    %v3494 = vpop.f32.mrb[0].mxu0
    %3495 = vdwg.mxu0
    %v3496 = vadd.f32 %v3386, %v3478
    %v3497 = vadd.f32 %v3387, %v3483
    %v3498 = vadd.f32 %v3388, %v3488
    %v3499 = vadd.f32 %v3389, %v3493
    %vm3500 = vcmask 326656
    %v3501 = vsel %vm3500, %v3496, 0.0
    %3502 = vadd.xlane.f32.xlu0 %v3501
    %v3503 = vpop.xlane.xlu0 %3502
    %v3504 = vsel %vm3500, %v3497, 0.0
    %3505 = vadd.xlane.f32.xlu0 %v3504
    %v3506 = vpop.xlane.xlu0 %3505
    %v3507 = vsel %vm3500, %v3498, 0.0
    %3508 = vadd.xlane.f32.xlu0 %v3507
    %v3509 = vpop.xlane.xlu0 %3508
    %v3510 = vsel %vm3500, %v3499, 0.0
    %3511 = vadd.xlane.f32.xlu0 %v3510
    %v3512 = vpop.xlane.xlu0 %3511
    %v3513 = vmul.f32 %v3503, 0.025
    %v3514 = vmul.f32 %v3506, 0.025
    %v3515 = vmul.f32 %v3509, 0.025
    %v3516 = vmul.f32 %v3512, 0.025
    %v3517 = vsub.f32 %v3496, %v3513
    %v3518 = vsub.f32 %v3497, %v3514
    %v3519 = vsub.f32 %v3498, %v3515
    %v3520 = vsub.f32 %v3499, %v3516
    %v3521 = vmul.f32 %v3517, %v3517
    %v3522 = vmul.f32 %v3518, %v3518
    %v3523 = vmul.f32 %v3519, %v3519
    %v3524 = vmul.f32 %v3520, %v3520
    %v3525 = vsel %vm3500, %v3521, 0.0
    %3526 = vadd.xlane.f32.xlu0 %v3525
    %v3527 = vpop.xlane.xlu0 %3526
    %v3528 = vsel %vm3500, %v3522, 0.0
    %3529 = vadd.xlane.f32.xlu0 %v3528
    %v3530 = vpop.xlane.xlu0 %3529
    %v3531 = vsel %vm3500, %v3523, 0.0
    %3532 = vadd.xlane.f32.xlu0 %v3531
    %v3533 = vpop.xlane.xlu0 %3532
    %v3534 = vsel %vm3500, %v3524, 0.0
    %3535 = vadd.xlane.f32.xlu0 %v3534
    %v3536 = vpop.xlane.xlu0 %3535
    %v3537 = vmul.f32 %v3527, 0.025
    %v3538 = vmul.f32 %v3530, 0.025
    %v3539 = vmul.f32 %v3533, 0.025
    %v3540 = vmul.f32 %v3536, 0.025
    %v3541 = vadd.f32 %v3537, 1e-05
    %v3542 = vadd.f32 %v3538, 1e-05
    %v3543 = vadd.f32 %v3539, 1e-05
    %v3544 = vadd.f32 %v3540, 1e-05
    %v3545 = vrsqrt.pop %v3541
    %v3546 = vrsqrt.pop %v3542
    %v3547 = vrsqrt.pop %v3543
    %v3548 = vrsqrt.pop %v3544
    %v3549 = vmul.f32 %v3517, %v3545
    %v3550 = vmul.f32 %v3518, %v3546
    %v3551 = vmul.f32 %v3519, %v3547
    %v3552 = vmul.f32 %v3520, %v3548
    %3554 = vset.pattern.permute.xlu0 0
    %3555 = vperm.xlu0 %3554, %v2865
    %v3556 = vpop.permute.xlu0 %3555
    %3559 = vset.pattern.permute.xlu0 0
    %3560 = vperm.xlu0 %3559, %v2866
    %v3561 = vpop.permute.xlu0 %3560
    %3564 = vset.pattern.permute.xlu0 0
    %3565 = vperm.xlu0 %3564, %v2867
    %v3566 = vpop.permute.xlu0 %3565
    %3569 = vset.pattern.permute.xlu0 0
    %3570 = vperm.xlu0 %3569, %v2868
    %v3571 = vpop.permute.xlu0 %3570
    %v3573 = vmul.f32 %v3549, %v3556
    %v3574 = vmul.f32 %v3550, %v3561
    %v3575 = vmul.f32 %v3551, %v3566
    %v3576 = vmul.f32 %v3552, %v3571
    %3578 = vset.pattern.permute.xlu0 0
    %3579 = vperm.xlu0 %3578, %v2869
    %v3580 = vpop.permute.xlu0 %3579
    %3583 = vset.pattern.permute.xlu0 0
    %3584 = vperm.xlu0 %3583, %v2870
    %v3585 = vpop.permute.xlu0 %3584
    %3588 = vset.pattern.permute.xlu0 0
    %3589 = vperm.xlu0 %3588, %v2871
    %v3590 = vpop.permute.xlu0 %3589
    %3593 = vset.pattern.permute.xlu0 0
    %3594 = vperm.xlu0 %3593, %v2872
    %v3595 = vpop.permute.xlu0 %3594
    %v3597 = vadd.f32 %v3573, %v3580
    %v3598 = vadd.f32 %v3574, %v3585
    %v3599 = vadd.f32 %v3575, %v3590
    %v3600 = vadd.f32 %v3576, %v3595
    %v3601 = vmax.f32 %v3597, 0.0
    %v3602 = vmax.f32 %v3598, 0.0
    %v3603 = vmax.f32 %v3599, 0.0
    %v3604 = vmax.f32 %v3600, 0.0
    %v3605 = vld [vmem:[%s43] sm:$0xff]
    %v3606 = vld [vmem:[%s43 + $0x8] sm:$0xff]
    %v3607 = vld [vmem:[%s43 + $0x10] sm:$0xff]
    %v3608 = vld [vmem:[%s43 + $0x18] sm:$0xff]
    %v3609 = vld [vmem:[%s43 + $0x20] sm:$0xff]
    %v3610 = vld [vmem:[%s43 + $0x28] sm:$0xff]
    %v3611 = vld [vmem:[%s43 + $0x30] sm:$0xff]
    %v3612 = vld [vmem:[%s43 + $0x38] sm:$0xff]
    %v3613 = vld [vmem:[%s45] sm:$0xff]
    %v3614 = vld [vmem:[%s45 + $0x8] sm:$0xff]
    %v3615 = vld [vmem:[%s47] sm:$0xff]
    %v3616 = vld [vmem:[%s47 + $0x8] sm:$0xff]
    %vm3617 = vcmask 261120
    %v3619 = vsel %vm3617, %v3605, 0
    %v3622 = vsel %vm3617, %v3606, 0
    %v3625 = vsel %vm3617, %v3607, 0
    %v3628 = vsel %vm3617, %v3608, 0
    %v3631 = vsel %vm3617, %v3609, 0
    %v3634 = vsel %vm3617, %v3610, 0
    %v3637 = vsel %vm3617, %v3611, 0
    %v3640 = vsel %vm3617, %v3612, 0
    %3642 = vmatprep.subr.mxu0 0.0
    %3643 = vmatpush1.msra.mxu0 %v3601
    %3644 = vmatprep.subr.mxu0 0.0
    %3645 = vmatpush1.msra.mxu0 %v3602
    %3646 = vmatprep.subr.mxu0 0.0
    %3647 = vmatpush1.msra.mxu0 %v3603
    %3648 = vmatprep.subr.mxu0 0.0
    %3649 = vmatpush1.msra.mxu0 %v3604
    %3650 = vmatprep.subr.mxu0 0.0
    %3651 = vmatpush1.msra.mxu0 0.0
    %3652 = vmatprep.subr.mxu0 0.0
    %3653 = vmatpush1.msra.mxu0 0.0
    %3654 = vmatprep.subr.mxu0 0.0
    %3655 = vmatpush1.msra.mxu0 0.0
    %3656 = vmatprep.subr.mxu0 0.0
    %3657 = vmatpush1.msra.mxu0 0.0
    %3658 = vmatprep.subr.mxu0 0.0
    %3659 = vmatpush1.msra.mxu0 0.0
    %3660 = vmatprep.subr.mxu0 0.0
    %3661 = vmatpush1.msra.mxu0 0.0
    %3662 = vmatprep.subr.mxu0 0.0
    %3663 = vmatpush1.msra.mxu0 0.0
    %3664 = vmatprep.subr.mxu0 0.0
    %3665 = vmatpush1.msra.mxu0 0.0
    %3666 = vmatprep.subr.mxu0 0.0
    %3667 = vmatpush1.msra.mxu0 0.0
    %3668 = vmatprep.subr.mxu0 0.0
    %3669 = vmatpush1.msra.mxu0 0.0
    %3670 = vmatprep.subr.mxu0 0.0
    %3671 = vmatpush1.msra.mxu0 0.0
    %3672 = vmatprep.subr.mxu0 0.0
    %3673 = vmatpush1.msra.mxu0 0.0
    %3674 = vmatprep.subr.mxu0 0.0
    %3675 = vmatpush1.msra.mxu0 0.0
    %3676 = vmatprep.subr.mxu0 0.0
    %3677 = vmatpush1.msra.mxu0 0.0
    %3678 = vmatprep.subr.mxu0 0.0
    %3679 = vmatpush1.msra.mxu0 0.0
    %3680 = vmatprep.subr.mxu0 0.0
    %3681 = vmatpush1.msra.mxu0 0.0
    %3682 = vmatprep.subr.mxu0 0.0
    %3683 = vmatpush1.msra.mxu0 0.0
    %3684 = vmatprep.subr.mxu0 0.0
    %3685 = vmatpush1.msra.mxu0 0.0
    %3686 = vmatprep.subr.mxu0 0.0
    %3687 = vmatpush1.msra.mxu0 0.0
    %3688 = vmatprep.subr.mxu0 0.0
    %3689 = vmatpush1.msra.mxu0 0.0
    %3690 = vmatprep.subr.mxu0 0.0
    %3691 = vmatpush1.msra.mxu0 0.0
    %3692 = vmatprep.subr.mxu0 0.0
    %3693 = vmatpush1.msra.mxu0 0.0
    %3694 = vmatprep.subr.mxu0 0.0
    %3695 = vmatpush1.msra.mxu0 0.0
    %3696 = vmatprep.subr.mxu0 0.0
    %3697 = vmatpush1.msra.mxu0 0.0
    %3698 = vmatprep.subr.mxu0 0.0
    %3699 = vmatpush1.msra.mxu0 0.0
    %3700 = vmatprep.subr.mxu0 0.0
    %3701 = vmatpush1.msra.mxu0 0.0
    %3702 = vmatprep.subr.mxu0 0.0
    %3703 = vmatpush1.msra.mxu0 0.0
    %3704 = vmatprep.subr.mxu0 0.0
    %3705 = vmatpush1.msra.mxu0 0.0
    %3706 = vmatprep.mubr.f32.mxu0 0.0
    %3707 = vmatmul.mubr.f32.gmra.mrb[0].mxu0 %v3619
    %v3708 = vpop.f32.mrb[0].mxu0
    %v3709 = vadd.f32 0.0, %v3708
    %v3710 = vpop.f32.mrb[0].mxu0
    %3711 = vmatprep.mubr.f32.mxu0 0.0
    %3712 = vmatmul.mubr.f32.gmra.mrb[0].mxu0 %v3622
    %v3713 = vpop.f32.mrb[0].mxu0
    %v3714 = vadd.f32 0.0, %v3713
    %v3715 = vpop.f32.mrb[0].mxu0
    %3716 = vmatprep.mubr.f32.mxu0 0.0
    %3717 = vmatmul.mubr.f32.gmra.mrb[0].mxu0 %v3625
    %v3718 = vpop.f32.mrb[0].mxu0
    %v3719 = vadd.f32 0.0, %v3718
    %v3720 = vpop.f32.mrb[0].mxu0
    %3721 = vmatprep.mubr.f32.mxu0 0.0
    %3722 = vmatmul.mubr.f32.gmra.mrb[0].mxu0 %v3628
    %v3723 = vpop.f32.mrb[0].mxu0
    %v3724 = vadd.f32 0.0, %v3723
    %v3725 = vpop.f32.mrb[0].mxu0
    %3726 = vmatprep.mubr.f32.mxu0 0.0
    %3727 = vmatmul.mubr.f32.gmra.mrb[0].mxu0 %v3631
    %v3728 = vpop.f32.mrb[0].mxu0
    %v3729 = vadd.f32 0.0, %v3728
    %v3730 = vpop.f32.mrb[0].mxu0
    %3731 = vmatprep.mubr.f32.mxu0 0.0
    %3732 = vmatmul.mubr.f32.gmra.mrb[0].mxu0 %v3634
    %v3733 = vpop.f32.mrb[0].mxu0
    %v3734 = vadd.f32 0.0, %v3733
    %v3735 = vpop.f32.mrb[0].mxu0
    %3736 = vmatprep.mubr.f32.mxu0 0.0
    %3737 = vmatmul.mubr.f32.gmra.mrb[0].mxu0 %v3637
    %v3738 = vpop.f32.mrb[0].mxu0
    %v3739 = vadd.f32 0.0, %v3738
    %v3740 = vpop.f32.mrb[0].mxu0
    %3741 = vmatprep.mubr.f32.mxu0 0.0
    %3742 = vmatmul.mubr.f32.gmra.mrb[0].mxu0 %v3640
    %v3743 = vpop.f32.mrb[0].mxu0
    %v3744 = vadd.f32 0.0, %v3743
    %v3745 = vpop.f32.mrb[0].mxu0
    %3746 = vdwg.mxu0
    %v3747 = vld [vmem:[%s49] sm:$0xf]
    %v3748 = vld [vmem:[%s49 + $0x4] sm:$0xf]
    %v3749 = vld [vmem:[%s49 + $0x8] sm:$0xf]
    %v3750 = vld [vmem:[%s49 + $0xc] sm:$0xf]
    %v3751 = vld [vmem:[%s49 + $0x10] sm:$0xf]
    %v3752 = vunpack.c.l.bf16 %v3747
    %v3753 = vunpack.c.l.bf16 %v3748
    %v3754 = vunpack.c.l.bf16 %v3749
    %v3755 = vunpack.c.l.bf16 %v3750
    %v3756 = vunpack.c.l.bf16 %v3751
    %v3757 = vld [vmem:[#allocation16] sm:$0xf]
    %v3758 = vld [vmem:[#allocation16 + $0x4] sm:$0xf]
    %v3759 = vld [vmem:[#allocation16 + $0x8] sm:$0xf]
    %v3760 = vld [vmem:[#allocation16 + $0xc] sm:$0xf]
    %v3761 = vld [vmem:[#allocation16 + $0x10] sm:$0xf]
    %v3762 = vunpack.c.l.bf16 %v3757
    %v3763 = vunpack.c.l.bf16 %v3758
    %v3764 = vunpack.c.l.bf16 %v3759
    %v3765 = vunpack.c.l.bf16 %v3760
    %v3766 = vunpack.c.l.bf16 %v3761
    %v3768 = vsel %vm3500, %v3719, 0
    %v3771 = vsel %vm3500, %v3724, 0
    %3773 = vmatprep.subr.mxu0 0.0
    %3774 = vmatpush1.msra.mxu0 %v3762
    %3775 = vmatprep.subr.mxu0 0.0
    %3776 = vmatpush1.msra.mxu0 %v3763
    %3777 = vmatprep.subr.mxu0 0.0
    %3778 = vmatpush1.msra.mxu0 %v3764
    %3779 = vmatprep.subr.mxu0 0.0
    %3780 = vmatpush1.msra.mxu0 %v3765
    %3781 = vmatprep.subr.mxu0 0.0
    %3782 = vmatpush1.msra.mxu0 %v3766
    %3783 = vmatprep.subr.mxu0 0.0
    %3784 = vmatpush1.msra.mxu0 0.0
    %3785 = vmatprep.subr.mxu0 0.0
    %3786 = vmatpush1.msra.mxu0 0.0
    %3787 = vmatprep.subr.mxu0 0.0
    %3788 = vmatpush1.msra.mxu0 0.0
    %3789 = vmatprep.subr.mxu0 0.0
    %3790 = vmatpush1.msra.mxu0 0.0
    %3791 = vmatprep.subr.mxu0 0.0
    %3792 = vmatpush1.msra.mxu0 0.0
    %3793 = vmatprep.subr.mxu0 0.0
    %3794 = vmatpush1.msra.mxu0 0.0
    %3795 = vmatprep.subr.mxu0 0.0
    %3796 = vmatpush1.msra.mxu0 0.0
    %3797 = vmatprep.subr.mxu0 0.0
    %3798 = vmatpush1.msra.mxu0 0.0
    %3799 = vmatprep.subr.mxu0 0.0
    %3800 = vmatpush1.msra.mxu0 0.0
    %3801 = vmatprep.subr.mxu0 0.0
    %3802 = vmatpush1.msra.mxu0 0.0
    %3803 = vmatprep.subr.mxu0 0.0
    %3804 = vmatpush1.msra.mxu0 0.0
    %3805 = vmatprep.subr.mxu0 0.0
    %3806 = vmatpush1.msra.mxu0 0.0
    %3807 = vmatprep.subr.mxu0 0.0
    %3808 = vmatpush1.msra.mxu0 0.0
    %3809 = vmatprep.subr.mxu0 0.0
    %3810 = vmatpush1.msra.mxu0 0.0
    %3811 = vmatprep.subr.mxu0 0.0
    %3812 = vmatpush1.msra.mxu0 0.0
    %3813 = vmatprep.subr.mxu0 0.0
    %3814 = vmatpush1.msra.mxu0 0.0
    %3815 = vmatprep.subr.mxu0 0.0
    %3816 = vmatpush1.msra.mxu0 0.0
    %3817 = vmatprep.subr.mxu0 0.0
    %3818 = vmatpush1.msra.mxu0 0.0
    %3819 = vmatprep.subr.mxu0 0.0
    %3820 = vmatpush1.msra.mxu0 0.0
    %3821 = vmatprep.subr.mxu0 0.0
    %3822 = vmatpush1.msra.mxu0 0.0
    %3823 = vmatprep.subr.mxu0 0.0
    %3824 = vmatpush1.msra.mxu0 0.0
    %3825 = vmatprep.subr.mxu0 0.0
    %3826 = vmatpush1.msra.mxu0 0.0
    %3827 = vmatprep.subr.mxu0 0.0
    %3828 = vmatpush1.msra.mxu0 0.0
    %3829 = vmatprep.subr.mxu0 0.0
    %3830 = vmatpush1.msra.mxu0 0.0
    %3831 = vmatprep.subr.mxu0 0.0
    %3832 = vmatpush1.msra.mxu0 0.0
    %3833 = vmatprep.subr.mxu0 0.0
    %3834 = vmatpush1.msra.mxu0 0.0
    %3835 = vmatprep.subr.mxu0 0.0
    %3836 = vmatpush1.msra.mxu0 0.0
    %3837 = vmatprep.mubr.f32.mxu0 0.0
    %3838 = vmatmul.mubr.f32.gmra.mrb[0].mxu0 %v3768
    %v3839 = vpop.f32.mrb[0].mxu0
    %v3840 = vadd.f32 0.0, %v3839
    %v3841 = vpop.f32.mrb[0].mxu0
    %3842 = vmatprep.mubr.f32.mxu0 0.0
    %3843 = vmatmul.mubr.f32.gmra.mrb[0].mxu0 %v3771
    %v3844 = vpop.f32.mrb[0].mxu0
    %v3845 = vadd.f32 0.0, %v3844
    %v3846 = vpop.f32.mrb[0].mxu0
    %3847 = vdwg.mxu0
    %v3849 = vsel %vm3500, %v3709, 0
    %v3852 = vsel %vm3500, %v3714, 0
    %3854 = vmatprep.subr.mxu0 0.0
    %3855 = vmatpush1.msra.mxu0 %v3752
    %3856 = vmatprep.subr.mxu0 0.0
    %3857 = vmatpush1.msra.mxu0 %v3753
    %3858 = vmatprep.subr.mxu0 0.0
    %3859 = vmatpush1.msra.mxu0 %v3754
    %3860 = vmatprep.subr.mxu0 0.0
    %3861 = vmatpush1.msra.mxu0 %v3755
    %3862 = vmatprep.subr.mxu0 0.0
    %3863 = vmatpush1.msra.mxu0 %v3756
    %3864 = vmatprep.subr.mxu0 0.0
    %3865 = vmatpush1.msra.mxu0 0.0
    %3866 = vmatprep.subr.mxu0 0.0
    %3867 = vmatpush1.msra.mxu0 0.0
    %3868 = vmatprep.subr.mxu0 0.0
    %3869 = vmatpush1.msra.mxu0 0.0
    %3870 = vmatprep.subr.mxu0 0.0
    %3871 = vmatpush1.msra.mxu0 0.0
    %3872 = vmatprep.subr.mxu0 0.0
    %3873 = vmatpush1.msra.mxu0 0.0
    %3874 = vmatprep.subr.mxu0 0.0
    %3875 = vmatpush1.msra.mxu0 0.0
    %3876 = vmatprep.subr.mxu0 0.0
    %3877 = vmatpush1.msra.mxu0 0.0
    %3878 = vmatprep.subr.mxu0 0.0
    %3879 = vmatpush1.msra.mxu0 0.0
    %3880 = vmatprep.subr.mxu0 0.0
    %3881 = vmatpush1.msra.mxu0 0.0
    %3882 = vmatprep.subr.mxu0 0.0
    %3883 = vmatpush1.msra.mxu0 0.0
    %3884 = vmatprep.subr.mxu0 0.0
    %3885 = vmatpush1.msra.mxu0 0.0
    %3886 = vmatprep.subr.mxu0 0.0
    %3887 = vmatpush1.msra.mxu0 0.0
    %3888 = vmatprep.subr.mxu0 0.0
    %3889 = vmatpush1.msra.mxu0 0.0
    %3890 = vmatprep.subr.mxu0 0.0
    %3891 = vmatpush1.msra.mxu0 0.0
    %3892 = vmatprep.subr.mxu0 0.0
    %3893 = vmatpush1.msra.mxu0 0.0
    %3894 = vmatprep.subr.mxu0 0.0
    %3895 = vmatpush1.msra.mxu0 0.0
    %3896 = vmatprep.subr.mxu0 0.0
    %3897 = vmatpush1.msra.mxu0 0.0
    %3898 = vmatprep.subr.mxu0 0.0
    %3899 = vmatpush1.msra.mxu0 0.0
    %3900 = vmatprep.subr.mxu0 0.0
    %3901 = vmatpush1.msra.mxu0 0.0
    %3902 = vmatprep.subr.mxu0 0.0
    %3903 = vmatpush1.msra.mxu0 0.0
    %3904 = vmatprep.subr.mxu0 0.0
    %3905 = vmatpush1.msra.mxu0 0.0
    %3906 = vmatprep.subr.mxu0 0.0
    %3907 = vmatpush1.msra.mxu0 0.0
    %3908 = vmatprep.subr.mxu0 0.0
    %3909 = vmatpush1.msra.mxu0 0.0
    %3910 = vmatprep.subr.mxu0 0.0
    %3911 = vmatpush1.msra.mxu0 0.0
    %3912 = vmatprep.subr.mxu0 0.0
    %3913 = vmatpush1.msra.mxu0 0.0
    %3914 = vmatprep.subr.mxu0 0.0
    %3915 = vmatpush1.msra.mxu0 0.0
    %3916 = vmatprep.subr.mxu0 0.0
    %3917 = vmatpush1.msra.mxu0 0.0
    %3918 = vmatprep.mubr.f32.mxu0 0.0
    %3919 = vmatmul.mubr.f32.gmra.mrb[0].mxu0 %v3849
    %v3920 = vpop.f32.mrb[0].mxu0
    %v3921 = vadd.f32 %v3840, %v3920
    %v3922 = vpop.f32.mrb[0].mxu0
    %3923 = vmatprep.mubr.f32.mxu0 0.0
    %3924 = vmatmul.mubr.f32.gmra.mrb[0].mxu0 %v3852
    %v3925 = vpop.f32.mrb[0].mxu0
    %v3926 = vadd.f32 %v3845, %v3925
    %v3927 = vpop.f32.mrb[0].mxu0
    %3928 = vdwg.mxu0
    %v3929 = vld [vmem:[#allocation17] sm:$0xf]
    %v3930 = vld [vmem:[#allocation17 + $0x4] sm:$0xf]
    %v3931 = vld [vmem:[#allocation17 + $0x8] sm:$0xf]
    %v3932 = vld [vmem:[#allocation17 + $0xc] sm:$0xf]
    %v3933 = vld [vmem:[#allocation17 + $0x10] sm:$0xf]
    %v3934 = vunpack.c.l.bf16 %v3929
    %v3935 = vunpack.c.l.bf16 %v3930
    %v3936 = vunpack.c.l.bf16 %v3931
    %v3937 = vunpack.c.l.bf16 %v3932
    %v3938 = vunpack.c.l.bf16 %v3933
    %v3940 = vsel %vm3500, %v3729, 0
    %v3943 = vsel %vm3500, %v3734, 0
    %3945 = vmatprep.subr.mxu0 0.0
    %3946 = vmatpush1.msra.mxu0 %v3934
    %3947 = vmatprep.subr.mxu0 0.0
    %3948 = vmatpush1.msra.mxu0 %v3935
    %3949 = vmatprep.subr.mxu0 0.0
    %3950 = vmatpush1.msra.mxu0 %v3936
    %3951 = vmatprep.subr.mxu0 0.0
    %3952 = vmatpush1.msra.mxu0 %v3937
    %3953 = vmatprep.subr.mxu0 0.0
    %3954 = vmatpush1.msra.mxu0 %v3938
    %3955 = vmatprep.subr.mxu0 0.0
    %3956 = vmatpush1.msra.mxu0 0.0
    %3957 = vmatprep.subr.mxu0 0.0
    %3958 = vmatpush1.msra.mxu0 0.0
    %3959 = vmatprep.subr.mxu0 0.0
    %3960 = vmatpush1.msra.mxu0 0.0
    %3961 = vmatprep.subr.mxu0 0.0
    %3962 = vmatpush1.msra.mxu0 0.0
    %3963 = vmatprep.subr.mxu0 0.0
    %3964 = vmatpush1.msra.mxu0 0.0
    %3965 = vmatprep.subr.mxu0 0.0
    %3966 = vmatpush1.msra.mxu0 0.0
    %3967 = vmatprep.subr.mxu0 0.0
    %3968 = vmatpush1.msra.mxu0 0.0
    %3969 = vmatprep.subr.mxu0 0.0
    %3970 = vmatpush1.msra.mxu0 0.0
    %3971 = vmatprep.subr.mxu0 0.0
    %3972 = vmatpush1.msra.mxu0 0.0
    %3973 = vmatprep.subr.mxu0 0.0
    %3974 = vmatpush1.msra.mxu0 0.0
    %3975 = vmatprep.subr.mxu0 0.0
    %3976 = vmatpush1.msra.mxu0 0.0
    %3977 = vmatprep.subr.mxu0 0.0
    %3978 = vmatpush1.msra.mxu0 0.0
    %3979 = vmatprep.subr.mxu0 0.0
    %3980 = vmatpush1.msra.mxu0 0.0
    %3981 = vmatprep.subr.mxu0 0.0
    %3982 = vmatpush1.msra.mxu0 0.0
    %3983 = vmatprep.subr.mxu0 0.0
    %3984 = vmatpush1.msra.mxu0 0.0
    %3985 = vmatprep.subr.mxu0 0.0
    %3986 = vmatpush1.msra.mxu0 0.0
    %3987 = vmatprep.subr.mxu0 0.0
    %3988 = vmatpush1.msra.mxu0 0.0
    %3989 = vmatprep.subr.mxu0 0.0
    %3990 = vmatpush1.msra.mxu0 0.0
    %3991 = vmatprep.subr.mxu0 0.0
    %3992 = vmatpush1.msra.mxu0 0.0
    %3993 = vmatprep.subr.mxu0 0.0
    %3994 = vmatpush1.msra.mxu0 0.0
    %3995 = vmatprep.subr.mxu0 0.0
    %3996 = vmatpush1.msra.mxu0 0.0
    %3997 = vmatprep.subr.mxu0 0.0
    %3998 = vmatpush1.msra.mxu0 0.0
    %3999 = vmatprep.subr.mxu0 0.0
    %4000 = vmatpush1.msra.mxu0 0.0
    %4001 = vmatprep.subr.mxu0 0.0
    %4002 = vmatpush1.msra.mxu0 0.0
    %4003 = vmatprep.subr.mxu0 0.0
    %4004 = vmatpush1.msra.mxu0 0.0
    %4005 = vmatprep.subr.mxu0 0.0
    %4006 = vmatpush1.msra.mxu0 0.0
    %4007 = vmatprep.subr.mxu0 0.0
    %4008 = vmatpush1.msra.mxu0 0.0
    %4009 = vmatprep.mubr.f32.mxu0 0.0
    %4010 = vmatmul.mubr.f32.gmra.mrb[0].mxu0 %v3940
    %v4011 = vpop.f32.mrb[0].mxu0
    %v4012 = vadd.f32 0.0, %v4011
    %v4013 = vpop.f32.mrb[0].mxu0
    %4014 = vmatprep.mubr.f32.mxu0 0.0
    %4015 = vmatmul.mubr.f32.gmra.mrb[0].mxu0 %v3943
    %v4016 = vpop.f32.mrb[0].mxu0
    %v4017 = vadd.f32 0.0, %v4016
    %v4018 = vpop.f32.mrb[0].mxu0
    %4019 = vdwg.mxu0
    %v4020 = vadd.f32 %v3921, %v4012
    %v4021 = vadd.f32 %v3926, %v4017
    %v4022 = vld [vmem:[#allocation19] sm:$0xf]
    %v4023 = vld [vmem:[#allocation19 + $0x4] sm:$0xf]
    %v4024 = vld [vmem:[#allocation19 + $0x8] sm:$0xf]
    %v4025 = vld [vmem:[#allocation19 + $0xc] sm:$0xf]
    %v4026 = vld [vmem:[#allocation19 + $0x10] sm:$0xf]
    %v4027 = vunpack.c.l.bf16 %v4022
    %v4028 = vunpack.c.l.bf16 %v4023
    %v4029 = vunpack.c.l.bf16 %v4024
    %v4030 = vunpack.c.l.bf16 %v4025
    %v4031 = vunpack.c.l.bf16 %v4026
    %v4033 = vsel %vm3500, %v3739, 0
    %v4036 = vsel %vm3500, %v3744, 0
    %4038 = vmatprep.subr.mxu0 0.0
    %4039 = vmatpush1.msra.mxu0 %v4027
    %4040 = vmatprep.subr.mxu0 0.0
    %4041 = vmatpush1.msra.mxu0 %v4028
    %4042 = vmatprep.subr.mxu0 0.0
    %4043 = vmatpush1.msra.mxu0 %v4029
    %4044 = vmatprep.subr.mxu0 0.0
    %4045 = vmatpush1.msra.mxu0 %v4030
    %4046 = vmatprep.subr.mxu0 0.0
    %4047 = vmatpush1.msra.mxu0 %v4031
    %4048 = vmatprep.subr.mxu0 0.0
    %4049 = vmatpush1.msra.mxu0 0.0
    %4050 = vmatprep.subr.mxu0 0.0
    %4051 = vmatpush1.msra.mxu0 0.0
    %4052 = vmatprep.subr.mxu0 0.0
    %4053 = vmatpush1.msra.mxu0 0.0
    %4054 = vmatprep.subr.mxu0 0.0
    %4055 = vmatpush1.msra.mxu0 0.0
    %4056 = vmatprep.subr.mxu0 0.0
    %4057 = vmatpush1.msra.mxu0 0.0
    %4058 = vmatprep.subr.mxu0 0.0
    %4059 = vmatpush1.msra.mxu0 0.0
    %4060 = vmatprep.subr.mxu0 0.0
    %4061 = vmatpush1.msra.mxu0 0.0
    %4062 = vmatprep.subr.mxu0 0.0
    %4063 = vmatpush1.msra.mxu0 0.0
    %4064 = vmatprep.subr.mxu0 0.0
    %4065 = vmatpush1.msra.mxu0 0.0
    %4066 = vmatprep.subr.mxu0 0.0
    %4067 = vmatpush1.msra.mxu0 0.0
    %4068 = vmatprep.subr.mxu0 0.0
    %4069 = vmatpush1.msra.mxu0 0.0
    %4070 = vmatprep.subr.mxu0 0.0
    %4071 = vmatpush1.msra.mxu0 0.0
    %4072 = vmatprep.subr.mxu0 0.0
    %4073 = vmatpush1.msra.mxu0 0.0
    %4074 = vmatprep.subr.mxu0 0.0
    %4075 = vmatpush1.msra.mxu0 0.0
    %4076 = vmatprep.subr.mxu0 0.0
    %4077 = vmatpush1.msra.mxu0 0.0
    %4078 = vmatprep.subr.mxu0 0.0
    %4079 = vmatpush1.msra.mxu0 0.0
    %4080 = vmatprep.subr.mxu0 0.0
    %4081 = vmatpush1.msra.mxu0 0.0
    %4082 = vmatprep.subr.mxu0 0.0
    %4083 = vmatpush1.msra.mxu0 0.0
    %4084 = vmatprep.subr.mxu0 0.0
    %4085 = vmatpush1.msra.mxu0 0.0
    %4086 = vmatprep.subr.mxu0 0.0
    %4087 = vmatpush1.msra.mxu0 0.0
    %4088 = vmatprep.subr.mxu0 0.0
    %4089 = vmatpush1.msra.mxu0 0.0
    %4090 = vmatprep.subr.mxu0 0.0
    %4091 = vmatpush1.msra.mxu0 0.0
    %4092 = vmatprep.subr.mxu0 0.0
    %4093 = vmatpush1.msra.mxu0 0.0
    %4094 = vmatprep.subr.mxu0 0.0
    %4095 = vmatpush1.msra.mxu0 0.0
    %4096 = vmatprep.subr.mxu0 0.0
    %4097 = vmatpush1.msra.mxu0 0.0
    %4098 = vmatprep.subr.mxu0 0.0
    %4099 = vmatpush1.msra.mxu0 0.0
    %4100 = vmatprep.subr.mxu0 0.0
    %4101 = vmatpush1.msra.mxu0 0.0
    %4102 = vmatprep.mubr.f32.mxu0 0.0
    %4103 = vmatmul.mubr.f32.gmra.mrb[0].mxu0 %v4033
    %v4104 = vpop.f32.mrb[0].mxu0
    %v4105 = vadd.f32 0.0, %v4104
    %v4106 = vpop.f32.mrb[0].mxu0
    %4107 = vmatprep.mubr.f32.mxu0 0.0
    %4108 = vmatmul.mubr.f32.gmra.mrb[0].mxu0 %v4036
    %v4109 = vpop.f32.mrb[0].mxu0
    %v4110 = vadd.f32 0.0, %v4109
    %v4111 = vpop.f32.mrb[0].mxu0
    %4112 = vdwg.mxu0
    %v4113 = vadd.f32 %v4020, %v4105
    %v4114 = vadd.f32 %v4021, %v4110
    %vm4115 = vcmask 654336
    %v4116 = vsel %vm4115, %v4113, 0.0
    %4117 = vadd.xlane.f32.xlu0 %v4116
    %v4118 = vpop.xlane.xlu0 %4117
    %v4119 = vsel %vm4115, %v4114, 0.0
    %4120 = vadd.xlane.f32.xlu0 %v4119
    %v4121 = vpop.xlane.xlu0 %4120
    %v4122 = vmul.f32 %v4118, 0.0125
    %v4123 = vmul.f32 %v4121, 0.0125
    %v4124 = vsub.f32 %v4113, %v4122
    %v4125 = vsub.f32 %v4114, %v4123
    %v4126 = vmul.f32 %v4124, %v4124
    %v4127 = vmul.f32 %v4125, %v4125
    %v4128 = vsel %vm4115, %v4126, 0.0
    %4129 = vadd.xlane.f32.xlu0 %v4128
    %v4130 = vpop.xlane.xlu0 %4129
    %v4131 = vsel %vm4115, %v4127, 0.0
    %4132 = vadd.xlane.f32.xlu0 %v4131
    %v4133 = vpop.xlane.xlu0 %4132
    %v4134 = vmul.f32 %v4130, 0.0125
    %v4135 = vmul.f32 %v4133, 0.0125
    %v4136 = vadd.f32 %v4134, 1e-05
    %v4137 = vadd.f32 %v4135, 1e-05
    %v4138 = vrsqrt.pop %v4136
    %v4139 = vrsqrt.pop %v4137
    %v4140 = vmul.f32 %v4124, %v4138
    %v4141 = vmul.f32 %v4125, %v4139
    %4143 = vset.pattern.permute.xlu0 0
    %4144 = vperm.xlu0 %4143, %v3613
    %v4145 = vpop.permute.xlu0 %4144
    %4148 = vset.pattern.permute.xlu0 0
    %4149 = vperm.xlu0 %4148, %v3614
    %v4150 = vpop.permute.xlu0 %4149
    %v4152 = vmul.f32 %v4140, %v4145
    %v4153 = vmul.f32 %v4141, %v4150
    %4155 = vset.pattern.permute.xlu0 0
    %4156 = vperm.xlu0 %4155, %v3615
    %v4157 = vpop.permute.xlu0 %4156
    %4160 = vset.pattern.permute.xlu0 0
    %4161 = vperm.xlu0 %4160, %v3616
    %v4162 = vpop.permute.xlu0 %4161
    %v4164 = vadd.f32 %v4152, %v4157
    %v4165 = vadd.f32 %v4153, %v4162
    %v4166 = vmax.f32 %v4164, 0.0
    %v4167 = vmax.f32 %v4165, 0.0
    %v4168 = vld [vmem:[%s57] sm:$0xff]
    %v4169 = vld [vmem:[%s57 + $0x8] sm:$0xff]
    %v4170 = vld [vmem:[%s57 + $0x10] sm:$0xff]
    %v4171 = vld [vmem:[%s57 + $0x18] sm:$0xff]
    %v4172 = vld [vmem:[%s59] sm:$0xff]
    %v4173 = vld [vmem:[%s61] sm:$0xff]
    %vm4174 = vcmask 130048
    %v4176 = vsel %vm4174, %v4168, 0
    %v4179 = vsel %vm4174, %v4169, 0
    %v4182 = vsel %vm4174, %v4170, 0
    %v4185 = vsel %vm4174, %v4171, 0
    %4187 = vmatprep.subr.mxu0 0.0
    %4188 = vmatpush1.msra.mxu0 %v4166
    %4189 = vmatprep.subr.mxu0 0.0
    %4190 = vmatpush1.msra.mxu0 %v4167
    %4191 = vmatprep.subr.mxu0 0.0
    %4192 = vmatpush1.msra.mxu0 0.0
    %4193 = vmatprep.subr.mxu0 0.0
    %4194 = vmatpush1.msra.mxu0 0.0
    %4195 = vmatprep.subr.mxu0 0.0
    %4196 = vmatpush1.msra.mxu0 0.0
    %4197 = vmatprep.subr.mxu0 0.0
    %4198 = vmatpush1.msra.mxu0 0.0
    %4199 = vmatprep.subr.mxu0 0.0
    %4200 = vmatpush1.msra.mxu0 0.0
    %4201 = vmatprep.subr.mxu0 0.0
    %4202 = vmatpush1.msra.mxu0 0.0
    %4203 = vmatprep.subr.mxu0 0.0
    %4204 = vmatpush1.msra.mxu0 0.0
    %4205 = vmatprep.subr.mxu0 0.0
    %4206 = vmatpush1.msra.mxu0 0.0
    %4207 = vmatprep.subr.mxu0 0.0
    %4208 = vmatpush1.msra.mxu0 0.0
    %4209 = vmatprep.subr.mxu0 0.0
    %4210 = vmatpush1.msra.mxu0 0.0
    %4211 = vmatprep.subr.mxu0 0.0
    %4212 = vmatpush1.msra.mxu0 0.0
    %4213 = vmatprep.subr.mxu0 0.0
    %4214 = vmatpush1.msra.mxu0 0.0
    %4215 = vmatprep.subr.mxu0 0.0
    %4216 = vmatpush1.msra.mxu0 0.0
    %4217 = vmatprep.subr.mxu0 0.0
    %4218 = vmatpush1.msra.mxu0 0.0
    %4219 = vmatprep.subr.mxu0 0.0
    %4220 = vmatpush1.msra.mxu0 0.0
    %4221 = vmatprep.subr.mxu0 0.0
    %4222 = vmatpush1.msra.mxu0 0.0
    %4223 = vmatprep.subr.mxu0 0.0
    %4224 = vmatpush1.msra.mxu0 0.0
    %4225 = vmatprep.subr.mxu0 0.0
    %4226 = vmatpush1.msra.mxu0 0.0
    %4227 = vmatprep.subr.mxu0 0.0
    %4228 = vmatpush1.msra.mxu0 0.0
    %4229 = vmatprep.subr.mxu0 0.0
    %4230 = vmatpush1.msra.mxu0 0.0
    %4231 = vmatprep.subr.mxu0 0.0
    %4232 = vmatpush1.msra.mxu0 0.0
    %4233 = vmatprep.subr.mxu0 0.0
    %4234 = vmatpush1.msra.mxu0 0.0
    %4235 = vmatprep.subr.mxu0 0.0
    %4236 = vmatpush1.msra.mxu0 0.0
    %4237 = vmatprep.subr.mxu0 0.0
    %4238 = vmatpush1.msra.mxu0 0.0
    %4239 = vmatprep.subr.mxu0 0.0
    %4240 = vmatpush1.msra.mxu0 0.0
    %4241 = vmatprep.subr.mxu0 0.0
    %4242 = vmatpush1.msra.mxu0 0.0
    %4243 = vmatprep.subr.mxu0 0.0
    %4244 = vmatpush1.msra.mxu0 0.0
    %4245 = vmatprep.subr.mxu0 0.0
    %4246 = vmatpush1.msra.mxu0 0.0
    %4247 = vmatprep.subr.mxu0 0.0
    %4248 = vmatpush1.msra.mxu0 0.0
    %4249 = vmatprep.subr.mxu0 0.0
    %4250 = vmatpush1.msra.mxu0 0.0
    %4251 = vmatprep.mubr.f32.mxu0 0.0
    %4252 = vmatmul.mubr.f32.gmra.mrb[0].mxu0 %v4176
    %v4253 = vpop.f32.mrb[0].mxu0
    %v4254 = vadd.f32 0.0, %v4253
    %v4255 = vpop.f32.mrb[0].mxu0
    %4256 = vmatprep.mubr.f32.mxu0 0.0
    %4257 = vmatmul.mubr.f32.gmra.mrb[0].mxu0 %v4179
    %v4258 = vpop.f32.mrb[0].mxu0
    %v4259 = vadd.f32 0.0, %v4258
    %v4260 = vpop.f32.mrb[0].mxu0
    %4261 = vmatprep.mubr.f32.mxu0 0.0
    %4262 = vmatmul.mubr.f32.gmra.mrb[0].mxu0 %v4182
    %v4263 = vpop.f32.mrb[0].mxu0
    %v4264 = vadd.f32 0.0, %v4263
    %v4265 = vpop.f32.mrb[0].mxu0
    %4266 = vmatprep.mubr.f32.mxu0 0.0
    %4267 = vmatmul.mubr.f32.gmra.mrb[0].mxu0 %v4185
    %v4268 = vpop.f32.mrb[0].mxu0
    %v4269 = vadd.f32 0.0, %v4268
    %v4270 = vpop.f32.mrb[0].mxu0
    %4271 = vdwg.mxu0
    %v4272 = vld [vmem:[%s63] sm:$0xff]
    %v4273 = vld [vmem:[%s63 + $0x8] sm:$0xff]
    %v4274 = vld [vmem:[%s63 + $0x10] sm:$0xff]
    %v4275 = vld [vmem:[%s63 + $0x18] sm:$0xff]
    %v4276 = vld [vmem:[%s63 + $0x20] sm:$0xff]
    %v4277 = vld [vmem:[%s63 + $0x28] sm:$0xff]
    %v4278 = vld [vmem:[%s63 + $0x30] sm:$0xff]
    %v4279 = vld [vmem:[%s63 + $0x38] sm:$0xff]
    %v4280 = vld [vmem:[%s63 + $0x40] sm:$0xff]
    %v4281 = vld [vmem:[%s63 + $0x48] sm:$0xff]
    %v4282 = vunpack.c.l.bf16 %v4272
    %v4283 = vunpack.c.h.bf16 %v4272
    %v4284 = vunpack.c.l.bf16 %v4273
    %v4285 = vunpack.c.h.bf16 %v4273
    %v4286 = vunpack.c.l.bf16 %v4274
    %v4287 = vunpack.c.h.bf16 %v4274
    %v4288 = vunpack.c.l.bf16 %v4275
    %v4289 = vunpack.c.h.bf16 %v4275
    %v4290 = vunpack.c.l.bf16 %v4276
    %v4291 = vunpack.c.h.bf16 %v4276
    %v4292 = vunpack.c.l.bf16 %v4277
    %v4293 = vunpack.c.h.bf16 %v4277
    %v4294 = vunpack.c.l.bf16 %v4278
    %v4295 = vunpack.c.h.bf16 %v4278
    %v4296 = vunpack.c.l.bf16 %v4279
    %v4297 = vunpack.c.h.bf16 %v4279
    %v4298 = vunpack.c.l.bf16 %v4280
    %v4299 = vunpack.c.h.bf16 %v4280
    %v4300 = vunpack.c.l.bf16 %v4281
    %v4301 = vunpack.c.h.bf16 %v4281
    %v4302 = vld [vmem:[%s65] sm:$0xff]
    %v4303 = vld [vmem:[%s65 + $0x8] sm:$0xff]
    %v4304 = vld [vmem:[%s65 + $0x10] sm:$0xff]
    %v4305 = vld [vmem:[%s65 + $0x18] sm:$0xff]
    %v4306 = vld [vmem:[%s65 + $0x20] sm:$0xff]
    %v4307 = vld [vmem:[%s65 + $0x28] sm:$0xff]
    %v4308 = vld [vmem:[%s65 + $0x30] sm:$0xff]
    %v4309 = vld [vmem:[%s65 + $0x38] sm:$0xff]
    %v4310 = vld [vmem:[%s65 + $0x40] sm:$0xff]
    %v4311 = vld [vmem:[%s65 + $0x48] sm:$0xff]
    %v4312 = vunpack.c.l.bf16 %v4302
    %v4313 = vunpack.c.h.bf16 %v4302
    %v4314 = vunpack.c.l.bf16 %v4303
    %v4315 = vunpack.c.h.bf16 %v4303
    %v4316 = vunpack.c.l.bf16 %v4304
    %v4317 = vunpack.c.h.bf16 %v4304
    %v4318 = vunpack.c.l.bf16 %v4305
    %v4319 = vunpack.c.h.bf16 %v4305
    %v4320 = vunpack.c.l.bf16 %v4306
    %v4321 = vunpack.c.h.bf16 %v4306
    %v4322 = vunpack.c.l.bf16 %v4307
    %v4323 = vunpack.c.h.bf16 %v4307
    %v4324 = vunpack.c.l.bf16 %v4308
    %v4325 = vunpack.c.h.bf16 %v4308
    %v4326 = vunpack.c.l.bf16 %v4309
    %v4327 = vunpack.c.h.bf16 %v4309
    %v4328 = vunpack.c.l.bf16 %v4310
    %v4329 = vunpack.c.h.bf16 %v4310
    %v4330 = vunpack.c.l.bf16 %v4311
    %v4331 = vunpack.c.h.bf16 %v4311
    %v4333 = vsel %vm4115, %v4259, 0
    %4335 = vmatprep.subr.mxu0 %v4313
    %4336 = vmatpush1.msra.mxu0 %v4312
    %4337 = vmatprep.subr.mxu0 %v4315
    %4338 = vmatpush1.msra.mxu0 %v4314
    %4339 = vmatprep.subr.mxu0 %v4317
    %4340 = vmatpush1.msra.mxu0 %v4316
    %4341 = vmatprep.subr.mxu0 %v4319
    %4342 = vmatpush1.msra.mxu0 %v4318
    %4343 = vmatprep.subr.mxu0 %v4321
    %4344 = vmatpush1.msra.mxu0 %v4320
    %4345 = vmatprep.subr.mxu0 %v4323
    %4346 = vmatpush1.msra.mxu0 %v4322
    %4347 = vmatprep.subr.mxu0 %v4325
    %4348 = vmatpush1.msra.mxu0 %v4324
    %4349 = vmatprep.subr.mxu0 %v4327
    %4350 = vmatpush1.msra.mxu0 %v4326
    %4351 = vmatprep.subr.mxu0 %v4329
    %4352 = vmatpush1.msra.mxu0 %v4328
    %4353 = vmatprep.subr.mxu0 %v4331
    %4354 = vmatpush1.msra.mxu0 %v4330
    %4355 = vmatprep.subr.mxu0 0.0
    %4356 = vmatpush1.msra.mxu0 0.0
    %4357 = vmatprep.subr.mxu0 0.0
    %4358 = vmatpush1.msra.mxu0 0.0
    %4359 = vmatprep.subr.mxu0 0.0
    %4360 = vmatpush1.msra.mxu0 0.0
    %4361 = vmatprep.subr.mxu0 0.0
    %4362 = vmatpush1.msra.mxu0 0.0
    %4363 = vmatprep.subr.mxu0 0.0
    %4364 = vmatpush1.msra.mxu0 0.0
    %4365 = vmatprep.subr.mxu0 0.0
    %4366 = vmatpush1.msra.mxu0 0.0
    %4367 = vmatprep.subr.mxu0 0.0
    %4368 = vmatpush1.msra.mxu0 0.0
    %4369 = vmatprep.subr.mxu0 0.0
    %4370 = vmatpush1.msra.mxu0 0.0
    %4371 = vmatprep.subr.mxu0 0.0
    %4372 = vmatpush1.msra.mxu0 0.0
    %4373 = vmatprep.subr.mxu0 0.0
    %4374 = vmatpush1.msra.mxu0 0.0
    %4375 = vmatprep.subr.mxu0 0.0
    %4376 = vmatpush1.msra.mxu0 0.0
    %4377 = vmatprep.subr.mxu0 0.0
    %4378 = vmatpush1.msra.mxu0 0.0
    %4379 = vmatprep.subr.mxu0 0.0
    %4380 = vmatpush1.msra.mxu0 0.0
    %4381 = vmatprep.subr.mxu0 0.0
    %4382 = vmatpush1.msra.mxu0 0.0
    %4383 = vmatprep.subr.mxu0 0.0
    %4384 = vmatpush1.msra.mxu0 0.0
    %4385 = vmatprep.subr.mxu0 0.0
    %4386 = vmatpush1.msra.mxu0 0.0
    %4387 = vmatprep.subr.mxu0 0.0
    %4388 = vmatpush1.msra.mxu0 0.0
    %4389 = vmatprep.subr.mxu0 0.0
    %4390 = vmatpush1.msra.mxu0 0.0
    %4391 = vmatprep.subr.mxu0 0.0
    %4392 = vmatpush1.msra.mxu0 0.0
    %4393 = vmatprep.subr.mxu0 0.0
    %4394 = vmatpush1.msra.mxu0 0.0
    %4395 = vmatprep.subr.mxu0 0.0
    %4396 = vmatpush1.msra.mxu0 0.0
    %4397 = vmatprep.subr.mxu0 0.0
    %4398 = vmatpush1.msra.mxu0 0.0
    %4399 = vmatprep.mubr.f32.mxu0 0.0
    %4400 = vmatmul.mubr.f32.gmra.mrb[0].mxu0 %v4333
    %v4401 = vpop.f32.mrb[0].mxu0
    %v4402 = vadd.f32 0.0, %v4401
    %v4403 = vpop.f32.mrb[0].mxu0
    %v4404 = vadd.f32 0.0, %v4403
    %4405 = vdwg.mxu0
    %v4407 = vsel %vm4115, %v4254, 0
    %4409 = vmatprep.subr.mxu0 %v4283
    %4410 = vmatpush1.msra.mxu0 %v4282
    %4411 = vmatprep.subr.mxu0 %v4285
    %4412 = vmatpush1.msra.mxu0 %v4284
    %4413 = vmatprep.subr.mxu0 %v4287
    %4414 = vmatpush1.msra.mxu0 %v4286
    %4415 = vmatprep.subr.mxu0 %v4289
    %4416 = vmatpush1.msra.mxu0 %v4288
    %4417 = vmatprep.subr.mxu0 %v4291
    %4418 = vmatpush1.msra.mxu0 %v4290
    %4419 = vmatprep.subr.mxu0 %v4293
    %4420 = vmatpush1.msra.mxu0 %v4292
    %4421 = vmatprep.subr.mxu0 %v4295
    %4422 = vmatpush1.msra.mxu0 %v4294
    %4423 = vmatprep.subr.mxu0 %v4297
    %4424 = vmatpush1.msra.mxu0 %v4296
    %4425 = vmatprep.subr.mxu0 %v4299
    %4426 = vmatpush1.msra.mxu0 %v4298
    %4427 = vmatprep.subr.mxu0 %v4301
    %4428 = vmatpush1.msra.mxu0 %v4300
    %4429 = vmatprep.subr.mxu0 0.0
    %4430 = vmatpush1.msra.mxu0 0.0
    %4431 = vmatprep.subr.mxu0 0.0
    %4432 = vmatpush1.msra.mxu0 0.0
    %4433 = vmatprep.subr.mxu0 0.0
    %4434 = vmatpush1.msra.mxu0 0.0
    %4435 = vmatprep.subr.mxu0 0.0
    %4436 = vmatpush1.msra.mxu0 0.0
    %4437 = vmatprep.subr.mxu0 0.0
    %4438 = vmatpush1.msra.mxu0 0.0
    %4439 = vmatprep.subr.mxu0 0.0
    %4440 = vmatpush1.msra.mxu0 0.0
    %4441 = vmatprep.subr.mxu0 0.0
    %4442 = vmatpush1.msra.mxu0 0.0
    %4443 = vmatprep.subr.mxu0 0.0
    %4444 = vmatpush1.msra.mxu0 0.0
    %4445 = vmatprep.subr.mxu0 0.0
    %4446 = vmatpush1.msra.mxu0 0.0
    %4447 = vmatprep.subr.mxu0 0.0
    %4448 = vmatpush1.msra.mxu0 0.0
    %4449 = vmatprep.subr.mxu0 0.0
    %4450 = vmatpush1.msra.mxu0 0.0
    %4451 = vmatprep.subr.mxu0 0.0
    %4452 = vmatpush1.msra.mxu0 0.0
    %4453 = vmatprep.subr.mxu0 0.0
    %4454 = vmatpush1.msra.mxu0 0.0
    %4455 = vmatprep.subr.mxu0 0.0
    %4456 = vmatpush1.msra.mxu0 0.0
    %4457 = vmatprep.subr.mxu0 0.0
    %4458 = vmatpush1.msra.mxu0 0.0
    %4459 = vmatprep.subr.mxu0 0.0
    %4460 = vmatpush1.msra.mxu0 0.0
    %4461 = vmatprep.subr.mxu0 0.0
    %4462 = vmatpush1.msra.mxu0 0.0
    %4463 = vmatprep.subr.mxu0 0.0
    %4464 = vmatpush1.msra.mxu0 0.0
    %4465 = vmatprep.subr.mxu0 0.0
    %4466 = vmatpush1.msra.mxu0 0.0
    %4467 = vmatprep.subr.mxu0 0.0
    %4468 = vmatpush1.msra.mxu0 0.0
    %4469 = vmatprep.subr.mxu0 0.0
    %4470 = vmatpush1.msra.mxu0 0.0
    %4471 = vmatprep.subr.mxu0 0.0
    %4472 = vmatpush1.msra.mxu0 0.0
    %4473 = vmatprep.mubr.f32.mxu0 0.0
    %4474 = vmatmul.mubr.f32.gmra.mrb[0].mxu0 %v4407
    %v4475 = vpop.f32.mrb[0].mxu0
    %v4476 = vadd.f32 %v4402, %v4475
    %v4477 = vpop.f32.mrb[0].mxu0
    %v4478 = vadd.f32 %v4404, %v4477
    %4479 = vdwg.mxu0
    %v4480 = vld [vmem:[#allocation20] sm:$0xff]
    %v4481 = vld [vmem:[#allocation20 + $0x8] sm:$0xff]
    %v4482 = vld [vmem:[#allocation20 + $0x10] sm:$0xff]
    %v4483 = vld [vmem:[#allocation20 + $0x18] sm:$0xff]
    %v4484 = vld [vmem:[#allocation20 + $0x20] sm:$0xff]
    %v4485 = vld [vmem:[#allocation20 + $0x28] sm:$0xff]
    %v4486 = vld [vmem:[#allocation20 + $0x30] sm:$0xff]
    %v4487 = vld [vmem:[#allocation20 + $0x38] sm:$0xff]
    %v4488 = vld [vmem:[#allocation20 + $0x40] sm:$0xff]
    %v4489 = vld [vmem:[#allocation20 + $0x48] sm:$0xff]
    %v4490 = vunpack.c.l.bf16 %v4480
    %v4491 = vunpack.c.h.bf16 %v4480
    %v4492 = vunpack.c.l.bf16 %v4481
    %v4493 = vunpack.c.h.bf16 %v4481
    %v4494 = vunpack.c.l.bf16 %v4482
    %v4495 = vunpack.c.h.bf16 %v4482
    %v4496 = vunpack.c.l.bf16 %v4483
    %v4497 = vunpack.c.h.bf16 %v4483
    %v4498 = vunpack.c.l.bf16 %v4484
    %v4499 = vunpack.c.h.bf16 %v4484
    %v4500 = vunpack.c.l.bf16 %v4485
    %v4501 = vunpack.c.h.bf16 %v4485
    %v4502 = vunpack.c.l.bf16 %v4486
    %v4503 = vunpack.c.h.bf16 %v4486
    %v4504 = vunpack.c.l.bf16 %v4487
    %v4505 = vunpack.c.h.bf16 %v4487
    %v4506 = vunpack.c.l.bf16 %v4488
    %v4507 = vunpack.c.h.bf16 %v4488
    %v4508 = vunpack.c.l.bf16 %v4489
    %v4509 = vunpack.c.h.bf16 %v4489
    %v4511 = vsel %vm4115, %v4264, 0
    %4513 = vmatprep.subr.mxu0 %v4491
    %4514 = vmatpush1.msra.mxu0 %v4490
    %4515 = vmatprep.subr.mxu0 %v4493
    %4516 = vmatpush1.msra.mxu0 %v4492
    %4517 = vmatprep.subr.mxu0 %v4495
    %4518 = vmatpush1.msra.mxu0 %v4494
    %4519 = vmatprep.subr.mxu0 %v4497
    %4520 = vmatpush1.msra.mxu0 %v4496
    %4521 = vmatprep.subr.mxu0 %v4499
    %4522 = vmatpush1.msra.mxu0 %v4498
    %4523 = vmatprep.subr.mxu0 %v4501
    %4524 = vmatpush1.msra.mxu0 %v4500
    %4525 = vmatprep.subr.mxu0 %v4503
    %4526 = vmatpush1.msra.mxu0 %v4502
    %4527 = vmatprep.subr.mxu0 %v4505
    %4528 = vmatpush1.msra.mxu0 %v4504
    %4529 = vmatprep.subr.mxu0 %v4507
    %4530 = vmatpush1.msra.mxu0 %v4506
    %4531 = vmatprep.subr.mxu0 %v4509
    %4532 = vmatpush1.msra.mxu0 %v4508
    %4533 = vmatprep.subr.mxu0 0.0
    %4534 = vmatpush1.msra.mxu0 0.0
    %4535 = vmatprep.subr.mxu0 0.0
    %4536 = vmatpush1.msra.mxu0 0.0
    %4537 = vmatprep.subr.mxu0 0.0
    %4538 = vmatpush1.msra.mxu0 0.0
    %4539 = vmatprep.subr.mxu0 0.0
    %4540 = vmatpush1.msra.mxu0 0.0
    %4541 = vmatprep.subr.mxu0 0.0
    %4542 = vmatpush1.msra.mxu0 0.0
    %4543 = vmatprep.subr.mxu0 0.0
    %4544 = vmatpush1.msra.mxu0 0.0
    %4545 = vmatprep.subr.mxu0 0.0
    %4546 = vmatpush1.msra.mxu0 0.0
    %4547 = vmatprep.subr.mxu0 0.0
    %4548 = vmatpush1.msra.mxu0 0.0
    %4549 = vmatprep.subr.mxu0 0.0
    %4550 = vmatpush1.msra.mxu0 0.0
    %4551 = vmatprep.subr.mxu0 0.0
    %4552 = vmatpush1.msra.mxu0 0.0
    %4553 = vmatprep.subr.mxu0 0.0
    %4554 = vmatpush1.msra.mxu0 0.0
    %4555 = vmatprep.subr.mxu0 0.0
    %4556 = vmatpush1.msra.mxu0 0.0
    %4557 = vmatprep.subr.mxu0 0.0
    %4558 = vmatpush1.msra.mxu0 0.0
    %4559 = vmatprep.subr.mxu0 0.0
    %4560 = vmatpush1.msra.mxu0 0.0
    %4561 = vmatprep.subr.mxu0 0.0
    %4562 = vmatpush1.msra.mxu0 0.0
    %4563 = vmatprep.subr.mxu0 0.0
    %4564 = vmatpush1.msra.mxu0 0.0
    %4565 = vmatprep.subr.mxu0 0.0
    %4566 = vmatpush1.msra.mxu0 0.0
    %4567 = vmatprep.subr.mxu0 0.0
    %4568 = vmatpush1.msra.mxu0 0.0
    %4569 = vmatprep.subr.mxu0 0.0
    %4570 = vmatpush1.msra.mxu0 0.0
    %4571 = vmatprep.subr.mxu0 0.0
    %4572 = vmatpush1.msra.mxu0 0.0
    %4573 = vmatprep.subr.mxu0 0.0
    %4574 = vmatpush1.msra.mxu0 0.0
    %4575 = vmatprep.subr.mxu0 0.0
    %4576 = vmatpush1.msra.mxu0 0.0
    %4577 = vmatprep.mubr.f32.mxu0 0.0
    %4578 = vmatmul.mubr.f32.gmra.mrb[0].mxu0 %v4511
    %v4579 = vpop.f32.mrb[0].mxu0
    %v4580 = vadd.f32 0.0, %v4579
    %v4581 = vpop.f32.mrb[0].mxu0
    %v4582 = vadd.f32 0.0, %v4581
    %4583 = vdwg.mxu0
    %v4584 = vadd.f32 %v4476, %v4580
    %v4585 = vadd.f32 %v4478, %v4582
    %v4586 = vld [vmem:[#allocation22] sm:$0xff]
    %v4587 = vld [vmem:[#allocation22 + $0x8] sm:$0xff]
    %v4588 = vld [vmem:[#allocation22 + $0x10] sm:$0xff]
    %v4589 = vld [vmem:[#allocation22 + $0x18] sm:$0xff]
    %v4590 = vld [vmem:[#allocation22 + $0x20] sm:$0xff]
    %v4591 = vld [vmem:[#allocation22 + $0x28] sm:$0xff]
    %v4592 = vld [vmem:[#allocation22 + $0x30] sm:$0xff]
    %v4593 = vld [vmem:[#allocation22 + $0x38] sm:$0xff]
    %v4594 = vld [vmem:[#allocation22 + $0x40] sm:$0xff]
    %v4595 = vld [vmem:[#allocation22 + $0x48] sm:$0xff]
    %v4596 = vunpack.c.l.bf16 %v4586
    %v4597 = vunpack.c.h.bf16 %v4586
    %v4598 = vunpack.c.l.bf16 %v4587
    %v4599 = vunpack.c.h.bf16 %v4587
    %v4600 = vunpack.c.l.bf16 %v4588
    %v4601 = vunpack.c.h.bf16 %v4588
    %v4602 = vunpack.c.l.bf16 %v4589
    %v4603 = vunpack.c.h.bf16 %v4589
    %v4604 = vunpack.c.l.bf16 %v4590
    %v4605 = vunpack.c.h.bf16 %v4590
    %v4606 = vunpack.c.l.bf16 %v4591
    %v4607 = vunpack.c.h.bf16 %v4591
    %v4608 = vunpack.c.l.bf16 %v4592
    %v4609 = vunpack.c.h.bf16 %v4592
    %v4610 = vunpack.c.l.bf16 %v4593
    %v4611 = vunpack.c.h.bf16 %v4593
    %v4612 = vunpack.c.l.bf16 %v4594
    %v4613 = vunpack.c.h.bf16 %v4594
    %v4614 = vunpack.c.l.bf16 %v4595
    %v4615 = vunpack.c.h.bf16 %v4595
    %v4617 = vsel %vm4115, %v4269, 0
    %4619 = vmatprep.subr.mxu0 %v4597
    %4620 = vmatpush1.msra.mxu0 %v4596
    %4621 = vmatprep.subr.mxu0 %v4599
    %4622 = vmatpush1.msra.mxu0 %v4598
    %4623 = vmatprep.subr.mxu0 %v4601
    %4624 = vmatpush1.msra.mxu0 %v4600
    %4625 = vmatprep.subr.mxu0 %v4603
    %4626 = vmatpush1.msra.mxu0 %v4602
    %4627 = vmatprep.subr.mxu0 %v4605
    %4628 = vmatpush1.msra.mxu0 %v4604
    %4629 = vmatprep.subr.mxu0 %v4607
    %4630 = vmatpush1.msra.mxu0 %v4606
    %4631 = vmatprep.subr.mxu0 %v4609
    %4632 = vmatpush1.msra.mxu0 %v4608
    %4633 = vmatprep.subr.mxu0 %v4611
    %4634 = vmatpush1.msra.mxu0 %v4610
    %4635 = vmatprep.subr.mxu0 %v4613
    %4636 = vmatpush1.msra.mxu0 %v4612
    %4637 = vmatprep.subr.mxu0 %v4615
    %4638 = vmatpush1.msra.mxu0 %v4614
    %4639 = vmatprep.subr.mxu0 0.0
    %4640 = vmatpush1.msra.mxu0 0.0
    %4641 = vmatprep.subr.mxu0 0.0
    %4642 = vmatpush1.msra.mxu0 0.0
    %4643 = vmatprep.subr.mxu0 0.0
    %4644 = vmatpush1.msra.mxu0 0.0
    %4645 = vmatprep.subr.mxu0 0.0
    %4646 = vmatpush1.msra.mxu0 0.0
    %4647 = vmatprep.subr.mxu0 0.0
    %4648 = vmatpush1.msra.mxu0 0.0
    %4649 = vmatprep.subr.mxu0 0.0
    %4650 = vmatpush1.msra.mxu0 0.0
    %4651 = vmatprep.subr.mxu0 0.0
    %4652 = vmatpush1.msra.mxu0 0.0
    %4653 = vmatprep.subr.mxu0 0.0
    %4654 = vmatpush1.msra.mxu0 0.0
    %4655 = vmatprep.subr.mxu0 0.0
    %4656 = vmatpush1.msra.mxu0 0.0
    %4657 = vmatprep.subr.mxu0 0.0
    %4658 = vmatpush1.msra.mxu0 0.0
    %4659 = vmatprep.subr.mxu0 0.0
    %4660 = vmatpush1.msra.mxu0 0.0
    %4661 = vmatprep.subr.mxu0 0.0
    %4662 = vmatpush1.msra.mxu0 0.0
    %4663 = vmatprep.subr.mxu0 0.0
    %4664 = vmatpush1.msra.mxu0 0.0
    %4665 = vmatprep.subr.mxu0 0.0
    %4666 = vmatpush1.msra.mxu0 0.0
    %4667 = vmatprep.subr.mxu0 0.0
    %4668 = vmatpush1.msra.mxu0 0.0
    %4669 = vmatprep.subr.mxu0 0.0
    %4670 = vmatpush1.msra.mxu0 0.0
    %4671 = vmatprep.subr.mxu0 0.0
    %4672 = vmatpush1.msra.mxu0 0.0
    %4673 = vmatprep.subr.mxu0 0.0
    %4674 = vmatpush1.msra.mxu0 0.0
    %4675 = vmatprep.subr.mxu0 0.0
    %4676 = vmatpush1.msra.mxu0 0.0
    %4677 = vmatprep.subr.mxu0 0.0
    %4678 = vmatpush1.msra.mxu0 0.0
    %4679 = vmatprep.subr.mxu0 0.0
    %4680 = vmatpush1.msra.mxu0 0.0
    %4681 = vmatprep.subr.mxu0 0.0
    %4682 = vmatpush1.msra.mxu0 0.0
    %4683 = vmatprep.mubr.f32.mxu0 0.0
    %4684 = vmatmul.mubr.f32.gmra.mrb[0].mxu0 %v4617
    %v4685 = vpop.f32.mrb[0].mxu0
    %v4686 = vadd.f32 0.0, %v4685
    %v4687 = vpop.f32.mrb[0].mxu0
    %v4688 = vadd.f32 0.0, %v4687
    %4689 = vdwg.mxu0
    %v4690 = vadd.f32 %v4584, %v4686
    %v4691 = vadd.f32 %v4585, %v4688
    %v4692 = vsel %vm3617, %v4691, 0.0
    %v4693 = vadd.f32 %v4690, %v4692
    %4694 = vadd.xlane.f32.xlu0 %v4693
    %v4695 = vpop.xlane.xlu0 %4694
    %v4696 = vmul.f32 %v4695, 0.00625
    %v4697 = vsub.f32 %v4690, %v4696
    %v4698 = vsub.f32 %v4691, %v4696
    %v4699 = vmul.f32 %v4697, %v4697
    %v4700 = vmul.f32 %v4698, %v4698
    %v4701 = vsel %vm3617, %v4700, 0.0
    %v4702 = vadd.f32 %v4699, %v4701
    %4703 = vadd.xlane.f32.xlu0 %v4702
    %v4704 = vpop.xlane.xlu0 %4703
    %v4705 = vmul.f32 %v4704, 0.00625
    %v4706 = vadd.f32 %v4705, 1e-05
    %v4707 = vrsqrt.pop %v4706
    %v4708 = vmul.f32 %v4697, %v4707
    %v4709 = vmul.f32 %v4698, %v4707
    %4711 = vset.pattern.permute.xlu0 0
    %4712 = vperm.xlu0 %4711, %v4172
    %v4713 = vpop.permute.xlu0 %4712
    %v4715 = vmul.f32 %v4708, %v4713
    %v4716 = vmul.f32 %v4709, %v4713
    %4718 = vset.pattern.permute.xlu0 0
    %4719 = vperm.xlu0 %4718, %v4173
    %v4720 = vpop.permute.xlu0 %4719
    %v4722 = vadd.f32 %v4715, %v4720
    %v4723 = vadd.f32 %v4716, %v4720
    %v4724 = vmax.f32 %v4722, 0.0
    %v4725 = vmax.f32 %v4723, 0.0
    %v4726 = vld [vmem:[%s71] sm:$0xff]
    %v4727 = vld [vmem:[%s71 + $0x8] sm:$0xff]
    %v4728 = vld [vmem:[%s73] sm:$0xf]
    %v4729 = vld [vmem:[%s75] sm:$0xf]
    %v4731 = vsel %vm528, %v4726, 0
    %v4734 = vsel %vm528, %v4727, 0
    %4736 = vmatprep.subr.mxu0 %v4725
    %4737 = vmatpush1.msra.mxu0 %v4724
    %4738 = vmatprep.subr.mxu0 0.0
    %4739 = vmatpush1.msra.mxu0 0.0
    %4740 = vmatprep.subr.mxu0 0.0
    %4741 = vmatpush1.msra.mxu0 0.0
    %4742 = vmatprep.subr.mxu0 0.0
    %4743 = vmatpush1.msra.mxu0 0.0
    %4744 = vmatprep.subr.mxu0 0.0
    %4745 = vmatpush1.msra.mxu0 0.0
    %4746 = vmatprep.subr.mxu0 0.0
    %4747 = vmatpush1.msra.mxu0 0.0
    %4748 = vmatprep.subr.mxu0 0.0
    %4749 = vmatpush1.msra.mxu0 0.0
    %4750 = vmatprep.subr.mxu0 0.0
    %4751 = vmatpush1.msra.mxu0 0.0
    %4752 = vmatprep.subr.mxu0 0.0
    %4753 = vmatpush1.msra.mxu0 0.0
    %4754 = vmatprep.subr.mxu0 0.0
    %4755 = vmatpush1.msra.mxu0 0.0
    %4756 = vmatprep.subr.mxu0 0.0
    %4757 = vmatpush1.msra.mxu0 0.0
    %4758 = vmatprep.subr.mxu0 0.0
    %4759 = vmatpush1.msra.mxu0 0.0
    %4760 = vmatprep.subr.mxu0 0.0
    %4761 = vmatpush1.msra.mxu0 0.0
    %4762 = vmatprep.subr.mxu0 0.0
    %4763 = vmatpush1.msra.mxu0 0.0
    %4764 = vmatprep.subr.mxu0 0.0
    %4765 = vmatpush1.msra.mxu0 0.0
    %4766 = vmatprep.subr.mxu0 0.0
    %4767 = vmatpush1.msra.mxu0 0.0
    %4768 = vmatprep.subr.mxu0 0.0
    %4769 = vmatpush1.msra.mxu0 0.0
    %4770 = vmatprep.subr.mxu0 0.0
    %4771 = vmatpush1.msra.mxu0 0.0
    %4772 = vmatprep.subr.mxu0 0.0
    %4773 = vmatpush1.msra.mxu0 0.0
    %4774 = vmatprep.subr.mxu0 0.0
    %4775 = vmatpush1.msra.mxu0 0.0
    %4776 = vmatprep.subr.mxu0 0.0
    %4777 = vmatpush1.msra.mxu0 0.0
    %4778 = vmatprep.subr.mxu0 0.0
    %4779 = vmatpush1.msra.mxu0 0.0
    %4780 = vmatprep.subr.mxu0 0.0
    %4781 = vmatpush1.msra.mxu0 0.0
    %4782 = vmatprep.subr.mxu0 0.0
    %4783 = vmatpush1.msra.mxu0 0.0
    %4784 = vmatprep.subr.mxu0 0.0
    %4785 = vmatpush1.msra.mxu0 0.0
    %4786 = vmatprep.subr.mxu0 0.0
    %4787 = vmatpush1.msra.mxu0 0.0
    %4788 = vmatprep.subr.mxu0 0.0
    %4789 = vmatpush1.msra.mxu0 0.0
    %4790 = vmatprep.subr.mxu0 0.0
    %4791 = vmatpush1.msra.mxu0 0.0
    %4792 = vmatprep.subr.mxu0 0.0
    %4793 = vmatpush1.msra.mxu0 0.0
    %4794 = vmatprep.subr.mxu0 0.0
    %4795 = vmatpush1.msra.mxu0 0.0
    %4796 = vmatprep.subr.mxu0 0.0
    %4797 = vmatpush1.msra.mxu0 0.0
    %4798 = vmatprep.subr.mxu0 0.0
    %4799 = vmatpush1.msra.mxu0 0.0
    %4800 = vmatprep.mubr.f32.mxu0 0.0
    %4801 = vmatmul.mubr.f32.gmra.mrb[0].mxu0 %v4731
    %v4802 = vpop.f32.mrb[0].mxu0
    %v4803 = vadd.f32 0.0, %v4802
    %v4804 = vpop.f32.mrb[0].mxu0
    %v4805 = vadd.f32 0.0, %v4804
    %4806 = vmatprep.mubr.f32.mxu0 0.0
    %4807 = vmatmul.mubr.f32.gmra.mrb[0].mxu0 %v4734
    %v4808 = vpop.f32.mrb[0].mxu0
    %v4809 = vadd.f32 0.0, %v4808
    %v4810 = vpop.f32.mrb[0].mxu0
    %v4811 = vadd.f32 0.0, %v4810
    %4812 = vdwg.mxu0
    %v4813 = vld [vmem:[%s77] sm:$0xff]
    %v4814 = vld [vmem:[%s77 + $0x8] sm:$0xf]
    %v4815 = vld [vmem:[%s77 + $0xc] sm:$0xff]
    %v4816 = vld [vmem:[%s77 + $0x14] sm:$0xf]
    %v4817 = vld [vmem:[%s77 + $0x18] sm:$0xff]
    %v4818 = vld [vmem:[%s77 + $0x20] sm:$0xf]
    %v4819 = vld [vmem:[%s77 + $0x24] sm:$0xff]
    %v4820 = vld [vmem:[%s77 + $0x2c] sm:$0xf]
    %v4821 = vld [vmem:[%s77 + $0x30] sm:$0xff]
    %v4822 = vld [vmem:[%s77 + $0x38] sm:$0xf]
    %v4823 = vld [vmem:[%s77 + $0x3c] sm:$0xff]
    %v4824 = vld [vmem:[%s77 + $0x44] sm:$0xf]
    %v4825 = vld [vmem:[%s77 + $0x48] sm:$0xff]
    %v4826 = vld [vmem:[%s77 + $0x50] sm:$0xf]
    %v4827 = vld [vmem:[%s77 + $0x54] sm:$0xff]
    %v4828 = vld [vmem:[%s77 + $0x5c] sm:$0xf]
    %v4829 = vld [vmem:[%s77 + $0x60] sm:$0xff]
    %v4830 = vld [vmem:[%s77 + $0x68] sm:$0xf]
    %v4831 = vld [vmem:[%s77 + $0x6c] sm:$0xff]
    %v4832 = vld [vmem:[%s77 + $0x74] sm:$0xf]
    %v4833 = vld [vmem:[%s77 + $0x78] sm:$0xff]
    %v4834 = vld [vmem:[%s77 + $0x80] sm:$0xf]
    %v4835 = vld [vmem:[%s77 + $0x84] sm:$0xff]
    %v4836 = vld [vmem:[%s77 + $0x8c] sm:$0xf]
    %v4837 = vld [vmem:[%s77 + $0x90] sm:$0xff]
    %v4838 = vld [vmem:[%s77 + $0x98] sm:$0xf]
    %v4839 = vld [vmem:[%s77 + $0x9c] sm:$0xff]
    %v4840 = vld [vmem:[%s77 + $0xa4] sm:$0xf]
    %v4841 = vld [vmem:[%s77 + $0xa8] sm:$0xff]
    %v4842 = vld [vmem:[%s77 + $0xb0] sm:$0xf]
    %v4843 = vld [vmem:[%s77 + $0xb4] sm:$0xff]
    %v4844 = vld [vmem:[%s77 + $0xbc] sm:$0xf]
    %v4845 = vld [vmem:[%s77 + $0xc0] sm:$0xff]
    %v4846 = vld [vmem:[%s77 + $0xc8] sm:$0xf]
    %v4847 = vld [vmem:[%s77 + $0xcc] sm:$0xff]
    %v4848 = vld [vmem:[%s77 + $0xd4] sm:$0xf]
    %v4849 = vld [vmem:[%s77 + $0xd8] sm:$0xff]
    %v4850 = vld [vmem:[%s77 + $0xe0] sm:$0xf]
    %v4851 = vld [vmem:[%s77 + $0xe4] sm:$0xff]
    %v4852 = vld [vmem:[%s77 + $0xec] sm:$0xf]
    %v4853 = vunpack.c.l.bf16 %v4813
    %v4854 = vunpack.c.h.bf16 %v4813
    %v4855 = vunpack.c.l.bf16 %v4814
    %v4856 = vunpack.c.l.bf16 %v4815
    %v4857 = vunpack.c.h.bf16 %v4815
    %v4858 = vunpack.c.l.bf16 %v4816
    %v4859 = vunpack.c.l.bf16 %v4817
    %v4860 = vunpack.c.h.bf16 %v4817
    %v4861 = vunpack.c.l.bf16 %v4818
    %v4862 = vunpack.c.l.bf16 %v4819
    %v4863 = vunpack.c.h.bf16 %v4819
    %v4864 = vunpack.c.l.bf16 %v4820
    %v4865 = vunpack.c.l.bf16 %v4821
    %v4866 = vunpack.c.h.bf16 %v4821
    %v4867 = vunpack.c.l.bf16 %v4822
    %v4868 = vunpack.c.l.bf16 %v4823
    %v4869 = vunpack.c.h.bf16 %v4823
    %v4870 = vunpack.c.l.bf16 %v4824
    %v4871 = vunpack.c.l.bf16 %v4825
    %v4872 = vunpack.c.h.bf16 %v4825
    %v4873 = vunpack.c.l.bf16 %v4826
    %v4874 = vunpack.c.l.bf16 %v4827
    %v4875 = vunpack.c.h.bf16 %v4827
    %v4876 = vunpack.c.l.bf16 %v4828
    %v4877 = vunpack.c.l.bf16 %v4829
    %v4878 = vunpack.c.h.bf16 %v4829
    %v4879 = vunpack.c.l.bf16 %v4830
    %v4880 = vunpack.c.l.bf16 %v4831
    %v4881 = vunpack.c.h.bf16 %v4831
    %v4882 = vunpack.c.l.bf16 %v4832
    %v4883 = vunpack.c.l.bf16 %v4833
    %v4884 = vunpack.c.h.bf16 %v4833
    %v4885 = vunpack.c.l.bf16 %v4834
    %v4886 = vunpack.c.l.bf16 %v4835
    %v4887 = vunpack.c.h.bf16 %v4835
    %v4888 = vunpack.c.l.bf16 %v4836
    %v4889 = vunpack.c.l.bf16 %v4837
    %v4890 = vunpack.c.h.bf16 %v4837
    %v4891 = vunpack.c.l.bf16 %v4838
    %v4892 = vunpack.c.l.bf16 %v4839
    %v4893 = vunpack.c.h.bf16 %v4839
    %v4894 = vunpack.c.l.bf16 %v4840
    %v4895 = vunpack.c.l.bf16 %v4841
    %v4896 = vunpack.c.h.bf16 %v4841
    %v4897 = vunpack.c.l.bf16 %v4842
    %v4898 = vunpack.c.l.bf16 %v4843
    %v4899 = vunpack.c.h.bf16 %v4843
    %v4900 = vunpack.c.l.bf16 %v4844
    %v4901 = vunpack.c.l.bf16 %v4845
    %v4902 = vunpack.c.h.bf16 %v4845
    %v4903 = vunpack.c.l.bf16 %v4846
    %v4904 = vunpack.c.l.bf16 %v4847
    %v4905 = vunpack.c.h.bf16 %v4847
    %v4906 = vunpack.c.l.bf16 %v4848
    %v4907 = vunpack.c.l.bf16 %v4849
    %v4908 = vunpack.c.h.bf16 %v4849
    %v4909 = vunpack.c.l.bf16 %v4850
    %v4910 = vunpack.c.l.bf16 %v4851
    %v4911 = vunpack.c.h.bf16 %v4851
    %v4912 = vunpack.c.l.bf16 %v4852
    %v4913 = vld [vmem:[%s79] sm:$0xff]
    %v4914 = vld [vmem:[%s79 + $0x8] sm:$0xf]
    %v4915 = vld [vmem:[%s79 + $0xc] sm:$0xff]
    %v4916 = vld [vmem:[%s79 + $0x14] sm:$0xf]
    %v4917 = vld [vmem:[%s79 + $0x18] sm:$0xff]
    %v4918 = vld [vmem:[%s79 + $0x20] sm:$0xf]
    %v4919 = vld [vmem:[%s79 + $0x24] sm:$0xff]
    %v4920 = vld [vmem:[%s79 + $0x2c] sm:$0xf]
    %v4921 = vld [vmem:[%s79 + $0x30] sm:$0xff]
    %v4922 = vld [vmem:[%s79 + $0x38] sm:$0xf]
    %v4923 = vld [vmem:[%s79 + $0x3c] sm:$0xff]
    %v4924 = vld [vmem:[%s79 + $0x44] sm:$0xf]
    %v4925 = vld [vmem:[%s79 + $0x48] sm:$0xff]
    %v4926 = vld [vmem:[%s79 + $0x50] sm:$0xf]
    %v4927 = vld [vmem:[%s79 + $0x54] sm:$0xff]
    %v4928 = vld [vmem:[%s79 + $0x5c] sm:$0xf]
    %v4929 = vld [vmem:[%s79 + $0x60] sm:$0xff]
    %v4930 = vld [vmem:[%s79 + $0x68] sm:$0xf]
    %v4931 = vld [vmem:[%s79 + $0x6c] sm:$0xff]
    %v4932 = vld [vmem:[%s79 + $0x74] sm:$0xf]
    %v4933 = vld [vmem:[%s79 + $0x78] sm:$0xff]
    %v4934 = vld [vmem:[%s79 + $0x80] sm:$0xf]
    %v4935 = vld [vmem:[%s79 + $0x84] sm:$0xff]
    %v4936 = vld [vmem:[%s79 + $0x8c] sm:$0xf]
    %v4937 = vld [vmem:[%s79 + $0x90] sm:$0xff]
    %v4938 = vld [vmem:[%s79 + $0x98] sm:$0xf]
    %v4939 = vld [vmem:[%s79 + $0x9c] sm:$0xff]
    %v4940 = vld [vmem:[%s79 + $0xa4] sm:$0xf]
    %v4941 = vld [vmem:[%s79 + $0xa8] sm:$0xff]
    %v4942 = vld [vmem:[%s79 + $0xb0] sm:$0xf]
    %v4943 = vld [vmem:[%s79 + $0xb4] sm:$0xff]
    %v4944 = vld [vmem:[%s79 + $0xbc] sm:$0xf]
    %v4945 = vld [vmem:[%s79 + $0xc0] sm:$0xff]
    %v4946 = vld [vmem:[%s79 + $0xc8] sm:$0xf]
    %v4947 = vld [vmem:[%s79 + $0xcc] sm:$0xff]
    %v4948 = vld [vmem:[%s79 + $0xd4] sm:$0xf]
    %v4949 = vld [vmem:[%s79 + $0xd8] sm:$0xff]
    %v4950 = vld [vmem:[%s79 + $0xe0] sm:$0xf]
    %v4951 = vld [vmem:[%s79 + $0xe4] sm:$0xff]
    %v4952 = vld [vmem:[%s79 + $0xec] sm:$0xf]
    %v4953 = vunpack.c.l.bf16 %v4913
    %v4954 = vunpack.c.h.bf16 %v4913
    %v4955 = vunpack.c.l.bf16 %v4914
    %v4956 = vunpack.c.l.bf16 %v4915
    %v4957 = vunpack.c.h.bf16 %v4915
    %v4958 = vunpack.c.l.bf16 %v4916
    %v4959 = vunpack.c.l.bf16 %v4917
    %v4960 = vunpack.c.h.bf16 %v4917
    %v4961 = vunpack.c.l.bf16 %v4918
    %v4962 = vunpack.c.l.bf16 %v4919
    %v4963 = vunpack.c.h.bf16 %v4919
    %v4964 = vunpack.c.l.bf16 %v4920
    %v4965 = vunpack.c.l.bf16 %v4921
    %v4966 = vunpack.c.h.bf16 %v4921
    %v4967 = vunpack.c.l.bf16 %v4922
    %v4968 = vunpack.c.l.bf16 %v4923
    %v4969 = vunpack.c.h.bf16 %v4923
    %v4970 = vunpack.c.l.bf16 %v4924
    %v4971 = vunpack.c.l.bf16 %v4925
    %v4972 = vunpack.c.h.bf16 %v4925
    %v4973 = vunpack.c.l.bf16 %v4926
    %v4974 = vunpack.c.l.bf16 %v4927
    %v4975 = vunpack.c.h.bf16 %v4927
    %v4976 = vunpack.c.l.bf16 %v4928
    %v4977 = vunpack.c.l.bf16 %v4929
    %v4978 = vunpack.c.h.bf16 %v4929
    %v4979 = vunpack.c.l.bf16 %v4930
    %v4980 = vunpack.c.l.bf16 %v4931
    %v4981 = vunpack.c.h.bf16 %v4931
    %v4982 = vunpack.c.l.bf16 %v4932
    %v4983 = vunpack.c.l.bf16 %v4933
    %v4984 = vunpack.c.h.bf16 %v4933
    %v4985 = vunpack.c.l.bf16 %v4934
    %v4986 = vunpack.c.l.bf16 %v4935
    %v4987 = vunpack.c.h.bf16 %v4935
    %v4988 = vunpack.c.l.bf16 %v4936
    %v4989 = vunpack.c.l.bf16 %v4937
    %v4990 = vunpack.c.h.bf16 %v4937
    %v4991 = vunpack.c.l.bf16 %v4938
    %v4992 = vunpack.c.l.bf16 %v4939
    %v4993 = vunpack.c.h.bf16 %v4939
    %v4994 = vunpack.c.l.bf16 %v4940
    %v4995 = vunpack.c.l.bf16 %v4941
    %v4996 = vunpack.c.h.bf16 %v4941
    %v4997 = vunpack.c.l.bf16 %v4942
    %v4998 = vunpack.c.l.bf16 %v4943
    %v4999 = vunpack.c.h.bf16 %v4943
    %v5000 = vunpack.c.l.bf16 %v4944
    %v5001 = vunpack.c.l.bf16 %v4945
    %v5002 = vunpack.c.h.bf16 %v4945
    %v5003 = vunpack.c.l.bf16 %v4946
    %v5004 = vunpack.c.l.bf16 %v4947
    %v5005 = vunpack.c.h.bf16 %v4947
    %v5006 = vunpack.c.l.bf16 %v4948
    %v5007 = vunpack.c.l.bf16 %v4949
    %v5008 = vunpack.c.h.bf16 %v4949
    %v5009 = vunpack.c.l.bf16 %v4950
    %v5010 = vunpack.c.l.bf16 %v4951
    %v5011 = vunpack.c.h.bf16 %v4951
    %v5012 = vunpack.c.l.bf16 %v4952
    %v5015 = vrot.slane %v4803, 4
    %v5016 = vrot.slane %v4805, 4
    %v5018 = vsel %vm3617, %v5016, 0
    %5020 = vmatprep.subr.mxu0 %v4954
    %5021 = vmatpush1.msra.mxu0 %v4953
    %5022 = vmatprep.subr.mxu0 %v4957
    %5023 = vmatpush1.msra.mxu0 %v4956
    %5024 = vmatprep.subr.mxu0 %v4960
    %5025 = vmatpush1.msra.mxu0 %v4959
    %5026 = vmatprep.subr.mxu0 %v4963
    %5027 = vmatpush1.msra.mxu0 %v4962
    %5028 = vmatprep.subr.mxu0 %v4966
    %5029 = vmatpush1.msra.mxu0 %v4965
    %5030 = vmatprep.subr.mxu0 %v4969
    %5031 = vmatpush1.msra.mxu0 %v4968
    %5032 = vmatprep.subr.mxu0 %v4972
    %5033 = vmatpush1.msra.mxu0 %v4971
    %5034 = vmatprep.subr.mxu0 %v4975
    %5035 = vmatpush1.msra.mxu0 %v4974
    %5036 = vmatprep.subr.mxu0 %v4978
    %5037 = vmatpush1.msra.mxu0 %v4977
    %5038 = vmatprep.subr.mxu0 %v4981
    %5039 = vmatpush1.msra.mxu0 %v4980
    %5040 = vmatprep.subr.mxu0 %v4984
    %5041 = vmatpush1.msra.mxu0 %v4983
    %5042 = vmatprep.subr.mxu0 %v4987
    %5043 = vmatpush1.msra.mxu0 %v4986
    %5044 = vmatprep.subr.mxu0 %v4990
    %5045 = vmatpush1.msra.mxu0 %v4989
    %5046 = vmatprep.subr.mxu0 %v4993
    %5047 = vmatpush1.msra.mxu0 %v4992
    %5048 = vmatprep.subr.mxu0 %v4996
    %5049 = vmatpush1.msra.mxu0 %v4995
    %5050 = vmatprep.subr.mxu0 %v4999
    %5051 = vmatpush1.msra.mxu0 %v4998
    %5052 = vmatprep.subr.mxu0 %v5002
    %5053 = vmatpush1.msra.mxu0 %v5001
    %5054 = vmatprep.subr.mxu0 %v5005
    %5055 = vmatpush1.msra.mxu0 %v5004
    %5056 = vmatprep.subr.mxu0 %v5008
    %5057 = vmatpush1.msra.mxu0 %v5007
    %5058 = vmatprep.subr.mxu0 %v5011
    %5059 = vmatpush1.msra.mxu0 %v5010
    %5060 = vmatprep.subr.mxu0 0.0
    %5061 = vmatpush1.msra.mxu0 0.0
    %5062 = vmatprep.subr.mxu0 0.0
    %5063 = vmatpush1.msra.mxu0 0.0
    %5064 = vmatprep.subr.mxu0 0.0
    %5065 = vmatpush1.msra.mxu0 0.0
    %5066 = vmatprep.subr.mxu0 0.0
    %5067 = vmatpush1.msra.mxu0 0.0
    %5068 = vmatprep.subr.mxu0 0.0
    %5069 = vmatpush1.msra.mxu0 0.0
    %5070 = vmatprep.subr.mxu0 0.0
    %5071 = vmatpush1.msra.mxu0 0.0
    %5072 = vmatprep.subr.mxu0 0.0
    %5073 = vmatpush1.msra.mxu0 0.0
    %5074 = vmatprep.subr.mxu0 0.0
    %5075 = vmatpush1.msra.mxu0 0.0
    %5076 = vmatprep.subr.mxu0 0.0
    %5077 = vmatpush1.msra.mxu0 0.0
    %5078 = vmatprep.subr.mxu0 0.0
    %5079 = vmatpush1.msra.mxu0 0.0
    %5080 = vmatprep.subr.mxu0 0.0
    %5081 = vmatpush1.msra.mxu0 0.0
    %5082 = vmatprep.subr.mxu0 0.0
    %5083 = vmatpush1.msra.mxu0 0.0
    %5084 = vmatprep.mubr.f32.mxu0 %v5018
    %5085 = vmatmul.mubr.f32.gmra.mrb[0].mxu0 %v5015
    %v5086 = vpop.f32.mrb[0].mxu0
    %v5087 = vadd.f32 0.0, %v5086
    %v5088 = vpop.f32.mrb[0].mxu0
    %v5089 = vadd.f32 0.0, %v5088
    %5090 = vdwg.mxu0
    %5091 = vmatprep.subr.mxu0 0.0
    %5092 = vmatpush1.msra.mxu0 %v4955
    %5093 = vmatprep.subr.mxu0 0.0
    %5094 = vmatpush1.msra.mxu0 %v4958
    %5095 = vmatprep.subr.mxu0 0.0
    %5096 = vmatpush1.msra.mxu0 %v4961
    %5097 = vmatprep.subr.mxu0 0.0
    %5098 = vmatpush1.msra.mxu0 %v4964
    %5099 = vmatprep.subr.mxu0 0.0
    %5100 = vmatpush1.msra.mxu0 %v4967
    %5101 = vmatprep.subr.mxu0 0.0
    %5102 = vmatpush1.msra.mxu0 %v4970
    %5103 = vmatprep.subr.mxu0 0.0
    %5104 = vmatpush1.msra.mxu0 %v4973
    %5105 = vmatprep.subr.mxu0 0.0
    %5106 = vmatpush1.msra.mxu0 %v4976
    %5107 = vmatprep.subr.mxu0 0.0
    %5108 = vmatpush1.msra.mxu0 %v4979
    %5109 = vmatprep.subr.mxu0 0.0
    %5110 = vmatpush1.msra.mxu0 %v4982
    %5111 = vmatprep.subr.mxu0 0.0
    %5112 = vmatpush1.msra.mxu0 %v4985
    %5113 = vmatprep.subr.mxu0 0.0
    %5114 = vmatpush1.msra.mxu0 %v4988
    %5115 = vmatprep.subr.mxu0 0.0
    %5116 = vmatpush1.msra.mxu0 %v4991
    %5117 = vmatprep.subr.mxu0 0.0
    %5118 = vmatpush1.msra.mxu0 %v4994
    %5119 = vmatprep.subr.mxu0 0.0
    %5120 = vmatpush1.msra.mxu0 %v4997
    %5121 = vmatprep.subr.mxu0 0.0
    %5122 = vmatpush1.msra.mxu0 %v5000
    %5123 = vmatprep.subr.mxu0 0.0
    %5124 = vmatpush1.msra.mxu0 %v5003
    %5125 = vmatprep.subr.mxu0 0.0
    %5126 = vmatpush1.msra.mxu0 %v5006
    %5127 = vmatprep.subr.mxu0 0.0
    %5128 = vmatpush1.msra.mxu0 %v5009
    %5129 = vmatprep.subr.mxu0 0.0
    %5130 = vmatpush1.msra.mxu0 %v5012
    %5131 = vmatprep.subr.mxu0 0.0
    %5132 = vmatpush1.msra.mxu0 0.0
    %5133 = vmatprep.subr.mxu0 0.0
    %5134 = vmatpush1.msra.mxu0 0.0
    %5135 = vmatprep.subr.mxu0 0.0
    %5136 = vmatpush1.msra.mxu0 0.0
    %5137 = vmatprep.subr.mxu0 0.0
    %5138 = vmatpush1.msra.mxu0 0.0
    %5139 = vmatprep.subr.mxu0 0.0
    %5140 = vmatpush1.msra.mxu0 0.0
    %5141 = vmatprep.subr.mxu0 0.0
    %5142 = vmatpush1.msra.mxu0 0.0
    %5143 = vmatprep.subr.mxu0 0.0
    %5144 = vmatpush1.msra.mxu0 0.0
    %5145 = vmatprep.subr.mxu0 0.0
    %5146 = vmatpush1.msra.mxu0 0.0
    %5147 = vmatprep.subr.mxu0 0.0
    %5148 = vmatpush1.msra.mxu0 0.0
    %5149 = vmatprep.subr.mxu0 0.0
    %5150 = vmatpush1.msra.mxu0 0.0
    %5151 = vmatprep.subr.mxu0 0.0
    %5152 = vmatpush1.msra.mxu0 0.0
    %5153 = vmatprep.subr.mxu0 0.0
    %5154 = vmatpush1.msra.mxu0 0.0
    %5155 = vmatprep.mubr.f32.mxu0 %v5018
    %5156 = vmatmul.mubr.f32.gmra.mrb[0].mxu0 %v5015
    %v5157 = vpop.f32.mrb[0].mxu0
    %v5158 = vadd.f32 0.0, %v5157
    %v5159 = vpop.f32.mrb[0].mxu0
    %5160 = vdwg.mxu0
    %v5161 = vsel %vm3617, %v4805, 0
    %5163 = vmatprep.subr.mxu0 %v4854
    %5164 = vmatpush1.msra.mxu0 %v4853
    %5165 = vmatprep.subr.mxu0 %v4857
    %5166 = vmatpush1.msra.mxu0 %v4856
    %5167 = vmatprep.subr.mxu0 %v4860
    %5168 = vmatpush1.msra.mxu0 %v4859
    %5169 = vmatprep.subr.mxu0 %v4863
    %5170 = vmatpush1.msra.mxu0 %v4862
    %5171 = vmatprep.subr.mxu0 %v4866
    %5172 = vmatpush1.msra.mxu0 %v4865
    %5173 = vmatprep.subr.mxu0 %v4869
    %5174 = vmatpush1.msra.mxu0 %v4868
    %5175 = vmatprep.subr.mxu0 %v4872
    %5176 = vmatpush1.msra.mxu0 %v4871
    %5177 = vmatprep.subr.mxu0 %v4875
    %5178 = vmatpush1.msra.mxu0 %v4874
    %5179 = vmatprep.subr.mxu0 %v4878
    %5180 = vmatpush1.msra.mxu0 %v4877
    %5181 = vmatprep.subr.mxu0 %v4881
    %5182 = vmatpush1.msra.mxu0 %v4880
    %5183 = vmatprep.subr.mxu0 %v4884
    %5184 = vmatpush1.msra.mxu0 %v4883
    %5185 = vmatprep.subr.mxu0 %v4887
    %5186 = vmatpush1.msra.mxu0 %v4886
    %5187 = vmatprep.subr.mxu0 %v4890
    %5188 = vmatpush1.msra.mxu0 %v4889
    %5189 = vmatprep.subr.mxu0 %v4893
    %5190 = vmatpush1.msra.mxu0 %v4892
    %5191 = vmatprep.subr.mxu0 %v4896
    %5192 = vmatpush1.msra.mxu0 %v4895
    %5193 = vmatprep.subr.mxu0 %v4899
    %5194 = vmatpush1.msra.mxu0 %v4898
    %5195 = vmatprep.subr.mxu0 %v4902
    %5196 = vmatpush1.msra.mxu0 %v4901
    %5197 = vmatprep.subr.mxu0 %v4905
    %5198 = vmatpush1.msra.mxu0 %v4904
    %5199 = vmatprep.subr.mxu0 %v4908
    %5200 = vmatpush1.msra.mxu0 %v4907
    %5201 = vmatprep.subr.mxu0 %v4911
    %5202 = vmatpush1.msra.mxu0 %v4910
    %5203 = vmatprep.subr.mxu0 0.0
    %5204 = vmatpush1.msra.mxu0 0.0
    %5205 = vmatprep.subr.mxu0 0.0
    %5206 = vmatpush1.msra.mxu0 0.0
    %5207 = vmatprep.subr.mxu0 0.0
    %5208 = vmatpush1.msra.mxu0 0.0
    %5209 = vmatprep.subr.mxu0 0.0
    %5210 = vmatpush1.msra.mxu0 0.0
    %5211 = vmatprep.subr.mxu0 0.0
    %5212 = vmatpush1.msra.mxu0 0.0
    %5213 = vmatprep.subr.mxu0 0.0
    %5214 = vmatpush1.msra.mxu0 0.0
    %5215 = vmatprep.subr.mxu0 0.0
    %5216 = vmatpush1.msra.mxu0 0.0
    %5217 = vmatprep.subr.mxu0 0.0
    %5218 = vmatpush1.msra.mxu0 0.0
    %5219 = vmatprep.subr.mxu0 0.0
    %5220 = vmatpush1.msra.mxu0 0.0
    %5221 = vmatprep.subr.mxu0 0.0
    %5222 = vmatpush1.msra.mxu0 0.0
    %5223 = vmatprep.subr.mxu0 0.0
    %5224 = vmatpush1.msra.mxu0 0.0
    %5225 = vmatprep.subr.mxu0 0.0
    %5226 = vmatpush1.msra.mxu0 0.0
    %5227 = vmatprep.mubr.f32.mxu0 %v5161
    %5228 = vmatmul.mubr.f32.gmra.mrb[0].mxu0 %v4803
    %v5229 = vpop.f32.mrb[0].mxu0
    %v5230 = vadd.f32 %v5087, %v5229
    %v5231 = vpop.f32.mrb[0].mxu0
    %v5232 = vadd.f32 %v5089, %v5231
    %5233 = vdwg.mxu0
    %5234 = vmatprep.subr.mxu0 0.0
    %5235 = vmatpush1.msra.mxu0 %v4855
    %5236 = vmatprep.subr.mxu0 0.0
    %5237 = vmatpush1.msra.mxu0 %v4858
    %5238 = vmatprep.subr.mxu0 0.0
    %5239 = vmatpush1.msra.mxu0 %v4861
    %5240 = vmatprep.subr.mxu0 0.0
    %5241 = vmatpush1.msra.mxu0 %v4864
    %5242 = vmatprep.subr.mxu0 0.0
    %5243 = vmatpush1.msra.mxu0 %v4867
    %5244 = vmatprep.subr.mxu0 0.0
    %5245 = vmatpush1.msra.mxu0 %v4870
    %5246 = vmatprep.subr.mxu0 0.0
    %5247 = vmatpush1.msra.mxu0 %v4873
    %5248 = vmatprep.subr.mxu0 0.0
    %5249 = vmatpush1.msra.mxu0 %v4876
    %5250 = vmatprep.subr.mxu0 0.0
    %5251 = vmatpush1.msra.mxu0 %v4879
    %5252 = vmatprep.subr.mxu0 0.0
    %5253 = vmatpush1.msra.mxu0 %v4882
    %5254 = vmatprep.subr.mxu0 0.0
    %5255 = vmatpush1.msra.mxu0 %v4885
    %5256 = vmatprep.subr.mxu0 0.0
    %5257 = vmatpush1.msra.mxu0 %v4888
    %5258 = vmatprep.subr.mxu0 0.0
    %5259 = vmatpush1.msra.mxu0 %v4891
    %5260 = vmatprep.subr.mxu0 0.0
    %5261 = vmatpush1.msra.mxu0 %v4894
    %5262 = vmatprep.subr.mxu0 0.0
    %5263 = vmatpush1.msra.mxu0 %v4897
    %5264 = vmatprep.subr.mxu0 0.0
    %5265 = vmatpush1.msra.mxu0 %v4900
    %5266 = vmatprep.subr.mxu0 0.0
    %5267 = vmatpush1.msra.mxu0 %v4903
    %5268 = vmatprep.subr.mxu0 0.0
    %5269 = vmatpush1.msra.mxu0 %v4906
    %5270 = vmatprep.subr.mxu0 0.0
    %5271 = vmatpush1.msra.mxu0 %v4909
    %5272 = vmatprep.subr.mxu0 0.0
    %5273 = vmatpush1.msra.mxu0 %v4912
    %5274 = vmatprep.subr.mxu0 0.0
    %5275 = vmatpush1.msra.mxu0 0.0
    %5276 = vmatprep.subr.mxu0 0.0
    %5277 = vmatpush1.msra.mxu0 0.0
    %5278 = vmatprep.subr.mxu0 0.0
    %5279 = vmatpush1.msra.mxu0 0.0
    %5280 = vmatprep.subr.mxu0 0.0
    %5281 = vmatpush1.msra.mxu0 0.0
    %5282 = vmatprep.subr.mxu0 0.0
    %5283 = vmatpush1.msra.mxu0 0.0
    %5284 = vmatprep.subr.mxu0 0.0
    %5285 = vmatpush1.msra.mxu0 0.0
    %5286 = vmatprep.subr.mxu0 0.0
    %5287 = vmatpush1.msra.mxu0 0.0
    %5288 = vmatprep.subr.mxu0 0.0
    %5289 = vmatpush1.msra.mxu0 0.0
    %5290 = vmatprep.subr.mxu0 0.0
    %5291 = vmatpush1.msra.mxu0 0.0
    %5292 = vmatprep.subr.mxu0 0.0
    %5293 = vmatpush1.msra.mxu0 0.0
    %5294 = vmatprep.subr.mxu0 0.0
    %5295 = vmatpush1.msra.mxu0 0.0
    %5296 = vmatprep.subr.mxu0 0.0
    %5297 = vmatpush1.msra.mxu0 0.0
    %5298 = vmatprep.mubr.f32.mxu0 %v5161
    %5299 = vmatmul.mubr.f32.gmra.mrb[0].mxu0 %v4803
    %v5300 = vpop.f32.mrb[0].mxu0
    %v5301 = vadd.f32 %v5158, %v5300
    %v5302 = vpop.f32.mrb[0].mxu0
    %5303 = vdwg.mxu0
    %v5304 = vld [vmem:[#allocation23] sm:$0xff]
    %v5305 = vld [vmem:[#allocation23 + $0x8] sm:$0xf]
    %v5306 = vld [vmem:[#allocation23 + $0xc] sm:$0xff]
    %v5307 = vld [vmem:[#allocation23 + $0x14] sm:$0xf]
    %v5308 = vld [vmem:[#allocation23 + $0x18] sm:$0xff]
    %v5309 = vld [vmem:[#allocation23 + $0x20] sm:$0xf]
    %v5310 = vld [vmem:[#allocation23 + $0x24] sm:$0xff]
    %v5311 = vld [vmem:[#allocation23 + $0x2c] sm:$0xf]
    %v5312 = vld [vmem:[#allocation23 + $0x30] sm:$0xff]
    %v5313 = vld [vmem:[#allocation23 + $0x38] sm:$0xf]
    %v5314 = vld [vmem:[#allocation23 + $0x3c] sm:$0xff]
    %v5315 = vld [vmem:[#allocation23 + $0x44] sm:$0xf]
    %v5316 = vld [vmem:[#allocation23 + $0x48] sm:$0xff]
    %v5317 = vld [vmem:[#allocation23 + $0x50] sm:$0xf]
    %v5318 = vld [vmem:[#allocation23 + $0x54] sm:$0xff]
    %v5319 = vld [vmem:[#allocation23 + $0x5c] sm:$0xf]
    %v5320 = vld [vmem:[#allocation23 + $0x60] sm:$0xff]
    %v5321 = vld [vmem:[#allocation23 + $0x68] sm:$0xf]
    %v5322 = vld [vmem:[#allocation23 + $0x6c] sm:$0xff]
    %v5323 = vld [vmem:[#allocation23 + $0x74] sm:$0xf]
    %v5324 = vld [vmem:[#allocation23 + $0x78] sm:$0xff]
    %v5325 = vld [vmem:[#allocation23 + $0x80] sm:$0xf]
    %v5326 = vld [vmem:[#allocation23 + $0x84] sm:$0xff]
    %v5327 = vld [vmem:[#allocation23 + $0x8c] sm:$0xf]
    %v5328 = vld [vmem:[#allocation23 + $0x90] sm:$0xff]
    %v5329 = vld [vmem:[#allocation23 + $0x98] sm:$0xf]
    %v5330 = vld [vmem:[#allocation23 + $0x9c] sm:$0xff]
    %v5331 = vld [vmem:[#allocation23 + $0xa4] sm:$0xf]
    %v5332 = vld [vmem:[#allocation23 + $0xa8] sm:$0xff]
    %v5333 = vld [vmem:[#allocation23 + $0xb0] sm:$0xf]
    %v5334 = vld [vmem:[#allocation23 + $0xb4] sm:$0xff]
    %v5335 = vld [vmem:[#allocation23 + $0xbc] sm:$0xf]
    %v5336 = vld [vmem:[#allocation23 + $0xc0] sm:$0xff]
    %v5337 = vld [vmem:[#allocation23 + $0xc8] sm:$0xf]
    %v5338 = vld [vmem:[#allocation23 + $0xcc] sm:$0xff]
    %v5339 = vld [vmem:[#allocation23 + $0xd4] sm:$0xf]
    %v5340 = vld [vmem:[#allocation23 + $0xd8] sm:$0xff]
    %v5341 = vld [vmem:[#allocation23 + $0xe0] sm:$0xf]
    %v5342 = vld [vmem:[#allocation23 + $0xe4] sm:$0xff]
    %v5343 = vld [vmem:[#allocation23 + $0xec] sm:$0xf]
    %v5344 = vunpack.c.l.bf16 %v5304
    %v5345 = vunpack.c.h.bf16 %v5304
    %v5346 = vunpack.c.l.bf16 %v5305
    %v5347 = vunpack.c.l.bf16 %v5306
    %v5348 = vunpack.c.h.bf16 %v5306
    %v5349 = vunpack.c.l.bf16 %v5307
    %v5350 = vunpack.c.l.bf16 %v5308
    %v5351 = vunpack.c.h.bf16 %v5308
    %v5352 = vunpack.c.l.bf16 %v5309
    %v5353 = vunpack.c.l.bf16 %v5310
    %v5354 = vunpack.c.h.bf16 %v5310
    %v5355 = vunpack.c.l.bf16 %v5311
    %v5356 = vunpack.c.l.bf16 %v5312
    %v5357 = vunpack.c.h.bf16 %v5312
    %v5358 = vunpack.c.l.bf16 %v5313
    %v5359 = vunpack.c.l.bf16 %v5314
    %v5360 = vunpack.c.h.bf16 %v5314
    %v5361 = vunpack.c.l.bf16 %v5315
    %v5362 = vunpack.c.l.bf16 %v5316
    %v5363 = vunpack.c.h.bf16 %v5316
    %v5364 = vunpack.c.l.bf16 %v5317
    %v5365 = vunpack.c.l.bf16 %v5318
    %v5366 = vunpack.c.h.bf16 %v5318
    %v5367 = vunpack.c.l.bf16 %v5319
    %v5368 = vunpack.c.l.bf16 %v5320
    %v5369 = vunpack.c.h.bf16 %v5320
    %v5370 = vunpack.c.l.bf16 %v5321
    %v5371 = vunpack.c.l.bf16 %v5322
    %v5372 = vunpack.c.h.bf16 %v5322
    %v5373 = vunpack.c.l.bf16 %v5323
    %v5374 = vunpack.c.l.bf16 %v5324
    %v5375 = vunpack.c.h.bf16 %v5324
    %v5376 = vunpack.c.l.bf16 %v5325
    %v5377 = vunpack.c.l.bf16 %v5326
    %v5378 = vunpack.c.h.bf16 %v5326
    %v5379 = vunpack.c.l.bf16 %v5327
    %v5380 = vunpack.c.l.bf16 %v5328
    %v5381 = vunpack.c.h.bf16 %v5328
    %v5382 = vunpack.c.l.bf16 %v5329
    %v5383 = vunpack.c.l.bf16 %v5330
    %v5384 = vunpack.c.h.bf16 %v5330
    %v5385 = vunpack.c.l.bf16 %v5331
    %v5386 = vunpack.c.l.bf16 %v5332
    %v5387 = vunpack.c.h.bf16 %v5332
    %v5388 = vunpack.c.l.bf16 %v5333
    %v5389 = vunpack.c.l.bf16 %v5334
    %v5390 = vunpack.c.h.bf16 %v5334
    %v5391 = vunpack.c.l.bf16 %v5335
    %v5392 = vunpack.c.l.bf16 %v5336
    %v5393 = vunpack.c.h.bf16 %v5336
    %v5394 = vunpack.c.l.bf16 %v5337
    %v5395 = vunpack.c.l.bf16 %v5338
    %v5396 = vunpack.c.h.bf16 %v5338
    %v5397 = vunpack.c.l.bf16 %v5339
    %v5398 = vunpack.c.l.bf16 %v5340
    %v5399 = vunpack.c.h.bf16 %v5340
    %v5400 = vunpack.c.l.bf16 %v5341
    %v5401 = vunpack.c.l.bf16 %v5342
    %v5402 = vunpack.c.h.bf16 %v5342
    %v5403 = vunpack.c.l.bf16 %v5343
    %v5405 = vsel %vm3617, %v4811, 0
    %5407 = vmatprep.subr.mxu0 %v5345
    %5408 = vmatpush1.msra.mxu0 %v5344
    %5409 = vmatprep.subr.mxu0 %v5348
    %5410 = vmatpush1.msra.mxu0 %v5347
    %5411 = vmatprep.subr.mxu0 %v5351
    %5412 = vmatpush1.msra.mxu0 %v5350
    %5413 = vmatprep.subr.mxu0 %v5354
    %5414 = vmatpush1.msra.mxu0 %v5353
    %5415 = vmatprep.subr.mxu0 %v5357
    %5416 = vmatpush1.msra.mxu0 %v5356
    %5417 = vmatprep.subr.mxu0 %v5360
    %5418 = vmatpush1.msra.mxu0 %v5359
    %5419 = vmatprep.subr.mxu0 %v5363
    %5420 = vmatpush1.msra.mxu0 %v5362
    %5421 = vmatprep.subr.mxu0 %v5366
    %5422 = vmatpush1.msra.mxu0 %v5365
    %5423 = vmatprep.subr.mxu0 %v5369
    %5424 = vmatpush1.msra.mxu0 %v5368
    %5425 = vmatprep.subr.mxu0 %v5372
    %5426 = vmatpush1.msra.mxu0 %v5371
    %5427 = vmatprep.subr.mxu0 %v5375
    %5428 = vmatpush1.msra.mxu0 %v5374
    %5429 = vmatprep.subr.mxu0 %v5378
    %5430 = vmatpush1.msra.mxu0 %v5377
    %5431 = vmatprep.subr.mxu0 %v5381
    %5432 = vmatpush1.msra.mxu0 %v5380
    %5433 = vmatprep.subr.mxu0 %v5384
    %5434 = vmatpush1.msra.mxu0 %v5383
    %5435 = vmatprep.subr.mxu0 %v5387
    %5436 = vmatpush1.msra.mxu0 %v5386
    %5437 = vmatprep.subr.mxu0 %v5390
    %5438 = vmatpush1.msra.mxu0 %v5389
    %5439 = vmatprep.subr.mxu0 %v5393
    %5440 = vmatpush1.msra.mxu0 %v5392
    %5441 = vmatprep.subr.mxu0 %v5396
    %5442 = vmatpush1.msra.mxu0 %v5395
    %5443 = vmatprep.subr.mxu0 %v5399
    %5444 = vmatpush1.msra.mxu0 %v5398
    %5445 = vmatprep.subr.mxu0 %v5402
    %5446 = vmatpush1.msra.mxu0 %v5401
    %5447 = vmatprep.subr.mxu0 0.0
    %5448 = vmatpush1.msra.mxu0 0.0
    %5449 = vmatprep.subr.mxu0 0.0
    %5450 = vmatpush1.msra.mxu0 0.0
    %5451 = vmatprep.subr.mxu0 0.0
    %5452 = vmatpush1.msra.mxu0 0.0
    %5453 = vmatprep.subr.mxu0 0.0
    %5454 = vmatpush1.msra.mxu0 0.0
    %5455 = vmatprep.subr.mxu0 0.0
    %5456 = vmatpush1.msra.mxu0 0.0
    %5457 = vmatprep.subr.mxu0 0.0
    %5458 = vmatpush1.msra.mxu0 0.0
    %5459 = vmatprep.subr.mxu0 0.0
    %5460 = vmatpush1.msra.mxu0 0.0
    %5461 = vmatprep.subr.mxu0 0.0
    %5462 = vmatpush1.msra.mxu0 0.0
    %5463 = vmatprep.subr.mxu0 0.0
    %5464 = vmatpush1.msra.mxu0 0.0
    %5465 = vmatprep.subr.mxu0 0.0
    %5466 = vmatpush1.msra.mxu0 0.0
    %5467 = vmatprep.subr.mxu0 0.0
    %5468 = vmatpush1.msra.mxu0 0.0
    %5469 = vmatprep.subr.mxu0 0.0
    %5470 = vmatpush1.msra.mxu0 0.0
    %5471 = vmatprep.mubr.f32.mxu0 %v5405
    %5472 = vmatmul.mubr.f32.gmra.mrb[0].mxu0 %v4809
    %v5473 = vpop.f32.mrb[0].mxu0
    %v5474 = vadd.f32 0.0, %v5473
    %v5475 = vpop.f32.mrb[0].mxu0
    %v5476 = vadd.f32 0.0, %v5475
    %5477 = vdwg.mxu0
    %5478 = vmatprep.subr.mxu0 0.0
    %5479 = vmatpush1.msra.mxu0 %v5346
    %5480 = vmatprep.subr.mxu0 0.0
    %5481 = vmatpush1.msra.mxu0 %v5349
    %5482 = vmatprep.subr.mxu0 0.0
    %5483 = vmatpush1.msra.mxu0 %v5352
    %5484 = vmatprep.subr.mxu0 0.0
    %5485 = vmatpush1.msra.mxu0 %v5355
    %5486 = vmatprep.subr.mxu0 0.0
    %5487 = vmatpush1.msra.mxu0 %v5358
    %5488 = vmatprep.subr.mxu0 0.0
    %5489 = vmatpush1.msra.mxu0 %v5361
    %5490 = vmatprep.subr.mxu0 0.0
    %5491 = vmatpush1.msra.mxu0 %v5364
    %5492 = vmatprep.subr.mxu0 0.0
    %5493 = vmatpush1.msra.mxu0 %v5367
    %5494 = vmatprep.subr.mxu0 0.0
    %5495 = vmatpush1.msra.mxu0 %v5370
    %5496 = vmatprep.subr.mxu0 0.0
    %5497 = vmatpush1.msra.mxu0 %v5373
    %5498 = vmatprep.subr.mxu0 0.0
    %5499 = vmatpush1.msra.mxu0 %v5376
    %5500 = vmatprep.subr.mxu0 0.0
    %5501 = vmatpush1.msra.mxu0 %v5379
    %5502 = vmatprep.subr.mxu0 0.0
    %5503 = vmatpush1.msra.mxu0 %v5382
    %5504 = vmatprep.subr.mxu0 0.0
    %5505 = vmatpush1.msra.mxu0 %v5385
    %5506 = vmatprep.subr.mxu0 0.0
    %5507 = vmatpush1.msra.mxu0 %v5388
    %5508 = vmatprep.subr.mxu0 0.0
    %5509 = vmatpush1.msra.mxu0 %v5391
    %5510 = vmatprep.subr.mxu0 0.0
    %5511 = vmatpush1.msra.mxu0 %v5394
    %5512 = vmatprep.subr.mxu0 0.0
    %5513 = vmatpush1.msra.mxu0 %v5397
    %5514 = vmatprep.subr.mxu0 0.0
    %5515 = vmatpush1.msra.mxu0 %v5400
    %5516 = vmatprep.subr.mxu0 0.0
    %5517 = vmatpush1.msra.mxu0 %v5403
    %5518 = vmatprep.subr.mxu0 0.0
    %5519 = vmatpush1.msra.mxu0 0.0
    %5520 = vmatprep.subr.mxu0 0.0
    %5521 = vmatpush1.msra.mxu0 0.0
    %5522 = vmatprep.subr.mxu0 0.0
    %5523 = vmatpush1.msra.mxu0 0.0
    %5524 = vmatprep.subr.mxu0 0.0
    %5525 = vmatpush1.msra.mxu0 0.0
    %5526 = vmatprep.subr.mxu0 0.0
    %5527 = vmatpush1.msra.mxu0 0.0
    %5528 = vmatprep.subr.mxu0 0.0
    %5529 = vmatpush1.msra.mxu0 0.0
    %5530 = vmatprep.subr.mxu0 0.0
    %5531 = vmatpush1.msra.mxu0 0.0
    %5532 = vmatprep.subr.mxu0 0.0
    %5533 = vmatpush1.msra.mxu0 0.0
    %5534 = vmatprep.subr.mxu0 0.0
    %5535 = vmatpush1.msra.mxu0 0.0
    %5536 = vmatprep.subr.mxu0 0.0
    %5537 = vmatpush1.msra.mxu0 0.0
    %5538 = vmatprep.subr.mxu0 0.0
    %5539 = vmatpush1.msra.mxu0 0.0
    %5540 = vmatprep.subr.mxu0 0.0
    %5541 = vmatpush1.msra.mxu0 0.0
    %5542 = vmatprep.mubr.f32.mxu0 %v5405
    %5543 = vmatmul.mubr.f32.gmra.mrb[0].mxu0 %v4809
    %v5544 = vpop.f32.mrb[0].mxu0
    %v5545 = vadd.f32 0.0, %v5544
    %v5546 = vpop.f32.mrb[0].mxu0
    %5547 = vdwg.mxu0
    %v5548 = vadd.f32 %v5230, %v5474
    %v5549 = vadd.f32 %v5232, %v5476
    %v5550 = vadd.f32 %v5301, %v5545
    %v5551 = vld [vmem:[#allocation25] sm:$0xff]
    %v5552 = vld [vmem:[#allocation25 + $0x8] sm:$0xf]
    %v5553 = vld [vmem:[#allocation25 + $0xc] sm:$0xff]
    %v5554 = vld [vmem:[#allocation25 + $0x14] sm:$0xf]
    %v5555 = vld [vmem:[#allocation25 + $0x18] sm:$0xff]
    %v5556 = vld [vmem:[#allocation25 + $0x20] sm:$0xf]
    %v5557 = vld [vmem:[#allocation25 + $0x24] sm:$0xff]
    %v5558 = vld [vmem:[#allocation25 + $0x2c] sm:$0xf]
    %v5559 = vld [vmem:[#allocation25 + $0x30] sm:$0xff]
    %v5560 = vld [vmem:[#allocation25 + $0x38] sm:$0xf]
    %v5561 = vld [vmem:[#allocation25 + $0x3c] sm:$0xff]
    %v5562 = vld [vmem:[#allocation25 + $0x44] sm:$0xf]
    %v5563 = vld [vmem:[#allocation25 + $0x48] sm:$0xff]
    %v5564 = vld [vmem:[#allocation25 + $0x50] sm:$0xf]
    %v5565 = vld [vmem:[#allocation25 + $0x54] sm:$0xff]
    %v5566 = vld [vmem:[#allocation25 + $0x5c] sm:$0xf]
    %v5567 = vld [vmem:[#allocation25 + $0x60] sm:$0xff]
    %v5568 = vld [vmem:[#allocation25 + $0x68] sm:$0xf]
    %v5569 = vld [vmem:[#allocation25 + $0x6c] sm:$0xff]
    %v5570 = vld [vmem:[#allocation25 + $0x74] sm:$0xf]
    %v5571 = vld [vmem:[#allocation25 + $0x78] sm:$0xff]
    %v5572 = vld [vmem:[#allocation25 + $0x80] sm:$0xf]
    %v5573 = vld [vmem:[#allocation25 + $0x84] sm:$0xff]
    %v5574 = vld [vmem:[#allocation25 + $0x8c] sm:$0xf]
    %v5575 = vld [vmem:[#allocation25 + $0x90] sm:$0xff]
    %v5576 = vld [vmem:[#allocation25 + $0x98] sm:$0xf]
    %v5577 = vld [vmem:[#allocation25 + $0x9c] sm:$0xff]
    %v5578 = vld [vmem:[#allocation25 + $0xa4] sm:$0xf]
    %v5579 = vld [vmem:[#allocation25 + $0xa8] sm:$0xff]
    %v5580 = vld [vmem:[#allocation25 + $0xb0] sm:$0xf]
    %v5581 = vld [vmem:[#allocation25 + $0xb4] sm:$0xff]
    %v5582 = vld [vmem:[#allocation25 + $0xbc] sm:$0xf]
    %v5583 = vld [vmem:[#allocation25 + $0xc0] sm:$0xff]
    %v5584 = vld [vmem:[#allocation25 + $0xc8] sm:$0xf]
    %v5585 = vld [vmem:[#allocation25 + $0xcc] sm:$0xff]
    %v5586 = vld [vmem:[#allocation25 + $0xd4] sm:$0xf]
    %v5587 = vld [vmem:[#allocation25 + $0xd8] sm:$0xff]
    %v5588 = vld [vmem:[#allocation25 + $0xe0] sm:$0xf]
    %v5589 = vld [vmem:[#allocation25 + $0xe4] sm:$0xff]
    %v5590 = vld [vmem:[#allocation25 + $0xec] sm:$0xf]
    %v5591 = vunpack.c.l.bf16 %v5551
    %v5592 = vunpack.c.h.bf16 %v5551
    %v5593 = vunpack.c.l.bf16 %v5552
    %v5594 = vunpack.c.l.bf16 %v5553
    %v5595 = vunpack.c.h.bf16 %v5553
    %v5596 = vunpack.c.l.bf16 %v5554
    %v5597 = vunpack.c.l.bf16 %v5555
    %v5598 = vunpack.c.h.bf16 %v5555
    %v5599 = vunpack.c.l.bf16 %v5556
    %v5600 = vunpack.c.l.bf16 %v5557
    %v5601 = vunpack.c.h.bf16 %v5557
    %v5602 = vunpack.c.l.bf16 %v5558
    %v5603 = vunpack.c.l.bf16 %v5559
    %v5604 = vunpack.c.h.bf16 %v5559
    %v5605 = vunpack.c.l.bf16 %v5560
    %v5606 = vunpack.c.l.bf16 %v5561
    %v5607 = vunpack.c.h.bf16 %v5561
    %v5608 = vunpack.c.l.bf16 %v5562
    %v5609 = vunpack.c.l.bf16 %v5563
    %v5610 = vunpack.c.h.bf16 %v5563
    %v5611 = vunpack.c.l.bf16 %v5564
    %v5612 = vunpack.c.l.bf16 %v5565
    %v5613 = vunpack.c.h.bf16 %v5565
    %v5614 = vunpack.c.l.bf16 %v5566
    %v5615 = vunpack.c.l.bf16 %v5567
    %v5616 = vunpack.c.h.bf16 %v5567
    %v5617 = vunpack.c.l.bf16 %v5568
    %v5618 = vunpack.c.l.bf16 %v5569
    %v5619 = vunpack.c.h.bf16 %v5569
    %v5620 = vunpack.c.l.bf16 %v5570
    %v5621 = vunpack.c.l.bf16 %v5571
    %v5622 = vunpack.c.h.bf16 %v5571
    %v5623 = vunpack.c.l.bf16 %v5572
    %v5624 = vunpack.c.l.bf16 %v5573
    %v5625 = vunpack.c.h.bf16 %v5573
    %v5626 = vunpack.c.l.bf16 %v5574
    %v5627 = vunpack.c.l.bf16 %v5575
    %v5628 = vunpack.c.h.bf16 %v5575
    %v5629 = vunpack.c.l.bf16 %v5576
    %v5630 = vunpack.c.l.bf16 %v5577
    %v5631 = vunpack.c.h.bf16 %v5577
    %v5632 = vunpack.c.l.bf16 %v5578
    %v5633 = vunpack.c.l.bf16 %v5579
    %v5634 = vunpack.c.h.bf16 %v5579
    %v5635 = vunpack.c.l.bf16 %v5580
    %v5636 = vunpack.c.l.bf16 %v5581
    %v5637 = vunpack.c.h.bf16 %v5581
    %v5638 = vunpack.c.l.bf16 %v5582
    %v5639 = vunpack.c.l.bf16 %v5583
    %v5640 = vunpack.c.h.bf16 %v5583
    %v5641 = vunpack.c.l.bf16 %v5584
    %v5642 = vunpack.c.l.bf16 %v5585
    %v5643 = vunpack.c.h.bf16 %v5585
    %v5644 = vunpack.c.l.bf16 %v5586
    %v5645 = vunpack.c.l.bf16 %v5587
    %v5646 = vunpack.c.h.bf16 %v5587
    %v5647 = vunpack.c.l.bf16 %v5588
    %v5648 = vunpack.c.l.bf16 %v5589
    %v5649 = vunpack.c.h.bf16 %v5589
    %v5650 = vunpack.c.l.bf16 %v5590
    %v5652 = vrot.slane %v4809, 4
    %v5653 = vrot.slane %v4811, 4
    %v5655 = vsel %vm3617, %v5653, 0
    %5657 = vmatprep.subr.mxu0 %v5592
    %5658 = vmatpush1.msra.mxu0 %v5591
    %5659 = vmatprep.subr.mxu0 %v5595
    %5660 = vmatpush1.msra.mxu0 %v5594
    %5661 = vmatprep.subr.mxu0 %v5598
    %5662 = vmatpush1.msra.mxu0 %v5597
    %5663 = vmatprep.subr.mxu0 %v5601
    %5664 = vmatpush1.msra.mxu0 %v5600
    %5665 = vmatprep.subr.mxu0 %v5604
    %5666 = vmatpush1.msra.mxu0 %v5603
    %5667 = vmatprep.subr.mxu0 %v5607
    %5668 = vmatpush1.msra.mxu0 %v5606
    %5669 = vmatprep.subr.mxu0 %v5610
    %5670 = vmatpush1.msra.mxu0 %v5609
    %5671 = vmatprep.subr.mxu0 %v5613
    %5672 = vmatpush1.msra.mxu0 %v5612
    %5673 = vmatprep.subr.mxu0 %v5616
    %5674 = vmatpush1.msra.mxu0 %v5615
    %5675 = vmatprep.subr.mxu0 %v5619
    %5676 = vmatpush1.msra.mxu0 %v5618
    %5677 = vmatprep.subr.mxu0 %v5622
    %5678 = vmatpush1.msra.mxu0 %v5621
    %5679 = vmatprep.subr.mxu0 %v5625
    %5680 = vmatpush1.msra.mxu0 %v5624
    %5681 = vmatprep.subr.mxu0 %v5628
    %5682 = vmatpush1.msra.mxu0 %v5627
    %5683 = vmatprep.subr.mxu0 %v5631
    %5684 = vmatpush1.msra.mxu0 %v5630
    %5685 = vmatprep.subr.mxu0 %v5634
    %5686 = vmatpush1.msra.mxu0 %v5633
    %5687 = vmatprep.subr.mxu0 %v5637
    %5688 = vmatpush1.msra.mxu0 %v5636
    %5689 = vmatprep.subr.mxu0 %v5640
    %5690 = vmatpush1.msra.mxu0 %v5639
    %5691 = vmatprep.subr.mxu0 %v5643
    %5692 = vmatpush1.msra.mxu0 %v5642
    %5693 = vmatprep.subr.mxu0 %v5646
    %5694 = vmatpush1.msra.mxu0 %v5645
    %5695 = vmatprep.subr.mxu0 %v5649
    %5696 = vmatpush1.msra.mxu0 %v5648
    %5697 = vmatprep.subr.mxu0 0.0
    %5698 = vmatpush1.msra.mxu0 0.0
    %5699 = vmatprep.subr.mxu0 0.0
    %5700 = vmatpush1.msra.mxu0 0.0
    %5701 = vmatprep.subr.mxu0 0.0
    %5702 = vmatpush1.msra.mxu0 0.0
    %5703 = vmatprep.subr.mxu0 0.0
    %5704 = vmatpush1.msra.mxu0 0.0
    %5705 = vmatprep.subr.mxu0 0.0
    %5706 = vmatpush1.msra.mxu0 0.0
    %5707 = vmatprep.subr.mxu0 0.0
    %5708 = vmatpush1.msra.mxu0 0.0
    %5709 = vmatprep.subr.mxu0 0.0
    %5710 = vmatpush1.msra.mxu0 0.0
    %5711 = vmatprep.subr.mxu0 0.0
    %5712 = vmatpush1.msra.mxu0 0.0
    %5713 = vmatprep.subr.mxu0 0.0
    %5714 = vmatpush1.msra.mxu0 0.0
    %5715 = vmatprep.subr.mxu0 0.0
    %5716 = vmatpush1.msra.mxu0 0.0
    %5717 = vmatprep.subr.mxu0 0.0
    %5718 = vmatpush1.msra.mxu0 0.0
    %5719 = vmatprep.subr.mxu0 0.0
    %5720 = vmatpush1.msra.mxu0 0.0
    %5721 = vmatprep.mubr.f32.mxu0 %v5655
    %5722 = vmatmul.mubr.f32.gmra.mrb[0].mxu0 %v5652
    %v5723 = vpop.f32.mrb[0].mxu0
    %v5724 = vadd.f32 0.0, %v5723
    %v5725 = vpop.f32.mrb[0].mxu0
    %v5726 = vadd.f32 0.0, %v5725
    %5727 = vdwg.mxu0
    %5728 = vmatprep.subr.mxu0 0.0
    %5729 = vmatpush1.msra.mxu0 %v5593
    %5730 = vmatprep.subr.mxu0 0.0
    %5731 = vmatpush1.msra.mxu0 %v5596
    %5732 = vmatprep.subr.mxu0 0.0
    %5733 = vmatpush1.msra.mxu0 %v5599
    %5734 = vmatprep.subr.mxu0 0.0
    %5735 = vmatpush1.msra.mxu0 %v5602
    %5736 = vmatprep.subr.mxu0 0.0
    %5737 = vmatpush1.msra.mxu0 %v5605
    %5738 = vmatprep.subr.mxu0 0.0
    %5739 = vmatpush1.msra.mxu0 %v5608
    %5740 = vmatprep.subr.mxu0 0.0
    %5741 = vmatpush1.msra.mxu0 %v5611
    %5742 = vmatprep.subr.mxu0 0.0
    %5743 = vmatpush1.msra.mxu0 %v5614
    %5744 = vmatprep.subr.mxu0 0.0
    %5745 = vmatpush1.msra.mxu0 %v5617
    %5746 = vmatprep.subr.mxu0 0.0
    %5747 = vmatpush1.msra.mxu0 %v5620
    %5748 = vmatprep.subr.mxu0 0.0
    %5749 = vmatpush1.msra.mxu0 %v5623
    %5750 = vmatprep.subr.mxu0 0.0
    %5751 = vmatpush1.msra.mxu0 %v5626
    %5752 = vmatprep.subr.mxu0 0.0
    %5753 = vmatpush1.msra.mxu0 %v5629
    %5754 = vmatprep.subr.mxu0 0.0
    %5755 = vmatpush1.msra.mxu0 %v5632
    %5756 = vmatprep.subr.mxu0 0.0
    %5757 = vmatpush1.msra.mxu0 %v5635
    %5758 = vmatprep.subr.mxu0 0.0
    %5759 = vmatpush1.msra.mxu0 %v5638
    %5760 = vmatprep.subr.mxu0 0.0
    %5761 = vmatpush1.msra.mxu0 %v5641
    %5762 = vmatprep.subr.mxu0 0.0
    %5763 = vmatpush1.msra.mxu0 %v5644
    %5764 = vmatprep.subr.mxu0 0.0
    %5765 = vmatpush1.msra.mxu0 %v5647
    %5766 = vmatprep.subr.mxu0 0.0
    %5767 = vmatpush1.msra.mxu0 %v5650
    %5768 = vmatprep.subr.mxu0 0.0
    %5769 = vmatpush1.msra.mxu0 0.0
    %5770 = vmatprep.subr.mxu0 0.0
    %5771 = vmatpush1.msra.mxu0 0.0
    %5772 = vmatprep.subr.mxu0 0.0
    %5773 = vmatpush1.msra.mxu0 0.0
    %5774 = vmatprep.subr.mxu0 0.0
    %5775 = vmatpush1.msra.mxu0 0.0
    %5776 = vmatprep.subr.mxu0 0.0
    %5777 = vmatpush1.msra.mxu0 0.0
    %5778 = vmatprep.subr.mxu0 0.0
    %5779 = vmatpush1.msra.mxu0 0.0
    %5780 = vmatprep.subr.mxu0 0.0
    %5781 = vmatpush1.msra.mxu0 0.0
    %5782 = vmatprep.subr.mxu0 0.0
    %5783 = vmatpush1.msra.mxu0 0.0
    %5784 = vmatprep.subr.mxu0 0.0
    %5785 = vmatpush1.msra.mxu0 0.0
    %5786 = vmatprep.subr.mxu0 0.0
    %5787 = vmatpush1.msra.mxu0 0.0
    %5788 = vmatprep.subr.mxu0 0.0
    %5789 = vmatpush1.msra.mxu0 0.0
    %5790 = vmatprep.subr.mxu0 0.0
    %5791 = vmatpush1.msra.mxu0 0.0
    %5792 = vmatprep.mubr.f32.mxu0 %v5655
    %5793 = vmatmul.mubr.f32.gmra.mrb[0].mxu0 %v5652
    %v5794 = vpop.f32.mrb[0].mxu0
    %v5795 = vadd.f32 0.0, %v5794
    %v5796 = vpop.f32.mrb[0].mxu0
    %5797 = vdwg.mxu0
    %v5798 = vadd.f32 %v5548, %v5724
    %v5799 = vadd.f32 %v5549, %v5726
    %v5800 = vadd.f32 %v5550, %v5795
    %v5801 = vsel %vm3091, %v5798, 0.0
    %v5802 = vsel %vm3091, %v5799, 0.0
    %v5803 = vadd.f32 %v5801, %v5802
    %vm5804 = vcmask 519168
    %v5805 = vsel %vm5804, %v5800, 0.0
    %v5806 = vadd.f32 %v5803, %v5805
    %5807 = vadd.xlane.f32.xlu0 %v5806
    %v5808 = vpop.xlane.xlu0 %5807
    %v5809 = vmul.f32 %v5808, 0.003125
    %v5810 = vsub.f32 %v5798, %v5809
    %v5811 = vsub.f32 %v5799, %v5809
    %v5812 = vsub.f32 %v5800, %v5809
    %v5813 = vmul.f32 %v5810, %v5810
    %v5814 = vmul.f32 %v5811, %v5811
    %v5815 = vmul.f32 %v5812, %v5812
    %v5816 = vsel %vm3091, %v5813, 0.0
    %v5817 = vsel %vm3091, %v5814, 0.0
    %v5818 = vadd.f32 %v5816, %v5817
    %v5819 = vsel %vm5804, %v5815, 0.0
    %v5820 = vadd.f32 %v5818, %v5819
    %5821 = vadd.xlane.f32.xlu0 %v5820
    %v5822 = vpop.xlane.xlu0 %5821
    %v5823 = vmul.f32 %v5822, 0.003125
    %v5824 = vadd.f32 %v5823, 1e-05
    %v5825 = vrsqrt.pop %v5824
    %v5826 = vmul.f32 %v5810, %v5825
    %v5827 = vmul.f32 %v5811, %v5825
    %v5828 = vmul.f32 %v5812, %v5825
    %5830 = vset.pattern.permute.xlu0 0
    %5831 = vperm.xlu0 %5830, %v4728
    %v5832 = vpop.permute.xlu0 %5831
    %v5834 = vmul.f32 %v5826, %v5832
    %v5835 = vmul.f32 %v5827, %v5832
    %v5836 = vmul.f32 %v5828, %v5832
    %5838 = vset.pattern.permute.xlu0 0
    %5839 = vperm.xlu0 %5838, %v4729
    %v5840 = vpop.permute.xlu0 %5839
    %v5842 = vadd.f32 %v5834, %v5840
    %v5843 = vadd.f32 %v5835, %v5840
    %v5844 = vadd.f32 %v5836, %v5840
    %v5845 = vmax.f32 %v5842, 0.0
    %v5846 = vmax.f32 %v5843, 0.0
    %v5847 = vmax.f32 %v5844, 0.0
    %v5848 = vld [vmem:[%s85] sm:$0xf]
    %vm5849 = vcmask 31744
    %v5851 = vsel %vm5849, %v5848, 0
    %v5854 = vsel %vm3091, %v5845, 0
    %v5857 = vsel %vm3091, %v5846, 0
    %v5860 = vsel %vm3091, %v5847, 0
    %5862 = vmatprep.subr.mxu0 %v5857
    %5863 = vmatpush1.msra.mxu0 %v5854
    %5864 = vmatprep.subr.mxu0 0.0
    %5865 = vmatpush1.msra.mxu0 0.0
    %5866 = vmatprep.subr.mxu0 0.0
    %5867 = vmatpush1.msra.mxu0 0.0
    %5868 = vmatprep.subr.mxu0 0.0
    %5869 = vmatpush1.msra.mxu0 0.0
    %5870 = vmatprep.subr.mxu0 0.0
    %5871 = vmatpush1.msra.mxu0 0.0
    %5872 = vmatprep.subr.mxu0 0.0
    %5873 = vmatpush1.msra.mxu0 0.0
    %5874 = vmatprep.subr.mxu0 0.0
    %5875 = vmatpush1.msra.mxu0 0.0
    %5876 = vmatprep.subr.mxu0 0.0
    %5877 = vmatpush1.msra.mxu0 0.0
    %5878 = vmatprep.subr.mxu0 0.0
    %5879 = vmatpush1.msra.mxu0 0.0
    %5880 = vmatprep.subr.mxu0 0.0
    %5881 = vmatpush1.msra.mxu0 0.0
    %5882 = vmatprep.subr.mxu0 0.0
    %5883 = vmatpush1.msra.mxu0 0.0
    %5884 = vmatprep.subr.mxu0 0.0
    %5885 = vmatpush1.msra.mxu0 0.0
    %5886 = vmatprep.subr.mxu0 0.0
    %5887 = vmatpush1.msra.mxu0 0.0
    %5888 = vmatprep.subr.mxu0 0.0
    %5889 = vmatpush1.msra.mxu0 0.0
    %5890 = vmatprep.subr.mxu0 0.0
    %5891 = vmatpush1.msra.mxu0 0.0
    %5892 = vmatprep.subr.mxu0 0.0
    %5893 = vmatpush1.msra.mxu0 0.0
    %5894 = vmatprep.subr.mxu0 0.0
    %5895 = vmatpush1.msra.mxu0 0.0
    %5896 = vmatprep.subr.mxu0 0.0
    %5897 = vmatpush1.msra.mxu0 0.0
    %5898 = vmatprep.subr.mxu0 0.0
    %5899 = vmatpush1.msra.mxu0 0.0
    %5900 = vmatprep.subr.mxu0 0.0
    %5901 = vmatpush1.msra.mxu0 0.0
    %5902 = vmatprep.subr.mxu0 0.0
    %5903 = vmatpush1.msra.mxu0 0.0
    %5904 = vmatprep.subr.mxu0 0.0
    %5905 = vmatpush1.msra.mxu0 0.0
    %5906 = vmatprep.subr.mxu0 0.0
    %5907 = vmatpush1.msra.mxu0 0.0
    %5908 = vmatprep.subr.mxu0 0.0
    %5909 = vmatpush1.msra.mxu0 0.0
    %5910 = vmatprep.subr.mxu0 0.0
    %5911 = vmatpush1.msra.mxu0 0.0
    %5912 = vmatprep.subr.mxu0 0.0
    %5913 = vmatpush1.msra.mxu0 0.0
    %5914 = vmatprep.subr.mxu0 0.0
    %5915 = vmatpush1.msra.mxu0 0.0
    %5916 = vmatprep.subr.mxu0 0.0
    %5917 = vmatpush1.msra.mxu0 0.0
    %5918 = vmatprep.subr.mxu0 0.0
    %5919 = vmatpush1.msra.mxu0 0.0
    %5920 = vmatprep.subr.mxu0 0.0
    %5921 = vmatpush1.msra.mxu0 0.0
    %5922 = vmatprep.subr.mxu0 0.0
    %5923 = vmatpush1.msra.mxu0 0.0
    %5924 = vmatprep.subr.mxu0 0.0
    %5925 = vmatpush1.msra.mxu0 0.0
    %5926 = vmatprep.mubr.f32.mxu0 0.0
    %5927 = vmatmul.mubr.f32.gmra.mrb[0].mxu0 %v5851
    %v5928 = vpop.f32.mrb[0].mxu0
    %v5929 = vadd.f32 0.0, %v5928
    %v5930 = vpop.f32.mrb[0].mxu0
    %v5931 = vadd.f32 0.0, %v5930
    %5932 = vdwg.mxu0
    %5933 = vmatprep.subr.mxu0 0.0
    %5934 = vmatpush1.msra.mxu0 %v5860
    %5935 = vmatprep.subr.mxu0 0.0
    %5936 = vmatpush1.msra.mxu0 0.0
    %5937 = vmatprep.subr.mxu0 0.0
    %5938 = vmatpush1.msra.mxu0 0.0
    %5939 = vmatprep.subr.mxu0 0.0
    %5940 = vmatpush1.msra.mxu0 0.0
    %5941 = vmatprep.subr.mxu0 0.0
    %5942 = vmatpush1.msra.mxu0 0.0
    %5943 = vmatprep.subr.mxu0 0.0
    %5944 = vmatpush1.msra.mxu0 0.0
    %5945 = vmatprep.subr.mxu0 0.0
    %5946 = vmatpush1.msra.mxu0 0.0
    %5947 = vmatprep.subr.mxu0 0.0
    %5948 = vmatpush1.msra.mxu0 0.0
    %5949 = vmatprep.subr.mxu0 0.0
    %5950 = vmatpush1.msra.mxu0 0.0
    %5951 = vmatprep.subr.mxu0 0.0
    %5952 = vmatpush1.msra.mxu0 0.0
    %5953 = vmatprep.subr.mxu0 0.0
    %5954 = vmatpush1.msra.mxu0 0.0
    %5955 = vmatprep.subr.mxu0 0.0
    %5956 = vmatpush1.msra.mxu0 0.0
    %5957 = vmatprep.subr.mxu0 0.0
    %5958 = vmatpush1.msra.mxu0 0.0
    %5959 = vmatprep.subr.mxu0 0.0
    %5960 = vmatpush1.msra.mxu0 0.0
    %5961 = vmatprep.subr.mxu0 0.0
    %5962 = vmatpush1.msra.mxu0 0.0
    %5963 = vmatprep.subr.mxu0 0.0
    %5964 = vmatpush1.msra.mxu0 0.0
    %5965 = vmatprep.subr.mxu0 0.0
    %5966 = vmatpush1.msra.mxu0 0.0
    %5967 = vmatprep.subr.mxu0 0.0
    %5968 = vmatpush1.msra.mxu0 0.0
    %5969 = vmatprep.subr.mxu0 0.0
    %5970 = vmatpush1.msra.mxu0 0.0
    %5971 = vmatprep.subr.mxu0 0.0
    %5972 = vmatpush1.msra.mxu0 0.0
    %5973 = vmatprep.subr.mxu0 0.0
    %5974 = vmatpush1.msra.mxu0 0.0
    %5975 = vmatprep.subr.mxu0 0.0
    %5976 = vmatpush1.msra.mxu0 0.0
    %5977 = vmatprep.subr.mxu0 0.0
    %5978 = vmatpush1.msra.mxu0 0.0
    %5979 = vmatprep.subr.mxu0 0.0
    %5980 = vmatpush1.msra.mxu0 0.0
    %5981 = vmatprep.subr.mxu0 0.0
    %5982 = vmatpush1.msra.mxu0 0.0
    %5983 = vmatprep.subr.mxu0 0.0
    %5984 = vmatpush1.msra.mxu0 0.0
    %5985 = vmatprep.subr.mxu0 0.0
    %5986 = vmatpush1.msra.mxu0 0.0
    %5987 = vmatprep.subr.mxu0 0.0
    %5988 = vmatpush1.msra.mxu0 0.0
    %5989 = vmatprep.subr.mxu0 0.0
    %5990 = vmatpush1.msra.mxu0 0.0
    %5991 = vmatprep.subr.mxu0 0.0
    %5992 = vmatpush1.msra.mxu0 0.0
    %5993 = vmatprep.subr.mxu0 0.0
    %5994 = vmatpush1.msra.mxu0 0.0
    %5995 = vmatprep.subr.mxu0 0.0
    %5996 = vmatpush1.msra.mxu0 0.0
    %5997 = vmatprep.mubr.f32.mxu0 0.0
    %5998 = vmatmul.mubr.f32.gmra.mrb[0].mxu0 %v5851
    %v5999 = vpop.f32.mrb[0].mxu0
    %v6000 = vadd.f32 0.0, %v5999
    %v6001 = vpop.f32.mrb[0].mxu0
    %6002 = vdwg.mxu0
    %v6003 = vld [vmem:[%s87] sm:$0xff]
    %v6004 = vld [vmem:[%s87 + $0x8] sm:$0xff]
    %v6005 = vld [vmem:[%s87 + $0x10] sm:$0xf]
    %v6006 = vld [vmem:[%s87 + $0x14] sm:$0xff]
    %v6007 = vld [vmem:[%s87 + $0x1c] sm:$0xff]
    %v6008 = vld [vmem:[%s87 + $0x24] sm:$0xf]
    %v6009 = vld [vmem:[%s87 + $0x28] sm:$0xff]
    %v6010 = vld [vmem:[%s87 + $0x30] sm:$0xff]
    %v6011 = vld [vmem:[%s87 + $0x38] sm:$0xf]
    %v6012 = vld [vmem:[%s87 + $0x3c] sm:$0xff]
    %v6013 = vld [vmem:[%s87 + $0x44] sm:$0xff]
    %v6014 = vld [vmem:[%s87 + $0x4c] sm:$0xf]
    %v6015 = vld [vmem:[%s87 + $0x50] sm:$0xff]
    %v6016 = vld [vmem:[%s87 + $0x58] sm:$0xff]
    %v6017 = vld [vmem:[%s87 + $0x60] sm:$0xf]
    %v6018 = vld [vmem:[%s87 + $0x64] sm:$0xff]
    %v6019 = vld [vmem:[%s87 + $0x6c] sm:$0xff]
    %v6020 = vld [vmem:[%s87 + $0x74] sm:$0xf]
    %v6021 = vld [vmem:[%s87 + $0x78] sm:$0xff]
    %v6022 = vld [vmem:[%s87 + $0x80] sm:$0xff]
    %v6023 = vld [vmem:[%s87 + $0x88] sm:$0xf]
    %v6024 = vld [vmem:[%s87 + $0x8c] sm:$0xff]
    %v6025 = vld [vmem:[%s87 + $0x94] sm:$0xff]
    %v6026 = vld [vmem:[%s87 + $0x9c] sm:$0xf]
    %v6027 = vld [vmem:[%s87 + $0xa0] sm:$0xff]
    %v6028 = vld [vmem:[%s87 + $0xa8] sm:$0xff]
    %v6029 = vld [vmem:[%s87 + $0xb0] sm:$0xf]
    %v6030 = vld [vmem:[%s87 + $0xb4] sm:$0xff]
    %v6031 = vld [vmem:[%s87 + $0xbc] sm:$0xff]
    %v6032 = vld [vmem:[%s87 + $0xc4] sm:$0xf]
    %v6033 = vld [vmem:[%s87 + $0xc8] sm:$0xff]
    %v6034 = vld [vmem:[%s87 + $0xd0] sm:$0xff]
    %v6035 = vld [vmem:[%s87 + $0xd8] sm:$0xf]
    %v6036 = vld [vmem:[%s87 + $0xdc] sm:$0xff]
    %v6037 = vld [vmem:[%s87 + $0xe4] sm:$0xff]
    %v6038 = vld [vmem:[%s87 + $0xec] sm:$0xf]
    %v6039 = vld [vmem:[%s87 + $0xf0] sm:$0xff]
    %v6040 = vld [vmem:[%s87 + $0xf8] sm:$0xff]
    %v6041 = vld [vmem:[%s87 + $0x100] sm:$0xf]
    %v6042 = vld [vmem:[%s87 + $0x104] sm:$0xff]
    %v6043 = vld [vmem:[%s87 + $0x10c] sm:$0xff]
    %v6044 = vld [vmem:[%s87 + $0x114] sm:$0xf]
    %v6045 = vld [vmem:[%s87 + $0x118] sm:$0xff]
    %v6046 = vld [vmem:[%s87 + $0x120] sm:$0xff]
    %v6047 = vld [vmem:[%s87 + $0x128] sm:$0xf]
    %v6048 = vld [vmem:[%s87 + $0x12c] sm:$0xff]
    %v6049 = vld [vmem:[%s87 + $0x134] sm:$0xff]
    %v6050 = vld [vmem:[%s87 + $0x13c] sm:$0xf]
    %v6051 = vld [vmem:[%s87 + $0x140] sm:$0xff]
    %v6052 = vld [vmem:[%s87 + $0x148] sm:$0xff]
    %v6053 = vld [vmem:[%s87 + $0x150] sm:$0xf]
    %v6054 = vld [vmem:[%s87 + $0x154] sm:$0xff]
    %v6055 = vld [vmem:[%s87 + $0x15c] sm:$0xff]
    %v6056 = vld [vmem:[%s87 + $0x164] sm:$0xf]
    %v6057 = vld [vmem:[%s87 + $0x168] sm:$0xff]
    %v6058 = vld [vmem:[%s87 + $0x170] sm:$0xff]
    %v6059 = vld [vmem:[%s87 + $0x178] sm:$0xf]
    %v6060 = vld [vmem:[%s87 + $0x17c] sm:$0xff]
    %v6061 = vld [vmem:[%s87 + $0x184] sm:$0xff]
    %v6062 = vld [vmem:[%s87 + $0x18c] sm:$0xf]
    %v6063 = vld [vmem:[%s87 + $0x190] sm:$0xff]
    %v6064 = vld [vmem:[%s87 + $0x198] sm:$0xff]
    %v6065 = vld [vmem:[%s87 + $0x1a0] sm:$0xf]
    %v6066 = vld [vmem:[%s87 + $0x1a4] sm:$0xff]
    %v6067 = vld [vmem:[%s87 + $0x1ac] sm:$0xff]
    %v6068 = vld [vmem:[%s87 + $0x1b4] sm:$0xf]
    %v6069 = vld [vmem:[%s87 + $0x1b8] sm:$0xff]
    %v6070 = vld [vmem:[%s87 + $0x1c0] sm:$0xff]
    %v6071 = vld [vmem:[%s87 + $0x1c8] sm:$0xf]
    %v6072 = vld [vmem:[%s87 + $0x1cc] sm:$0xff]
    %v6073 = vld [vmem:[%s87 + $0x1d4] sm:$0xff]
    %v6074 = vld [vmem:[%s87 + $0x1dc] sm:$0xf]
    %v6075 = vld [vmem:[%s87 + $0x1e0] sm:$0xff]
    %v6076 = vld [vmem:[%s87 + $0x1e8] sm:$0xff]
    %v6077 = vld [vmem:[%s87 + $0x1f0] sm:$0xf]
    %v6078 = vld [vmem:[%s87 + $0x1f4] sm:$0xff]
    %v6079 = vld [vmem:[%s87 + $0x1fc] sm:$0xff]
    %v6080 = vld [vmem:[%s87 + $0x204] sm:$0xf]
    %v6081 = vld [vmem:[%s87 + $0x208] sm:$0xff]
    %v6082 = vld [vmem:[%s87 + $0x210] sm:$0xff]
    %v6083 = vld [vmem:[%s87 + $0x218] sm:$0xf]
    %v6084 = vld [vmem:[%s87 + $0x21c] sm:$0xff]
    %v6085 = vld [vmem:[%s87 + $0x224] sm:$0xff]
    %v6086 = vld [vmem:[%s87 + $0x22c] sm:$0xf]
    %v6087 = vld [vmem:[%s87 + $0x230] sm:$0xff]
    %v6088 = vld [vmem:[%s87 + $0x238] sm:$0xff]
    %v6089 = vld [vmem:[%s87 + $0x240] sm:$0xf]
    %v6090 = vld [vmem:[%s87 + $0x244] sm:$0xff]
    %v6091 = vld [vmem:[%s87 + $0x24c] sm:$0xff]
    %v6092 = vld [vmem:[%s87 + $0x254] sm:$0xf]
    %v6093 = vld [vmem:[%s87 + $0x258] sm:$0xff]
    %v6094 = vld [vmem:[%s87 + $0x260] sm:$0xff]
    %v6095 = vld [vmem:[%s87 + $0x268] sm:$0xf]
    %v6096 = vld [vmem:[%s87 + $0x26c] sm:$0xff]
    %v6097 = vld [vmem:[%s87 + $0x274] sm:$0xff]
    %v6098 = vld [vmem:[%s87 + $0x27c] sm:$0xf]
    %v6099 = vld [vmem:[%s87 + $0x280] sm:$0xff]
    %v6100 = vld [vmem:[%s87 + $0x288] sm:$0xff]
    %v6101 = vld [vmem:[%s87 + $0x290] sm:$0xf]
    %v6102 = vld [vmem:[%s87 + $0x294] sm:$0xff]
    %v6103 = vld [vmem:[%s87 + $0x29c] sm:$0xff]
    %v6104 = vld [vmem:[%s87 + $0x2a4] sm:$0xf]
    %v6105 = vld [vmem:[%s87 + $0x2a8] sm:$0xff]
    %v6106 = vld [vmem:[%s87 + $0x2b0] sm:$0xff]
    %v6107 = vld [vmem:[%s87 + $0x2b8] sm:$0xf]
    %v6108 = vld [vmem:[%s87 + $0x2bc] sm:$0xff]
    %v6109 = vld [vmem:[%s87 + $0x2c4] sm:$0xff]
    %v6110 = vld [vmem:[%s87 + $0x2cc] sm:$0xf]
    %v6111 = vld [vmem:[%s87 + $0x2d0] sm:$0xff]
    %v6112 = vld [vmem:[%s87 + $0x2d8] sm:$0xff]
    %v6113 = vld [vmem:[%s87 + $0x2e0] sm:$0xf]
    %v6114 = vld [vmem:[%s87 + $0x2e4] sm:$0xff]
    %v6115 = vld [vmem:[%s87 + $0x2ec] sm:$0xff]
    %v6116 = vld [vmem:[%s87 + $0x2f4] sm:$0xf]
    %v6117 = vld [vmem:[%s87 + $0x2f8] sm:$0xff]
    %v6118 = vld [vmem:[%s87 + $0x300] sm:$0xff]
    %v6119 = vld [vmem:[%s87 + $0x308] sm:$0xf]
    %v6120 = vld [vmem:[%s87 + $0x30c] sm:$0xff]
    %v6121 = vld [vmem:[%s87 + $0x314] sm:$0xff]
    %v6122 = vld [vmem:[%s87 + $0x31c] sm:$0xf]
    %v6123 = vunpack.c.l.bf16 %v6003
    %v6124 = vunpack.c.h.bf16 %v6003
    %v6125 = vunpack.c.l.bf16 %v6004
    %v6126 = vunpack.c.h.bf16 %v6004
    %v6127 = vunpack.c.l.bf16 %v6005
    %v6128 = vunpack.c.l.bf16 %v6006
    %v6129 = vunpack.c.h.bf16 %v6006
    %v6130 = vunpack.c.l.bf16 %v6007
    %v6131 = vunpack.c.h.bf16 %v6007
    %v6132 = vunpack.c.l.bf16 %v6008
    %v6133 = vunpack.c.l.bf16 %v6009
    %v6134 = vunpack.c.h.bf16 %v6009
    %v6135 = vunpack.c.l.bf16 %v6010
    %v6136 = vunpack.c.h.bf16 %v6010
    %v6137 = vunpack.c.l.bf16 %v6011
    %v6138 = vunpack.c.l.bf16 %v6012
    %v6139 = vunpack.c.h.bf16 %v6012
    %v6140 = vunpack.c.l.bf16 %v6013
    %v6141 = vunpack.c.h.bf16 %v6013
    %v6142 = vunpack.c.l.bf16 %v6014
    %v6143 = vunpack.c.l.bf16 %v6015
    %v6144 = vunpack.c.h.bf16 %v6015
    %v6145 = vunpack.c.l.bf16 %v6016
    %v6146 = vunpack.c.h.bf16 %v6016
    %v6147 = vunpack.c.l.bf16 %v6017
    %v6148 = vunpack.c.l.bf16 %v6018
    %v6149 = vunpack.c.h.bf16 %v6018
    %v6150 = vunpack.c.l.bf16 %v6019
    %v6151 = vunpack.c.h.bf16 %v6019
    %v6152 = vunpack.c.l.bf16 %v6020
    %v6153 = vunpack.c.l.bf16 %v6021
    %v6154 = vunpack.c.h.bf16 %v6021
    %v6155 = vunpack.c.l.bf16 %v6022
    %v6156 = vunpack.c.h.bf16 %v6022
    %v6157 = vunpack.c.l.bf16 %v6023
    %v6158 = vunpack.c.l.bf16 %v6024
    %v6159 = vunpack.c.h.bf16 %v6024
    %v6160 = vunpack.c.l.bf16 %v6025
    %v6161 = vunpack.c.h.bf16 %v6025
    %v6162 = vunpack.c.l.bf16 %v6026
    %v6163 = vunpack.c.l.bf16 %v6027
    %v6164 = vunpack.c.h.bf16 %v6027
    %v6165 = vunpack.c.l.bf16 %v6028
    %v6166 = vunpack.c.h.bf16 %v6028
    %v6167 = vunpack.c.l.bf16 %v6029
    %v6168 = vunpack.c.l.bf16 %v6030
    %v6169 = vunpack.c.h.bf16 %v6030
    %v6170 = vunpack.c.l.bf16 %v6031
    %v6171 = vunpack.c.h.bf16 %v6031
    %v6172 = vunpack.c.l.bf16 %v6032
    %v6173 = vunpack.c.l.bf16 %v6033
    %v6174 = vunpack.c.h.bf16 %v6033
    %v6175 = vunpack.c.l.bf16 %v6034
    %v6176 = vunpack.c.h.bf16 %v6034
    %v6177 = vunpack.c.l.bf16 %v6035
    %v6178 = vunpack.c.l.bf16 %v6036
    %v6179 = vunpack.c.h.bf16 %v6036
    %v6180 = vunpack.c.l.bf16 %v6037
    %v6181 = vunpack.c.h.bf16 %v6037
    %v6182 = vunpack.c.l.bf16 %v6038
    %v6183 = vunpack.c.l.bf16 %v6039
    %v6184 = vunpack.c.h.bf16 %v6039
    %v6185 = vunpack.c.l.bf16 %v6040
    %v6186 = vunpack.c.h.bf16 %v6040
    %v6187 = vunpack.c.l.bf16 %v6041
    %v6188 = vunpack.c.l.bf16 %v6042
    %v6189 = vunpack.c.h.bf16 %v6042
    %v6190 = vunpack.c.l.bf16 %v6043
    %v6191 = vunpack.c.h.bf16 %v6043
    %v6192 = vunpack.c.l.bf16 %v6044
    %v6193 = vunpack.c.l.bf16 %v6045
    %v6194 = vunpack.c.h.bf16 %v6045
    %v6195 = vunpack.c.l.bf16 %v6046
    %v6196 = vunpack.c.h.bf16 %v6046
    %v6197 = vunpack.c.l.bf16 %v6047
    %v6198 = vunpack.c.l.bf16 %v6048
    %v6199 = vunpack.c.h.bf16 %v6048
    %v6200 = vunpack.c.l.bf16 %v6049
    %v6201 = vunpack.c.h.bf16 %v6049
    %v6202 = vunpack.c.l.bf16 %v6050
    %v6203 = vunpack.c.l.bf16 %v6051
    %v6204 = vunpack.c.h.bf16 %v6051
    %v6205 = vunpack.c.l.bf16 %v6052
    %v6206 = vunpack.c.h.bf16 %v6052
    %v6207 = vunpack.c.l.bf16 %v6053
    %v6208 = vunpack.c.l.bf16 %v6054
    %v6209 = vunpack.c.h.bf16 %v6054
    %v6210 = vunpack.c.l.bf16 %v6055
    %v6211 = vunpack.c.h.bf16 %v6055
    %v6212 = vunpack.c.l.bf16 %v6056
    %v6213 = vunpack.c.l.bf16 %v6057
    %v6214 = vunpack.c.h.bf16 %v6057
    %v6215 = vunpack.c.l.bf16 %v6058
    %v6216 = vunpack.c.h.bf16 %v6058
    %v6217 = vunpack.c.l.bf16 %v6059
    %v6218 = vunpack.c.l.bf16 %v6060
    %v6219 = vunpack.c.h.bf16 %v6060
    %v6220 = vunpack.c.l.bf16 %v6061
    %v6221 = vunpack.c.h.bf16 %v6061
    %v6222 = vunpack.c.l.bf16 %v6062
    %v6223 = vunpack.c.l.bf16 %v6063
    %v6224 = vunpack.c.h.bf16 %v6063
    %v6225 = vunpack.c.l.bf16 %v6064
    %v6226 = vunpack.c.h.bf16 %v6064
    %v6227 = vunpack.c.l.bf16 %v6065
    %v6228 = vunpack.c.l.bf16 %v6066
    %v6229 = vunpack.c.h.bf16 %v6066
    %v6230 = vunpack.c.l.bf16 %v6067
    %v6231 = vunpack.c.h.bf16 %v6067
    %v6232 = vunpack.c.l.bf16 %v6068
    %v6233 = vunpack.c.l.bf16 %v6069
    %v6234 = vunpack.c.h.bf16 %v6069
    %v6235 = vunpack.c.l.bf16 %v6070
    %v6236 = vunpack.c.h.bf16 %v6070
    %v6237 = vunpack.c.l.bf16 %v6071
    %v6238 = vunpack.c.l.bf16 %v6072
    %v6239 = vunpack.c.h.bf16 %v6072
    %v6240 = vunpack.c.l.bf16 %v6073
    %v6241 = vunpack.c.h.bf16 %v6073
    %v6242 = vunpack.c.l.bf16 %v6074
    %v6243 = vunpack.c.l.bf16 %v6075
    %v6244 = vunpack.c.h.bf16 %v6075
    %v6245 = vunpack.c.l.bf16 %v6076
    %v6246 = vunpack.c.h.bf16 %v6076
    %v6247 = vunpack.c.l.bf16 %v6077
    %v6248 = vunpack.c.l.bf16 %v6078
    %v6249 = vunpack.c.h.bf16 %v6078
    %v6250 = vunpack.c.l.bf16 %v6079
    %v6251 = vunpack.c.h.bf16 %v6079
    %v6252 = vunpack.c.l.bf16 %v6080
    %v6253 = vunpack.c.l.bf16 %v6081
    %v6254 = vunpack.c.h.bf16 %v6081
    %v6255 = vunpack.c.l.bf16 %v6082
    %v6256 = vunpack.c.h.bf16 %v6082
    %v6257 = vunpack.c.l.bf16 %v6083
    %v6258 = vunpack.c.l.bf16 %v6084
    %v6259 = vunpack.c.h.bf16 %v6084
    %v6260 = vunpack.c.l.bf16 %v6085
    %v6261 = vunpack.c.h.bf16 %v6085
    %v6262 = vunpack.c.l.bf16 %v6086
    %v6263 = vunpack.c.l.bf16 %v6087
    %v6264 = vunpack.c.h.bf16 %v6087
    %v6265 = vunpack.c.l.bf16 %v6088
    %v6266 = vunpack.c.h.bf16 %v6088
    %v6267 = vunpack.c.l.bf16 %v6089
    %v6268 = vunpack.c.l.bf16 %v6090
    %v6269 = vunpack.c.h.bf16 %v6090
    %v6270 = vunpack.c.l.bf16 %v6091
    %v6271 = vunpack.c.h.bf16 %v6091
    %v6272 = vunpack.c.l.bf16 %v6092
    %v6273 = vunpack.c.l.bf16 %v6093
    %v6274 = vunpack.c.h.bf16 %v6093
    %v6275 = vunpack.c.l.bf16 %v6094
    %v6276 = vunpack.c.h.bf16 %v6094
    %v6277 = vunpack.c.l.bf16 %v6095
    %v6278 = vunpack.c.l.bf16 %v6096
    %v6279 = vunpack.c.h.bf16 %v6096
    %v6280 = vunpack.c.l.bf16 %v6097
    %v6281 = vunpack.c.h.bf16 %v6097
    %v6282 = vunpack.c.l.bf16 %v6098
    %v6283 = vunpack.c.l.bf16 %v6099
    %v6284 = vunpack.c.h.bf16 %v6099
    %v6285 = vunpack.c.l.bf16 %v6100
    %v6286 = vunpack.c.h.bf16 %v6100
    %v6287 = vunpack.c.l.bf16 %v6101
    %v6288 = vunpack.c.l.bf16 %v6102
    %v6289 = vunpack.c.h.bf16 %v6102
    %v6290 = vunpack.c.l.bf16 %v6103
    %v6291 = vunpack.c.h.bf16 %v6103
    %v6292 = vunpack.c.l.bf16 %v6104
    %v6293 = vunpack.c.l.bf16 %v6105
    %v6294 = vunpack.c.h.bf16 %v6105
    %v6295 = vunpack.c.l.bf16 %v6106
    %v6296 = vunpack.c.h.bf16 %v6106
    %v6297 = vunpack.c.l.bf16 %v6107
    %v6298 = vunpack.c.l.bf16 %v6108
    %v6299 = vunpack.c.h.bf16 %v6108
    %v6300 = vunpack.c.l.bf16 %v6109
    %v6301 = vunpack.c.h.bf16 %v6109
    %v6302 = vunpack.c.l.bf16 %v6110
    %v6303 = vunpack.c.l.bf16 %v6111
    %v6304 = vunpack.c.h.bf16 %v6111
    %v6305 = vunpack.c.l.bf16 %v6112
    %v6306 = vunpack.c.h.bf16 %v6112
    %v6307 = vunpack.c.l.bf16 %v6113
    %v6308 = vunpack.c.l.bf16 %v6114
    %v6309 = vunpack.c.h.bf16 %v6114
    %v6310 = vunpack.c.l.bf16 %v6115
    %v6311 = vunpack.c.h.bf16 %v6115
    %v6312 = vunpack.c.l.bf16 %v6116
    %v6313 = vunpack.c.l.bf16 %v6117
    %v6314 = vunpack.c.h.bf16 %v6117
    %v6315 = vunpack.c.l.bf16 %v6118
    %v6316 = vunpack.c.h.bf16 %v6118
    %v6317 = vunpack.c.l.bf16 %v6119
    %v6318 = vunpack.c.l.bf16 %v6120
    %v6319 = vunpack.c.h.bf16 %v6120
    %v6320 = vunpack.c.l.bf16 %v6121
    %v6321 = vunpack.c.h.bf16 %v6121
    %v6322 = vunpack.c.l.bf16 %v6122
    %v6323 = vld [vmem:[#allocation26] sm:$0xff]
    %v6324 = vld [vmem:[#allocation26 + $0x8] sm:$0xff]
    %v6325 = vld [vmem:[#allocation26 + $0x10] sm:$0xf]
    %v6326 = vld [vmem:[#allocation26 + $0x14] sm:$0xff]
    %v6327 = vld [vmem:[#allocation26 + $0x1c] sm:$0xff]
    %v6328 = vld [vmem:[#allocation26 + $0x24] sm:$0xf]
    %v6329 = vld [vmem:[#allocation26 + $0x28] sm:$0xff]
    %v6330 = vld [vmem:[#allocation26 + $0x30] sm:$0xff]
    %v6331 = vld [vmem:[#allocation26 + $0x38] sm:$0xf]
    %v6332 = vld [vmem:[#allocation26 + $0x3c] sm:$0xff]
    %v6333 = vld [vmem:[#allocation26 + $0x44] sm:$0xff]
    %v6334 = vld [vmem:[#allocation26 + $0x4c] sm:$0xf]
    %v6335 = vld [vmem:[#allocation26 + $0x50] sm:$0xff]
    %v6336 = vld [vmem:[#allocation26 + $0x58] sm:$0xff]
    %v6337 = vld [vmem:[#allocation26 + $0x60] sm:$0xf]
    %v6338 = vld [vmem:[#allocation26 + $0x64] sm:$0xff]
    %v6339 = vld [vmem:[#allocation26 + $0x6c] sm:$0xff]
    %v6340 = vld [vmem:[#allocation26 + $0x74] sm:$0xf]
    %v6341 = vld [vmem:[#allocation26 + $0x78] sm:$0xff]
    %v6342 = vld [vmem:[#allocation26 + $0x80] sm:$0xff]
    %v6343 = vld [vmem:[#allocation26 + $0x88] sm:$0xf]
    %v6344 = vld [vmem:[#allocation26 + $0x8c] sm:$0xff]
    %v6345 = vld [vmem:[#allocation26 + $0x94] sm:$0xff]
    %v6346 = vld [vmem:[#allocation26 + $0x9c] sm:$0xf]
    %v6347 = vld [vmem:[#allocation26 + $0xa0] sm:$0xff]
    %v6348 = vld [vmem:[#allocation26 + $0xa8] sm:$0xff]
    %v6349 = vld [vmem:[#allocation26 + $0xb0] sm:$0xf]
    %v6350 = vld [vmem:[#allocation26 + $0xb4] sm:$0xff]
    %v6351 = vld [vmem:[#allocation26 + $0xbc] sm:$0xff]
    %v6352 = vld [vmem:[#allocation26 + $0xc4] sm:$0xf]
    %v6353 = vld [vmem:[#allocation26 + $0xc8] sm:$0xff]
    %v6354 = vld [vmem:[#allocation26 + $0xd0] sm:$0xff]
    %v6355 = vld [vmem:[#allocation26 + $0xd8] sm:$0xf]
    %v6356 = vld [vmem:[#allocation26 + $0xdc] sm:$0xff]
    %v6357 = vld [vmem:[#allocation26 + $0xe4] sm:$0xff]
    %v6358 = vld [vmem:[#allocation26 + $0xec] sm:$0xf]
    %v6359 = vld [vmem:[#allocation26 + $0xf0] sm:$0xff]
    %v6360 = vld [vmem:[#allocation26 + $0xf8] sm:$0xff]
    %v6361 = vld [vmem:[#allocation26 + $0x100] sm:$0xf]
    %v6362 = vld [vmem:[#allocation26 + $0x104] sm:$0xff]
    %v6363 = vld [vmem:[#allocation26 + $0x10c] sm:$0xff]
    %v6364 = vld [vmem:[#allocation26 + $0x114] sm:$0xf]
    %v6365 = vld [vmem:[#allocation26 + $0x118] sm:$0xff]
    %v6366 = vld [vmem:[#allocation26 + $0x120] sm:$0xff]
    %v6367 = vld [vmem:[#allocation26 + $0x128] sm:$0xf]
    %v6368 = vld [vmem:[#allocation26 + $0x12c] sm:$0xff]
    %v6369 = vld [vmem:[#allocation26 + $0x134] sm:$0xff]
    %v6370 = vld [vmem:[#allocation26 + $0x13c] sm:$0xf]
    %v6371 = vld [vmem:[#allocation26 + $0x140] sm:$0xff]
    %v6372 = vld [vmem:[#allocation26 + $0x148] sm:$0xff]
    %v6373 = vld [vmem:[#allocation26 + $0x150] sm:$0xf]
    %v6374 = vld [vmem:[#allocation26 + $0x154] sm:$0xff]
    %v6375 = vld [vmem:[#allocation26 + $0x15c] sm:$0xff]
    %v6376 = vld [vmem:[#allocation26 + $0x164] sm:$0xf]
    %v6377 = vld [vmem:[#allocation26 + $0x168] sm:$0xff]
    %v6378 = vld [vmem:[#allocation26 + $0x170] sm:$0xff]
    %v6379 = vld [vmem:[#allocation26 + $0x178] sm:$0xf]
    %v6380 = vld [vmem:[#allocation26 + $0x17c] sm:$0xff]
    %v6381 = vld [vmem:[#allocation26 + $0x184] sm:$0xff]
    %v6382 = vld [vmem:[#allocation26 + $0x18c] sm:$0xf]
    %v6383 = vld [vmem:[#allocation26 + $0x190] sm:$0xff]
    %v6384 = vld [vmem:[#allocation26 + $0x198] sm:$0xff]
    %v6385 = vld [vmem:[#allocation26 + $0x1a0] sm:$0xf]
    %v6386 = vld [vmem:[#allocation26 + $0x1a4] sm:$0xff]
    %v6387 = vld [vmem:[#allocation26 + $0x1ac] sm:$0xff]
    %v6388 = vld [vmem:[#allocation26 + $0x1b4] sm:$0xf]
    %v6389 = vld [vmem:[#allocation26 + $0x1b8] sm:$0xff]
    %v6390 = vld [vmem:[#allocation26 + $0x1c0] sm:$0xff]
    %v6391 = vld [vmem:[#allocation26 + $0x1c8] sm:$0xf]
    %v6392 = vld [vmem:[#allocation26 + $0x1cc] sm:$0xff]
    %v6393 = vld [vmem:[#allocation26 + $0x1d4] sm:$0xff]
    %v6394 = vld [vmem:[#allocation26 + $0x1dc] sm:$0xf]
    %v6395 = vld [vmem:[#allocation26 + $0x1e0] sm:$0xff]
    %v6396 = vld [vmem:[#allocation26 + $0x1e8] sm:$0xff]
    %v6397 = vld [vmem:[#allocation26 + $0x1f0] sm:$0xf]
    %v6398 = vld [vmem:[#allocation26 + $0x1f4] sm:$0xff]
    %v6399 = vld [vmem:[#allocation26 + $0x1fc] sm:$0xff]
    %v6400 = vld [vmem:[#allocation26 + $0x204] sm:$0xf]
    %v6401 = vld [vmem:[#allocation26 + $0x208] sm:$0xff]
    %v6402 = vld [vmem:[#allocation26 + $0x210] sm:$0xff]
    %v6403 = vld [vmem:[#allocation26 + $0x218] sm:$0xf]
    %v6404 = vld [vmem:[#allocation26 + $0x21c] sm:$0xff]
    %v6405 = vld [vmem:[#allocation26 + $0x224] sm:$0xff]
    %v6406 = vld [vmem:[#allocation26 + $0x22c] sm:$0xf]
    %v6407 = vld [vmem:[#allocation26 + $0x230] sm:$0xff]
    %v6408 = vld [vmem:[#allocation26 + $0x238] sm:$0xff]
    %v6409 = vld [vmem:[#allocation26 + $0x240] sm:$0xf]
    %v6410 = vld [vmem:[#allocation26 + $0x244] sm:$0xff]
    %v6411 = vld [vmem:[#allocation26 + $0x24c] sm:$0xff]
    %v6412 = vld [vmem:[#allocation26 + $0x254] sm:$0xf]
    %v6413 = vld [vmem:[#allocation26 + $0x258] sm:$0xff]
    %v6414 = vld [vmem:[#allocation26 + $0x260] sm:$0xff]
    %v6415 = vld [vmem:[#allocation26 + $0x268] sm:$0xf]
    %v6416 = vld [vmem:[#allocation26 + $0x26c] sm:$0xff]
    %v6417 = vld [vmem:[#allocation26 + $0x274] sm:$0xff]
    %v6418 = vld [vmem:[#allocation26 + $0x27c] sm:$0xf]
    %v6419 = vld [vmem:[#allocation26 + $0x280] sm:$0xff]
    %v6420 = vld [vmem:[#allocation26 + $0x288] sm:$0xff]
    %v6421 = vld [vmem:[#allocation26 + $0x290] sm:$0xf]
    %v6422 = vld [vmem:[#allocation26 + $0x294] sm:$0xff]
    %v6423 = vld [vmem:[#allocation26 + $0x29c] sm:$0xff]
    %v6424 = vld [vmem:[#allocation26 + $0x2a4] sm:$0xf]
    %v6425 = vld [vmem:[#allocation26 + $0x2a8] sm:$0xff]
    %v6426 = vld [vmem:[#allocation26 + $0x2b0] sm:$0xff]
    %v6427 = vld [vmem:[#allocation26 + $0x2b8] sm:$0xf]
    %v6428 = vld [vmem:[#allocation26 + $0x2bc] sm:$0xff]
    %v6429 = vld [vmem:[#allocation26 + $0x2c4] sm:$0xff]
    %v6430 = vld [vmem:[#allocation26 + $0x2cc] sm:$0xf]
    %v6431 = vld [vmem:[#allocation26 + $0x2d0] sm:$0xff]
    %v6432 = vld [vmem:[#allocation26 + $0x2d8] sm:$0xff]
    %v6433 = vld [vmem:[#allocation26 + $0x2e0] sm:$0xf]
    %v6434 = vld [vmem:[#allocation26 + $0x2e4] sm:$0xff]
    %v6435 = vld [vmem:[#allocation26 + $0x2ec] sm:$0xff]
    %v6436 = vld [vmem:[#allocation26 + $0x2f4] sm:$0xf]
    %v6437 = vld [vmem:[#allocation26 + $0x2f8] sm:$0xff]
    %v6438 = vld [vmem:[#allocation26 + $0x300] sm:$0xff]
    %v6439 = vld [vmem:[#allocation26 + $0x308] sm:$0xf]
    %v6440 = vld [vmem:[#allocation26 + $0x30c] sm:$0xff]
    %v6441 = vld [vmem:[#allocation26 + $0x314] sm:$0xff]
    %v6442 = vld [vmem:[#allocation26 + $0x31c] sm:$0xf]
    %v6443 = vunpack.c.l.bf16 %v6323
    %v6444 = vunpack.c.h.bf16 %v6323
    %v6445 = vunpack.c.l.bf16 %v6324
    %v6446 = vunpack.c.h.bf16 %v6324
    %v6447 = vunpack.c.l.bf16 %v6325
    %v6448 = vunpack.c.l.bf16 %v6326
    %v6449 = vunpack.c.h.bf16 %v6326
    %v6450 = vunpack.c.l.bf16 %v6327
    %v6451 = vunpack.c.h.bf16 %v6327
    %v6452 = vunpack.c.l.bf16 %v6328
    %v6453 = vunpack.c.l.bf16 %v6329
    %v6454 = vunpack.c.h.bf16 %v6329
    %v6455 = vunpack.c.l.bf16 %v6330
    %v6456 = vunpack.c.h.bf16 %v6330
    %v6457 = vunpack.c.l.bf16 %v6331
    %v6458 = vunpack.c.l.bf16 %v6332
    %v6459 = vunpack.c.h.bf16 %v6332
    %v6460 = vunpack.c.l.bf16 %v6333
    %v6461 = vunpack.c.h.bf16 %v6333
    %v6462 = vunpack.c.l.bf16 %v6334
    %v6463 = vunpack.c.l.bf16 %v6335
    %v6464 = vunpack.c.h.bf16 %v6335
    %v6465 = vunpack.c.l.bf16 %v6336
    %v6466 = vunpack.c.h.bf16 %v6336
    %v6467 = vunpack.c.l.bf16 %v6337
    %v6468 = vunpack.c.l.bf16 %v6338
    %v6469 = vunpack.c.h.bf16 %v6338
    %v6470 = vunpack.c.l.bf16 %v6339
    %v6471 = vunpack.c.h.bf16 %v6339
    %v6472 = vunpack.c.l.bf16 %v6340
    %v6473 = vunpack.c.l.bf16 %v6341
    %v6474 = vunpack.c.h.bf16 %v6341
    %v6475 = vunpack.c.l.bf16 %v6342
    %v6476 = vunpack.c.h.bf16 %v6342
    %v6477 = vunpack.c.l.bf16 %v6343
    %v6478 = vunpack.c.l.bf16 %v6344
    %v6479 = vunpack.c.h.bf16 %v6344
    %v6480 = vunpack.c.l.bf16 %v6345
    %v6481 = vunpack.c.h.bf16 %v6345
    %v6482 = vunpack.c.l.bf16 %v6346
    %v6483 = vunpack.c.l.bf16 %v6347
    %v6484 = vunpack.c.h.bf16 %v6347
    %v6485 = vunpack.c.l.bf16 %v6348
    %v6486 = vunpack.c.h.bf16 %v6348
    %v6487 = vunpack.c.l.bf16 %v6349
    %v6488 = vunpack.c.l.bf16 %v6350
    %v6489 = vunpack.c.h.bf16 %v6350
    %v6490 = vunpack.c.l.bf16 %v6351
    %v6491 = vunpack.c.h.bf16 %v6351
    %v6492 = vunpack.c.l.bf16 %v6352
    %v6493 = vunpack.c.l.bf16 %v6353
    %v6494 = vunpack.c.h.bf16 %v6353
    %v6495 = vunpack.c.l.bf16 %v6354
    %v6496 = vunpack.c.h.bf16 %v6354
    %v6497 = vunpack.c.l.bf16 %v6355
    %v6498 = vunpack.c.l.bf16 %v6356
    %v6499 = vunpack.c.h.bf16 %v6356
    %v6500 = vunpack.c.l.bf16 %v6357
    %v6501 = vunpack.c.h.bf16 %v6357
    %v6502 = vunpack.c.l.bf16 %v6358
    %v6503 = vunpack.c.l.bf16 %v6359
    %v6504 = vunpack.c.h.bf16 %v6359
    %v6505 = vunpack.c.l.bf16 %v6360
    %v6506 = vunpack.c.h.bf16 %v6360
    %v6507 = vunpack.c.l.bf16 %v6361
    %v6508 = vunpack.c.l.bf16 %v6362
    %v6509 = vunpack.c.h.bf16 %v6362
    %v6510 = vunpack.c.l.bf16 %v6363
    %v6511 = vunpack.c.h.bf16 %v6363
    %v6512 = vunpack.c.l.bf16 %v6364
    %v6513 = vunpack.c.l.bf16 %v6365
    %v6514 = vunpack.c.h.bf16 %v6365
    %v6515 = vunpack.c.l.bf16 %v6366
    %v6516 = vunpack.c.h.bf16 %v6366
    %v6517 = vunpack.c.l.bf16 %v6367
    %v6518 = vunpack.c.l.bf16 %v6368
    %v6519 = vunpack.c.h.bf16 %v6368
    %v6520 = vunpack.c.l.bf16 %v6369
    %v6521 = vunpack.c.h.bf16 %v6369
    %v6522 = vunpack.c.l.bf16 %v6370
    %v6523 = vunpack.c.l.bf16 %v6371
    %v6524 = vunpack.c.h.bf16 %v6371
    %v6525 = vunpack.c.l.bf16 %v6372
    %v6526 = vunpack.c.h.bf16 %v6372
    %v6527 = vunpack.c.l.bf16 %v6373
    %v6528 = vunpack.c.l.bf16 %v6374
    %v6529 = vunpack.c.h.bf16 %v6374
    %v6530 = vunpack.c.l.bf16 %v6375
    %v6531 = vunpack.c.h.bf16 %v6375
    %v6532 = vunpack.c.l.bf16 %v6376
    %v6533 = vunpack.c.l.bf16 %v6377
    %v6534 = vunpack.c.h.bf16 %v6377
    %v6535 = vunpack.c.l.bf16 %v6378
    %v6536 = vunpack.c.h.bf16 %v6378
    %v6537 = vunpack.c.l.bf16 %v6379
    %v6538 = vunpack.c.l.bf16 %v6380
    %v6539 = vunpack.c.h.bf16 %v6380
    %v6540 = vunpack.c.l.bf16 %v6381
    %v6541 = vunpack.c.h.bf16 %v6381
    %v6542 = vunpack.c.l.bf16 %v6382
    %v6543 = vunpack.c.l.bf16 %v6383
    %v6544 = vunpack.c.h.bf16 %v6383
    %v6545 = vunpack.c.l.bf16 %v6384
    %v6546 = vunpack.c.h.bf16 %v6384
    %v6547 = vunpack.c.l.bf16 %v6385
    %v6548 = vunpack.c.l.bf16 %v6386
    %v6549 = vunpack.c.h.bf16 %v6386
    %v6550 = vunpack.c.l.bf16 %v6387
    %v6551 = vunpack.c.h.bf16 %v6387
    %v6552 = vunpack.c.l.bf16 %v6388
    %v6553 = vunpack.c.l.bf16 %v6389
    %v6554 = vunpack.c.h.bf16 %v6389
    %v6555 = vunpack.c.l.bf16 %v6390
    %v6556 = vunpack.c.h.bf16 %v6390
    %v6557 = vunpack.c.l.bf16 %v6391
    %v6558 = vunpack.c.l.bf16 %v6392
    %v6559 = vunpack.c.h.bf16 %v6392
    %v6560 = vunpack.c.l.bf16 %v6393
    %v6561 = vunpack.c.h.bf16 %v6393
    %v6562 = vunpack.c.l.bf16 %v6394
    %v6563 = vunpack.c.l.bf16 %v6395
    %v6564 = vunpack.c.h.bf16 %v6395
    %v6565 = vunpack.c.l.bf16 %v6396
    %v6566 = vunpack.c.h.bf16 %v6396
    %v6567 = vunpack.c.l.bf16 %v6397
    %v6568 = vunpack.c.l.bf16 %v6398
    %v6569 = vunpack.c.h.bf16 %v6398
    %v6570 = vunpack.c.l.bf16 %v6399
    %v6571 = vunpack.c.h.bf16 %v6399
    %v6572 = vunpack.c.l.bf16 %v6400
    %v6573 = vunpack.c.l.bf16 %v6401
    %v6574 = vunpack.c.h.bf16 %v6401
    %v6575 = vunpack.c.l.bf16 %v6402
    %v6576 = vunpack.c.h.bf16 %v6402
    %v6577 = vunpack.c.l.bf16 %v6403
    %v6578 = vunpack.c.l.bf16 %v6404
    %v6579 = vunpack.c.h.bf16 %v6404
    %v6580 = vunpack.c.l.bf16 %v6405
    %v6581 = vunpack.c.h.bf16 %v6405
    %v6582 = vunpack.c.l.bf16 %v6406
    %v6583 = vunpack.c.l.bf16 %v6407
    %v6584 = vunpack.c.h.bf16 %v6407
    %v6585 = vunpack.c.l.bf16 %v6408
    %v6586 = vunpack.c.h.bf16 %v6408
    %v6587 = vunpack.c.l.bf16 %v6409
    %v6588 = vunpack.c.l.bf16 %v6410
    %v6589 = vunpack.c.h.bf16 %v6410
    %v6590 = vunpack.c.l.bf16 %v6411
    %v6591 = vunpack.c.h.bf16 %v6411
    %v6592 = vunpack.c.l.bf16 %v6412
    %v6593 = vunpack.c.l.bf16 %v6413
    %v6594 = vunpack.c.h.bf16 %v6413
    %v6595 = vunpack.c.l.bf16 %v6414
    %v6596 = vunpack.c.h.bf16 %v6414
    %v6597 = vunpack.c.l.bf16 %v6415
    %v6598 = vunpack.c.l.bf16 %v6416
    %v6599 = vunpack.c.h.bf16 %v6416
    %v6600 = vunpack.c.l.bf16 %v6417
    %v6601 = vunpack.c.h.bf16 %v6417
    %v6602 = vunpack.c.l.bf16 %v6418
    %v6603 = vunpack.c.l.bf16 %v6419
    %v6604 = vunpack.c.h.bf16 %v6419
    %v6605 = vunpack.c.l.bf16 %v6420
    %v6606 = vunpack.c.h.bf16 %v6420
    %v6607 = vunpack.c.l.bf16 %v6421
    %v6608 = vunpack.c.l.bf16 %v6422
    %v6609 = vunpack.c.h.bf16 %v6422
    %v6610 = vunpack.c.l.bf16 %v6423
    %v6611 = vunpack.c.h.bf16 %v6423
    %v6612 = vunpack.c.l.bf16 %v6424
    %v6613 = vunpack.c.l.bf16 %v6425
    %v6614 = vunpack.c.h.bf16 %v6425
    %v6615 = vunpack.c.l.bf16 %v6426
    %v6616 = vunpack.c.h.bf16 %v6426
    %v6617 = vunpack.c.l.bf16 %v6427
    %v6618 = vunpack.c.l.bf16 %v6428
    %v6619 = vunpack.c.h.bf16 %v6428
    %v6620 = vunpack.c.l.bf16 %v6429
    %v6621 = vunpack.c.h.bf16 %v6429
    %v6622 = vunpack.c.l.bf16 %v6430
    %v6623 = vunpack.c.l.bf16 %v6431
    %v6624 = vunpack.c.h.bf16 %v6431
    %v6625 = vunpack.c.l.bf16 %v6432
    %v6626 = vunpack.c.h.bf16 %v6432
    %v6627 = vunpack.c.l.bf16 %v6433
    %v6628 = vunpack.c.l.bf16 %v6434
    %v6629 = vunpack.c.h.bf16 %v6434
    %v6630 = vunpack.c.l.bf16 %v6435
    %v6631 = vunpack.c.h.bf16 %v6435
    %v6632 = vunpack.c.l.bf16 %v6436
    %v6633 = vunpack.c.l.bf16 %v6437
    %v6634 = vunpack.c.h.bf16 %v6437
    %v6635 = vunpack.c.l.bf16 %v6438
    %v6636 = vunpack.c.h.bf16 %v6438
    %v6637 = vunpack.c.l.bf16 %v6439
    %v6638 = vunpack.c.l.bf16 %v6440
    %v6639 = vunpack.c.h.bf16 %v6440
    %v6640 = vunpack.c.l.bf16 %v6441
    %v6641 = vunpack.c.h.bf16 %v6441
    %v6642 = vunpack.c.l.bf16 %v6442
    %v6646 = vrot.slane %v5929, 1
    %v6647 = vrot.slane %v5931, 1
    %v6648 = vrot.slane %v6000, 1
    %v6651 = vsel %vm2873, %v6648, 0
    %6653 = vmatprep.subr.mxu0 %v6444
    %6654 = vmatpush1.msra.mxu0 %v6443
    %6655 = vmatprep.subr.mxu0 %v6449
    %6656 = vmatpush1.msra.mxu0 %v6448
    %6657 = vmatprep.subr.mxu0 %v6454
    %6658 = vmatpush1.msra.mxu0 %v6453
    %6659 = vmatprep.subr.mxu0 %v6459
    %6660 = vmatpush1.msra.mxu0 %v6458
    %6661 = vmatprep.subr.mxu0 %v6464
    %6662 = vmatpush1.msra.mxu0 %v6463
    %6663 = vmatprep.subr.mxu0 %v6469
    %6664 = vmatpush1.msra.mxu0 %v6468
    %6665 = vmatprep.subr.mxu0 %v6474
    %6666 = vmatpush1.msra.mxu0 %v6473
    %6667 = vmatprep.subr.mxu0 %v6479
    %6668 = vmatpush1.msra.mxu0 %v6478
    %6669 = vmatprep.subr.mxu0 %v6484
    %6670 = vmatpush1.msra.mxu0 %v6483
    %6671 = vmatprep.subr.mxu0 %v6489
    %6672 = vmatpush1.msra.mxu0 %v6488
    %6673 = vmatprep.subr.mxu0 %v6494
    %6674 = vmatpush1.msra.mxu0 %v6493
    %6675 = vmatprep.subr.mxu0 %v6499
    %6676 = vmatpush1.msra.mxu0 %v6498
    %6677 = vmatprep.subr.mxu0 %v6504
    %6678 = vmatpush1.msra.mxu0 %v6503
    %6679 = vmatprep.subr.mxu0 %v6509
    %6680 = vmatpush1.msra.mxu0 %v6508
    %6681 = vmatprep.subr.mxu0 %v6514
    %6682 = vmatpush1.msra.mxu0 %v6513
    %6683 = vmatprep.subr.mxu0 %v6519
    %6684 = vmatpush1.msra.mxu0 %v6518
    %6685 = vmatprep.subr.mxu0 %v6524
    %6686 = vmatpush1.msra.mxu0 %v6523
    %6687 = vmatprep.subr.mxu0 %v6529
    %6688 = vmatpush1.msra.mxu0 %v6528
    %6689 = vmatprep.subr.mxu0 %v6534
    %6690 = vmatpush1.msra.mxu0 %v6533
    %6691 = vmatprep.subr.mxu0 %v6539
    %6692 = vmatpush1.msra.mxu0 %v6538
    %6693 = vmatprep.subr.mxu0 %v6544
    %6694 = vmatpush1.msra.mxu0 %v6543
    %6695 = vmatprep.subr.mxu0 %v6549
    %6696 = vmatpush1.msra.mxu0 %v6548
    %6697 = vmatprep.subr.mxu0 %v6554
    %6698 = vmatpush1.msra.mxu0 %v6553
    %6699 = vmatprep.subr.mxu0 %v6559
    %6700 = vmatpush1.msra.mxu0 %v6558
    %6701 = vmatprep.subr.mxu0 %v6564
    %6702 = vmatpush1.msra.mxu0 %v6563
    %6703 = vmatprep.subr.mxu0 %v6569
    %6704 = vmatpush1.msra.mxu0 %v6568
    %6705 = vmatprep.subr.mxu0 %v6574
    %6706 = vmatpush1.msra.mxu0 %v6573
    %6707 = vmatprep.subr.mxu0 %v6579
    %6708 = vmatpush1.msra.mxu0 %v6578
    %6709 = vmatprep.subr.mxu0 %v6584
    %6710 = vmatpush1.msra.mxu0 %v6583
    %6711 = vmatprep.subr.mxu0 %v6589
    %6712 = vmatpush1.msra.mxu0 %v6588
    %6713 = vmatprep.subr.mxu0 %v6594
    %6714 = vmatpush1.msra.mxu0 %v6593
    %6715 = vmatprep.subr.mxu0 %v6599
    %6716 = vmatpush1.msra.mxu0 %v6598
    %6717 = vmatprep.mubr.f32.mxu0 %v6647
    %6718 = vmatmul.mubr.f32.gmra.mrb[0].mxu0 %v6646
    %v6719 = vpop.f32.mrb[0].mxu0
    %v6720 = vadd.f32 0.0, %v6719
    %v6721 = vpop.f32.mrb[0].mxu0
    %v6722 = vadd.f32 0.0, %v6721
    %6723 = vdwg.mxu0
    %6724 = vmatprep.subr.mxu0 %v6604
    %6725 = vmatpush1.msra.mxu0 %v6603
    %6726 = vmatprep.subr.mxu0 %v6609
    %6727 = vmatpush1.msra.mxu0 %v6608
    %6728 = vmatprep.subr.mxu0 %v6614
    %6729 = vmatpush1.msra.mxu0 %v6613
    %6730 = vmatprep.subr.mxu0 %v6619
    %6731 = vmatpush1.msra.mxu0 %v6618
    %6732 = vmatprep.subr.mxu0 %v6624
    %6733 = vmatpush1.msra.mxu0 %v6623
    %6734 = vmatprep.subr.mxu0 %v6629
    %6735 = vmatpush1.msra.mxu0 %v6628
    %6736 = vmatprep.subr.mxu0 %v6634
    %6737 = vmatpush1.msra.mxu0 %v6633
    %6738 = vmatprep.subr.mxu0 %v6639
    %6739 = vmatpush1.msra.mxu0 %v6638
    %6740 = vmatprep.subr.mxu0 0.0
    %6741 = vmatpush1.msra.mxu0 0.0
    %6742 = vmatprep.subr.mxu0 0.0
    %6743 = vmatpush1.msra.mxu0 0.0
    %6744 = vmatprep.subr.mxu0 0.0
    %6745 = vmatpush1.msra.mxu0 0.0
    %6746 = vmatprep.subr.mxu0 0.0
    %6747 = vmatpush1.msra.mxu0 0.0
    %6748 = vmatprep.subr.mxu0 0.0
    %6749 = vmatpush1.msra.mxu0 0.0
    %6750 = vmatprep.subr.mxu0 0.0
    %6751 = vmatpush1.msra.mxu0 0.0
    %6752 = vmatprep.subr.mxu0 0.0
    %6753 = vmatpush1.msra.mxu0 0.0
    %6754 = vmatprep.subr.mxu0 0.0
    %6755 = vmatpush1.msra.mxu0 0.0
    %6756 = vmatprep.subr.mxu0 0.0
    %6757 = vmatpush1.msra.mxu0 0.0
    %6758 = vmatprep.subr.mxu0 0.0
    %6759 = vmatpush1.msra.mxu0 0.0
    %6760 = vmatprep.subr.mxu0 0.0
    %6761 = vmatpush1.msra.mxu0 0.0
    %6762 = vmatprep.subr.mxu0 0.0
    %6763 = vmatpush1.msra.mxu0 0.0
    %6764 = vmatprep.subr.mxu0 0.0
    %6765 = vmatpush1.msra.mxu0 0.0
    %6766 = vmatprep.subr.mxu0 0.0
    %6767 = vmatpush1.msra.mxu0 0.0
    %6768 = vmatprep.subr.mxu0 0.0
    %6769 = vmatpush1.msra.mxu0 0.0
    %6770 = vmatprep.subr.mxu0 0.0
    %6771 = vmatpush1.msra.mxu0 0.0
    %6772 = vmatprep.subr.mxu0 0.0
    %6773 = vmatpush1.msra.mxu0 0.0
    %6774 = vmatprep.subr.mxu0 0.0
    %6775 = vmatpush1.msra.mxu0 0.0
    %6776 = vmatprep.subr.mxu0 0.0
    %6777 = vmatpush1.msra.mxu0 0.0
    %6778 = vmatprep.subr.mxu0 0.0
    %6779 = vmatpush1.msra.mxu0 0.0
    %6780 = vmatprep.subr.mxu0 0.0
    %6781 = vmatpush1.msra.mxu0 0.0
    %6782 = vmatprep.subr.mxu0 0.0
    %6783 = vmatpush1.msra.mxu0 0.0
    %6784 = vmatprep.subr.mxu0 0.0
    %6785 = vmatpush1.msra.mxu0 0.0
    %6786 = vmatprep.subr.mxu0 0.0
    %6787 = vmatpush1.msra.mxu0 0.0
    %6788 = vmatprep.mubr.f32.mxu0 0.0
    %6789 = vmatmul.mubr.f32.gmra.mrb[0].mxu0 %v6651
    %v6790 = vpop.f32.mrb[0].mxu0
    %v6791 = vadd.f32 %v6720, %v6790
    %v6792 = vpop.f32.mrb[0].mxu0
    %v6793 = vadd.f32 %v6722, %v6792
    %6794 = vdwg.mxu0
    %6795 = vmatprep.subr.mxu0 %v6446
    %6796 = vmatpush1.msra.mxu0 %v6445
    %6797 = vmatprep.subr.mxu0 %v6451
    %6798 = vmatpush1.msra.mxu0 %v6450
    %6799 = vmatprep.subr.mxu0 %v6456
    %6800 = vmatpush1.msra.mxu0 %v6455
    %6801 = vmatprep.subr.mxu0 %v6461
    %6802 = vmatpush1.msra.mxu0 %v6460
    %6803 = vmatprep.subr.mxu0 %v6466
    %6804 = vmatpush1.msra.mxu0 %v6465
    %6805 = vmatprep.subr.mxu0 %v6471
    %6806 = vmatpush1.msra.mxu0 %v6470
    %6807 = vmatprep.subr.mxu0 %v6476
    %6808 = vmatpush1.msra.mxu0 %v6475
    %6809 = vmatprep.subr.mxu0 %v6481
    %6810 = vmatpush1.msra.mxu0 %v6480
    %6811 = vmatprep.subr.mxu0 %v6486
    %6812 = vmatpush1.msra.mxu0 %v6485
    %6813 = vmatprep.subr.mxu0 %v6491
    %6814 = vmatpush1.msra.mxu0 %v6490
    %6815 = vmatprep.subr.mxu0 %v6496
    %6816 = vmatpush1.msra.mxu0 %v6495
    %6817 = vmatprep.subr.mxu0 %v6501
    %6818 = vmatpush1.msra.mxu0 %v6500
    %6819 = vmatprep.subr.mxu0 %v6506
    %6820 = vmatpush1.msra.mxu0 %v6505
    %6821 = vmatprep.subr.mxu0 %v6511
    %6822 = vmatpush1.msra.mxu0 %v6510
    %6823 = vmatprep.subr.mxu0 %v6516
    %6824 = vmatpush1.msra.mxu0 %v6515
    %6825 = vmatprep.subr.mxu0 %v6521
    %6826 = vmatpush1.msra.mxu0 %v6520
    %6827 = vmatprep.subr.mxu0 %v6526
    %6828 = vmatpush1.msra.mxu0 %v6525
    %6829 = vmatprep.subr.mxu0 %v6531
    %6830 = vmatpush1.msra.mxu0 %v6530
    %6831 = vmatprep.subr.mxu0 %v6536
    %6832 = vmatpush1.msra.mxu0 %v6535
    %6833 = vmatprep.subr.mxu0 %v6541
    %6834 = vmatpush1.msra.mxu0 %v6540
    %6835 = vmatprep.subr.mxu0 %v6546
    %6836 = vmatpush1.msra.mxu0 %v6545
    %6837 = vmatprep.subr.mxu0 %v6551
    %6838 = vmatpush1.msra.mxu0 %v6550
    %6839 = vmatprep.subr.mxu0 %v6556
    %6840 = vmatpush1.msra.mxu0 %v6555
    %6841 = vmatprep.subr.mxu0 %v6561
    %6842 = vmatpush1.msra.mxu0 %v6560
    %6843 = vmatprep.subr.mxu0 %v6566
    %6844 = vmatpush1.msra.mxu0 %v6565
    %6845 = vmatprep.subr.mxu0 %v6571
    %6846 = vmatpush1.msra.mxu0 %v6570
    %6847 = vmatprep.subr.mxu0 %v6576
    %6848 = vmatpush1.msra.mxu0 %v6575
    %6849 = vmatprep.subr.mxu0 %v6581
    %6850 = vmatpush1.msra.mxu0 %v6580
    %6851 = vmatprep.subr.mxu0 %v6586
    %6852 = vmatpush1.msra.mxu0 %v6585
    %6853 = vmatprep.subr.mxu0 %v6591
    %6854 = vmatpush1.msra.mxu0 %v6590
    %6855 = vmatprep.subr.mxu0 %v6596
    %6856 = vmatpush1.msra.mxu0 %v6595
    %6857 = vmatprep.subr.mxu0 %v6601
    %6858 = vmatpush1.msra.mxu0 %v6600
    %6859 = vmatprep.mubr.f32.mxu0 %v6647
    %6860 = vmatmul.mubr.f32.gmra.mrb[0].mxu0 %v6646
    %v6861 = vpop.f32.mrb[0].mxu0
    %v6862 = vadd.f32 0.0, %v6861
    %v6863 = vpop.f32.mrb[0].mxu0
    %v6864 = vadd.f32 0.0, %v6863
    %6865 = vdwg.mxu0
    %6866 = vmatprep.subr.mxu0 %v6606
    %6867 = vmatpush1.msra.mxu0 %v6605
    %6868 = vmatprep.subr.mxu0 %v6611
    %6869 = vmatpush1.msra.mxu0 %v6610
    %6870 = vmatprep.subr.mxu0 %v6616
    %6871 = vmatpush1.msra.mxu0 %v6615
    %6872 = vmatprep.subr.mxu0 %v6621
    %6873 = vmatpush1.msra.mxu0 %v6620
    %6874 = vmatprep.subr.mxu0 %v6626
    %6875 = vmatpush1.msra.mxu0 %v6625
    %6876 = vmatprep.subr.mxu0 %v6631
    %6877 = vmatpush1.msra.mxu0 %v6630
    %6878 = vmatprep.subr.mxu0 %v6636
    %6879 = vmatpush1.msra.mxu0 %v6635
    %6880 = vmatprep.subr.mxu0 %v6641
    %6881 = vmatpush1.msra.mxu0 %v6640
    %6882 = vmatprep.subr.mxu0 0.0
    %6883 = vmatpush1.msra.mxu0 0.0
    %6884 = vmatprep.subr.mxu0 0.0
    %6885 = vmatpush1.msra.mxu0 0.0
    %6886 = vmatprep.subr.mxu0 0.0
    %6887 = vmatpush1.msra.mxu0 0.0
    %6888 = vmatprep.subr.mxu0 0.0
    %6889 = vmatpush1.msra.mxu0 0.0
    %6890 = vmatprep.subr.mxu0 0.0
    %6891 = vmatpush1.msra.mxu0 0.0
    %6892 = vmatprep.subr.mxu0 0.0
    %6893 = vmatpush1.msra.mxu0 0.0
    %6894 = vmatprep.subr.mxu0 0.0
    %6895 = vmatpush1.msra.mxu0 0.0
    %6896 = vmatprep.subr.mxu0 0.0
    %6897 = vmatpush1.msra.mxu0 0.0
    %6898 = vmatprep.subr.mxu0 0.0
    %6899 = vmatpush1.msra.mxu0 0.0
    %6900 = vmatprep.subr.mxu0 0.0
    %6901 = vmatpush1.msra.mxu0 0.0
    %6902 = vmatprep.subr.mxu0 0.0
    %6903 = vmatpush1.msra.mxu0 0.0
    %6904 = vmatprep.subr.mxu0 0.0
    %6905 = vmatpush1.msra.mxu0 0.0
    %6906 = vmatprep.subr.mxu0 0.0
    %6907 = vmatpush1.msra.mxu0 0.0
    %6908 = vmatprep.subr.mxu0 0.0
    %6909 = vmatpush1.msra.mxu0 0.0
    %6910 = vmatprep.subr.mxu0 0.0
    %6911 = vmatpush1.msra.mxu0 0.0
    %6912 = vmatprep.subr.mxu0 0.0
    %6913 = vmatpush1.msra.mxu0 0.0
    %6914 = vmatprep.subr.mxu0 0.0
    %6915 = vmatpush1.msra.mxu0 0.0
    %6916 = vmatprep.subr.mxu0 0.0
    %6917 = vmatpush1.msra.mxu0 0.0
    %6918 = vmatprep.subr.mxu0 0.0
    %6919 = vmatpush1.msra.mxu0 0.0
    %6920 = vmatprep.subr.mxu0 0.0
    %6921 = vmatpush1.msra.mxu0 0.0
    %6922 = vmatprep.subr.mxu0 0.0
    %6923 = vmatpush1.msra.mxu0 0.0
    %6924 = vmatprep.subr.mxu0 0.0
    %6925 = vmatpush1.msra.mxu0 0.0
    %6926 = vmatprep.subr.mxu0 0.0
    %6927 = vmatpush1.msra.mxu0 0.0
    %6928 = vmatprep.subr.mxu0 0.0
    %6929 = vmatpush1.msra.mxu0 0.0
    %6930 = vmatprep.mubr.f32.mxu0 0.0
    %6931 = vmatmul.mubr.f32.gmra.mrb[0].mxu0 %v6651
    %v6932 = vpop.f32.mrb[0].mxu0
    %v6933 = vadd.f32 %v6862, %v6932
    %v6934 = vpop.f32.mrb[0].mxu0
    %v6935 = vadd.f32 %v6864, %v6934
    %6936 = vdwg.mxu0
    %6937 = vmatprep.subr.mxu0 0.0
    %6938 = vmatpush1.msra.mxu0 %v6447
    %6939 = vmatprep.subr.mxu0 0.0
    %6940 = vmatpush1.msra.mxu0 %v6452
    %6941 = vmatprep.subr.mxu0 0.0
    %6942 = vmatpush1.msra.mxu0 %v6457
    %6943 = vmatprep.subr.mxu0 0.0
    %6944 = vmatpush1.msra.mxu0 %v6462
    %6945 = vmatprep.subr.mxu0 0.0
    %6946 = vmatpush1.msra.mxu0 %v6467
    %6947 = vmatprep.subr.mxu0 0.0
    %6948 = vmatpush1.msra.mxu0 %v6472
    %6949 = vmatprep.subr.mxu0 0.0
    %6950 = vmatpush1.msra.mxu0 %v6477
    %6951 = vmatprep.subr.mxu0 0.0
    %6952 = vmatpush1.msra.mxu0 %v6482
    %6953 = vmatprep.subr.mxu0 0.0
    %6954 = vmatpush1.msra.mxu0 %v6487
    %6955 = vmatprep.subr.mxu0 0.0
    %6956 = vmatpush1.msra.mxu0 %v6492
    %6957 = vmatprep.subr.mxu0 0.0
    %6958 = vmatpush1.msra.mxu0 %v6497
    %6959 = vmatprep.subr.mxu0 0.0
    %6960 = vmatpush1.msra.mxu0 %v6502
    %6961 = vmatprep.subr.mxu0 0.0
    %6962 = vmatpush1.msra.mxu0 %v6507
    %6963 = vmatprep.subr.mxu0 0.0
    %6964 = vmatpush1.msra.mxu0 %v6512
    %6965 = vmatprep.subr.mxu0 0.0
    %6966 = vmatpush1.msra.mxu0 %v6517
    %6967 = vmatprep.subr.mxu0 0.0
    %6968 = vmatpush1.msra.mxu0 %v6522
    %6969 = vmatprep.subr.mxu0 0.0
    %6970 = vmatpush1.msra.mxu0 %v6527
    %6971 = vmatprep.subr.mxu0 0.0
    %6972 = vmatpush1.msra.mxu0 %v6532
    %6973 = vmatprep.subr.mxu0 0.0
    %6974 = vmatpush1.msra.mxu0 %v6537
    %6975 = vmatprep.subr.mxu0 0.0
    %6976 = vmatpush1.msra.mxu0 %v6542
    %6977 = vmatprep.subr.mxu0 0.0
    %6978 = vmatpush1.msra.mxu0 %v6547
    %6979 = vmatprep.subr.mxu0 0.0
    %6980 = vmatpush1.msra.mxu0 %v6552
    %6981 = vmatprep.subr.mxu0 0.0
    %6982 = vmatpush1.msra.mxu0 %v6557
    %6983 = vmatprep.subr.mxu0 0.0
    %6984 = vmatpush1.msra.mxu0 %v6562
    %6985 = vmatprep.subr.mxu0 0.0
    %6986 = vmatpush1.msra.mxu0 %v6567
    %6987 = vmatprep.subr.mxu0 0.0
    %6988 = vmatpush1.msra.mxu0 %v6572
    %6989 = vmatprep.subr.mxu0 0.0
    %6990 = vmatpush1.msra.mxu0 %v6577
    %6991 = vmatprep.subr.mxu0 0.0
    %6992 = vmatpush1.msra.mxu0 %v6582
    %6993 = vmatprep.subr.mxu0 0.0
    %6994 = vmatpush1.msra.mxu0 %v6587
    %6995 = vmatprep.subr.mxu0 0.0
    %6996 = vmatpush1.msra.mxu0 %v6592
    %6997 = vmatprep.subr.mxu0 0.0
    %6998 = vmatpush1.msra.mxu0 %v6597
    %6999 = vmatprep.subr.mxu0 0.0
    %7000 = vmatpush1.msra.mxu0 %v6602
    %7001 = vmatprep.mubr.f32.mxu0 %v6647
    %7002 = vmatmul.mubr.f32.gmra.mrb[0].mxu0 %v6646
    %v7003 = vpop.f32.mrb[0].mxu0
    %v7004 = vadd.f32 0.0, %v7003
    %v7005 = vpop.f32.mrb[0].mxu0
    %7006 = vdwg.mxu0
    %7007 = vmatprep.subr.mxu0 0.0
    %7008 = vmatpush1.msra.mxu0 %v6607
    %7009 = vmatprep.subr.mxu0 0.0
    %7010 = vmatpush1.msra.mxu0 %v6612
    %7011 = vmatprep.subr.mxu0 0.0
    %7012 = vmatpush1.msra.mxu0 %v6617
    %7013 = vmatprep.subr.mxu0 0.0
    %7014 = vmatpush1.msra.mxu0 %v6622
    %7015 = vmatprep.subr.mxu0 0.0
    %7016 = vmatpush1.msra.mxu0 %v6627
    %7017 = vmatprep.subr.mxu0 0.0
    %7018 = vmatpush1.msra.mxu0 %v6632
    %7019 = vmatprep.subr.mxu0 0.0
    %7020 = vmatpush1.msra.mxu0 %v6637
    %7021 = vmatprep.subr.mxu0 0.0
    %7022 = vmatpush1.msra.mxu0 %v6642
    %7023 = vmatprep.subr.mxu0 0.0
    %7024 = vmatpush1.msra.mxu0 0.0
    %7025 = vmatprep.subr.mxu0 0.0
    %7026 = vmatpush1.msra.mxu0 0.0
    %7027 = vmatprep.subr.mxu0 0.0
    %7028 = vmatpush1.msra.mxu0 0.0
    %7029 = vmatprep.subr.mxu0 0.0
    %7030 = vmatpush1.msra.mxu0 0.0
    %7031 = vmatprep.subr.mxu0 0.0
    %7032 = vmatpush1.msra.mxu0 0.0
    %7033 = vmatprep.subr.mxu0 0.0
    %7034 = vmatpush1.msra.mxu0 0.0
    %7035 = vmatprep.subr.mxu0 0.0
    %7036 = vmatpush1.msra.mxu0 0.0
    %7037 = vmatprep.subr.mxu0 0.0
    %7038 = vmatpush1.msra.mxu0 0.0
    %7039 = vmatprep.subr.mxu0 0.0
    %7040 = vmatpush1.msra.mxu0 0.0
    %7041 = vmatprep.subr.mxu0 0.0
    %7042 = vmatpush1.msra.mxu0 0.0
    %7043 = vmatprep.subr.mxu0 0.0
    %7044 = vmatpush1.msra.mxu0 0.0
    %7045 = vmatprep.subr.mxu0 0.0
    %7046 = vmatpush1.msra.mxu0 0.0
    %7047 = vmatprep.subr.mxu0 0.0
    %7048 = vmatpush1.msra.mxu0 0.0
    %7049 = vmatprep.subr.mxu0 0.0
    %7050 = vmatpush1.msra.mxu0 0.0
    %7051 = vmatprep.subr.mxu0 0.0
    %7052 = vmatpush1.msra.mxu0 0.0
    %7053 = vmatprep.subr.mxu0 0.0
    %7054 = vmatpush1.msra.mxu0 0.0
    %7055 = vmatprep.subr.mxu0 0.0
    %7056 = vmatpush1.msra.mxu0 0.0
    %7057 = vmatprep.subr.mxu0 0.0
    %7058 = vmatpush1.msra.mxu0 0.0
    %7059 = vmatprep.subr.mxu0 0.0
    %7060 = vmatpush1.msra.mxu0 0.0
    %7061 = vmatprep.subr.mxu0 0.0
    %7062 = vmatpush1.msra.mxu0 0.0
    %7063 = vmatprep.subr.mxu0 0.0
    %7064 = vmatpush1.msra.mxu0 0.0
    %7065 = vmatprep.subr.mxu0 0.0
    %7066 = vmatpush1.msra.mxu0 0.0
    %7067 = vmatprep.subr.mxu0 0.0
    %7068 = vmatpush1.msra.mxu0 0.0
    %7069 = vmatprep.subr.mxu0 0.0
    %7070 = vmatpush1.msra.mxu0 0.0
    %7071 = vmatprep.mubr.f32.mxu0 0.0
    %7072 = vmatmul.mubr.f32.gmra.mrb[0].mxu0 %v6651
    %v7073 = vpop.f32.mrb[0].mxu0
    %v7074 = vadd.f32 %v7004, %v7073
    %v7075 = vpop.f32.mrb[0].mxu0
    %7076 = vdwg.mxu0
    %v7077 = vsel %vm2873, %v6000, 0
    %7079 = vmatprep.subr.mxu0 %v6124
    %7080 = vmatpush1.msra.mxu0 %v6123
    %7081 = vmatprep.subr.mxu0 %v6129
    %7082 = vmatpush1.msra.mxu0 %v6128
    %7083 = vmatprep.subr.mxu0 %v6134
    %7084 = vmatpush1.msra.mxu0 %v6133
    %7085 = vmatprep.subr.mxu0 %v6139
    %7086 = vmatpush1.msra.mxu0 %v6138
    %7087 = vmatprep.subr.mxu0 %v6144
    %7088 = vmatpush1.msra.mxu0 %v6143
    %7089 = vmatprep.subr.mxu0 %v6149
    %7090 = vmatpush1.msra.mxu0 %v6148
    %7091 = vmatprep.subr.mxu0 %v6154
    %7092 = vmatpush1.msra.mxu0 %v6153
    %7093 = vmatprep.subr.mxu0 %v6159
    %7094 = vmatpush1.msra.mxu0 %v6158
    %7095 = vmatprep.subr.mxu0 %v6164
    %7096 = vmatpush1.msra.mxu0 %v6163
    %7097 = vmatprep.subr.mxu0 %v6169
    %7098 = vmatpush1.msra.mxu0 %v6168
    %7099 = vmatprep.subr.mxu0 %v6174
    %7100 = vmatpush1.msra.mxu0 %v6173
    %7101 = vmatprep.subr.mxu0 %v6179
    %7102 = vmatpush1.msra.mxu0 %v6178
    %7103 = vmatprep.subr.mxu0 %v6184
    %7104 = vmatpush1.msra.mxu0 %v6183
    %7105 = vmatprep.subr.mxu0 %v6189
    %7106 = vmatpush1.msra.mxu0 %v6188
    %7107 = vmatprep.subr.mxu0 %v6194
    %7108 = vmatpush1.msra.mxu0 %v6193
    %7109 = vmatprep.subr.mxu0 %v6199
    %7110 = vmatpush1.msra.mxu0 %v6198
    %7111 = vmatprep.subr.mxu0 %v6204
    %7112 = vmatpush1.msra.mxu0 %v6203
    %7113 = vmatprep.subr.mxu0 %v6209
    %7114 = vmatpush1.msra.mxu0 %v6208
    %7115 = vmatprep.subr.mxu0 %v6214
    %7116 = vmatpush1.msra.mxu0 %v6213
    %7117 = vmatprep.subr.mxu0 %v6219
    %7118 = vmatpush1.msra.mxu0 %v6218
    %7119 = vmatprep.subr.mxu0 %v6224
    %7120 = vmatpush1.msra.mxu0 %v6223
    %7121 = vmatprep.subr.mxu0 %v6229
    %7122 = vmatpush1.msra.mxu0 %v6228
    %7123 = vmatprep.subr.mxu0 %v6234
    %7124 = vmatpush1.msra.mxu0 %v6233
    %7125 = vmatprep.subr.mxu0 %v6239
    %7126 = vmatpush1.msra.mxu0 %v6238
    %7127 = vmatprep.subr.mxu0 %v6244
    %7128 = vmatpush1.msra.mxu0 %v6243
    %7129 = vmatprep.subr.mxu0 %v6249
    %7130 = vmatpush1.msra.mxu0 %v6248
    %7131 = vmatprep.subr.mxu0 %v6254
    %7132 = vmatpush1.msra.mxu0 %v6253
    %7133 = vmatprep.subr.mxu0 %v6259
    %7134 = vmatpush1.msra.mxu0 %v6258
    %7135 = vmatprep.subr.mxu0 %v6264
    %7136 = vmatpush1.msra.mxu0 %v6263
    %7137 = vmatprep.subr.mxu0 %v6269
    %7138 = vmatpush1.msra.mxu0 %v6268
    %7139 = vmatprep.subr.mxu0 %v6274
    %7140 = vmatpush1.msra.mxu0 %v6273
    %7141 = vmatprep.subr.mxu0 %v6279
    %7142 = vmatpush1.msra.mxu0 %v6278
    %7143 = vmatprep.mubr.f32.mxu0 %v5931
    %7144 = vmatmul.mubr.f32.gmra.mrb[0].mxu0 %v5929
    %v7145 = vpop.f32.mrb[0].mxu0
    %v7146 = vadd.f32 %v6791, %v7145
    %v7147 = vpop.f32.mrb[0].mxu0
    %v7148 = vadd.f32 %v6793, %v7147
    %7149 = vdwg.mxu0
    %7150 = vmatprep.subr.mxu0 %v6284
    %7151 = vmatpush1.msra.mxu0 %v6283
    %7152 = vmatprep.subr.mxu0 %v6289
    %7153 = vmatpush1.msra.mxu0 %v6288
    %7154 = vmatprep.subr.mxu0 %v6294
    %7155 = vmatpush1.msra.mxu0 %v6293
    %7156 = vmatprep.subr.mxu0 %v6299
    %7157 = vmatpush1.msra.mxu0 %v6298
    %7158 = vmatprep.subr.mxu0 %v6304
    %7159 = vmatpush1.msra.mxu0 %v6303
    %7160 = vmatprep.subr.mxu0 %v6309
    %7161 = vmatpush1.msra.mxu0 %v6308
    %7162 = vmatprep.subr.mxu0 %v6314
    %7163 = vmatpush1.msra.mxu0 %v6313
    %7164 = vmatprep.subr.mxu0 %v6319
    %7165 = vmatpush1.msra.mxu0 %v6318
    %7166 = vmatprep.subr.mxu0 0.0
    %7167 = vmatpush1.msra.mxu0 0.0
    %7168 = vmatprep.subr.mxu0 0.0
    %7169 = vmatpush1.msra.mxu0 0.0
    %7170 = vmatprep.subr.mxu0 0.0
    %7171 = vmatpush1.msra.mxu0 0.0
    %7172 = vmatprep.subr.mxu0 0.0
    %7173 = vmatpush1.msra.mxu0 0.0
    %7174 = vmatprep.subr.mxu0 0.0
    %7175 = vmatpush1.msra.mxu0 0.0
    %7176 = vmatprep.subr.mxu0 0.0
    %7177 = vmatpush1.msra.mxu0 0.0
    %7178 = vmatprep.subr.mxu0 0.0
    %7179 = vmatpush1.msra.mxu0 0.0
    %7180 = vmatprep.subr.mxu0 0.0
    %7181 = vmatpush1.msra.mxu0 0.0
    %7182 = vmatprep.subr.mxu0 0.0
    %7183 = vmatpush1.msra.mxu0 0.0
    %7184 = vmatprep.subr.mxu0 0.0
    %7185 = vmatpush1.msra.mxu0 0.0
    %7186 = vmatprep.subr.mxu0 0.0
    %7187 = vmatpush1.msra.mxu0 0.0
    %7188 = vmatprep.subr.mxu0 0.0
    %7189 = vmatpush1.msra.mxu0 0.0
    %7190 = vmatprep.subr.mxu0 0.0
    %7191 = vmatpush1.msra.mxu0 0.0
    %7192 = vmatprep.subr.mxu0 0.0
    %7193 = vmatpush1.msra.mxu0 0.0
    %7194 = vmatprep.subr.mxu0 0.0
    %7195 = vmatpush1.msra.mxu0 0.0
    %7196 = vmatprep.subr.mxu0 0.0
    %7197 = vmatpush1.msra.mxu0 0.0
    %7198 = vmatprep.subr.mxu0 0.0
    %7199 = vmatpush1.msra.mxu0 0.0
    %7200 = vmatprep.subr.mxu0 0.0
    %7201 = vmatpush1.msra.mxu0 0.0
    %7202 = vmatprep.subr.mxu0 0.0
    %7203 = vmatpush1.msra.mxu0 0.0
    %7204 = vmatprep.subr.mxu0 0.0
    %7205 = vmatpush1.msra.mxu0 0.0
    %7206 = vmatprep.subr.mxu0 0.0
    %7207 = vmatpush1.msra.mxu0 0.0
    %7208 = vmatprep.subr.mxu0 0.0
    %7209 = vmatpush1.msra.mxu0 0.0
    %7210 = vmatprep.subr.mxu0 0.0
    %7211 = vmatpush1.msra.mxu0 0.0
    %7212 = vmatprep.subr.mxu0 0.0
    %7213 = vmatpush1.msra.mxu0 0.0
    %7214 = vmatprep.mubr.f32.mxu0 0.0
    %7215 = vmatmul.mubr.f32.gmra.mrb[0].mxu0 %v7077
    %v7216 = vpop.f32.mrb[0].mxu0
    %v7217 = vadd.f32 %v7146, %v7216
    %v7218 = vpop.f32.mrb[0].mxu0
    %v7219 = vadd.f32 %v7148, %v7218
    %7220 = vdwg.mxu0
    %7221 = vmatprep.subr.mxu0 %v6126
    %7222 = vmatpush1.msra.mxu0 %v6125
    %7223 = vmatprep.subr.mxu0 %v6131
    %7224 = vmatpush1.msra.mxu0 %v6130
    %7225 = vmatprep.subr.mxu0 %v6136
    %7226 = vmatpush1.msra.mxu0 %v6135
    %7227 = vmatprep.subr.mxu0 %v6141
    %7228 = vmatpush1.msra.mxu0 %v6140
    %7229 = vmatprep.subr.mxu0 %v6146
    %7230 = vmatpush1.msra.mxu0 %v6145
    %7231 = vmatprep.subr.mxu0 %v6151
    %7232 = vmatpush1.msra.mxu0 %v6150
    %7233 = vmatprep.subr.mxu0 %v6156
    %7234 = vmatpush1.msra.mxu0 %v6155
    %7235 = vmatprep.subr.mxu0 %v6161
    %7236 = vmatpush1.msra.mxu0 %v6160
    %7237 = vmatprep.subr.mxu0 %v6166
    %7238 = vmatpush1.msra.mxu0 %v6165
    %7239 = vmatprep.subr.mxu0 %v6171
    %7240 = vmatpush1.msra.mxu0 %v6170
    %7241 = vmatprep.subr.mxu0 %v6176
    %7242 = vmatpush1.msra.mxu0 %v6175
    %7243 = vmatprep.subr.mxu0 %v6181
    %7244 = vmatpush1.msra.mxu0 %v6180
    %7245 = vmatprep.subr.mxu0 %v6186
    %7246 = vmatpush1.msra.mxu0 %v6185
    %7247 = vmatprep.subr.mxu0 %v6191
    %7248 = vmatpush1.msra.mxu0 %v6190
    %7249 = vmatprep.subr.mxu0 %v6196
    %7250 = vmatpush1.msra.mxu0 %v6195
    %7251 = vmatprep.subr.mxu0 %v6201
    %7252 = vmatpush1.msra.mxu0 %v6200
    %7253 = vmatprep.subr.mxu0 %v6206
    %7254 = vmatpush1.msra.mxu0 %v6205
    %7255 = vmatprep.subr.mxu0 %v6211
    %7256 = vmatpush1.msra.mxu0 %v6210
    %7257 = vmatprep.subr.mxu0 %v6216
    %7258 = vmatpush1.msra.mxu0 %v6215
    %7259 = vmatprep.subr.mxu0 %v6221
    %7260 = vmatpush1.msra.mxu0 %v6220
    %7261 = vmatprep.subr.mxu0 %v6226
    %7262 = vmatpush1.msra.mxu0 %v6225
    %7263 = vmatprep.subr.mxu0 %v6231
    %7264 = vmatpush1.msra.mxu0 %v6230
    %7265 = vmatprep.subr.mxu0 %v6236
    %7266 = vmatpush1.msra.mxu0 %v6235
    %7267 = vmatprep.subr.mxu0 %v6241
    %7268 = vmatpush1.msra.mxu0 %v6240
    %7269 = vmatprep.subr.mxu0 %v6246
    %7270 = vmatpush1.msra.mxu0 %v6245
    %7271 = vmatprep.subr.mxu0 %v6251
    %7272 = vmatpush1.msra.mxu0 %v6250
    %7273 = vmatprep.subr.mxu0 %v6256
    %7274 = vmatpush1.msra.mxu0 %v6255
    %7275 = vmatprep.subr.mxu0 %v6261
    %7276 = vmatpush1.msra.mxu0 %v6260
    %7277 = vmatprep.subr.mxu0 %v6266
    %7278 = vmatpush1.msra.mxu0 %v6265
    %7279 = vmatprep.subr.mxu0 %v6271
    %7280 = vmatpush1.msra.mxu0 %v6270
    %7281 = vmatprep.subr.mxu0 %v6276
    %7282 = vmatpush1.msra.mxu0 %v6275
    %7283 = vmatprep.subr.mxu0 %v6281
    %7284 = vmatpush1.msra.mxu0 %v6280
    %7285 = vmatprep.mubr.f32.mxu0 %v5931
    %7286 = vmatmul.mubr.f32.gmra.mrb[0].mxu0 %v5929
    %v7287 = vpop.f32.mrb[0].mxu0
    %v7288 = vadd.f32 %v6933, %v7287
    %v7289 = vpop.f32.mrb[0].mxu0
    %v7290 = vadd.f32 %v6935, %v7289
    %7291 = vdwg.mxu0
    %7292 = vmatprep.subr.mxu0 %v6286
    %7293 = vmatpush1.msra.mxu0 %v6285
    %7294 = vmatprep.subr.mxu0 %v6291
    %7295 = vmatpush1.msra.mxu0 %v6290
    %7296 = vmatprep.subr.mxu0 %v6296
    %7297 = vmatpush1.msra.mxu0 %v6295
    %7298 = vmatprep.subr.mxu0 %v6301
    %7299 = vmatpush1.msra.mxu0 %v6300
    %7300 = vmatprep.subr.mxu0 %v6306
    %7301 = vmatpush1.msra.mxu0 %v6305
    %7302 = vmatprep.subr.mxu0 %v6311
    %7303 = vmatpush1.msra.mxu0 %v6310
    %7304 = vmatprep.subr.mxu0 %v6316
    %7305 = vmatpush1.msra.mxu0 %v6315
    %7306 = vmatprep.subr.mxu0 %v6321
    %7307 = vmatpush1.msra.mxu0 %v6320
    %7308 = vmatprep.subr.mxu0 0.0
    %7309 = vmatpush1.msra.mxu0 0.0
    %7310 = vmatprep.subr.mxu0 0.0
    %7311 = vmatpush1.msra.mxu0 0.0
    %7312 = vmatprep.subr.mxu0 0.0
    %7313 = vmatpush1.msra.mxu0 0.0
    %7314 = vmatprep.subr.mxu0 0.0
    %7315 = vmatpush1.msra.mxu0 0.0
    %7316 = vmatprep.subr.mxu0 0.0
    %7317 = vmatpush1.msra.mxu0 0.0
    %7318 = vmatprep.subr.mxu0 0.0
    %7319 = vmatpush1.msra.mxu0 0.0
    %7320 = vmatprep.subr.mxu0 0.0
    %7321 = vmatpush1.msra.mxu0 0.0
    %7322 = vmatprep.subr.mxu0 0.0
    %7323 = vmatpush1.msra.mxu0 0.0
    %7324 = vmatprep.subr.mxu0 0.0
    %7325 = vmatpush1.msra.mxu0 0.0
    %7326 = vmatprep.subr.mxu0 0.0
    %7327 = vmatpush1.msra.mxu0 0.0
    %7328 = vmatprep.subr.mxu0 0.0
    %7329 = vmatpush1.msra.mxu0 0.0
    %7330 = vmatprep.subr.mxu0 0.0
    %7331 = vmatpush1.msra.mxu0 0.0
    %7332 = vmatprep.subr.mxu0 0.0
    %7333 = vmatpush1.msra.mxu0 0.0
    %7334 = vmatprep.subr.mxu0 0.0
    %7335 = vmatpush1.msra.mxu0 0.0
    %7336 = vmatprep.subr.mxu0 0.0
    %7337 = vmatpush1.msra.mxu0 0.0
    %7338 = vmatprep.subr.mxu0 0.0
    %7339 = vmatpush1.msra.mxu0 0.0
    %7340 = vmatprep.subr.mxu0 0.0
    %7341 = vmatpush1.msra.mxu0 0.0
    %7342 = vmatprep.subr.mxu0 0.0
    %7343 = vmatpush1.msra.mxu0 0.0
    %7344 = vmatprep.subr.mxu0 0.0
    %7345 = vmatpush1.msra.mxu0 0.0
    %7346 = vmatprep.subr.mxu0 0.0
    %7347 = vmatpush1.msra.mxu0 0.0
    %7348 = vmatprep.subr.mxu0 0.0
    %7349 = vmatpush1.msra.mxu0 0.0
    %7350 = vmatprep.subr.mxu0 0.0
    %7351 = vmatpush1.msra.mxu0 0.0
    %7352 = vmatprep.subr.mxu0 0.0
    %7353 = vmatpush1.msra.mxu0 0.0
    %7354 = vmatprep.subr.mxu0 0.0
    %7355 = vmatpush1.msra.mxu0 0.0
    %7356 = vmatprep.mubr.f32.mxu0 0.0
    %7357 = vmatmul.mubr.f32.gmra.mrb[0].mxu0 %v7077
    %v7358 = vpop.f32.mrb[0].mxu0
    %v7359 = vadd.f32 %v7288, %v7358
    %v7360 = vpop.f32.mrb[0].mxu0
    %v7361 = vadd.f32 %v7290, %v7360
    %7362 = vdwg.mxu0
    %7363 = vmatprep.subr.mxu0 0.0
    %7364 = vmatpush1.msra.mxu0 %v6127
    %7365 = vmatprep.subr.mxu0 0.0
    %7366 = vmatpush1.msra.mxu0 %v6132
    %7367 = vmatprep.subr.mxu0 0.0
    %7368 = vmatpush1.msra.mxu0 %v6137
    %7369 = vmatprep.subr.mxu0 0.0
    %7370 = vmatpush1.msra.mxu0 %v6142
    %7371 = vmatprep.subr.mxu0 0.0
    %7372 = vmatpush1.msra.mxu0 %v6147
    %7373 = vmatprep.subr.mxu0 0.0
    %7374 = vmatpush1.msra.mxu0 %v6152
    %7375 = vmatprep.subr.mxu0 0.0
    %7376 = vmatpush1.msra.mxu0 %v6157
    %7377 = vmatprep.subr.mxu0 0.0
    %7378 = vmatpush1.msra.mxu0 %v6162
    %7379 = vmatprep.subr.mxu0 0.0
    %7380 = vmatpush1.msra.mxu0 %v6167
    %7381 = vmatprep.subr.mxu0 0.0
    %7382 = vmatpush1.msra.mxu0 %v6172
    %7383 = vmatprep.subr.mxu0 0.0
    %7384 = vmatpush1.msra.mxu0 %v6177
    %7385 = vmatprep.subr.mxu0 0.0
    %7386 = vmatpush1.msra.mxu0 %v6182
    %7387 = vmatprep.subr.mxu0 0.0
    %7388 = vmatpush1.msra.mxu0 %v6187
    %7389 = vmatprep.subr.mxu0 0.0
    %7390 = vmatpush1.msra.mxu0 %v6192
    %7391 = vmatprep.subr.mxu0 0.0
    %7392 = vmatpush1.msra.mxu0 %v6197
    %7393 = vmatprep.subr.mxu0 0.0
    %7394 = vmatpush1.msra.mxu0 %v6202
    %7395 = vmatprep.subr.mxu0 0.0
    %7396 = vmatpush1.msra.mxu0 %v6207
    %7397 = vmatprep.subr.mxu0 0.0
    %7398 = vmatpush1.msra.mxu0 %v6212
    %7399 = vmatprep.subr.mxu0 0.0
    %7400 = vmatpush1.msra.mxu0 %v6217
    %7401 = vmatprep.subr.mxu0 0.0
    %7402 = vmatpush1.msra.mxu0 %v6222
    %7403 = vmatprep.subr.mxu0 0.0
    %7404 = vmatpush1.msra.mxu0 %v6227
    %7405 = vmatprep.subr.mxu0 0.0
    %7406 = vmatpush1.msra.mxu0 %v6232
    %7407 = vmatprep.subr.mxu0 0.0
    %7408 = vmatpush1.msra.mxu0 %v6237
    %7409 = vmatprep.subr.mxu0 0.0
    %7410 = vmatpush1.msra.mxu0 %v6242
    %7411 = vmatprep.subr.mxu0 0.0
    %7412 = vmatpush1.msra.mxu0 %v6247
    %7413 = vmatprep.subr.mxu0 0.0
    %7414 = vmatpush1.msra.mxu0 %v6252
    %7415 = vmatprep.subr.mxu0 0.0
    %7416 = vmatpush1.msra.mxu0 %v6257
    %7417 = vmatprep.subr.mxu0 0.0
    %7418 = vmatpush1.msra.mxu0 %v6262
    %7419 = vmatprep.subr.mxu0 0.0
    %7420 = vmatpush1.msra.mxu0 %v6267
    %7421 = vmatprep.subr.mxu0 0.0
    %7422 = vmatpush1.msra.mxu0 %v6272
    %7423 = vmatprep.subr.mxu0 0.0
    %7424 = vmatpush1.msra.mxu0 %v6277
    %7425 = vmatprep.subr.mxu0 0.0
    %7426 = vmatpush1.msra.mxu0 %v6282
    %7427 = vmatprep.mubr.f32.mxu0 %v5931
    %7428 = vmatmul.mubr.f32.gmra.mrb[0].mxu0 %v5929
    %v7429 = vpop.f32.mrb[0].mxu0
    %v7430 = vadd.f32 %v7074, %v7429
    %v7431 = vpop.f32.mrb[0].mxu0
    %7432 = vdwg.mxu0
    %7433 = vmatprep.subr.mxu0 0.0
    %7434 = vmatpush1.msra.mxu0 %v6287
    %7435 = vmatprep.subr.mxu0 0.0
    %7436 = vmatpush1.msra.mxu0 %v6292
    %7437 = vmatprep.subr.mxu0 0.0
    %7438 = vmatpush1.msra.mxu0 %v6297
    %7439 = vmatprep.subr.mxu0 0.0
    %7440 = vmatpush1.msra.mxu0 %v6302
    %7441 = vmatprep.subr.mxu0 0.0
    %7442 = vmatpush1.msra.mxu0 %v6307
    %7443 = vmatprep.subr.mxu0 0.0
    %7444 = vmatpush1.msra.mxu0 %v6312
    %7445 = vmatprep.subr.mxu0 0.0
    %7446 = vmatpush1.msra.mxu0 %v6317
    %7447 = vmatprep.subr.mxu0 0.0
    %7448 = vmatpush1.msra.mxu0 %v6322
    %7449 = vmatprep.subr.mxu0 0.0
    %7450 = vmatpush1.msra.mxu0 0.0
    %7451 = vmatprep.subr.mxu0 0.0
    %7452 = vmatpush1.msra.mxu0 0.0
    %7453 = vmatprep.subr.mxu0 0.0
    %7454 = vmatpush1.msra.mxu0 0.0
    %7455 = vmatprep.subr.mxu0 0.0
    %7456 = vmatpush1.msra.mxu0 0.0
    %7457 = vmatprep.subr.mxu0 0.0
    %7458 = vmatpush1.msra.mxu0 0.0
    %7459 = vmatprep.subr.mxu0 0.0
    %7460 = vmatpush1.msra.mxu0 0.0
    %7461 = vmatprep.subr.mxu0 0.0
    %7462 = vmatpush1.msra.mxu0 0.0
    %7463 = vmatprep.subr.mxu0 0.0
    %7464 = vmatpush1.msra.mxu0 0.0
    %7465 = vmatprep.subr.mxu0 0.0
    %7466 = vmatpush1.msra.mxu0 0.0
    %7467 = vmatprep.subr.mxu0 0.0
    %7468 = vmatpush1.msra.mxu0 0.0
    %7469 = vmatprep.subr.mxu0 0.0
    %7470 = vmatpush1.msra.mxu0 0.0
    %7471 = vmatprep.subr.mxu0 0.0
    %7472 = vmatpush1.msra.mxu0 0.0
    %7473 = vmatprep.subr.mxu0 0.0
    %7474 = vmatpush1.msra.mxu0 0.0
    %7475 = vmatprep.subr.mxu0 0.0
    %7476 = vmatpush1.msra.mxu0 0.0
    %7477 = vmatprep.subr.mxu0 0.0
    %7478 = vmatpush1.msra.mxu0 0.0
    %7479 = vmatprep.subr.mxu0 0.0
    %7480 = vmatpush1.msra.mxu0 0.0
    %7481 = vmatprep.subr.mxu0 0.0
    %7482 = vmatpush1.msra.mxu0 0.0
    %7483 = vmatprep.subr.mxu0 0.0
    %7484 = vmatpush1.msra.mxu0 0.0
    %7485 = vmatprep.subr.mxu0 0.0
    %7486 = vmatpush1.msra.mxu0 0.0
    %7487 = vmatprep.subr.mxu0 0.0
    %7488 = vmatpush1.msra.mxu0 0.0
    %7489 = vmatprep.subr.mxu0 0.0
    %7490 = vmatpush1.msra.mxu0 0.0
    %7491 = vmatprep.subr.mxu0 0.0
    %7492 = vmatpush1.msra.mxu0 0.0
    %7493 = vmatprep.subr.mxu0 0.0
    %7494 = vmatpush1.msra.mxu0 0.0
    %7495 = vmatprep.subr.mxu0 0.0
    %7496 = vmatpush1.msra.mxu0 0.0
    %7497 = vmatprep.mubr.f32.mxu0 0.0
    %7498 = vmatmul.mubr.f32.gmra.mrb[0].mxu0 %v7077
    %v7499 = vpop.f32.mrb[0].mxu0
    %v7500 = vadd.f32 %v7430, %v7499
    %v7501 = vpop.f32.mrb[0].mxu0
    %7502 = vdwg.mxu0
    %v7503 = vld [vmem:[#allocation28] sm:$0xff]
    %v7504 = vld [vmem:[#allocation28 + $0x8] sm:$0xff]
    %v7505 = vld [vmem:[#allocation28 + $0x10] sm:$0xf]
    %v7506 = vld [vmem:[#allocation28 + $0x14] sm:$0xff]
    %v7507 = vld [vmem:[#allocation28 + $0x1c] sm:$0xff]
    %v7508 = vld [vmem:[#allocation28 + $0x24] sm:$0xf]
    %v7509 = vld [vmem:[#allocation28 + $0x28] sm:$0xff]
    %v7510 = vld [vmem:[#allocation28 + $0x30] sm:$0xff]
    %v7511 = vld [vmem:[#allocation28 + $0x38] sm:$0xf]
    %v7512 = vld [vmem:[#allocation28 + $0x3c] sm:$0xff]
    %v7513 = vld [vmem:[#allocation28 + $0x44] sm:$0xff]
    %v7514 = vld [vmem:[#allocation28 + $0x4c] sm:$0xf]
    %v7515 = vld [vmem:[#allocation28 + $0x50] sm:$0xff]
    %v7516 = vld [vmem:[#allocation28 + $0x58] sm:$0xff]
    %v7517 = vld [vmem:[#allocation28 + $0x60] sm:$0xf]
    %v7518 = vld [vmem:[#allocation28 + $0x64] sm:$0xff]
    %v7519 = vld [vmem:[#allocation28 + $0x6c] sm:$0xff]
    %v7520 = vld [vmem:[#allocation28 + $0x74] sm:$0xf]
    %v7521 = vld [vmem:[#allocation28 + $0x78] sm:$0xff]
    %v7522 = vld [vmem:[#allocation28 + $0x80] sm:$0xff]
    %v7523 = vld [vmem:[#allocation28 + $0x88] sm:$0xf]
    %v7524 = vld [vmem:[#allocation28 + $0x8c] sm:$0xff]
    %v7525 = vld [vmem:[#allocation28 + $0x94] sm:$0xff]
    %v7526 = vld [vmem:[#allocation28 + $0x9c] sm:$0xf]
    %v7527 = vld [vmem:[#allocation28 + $0xa0] sm:$0xff]
    %v7528 = vld [vmem:[#allocation28 + $0xa8] sm:$0xff]
    %v7529 = vld [vmem:[#allocation28 + $0xb0] sm:$0xf]
    %v7530 = vld [vmem:[#allocation28 + $0xb4] sm:$0xff]
    %v7531 = vld [vmem:[#allocation28 + $0xbc] sm:$0xff]
    %v7532 = vld [vmem:[#allocation28 + $0xc4] sm:$0xf]
    %v7533 = vld [vmem:[#allocation28 + $0xc8] sm:$0xff]
    %v7534 = vld [vmem:[#allocation28 + $0xd0] sm:$0xff]
    %v7535 = vld [vmem:[#allocation28 + $0xd8] sm:$0xf]
    %v7536 = vld [vmem:[#allocation28 + $0xdc] sm:$0xff]
    %v7537 = vld [vmem:[#allocation28 + $0xe4] sm:$0xff]
    %v7538 = vld [vmem:[#allocation28 + $0xec] sm:$0xf]
    %v7539 = vld [vmem:[#allocation28 + $0xf0] sm:$0xff]
    %v7540 = vld [vmem:[#allocation28 + $0xf8] sm:$0xff]
    %v7541 = vld [vmem:[#allocation28 + $0x100] sm:$0xf]
    %v7542 = vld [vmem:[#allocation28 + $0x104] sm:$0xff]
    %v7543 = vld [vmem:[#allocation28 + $0x10c] sm:$0xff]
    %v7544 = vld [vmem:[#allocation28 + $0x114] sm:$0xf]
    %v7545 = vld [vmem:[#allocation28 + $0x118] sm:$0xff]
    %v7546 = vld [vmem:[#allocation28 + $0x120] sm:$0xff]
    %v7547 = vld [vmem:[#allocation28 + $0x128] sm:$0xf]
    %v7548 = vld [vmem:[#allocation28 + $0x12c] sm:$0xff]
    %v7549 = vld [vmem:[#allocation28 + $0x134] sm:$0xff]
    %v7550 = vld [vmem:[#allocation28 + $0x13c] sm:$0xf]
    %v7551 = vld [vmem:[#allocation28 + $0x140] sm:$0xff]
    %v7552 = vld [vmem:[#allocation28 + $0x148] sm:$0xff]
    %v7553 = vld [vmem:[#allocation28 + $0x150] sm:$0xf]
    %v7554 = vld [vmem:[#allocation28 + $0x154] sm:$0xff]
    %v7555 = vld [vmem:[#allocation28 + $0x15c] sm:$0xff]
    %v7556 = vld [vmem:[#allocation28 + $0x164] sm:$0xf]
    %v7557 = vld [vmem:[#allocation28 + $0x168] sm:$0xff]
    %v7558 = vld [vmem:[#allocation28 + $0x170] sm:$0xff]
    %v7559 = vld [vmem:[#allocation28 + $0x178] sm:$0xf]
    %v7560 = vld [vmem:[#allocation28 + $0x17c] sm:$0xff]
    %v7561 = vld [vmem:[#allocation28 + $0x184] sm:$0xff]
    %v7562 = vld [vmem:[#allocation28 + $0x18c] sm:$0xf]
    %v7563 = vld [vmem:[#allocation28 + $0x190] sm:$0xff]
    %v7564 = vld [vmem:[#allocation28 + $0x198] sm:$0xff]
    %v7565 = vld [vmem:[#allocation28 + $0x1a0] sm:$0xf]
    %v7566 = vld [vmem:[#allocation28 + $0x1a4] sm:$0xff]
    %v7567 = vld [vmem:[#allocation28 + $0x1ac] sm:$0xff]
    %v7568 = vld [vmem:[#allocation28 + $0x1b4] sm:$0xf]
    %v7569 = vld [vmem:[#allocation28 + $0x1b8] sm:$0xff]
    %v7570 = vld [vmem:[#allocation28 + $0x1c0] sm:$0xff]
    %v7571 = vld [vmem:[#allocation28 + $0x1c8] sm:$0xf]
    %v7572 = vld [vmem:[#allocation28 + $0x1cc] sm:$0xff]
    %v7573 = vld [vmem:[#allocation28 + $0x1d4] sm:$0xff]
    %v7574 = vld [vmem:[#allocation28 + $0x1dc] sm:$0xf]
    %v7575 = vld [vmem:[#allocation28 + $0x1e0] sm:$0xff]
    %v7576 = vld [vmem:[#allocation28 + $0x1e8] sm:$0xff]
    %v7577 = vld [vmem:[#allocation28 + $0x1f0] sm:$0xf]
    %v7578 = vld [vmem:[#allocation28 + $0x1f4] sm:$0xff]
    %v7579 = vld [vmem:[#allocation28 + $0x1fc] sm:$0xff]
    %v7580 = vld [vmem:[#allocation28 + $0x204] sm:$0xf]
    %v7581 = vld [vmem:[#allocation28 + $0x208] sm:$0xff]
    %v7582 = vld [vmem:[#allocation28 + $0x210] sm:$0xff]
    %v7583 = vld [vmem:[#allocation28 + $0x218] sm:$0xf]
    %v7584 = vld [vmem:[#allocation28 + $0x21c] sm:$0xff]
    %v7585 = vld [vmem:[#allocation28 + $0x224] sm:$0xff]
    %v7586 = vld [vmem:[#allocation28 + $0x22c] sm:$0xf]
    %v7587 = vld [vmem:[#allocation28 + $0x230] sm:$0xff]
    %v7588 = vld [vmem:[#allocation28 + $0x238] sm:$0xff]
    %v7589 = vld [vmem:[#allocation28 + $0x240] sm:$0xf]
    %v7590 = vld [vmem:[#allocation28 + $0x244] sm:$0xff]
    %v7591 = vld [vmem:[#allocation28 + $0x24c] sm:$0xff]
    %v7592 = vld [vmem:[#allocation28 + $0x254] sm:$0xf]
    %v7593 = vld [vmem:[#allocation28 + $0x258] sm:$0xff]
    %v7594 = vld [vmem:[#allocation28 + $0x260] sm:$0xff]
    %v7595 = vld [vmem:[#allocation28 + $0x268] sm:$0xf]
    %v7596 = vld [vmem:[#allocation28 + $0x26c] sm:$0xff]
    %v7597 = vld [vmem:[#allocation28 + $0x274] sm:$0xff]
    %v7598 = vld [vmem:[#allocation28 + $0x27c] sm:$0xf]
    %v7599 = vld [vmem:[#allocation28 + $0x280] sm:$0xff]
    %v7600 = vld [vmem:[#allocation28 + $0x288] sm:$0xff]
    %v7601 = vld [vmem:[#allocation28 + $0x290] sm:$0xf]
    %v7602 = vld [vmem:[#allocation28 + $0x294] sm:$0xff]
    %v7603 = vld [vmem:[#allocation28 + $0x29c] sm:$0xff]
    %v7604 = vld [vmem:[#allocation28 + $0x2a4] sm:$0xf]
    %v7605 = vld [vmem:[#allocation28 + $0x2a8] sm:$0xff]
    %v7606 = vld [vmem:[#allocation28 + $0x2b0] sm:$0xff]
    %v7607 = vld [vmem:[#allocation28 + $0x2b8] sm:$0xf]
    %v7608 = vld [vmem:[#allocation28 + $0x2bc] sm:$0xff]
    %v7609 = vld [vmem:[#allocation28 + $0x2c4] sm:$0xff]
    %v7610 = vld [vmem:[#allocation28 + $0x2cc] sm:$0xf]
    %v7611 = vld [vmem:[#allocation28 + $0x2d0] sm:$0xff]
    %v7612 = vld [vmem:[#allocation28 + $0x2d8] sm:$0xff]
    %v7613 = vld [vmem:[#allocation28 + $0x2e0] sm:$0xf]
    %v7614 = vld [vmem:[#allocation28 + $0x2e4] sm:$0xff]
    %v7615 = vld [vmem:[#allocation28 + $0x2ec] sm:$0xff]
    %v7616 = vld [vmem:[#allocation28 + $0x2f4] sm:$0xf]
    %v7617 = vld [vmem:[#allocation28 + $0x2f8] sm:$0xff]
    %v7618 = vld [vmem:[#allocation28 + $0x300] sm:$0xff]
    %v7619 = vld [vmem:[#allocation28 + $0x308] sm:$0xf]
    %v7620 = vld [vmem:[#allocation28 + $0x30c] sm:$0xff]
    %v7621 = vld [vmem:[#allocation28 + $0x314] sm:$0xff]
    %v7622 = vld [vmem:[#allocation28 + $0x31c] sm:$0xf]
    %v7623 = vunpack.c.l.bf16 %v7503
    %v7624 = vunpack.c.h.bf16 %v7503
    %v7625 = vunpack.c.l.bf16 %v7504
    %v7626 = vunpack.c.h.bf16 %v7504
    %v7627 = vunpack.c.l.bf16 %v7505
    %v7628 = vunpack.c.l.bf16 %v7506
    %v7629 = vunpack.c.h.bf16 %v7506
    %v7630 = vunpack.c.l.bf16 %v7507
    %v7631 = vunpack.c.h.bf16 %v7507
    %v7632 = vunpack.c.l.bf16 %v7508
    %v7633 = vunpack.c.l.bf16 %v7509
    %v7634 = vunpack.c.h.bf16 %v7509
    %v7635 = vunpack.c.l.bf16 %v7510
    %v7636 = vunpack.c.h.bf16 %v7510
    %v7637 = vunpack.c.l.bf16 %v7511
    %v7638 = vunpack.c.l.bf16 %v7512
    %v7639 = vunpack.c.h.bf16 %v7512
    %v7640 = vunpack.c.l.bf16 %v7513
    %v7641 = vunpack.c.h.bf16 %v7513
    %v7642 = vunpack.c.l.bf16 %v7514
    %v7643 = vunpack.c.l.bf16 %v7515
    %v7644 = vunpack.c.h.bf16 %v7515
    %v7645 = vunpack.c.l.bf16 %v7516
    %v7646 = vunpack.c.h.bf16 %v7516
    %v7647 = vunpack.c.l.bf16 %v7517
    %v7648 = vunpack.c.l.bf16 %v7518
    %v7649 = vunpack.c.h.bf16 %v7518
    %v7650 = vunpack.c.l.bf16 %v7519
    %v7651 = vunpack.c.h.bf16 %v7519
    %v7652 = vunpack.c.l.bf16 %v7520
    %v7653 = vunpack.c.l.bf16 %v7521
    %v7654 = vunpack.c.h.bf16 %v7521
    %v7655 = vunpack.c.l.bf16 %v7522
    %v7656 = vunpack.c.h.bf16 %v7522
    %v7657 = vunpack.c.l.bf16 %v7523
    %v7658 = vunpack.c.l.bf16 %v7524
    %v7659 = vunpack.c.h.bf16 %v7524
    %v7660 = vunpack.c.l.bf16 %v7525
    %v7661 = vunpack.c.h.bf16 %v7525
    %v7662 = vunpack.c.l.bf16 %v7526
    %v7663 = vunpack.c.l.bf16 %v7527
    %v7664 = vunpack.c.h.bf16 %v7527
    %v7665 = vunpack.c.l.bf16 %v7528
    %v7666 = vunpack.c.h.bf16 %v7528
    %v7667 = vunpack.c.l.bf16 %v7529
    %v7668 = vunpack.c.l.bf16 %v7530
    %v7669 = vunpack.c.h.bf16 %v7530
    %v7670 = vunpack.c.l.bf16 %v7531
    %v7671 = vunpack.c.h.bf16 %v7531
    %v7672 = vunpack.c.l.bf16 %v7532
    %v7673 = vunpack.c.l.bf16 %v7533
    %v7674 = vunpack.c.h.bf16 %v7533
    %v7675 = vunpack.c.l.bf16 %v7534
    %v7676 = vunpack.c.h.bf16 %v7534
    %v7677 = vunpack.c.l.bf16 %v7535
    %v7678 = vunpack.c.l.bf16 %v7536
    %v7679 = vunpack.c.h.bf16 %v7536
    %v7680 = vunpack.c.l.bf16 %v7537
    %v7681 = vunpack.c.h.bf16 %v7537
    %v7682 = vunpack.c.l.bf16 %v7538
    %v7683 = vunpack.c.l.bf16 %v7539
    %v7684 = vunpack.c.h.bf16 %v7539
    %v7685 = vunpack.c.l.bf16 %v7540
    %v7686 = vunpack.c.h.bf16 %v7540
    %v7687 = vunpack.c.l.bf16 %v7541
    %v7688 = vunpack.c.l.bf16 %v7542
    %v7689 = vunpack.c.h.bf16 %v7542
    %v7690 = vunpack.c.l.bf16 %v7543
    %v7691 = vunpack.c.h.bf16 %v7543
    %v7692 = vunpack.c.l.bf16 %v7544
    %v7693 = vunpack.c.l.bf16 %v7545
    %v7694 = vunpack.c.h.bf16 %v7545
    %v7695 = vunpack.c.l.bf16 %v7546
    %v7696 = vunpack.c.h.bf16 %v7546
    %v7697 = vunpack.c.l.bf16 %v7547
    %v7698 = vunpack.c.l.bf16 %v7548
    %v7699 = vunpack.c.h.bf16 %v7548
    %v7700 = vunpack.c.l.bf16 %v7549
    %v7701 = vunpack.c.h.bf16 %v7549
    %v7702 = vunpack.c.l.bf16 %v7550
    %v7703 = vunpack.c.l.bf16 %v7551
    %v7704 = vunpack.c.h.bf16 %v7551
    %v7705 = vunpack.c.l.bf16 %v7552
    %v7706 = vunpack.c.h.bf16 %v7552
    %v7707 = vunpack.c.l.bf16 %v7553
    %v7708 = vunpack.c.l.bf16 %v7554
    %v7709 = vunpack.c.h.bf16 %v7554
    %v7710 = vunpack.c.l.bf16 %v7555
    %v7711 = vunpack.c.h.bf16 %v7555
    %v7712 = vunpack.c.l.bf16 %v7556
    %v7713 = vunpack.c.l.bf16 %v7557
    %v7714 = vunpack.c.h.bf16 %v7557
    %v7715 = vunpack.c.l.bf16 %v7558
    %v7716 = vunpack.c.h.bf16 %v7558
    %v7717 = vunpack.c.l.bf16 %v7559
    %v7718 = vunpack.c.l.bf16 %v7560
    %v7719 = vunpack.c.h.bf16 %v7560
    %v7720 = vunpack.c.l.bf16 %v7561
    %v7721 = vunpack.c.h.bf16 %v7561
    %v7722 = vunpack.c.l.bf16 %v7562
    %v7723 = vunpack.c.l.bf16 %v7563
    %v7724 = vunpack.c.h.bf16 %v7563
    %v7725 = vunpack.c.l.bf16 %v7564
    %v7726 = vunpack.c.h.bf16 %v7564
    %v7727 = vunpack.c.l.bf16 %v7565
    %v7728 = vunpack.c.l.bf16 %v7566
    %v7729 = vunpack.c.h.bf16 %v7566
    %v7730 = vunpack.c.l.bf16 %v7567
    %v7731 = vunpack.c.h.bf16 %v7567
    %v7732 = vunpack.c.l.bf16 %v7568
    %v7733 = vunpack.c.l.bf16 %v7569
    %v7734 = vunpack.c.h.bf16 %v7569
    %v7735 = vunpack.c.l.bf16 %v7570
    %v7736 = vunpack.c.h.bf16 %v7570
    %v7737 = vunpack.c.l.bf16 %v7571
    %v7738 = vunpack.c.l.bf16 %v7572
    %v7739 = vunpack.c.h.bf16 %v7572
    %v7740 = vunpack.c.l.bf16 %v7573
    %v7741 = vunpack.c.h.bf16 %v7573
    %v7742 = vunpack.c.l.bf16 %v7574
    %v7743 = vunpack.c.l.bf16 %v7575
    %v7744 = vunpack.c.h.bf16 %v7575
    %v7745 = vunpack.c.l.bf16 %v7576
    %v7746 = vunpack.c.h.bf16 %v7576
    %v7747 = vunpack.c.l.bf16 %v7577
    %v7748 = vunpack.c.l.bf16 %v7578
    %v7749 = vunpack.c.h.bf16 %v7578
    %v7750 = vunpack.c.l.bf16 %v7579
    %v7751 = vunpack.c.h.bf16 %v7579
    %v7752 = vunpack.c.l.bf16 %v7580
    %v7753 = vunpack.c.l.bf16 %v7581
    %v7754 = vunpack.c.h.bf16 %v7581
    %v7755 = vunpack.c.l.bf16 %v7582
    %v7756 = vunpack.c.h.bf16 %v7582
    %v7757 = vunpack.c.l.bf16 %v7583
    %v7758 = vunpack.c.l.bf16 %v7584
    %v7759 = vunpack.c.h.bf16 %v7584
    %v7760 = vunpack.c.l.bf16 %v7585
    %v7761 = vunpack.c.h.bf16 %v7585
    %v7762 = vunpack.c.l.bf16 %v7586
    %v7763 = vunpack.c.l.bf16 %v7587
    %v7764 = vunpack.c.h.bf16 %v7587
    %v7765 = vunpack.c.l.bf16 %v7588
    %v7766 = vunpack.c.h.bf16 %v7588
    %v7767 = vunpack.c.l.bf16 %v7589
    %v7768 = vunpack.c.l.bf16 %v7590
    %v7769 = vunpack.c.h.bf16 %v7590
    %v7770 = vunpack.c.l.bf16 %v7591
    %v7771 = vunpack.c.h.bf16 %v7591
    %v7772 = vunpack.c.l.bf16 %v7592
    %v7773 = vunpack.c.l.bf16 %v7593
    %v7774 = vunpack.c.h.bf16 %v7593
    %v7775 = vunpack.c.l.bf16 %v7594
    %v7776 = vunpack.c.h.bf16 %v7594
    %v7777 = vunpack.c.l.bf16 %v7595
    %v7778 = vunpack.c.l.bf16 %v7596
    %v7779 = vunpack.c.h.bf16 %v7596
    %v7780 = vunpack.c.l.bf16 %v7597
    %v7781 = vunpack.c.h.bf16 %v7597
    %v7782 = vunpack.c.l.bf16 %v7598
    %v7783 = vunpack.c.l.bf16 %v7599
    %v7784 = vunpack.c.h.bf16 %v7599
    %v7785 = vunpack.c.l.bf16 %v7600
    %v7786 = vunpack.c.h.bf16 %v7600
    %v7787 = vunpack.c.l.bf16 %v7601
    %v7788 = vunpack.c.l.bf16 %v7602
    %v7789 = vunpack.c.h.bf16 %v7602
    %v7790 = vunpack.c.l.bf16 %v7603
    %v7791 = vunpack.c.h.bf16 %v7603
    %v7792 = vunpack.c.l.bf16 %v7604
    %v7793 = vunpack.c.l.bf16 %v7605
    %v7794 = vunpack.c.h.bf16 %v7605
    %v7795 = vunpack.c.l.bf16 %v7606
    %v7796 = vunpack.c.h.bf16 %v7606
    %v7797 = vunpack.c.l.bf16 %v7607
    %v7798 = vunpack.c.l.bf16 %v7608
    %v7799 = vunpack.c.h.bf16 %v7608
    %v7800 = vunpack.c.l.bf16 %v7609
    %v7801 = vunpack.c.h.bf16 %v7609
    %v7802 = vunpack.c.l.bf16 %v7610
    %v7803 = vunpack.c.l.bf16 %v7611
    %v7804 = vunpack.c.h.bf16 %v7611
    %v7805 = vunpack.c.l.bf16 %v7612
    %v7806 = vunpack.c.h.bf16 %v7612
    %v7807 = vunpack.c.l.bf16 %v7613
    %v7808 = vunpack.c.l.bf16 %v7614
    %v7809 = vunpack.c.h.bf16 %v7614
    %v7810 = vunpack.c.l.bf16 %v7615
    %v7811 = vunpack.c.h.bf16 %v7615
    %v7812 = vunpack.c.l.bf16 %v7616
    %v7813 = vunpack.c.l.bf16 %v7617
    %v7814 = vunpack.c.h.bf16 %v7617
    %v7815 = vunpack.c.l.bf16 %v7618
    %v7816 = vunpack.c.h.bf16 %v7618
    %v7817 = vunpack.c.l.bf16 %v7619
    %v7818 = vunpack.c.l.bf16 %v7620
    %v7819 = vunpack.c.h.bf16 %v7620
    %v7820 = vunpack.c.l.bf16 %v7621
    %v7821 = vunpack.c.h.bf16 %v7621
    %v7822 = vunpack.c.l.bf16 %v7622
    %v7823 = vrot.slane %v5929, 2
    %v7824 = vrot.slane %v5931, 2
    %v7825 = vrot.slane %v6000, 2
    %v7828 = vsel %vm2873, %v7825, 0
    %7830 = vmatprep.subr.mxu0 %v7624
    %7831 = vmatpush1.msra.mxu0 %v7623
    %7832 = vmatprep.subr.mxu0 %v7629
    %7833 = vmatpush1.msra.mxu0 %v7628
    %7834 = vmatprep.subr.mxu0 %v7634
    %7835 = vmatpush1.msra.mxu0 %v7633
    %7836 = vmatprep.subr.mxu0 %v7639
    %7837 = vmatpush1.msra.mxu0 %v7638
    %7838 = vmatprep.subr.mxu0 %v7644
    %7839 = vmatpush1.msra.mxu0 %v7643
    %7840 = vmatprep.subr.mxu0 %v7649
    %7841 = vmatpush1.msra.mxu0 %v7648
    %7842 = vmatprep.subr.mxu0 %v7654
    %7843 = vmatpush1.msra.mxu0 %v7653
    %7844 = vmatprep.subr.mxu0 %v7659
    %7845 = vmatpush1.msra.mxu0 %v7658
    %7846 = vmatprep.subr.mxu0 %v7664
    %7847 = vmatpush1.msra.mxu0 %v7663
    %7848 = vmatprep.subr.mxu0 %v7669
    %7849 = vmatpush1.msra.mxu0 %v7668
    %7850 = vmatprep.subr.mxu0 %v7674
    %7851 = vmatpush1.msra.mxu0 %v7673
    %7852 = vmatprep.subr.mxu0 %v7679
    %7853 = vmatpush1.msra.mxu0 %v7678
    %7854 = vmatprep.subr.mxu0 %v7684
    %7855 = vmatpush1.msra.mxu0 %v7683
    %7856 = vmatprep.subr.mxu0 %v7689
    %7857 = vmatpush1.msra.mxu0 %v7688
    %7858 = vmatprep.subr.mxu0 %v7694
    %7859 = vmatpush1.msra.mxu0 %v7693
    %7860 = vmatprep.subr.mxu0 %v7699
    %7861 = vmatpush1.msra.mxu0 %v7698
    %7862 = vmatprep.subr.mxu0 %v7704
    %7863 = vmatpush1.msra.mxu0 %v7703
    %7864 = vmatprep.subr.mxu0 %v7709
    %7865 = vmatpush1.msra.mxu0 %v7708
    %7866 = vmatprep.subr.mxu0 %v7714
    %7867 = vmatpush1.msra.mxu0 %v7713
    %7868 = vmatprep.subr.mxu0 %v7719
    %7869 = vmatpush1.msra.mxu0 %v7718
    %7870 = vmatprep.subr.mxu0 %v7724
    %7871 = vmatpush1.msra.mxu0 %v7723
    %7872 = vmatprep.subr.mxu0 %v7729
    %7873 = vmatpush1.msra.mxu0 %v7728
    %7874 = vmatprep.subr.mxu0 %v7734
    %7875 = vmatpush1.msra.mxu0 %v7733
    %7876 = vmatprep.subr.mxu0 %v7739
    %7877 = vmatpush1.msra.mxu0 %v7738
    %7878 = vmatprep.subr.mxu0 %v7744
    %7879 = vmatpush1.msra.mxu0 %v7743
    %7880 = vmatprep.subr.mxu0 %v7749
    %7881 = vmatpush1.msra.mxu0 %v7748
    %7882 = vmatprep.subr.mxu0 %v7754
    %7883 = vmatpush1.msra.mxu0 %v7753
    %7884 = vmatprep.subr.mxu0 %v7759
    %7885 = vmatpush1.msra.mxu0 %v7758
    %7886 = vmatprep.subr.mxu0 %v7764
    %7887 = vmatpush1.msra.mxu0 %v7763
    %7888 = vmatprep.subr.mxu0 %v7769
    %7889 = vmatpush1.msra.mxu0 %v7768
    %7890 = vmatprep.subr.mxu0 %v7774
    %7891 = vmatpush1.msra.mxu0 %v7773
    %7892 = vmatprep.subr.mxu0 %v7779
    %7893 = vmatpush1.msra.mxu0 %v7778
    %7894 = vmatprep.mubr.f32.mxu0 %v7824
    %7895 = vmatmul.mubr.f32.gmra.mrb[0].mxu0 %v7823
    %v7896 = vpop.f32.mrb[0].mxu0
    %v7897 = vadd.f32 0.0, %v7896
    %v7898 = vpop.f32.mrb[0].mxu0
    %v7899 = vadd.f32 0.0, %v7898
    %7900 = vdwg.mxu0
    %7901 = vmatprep.subr.mxu0 %v7784
    %7902 = vmatpush1.msra.mxu0 %v7783
    %7903 = vmatprep.subr.mxu0 %v7789
    %7904 = vmatpush1.msra.mxu0 %v7788
    %7905 = vmatprep.subr.mxu0 %v7794
    %7906 = vmatpush1.msra.mxu0 %v7793
    %7907 = vmatprep.subr.mxu0 %v7799
    %7908 = vmatpush1.msra.mxu0 %v7798
    %7909 = vmatprep.subr.mxu0 %v7804
    %7910 = vmatpush1.msra.mxu0 %v7803
    %7911 = vmatprep.subr.mxu0 %v7809
    %7912 = vmatpush1.msra.mxu0 %v7808
    %7913 = vmatprep.subr.mxu0 %v7814
    %7914 = vmatpush1.msra.mxu0 %v7813
    %7915 = vmatprep.subr.mxu0 %v7819
    %7916 = vmatpush1.msra.mxu0 %v7818
    %7917 = vmatprep.subr.mxu0 0.0
    %7918 = vmatpush1.msra.mxu0 0.0
    %7919 = vmatprep.subr.mxu0 0.0
    %7920 = vmatpush1.msra.mxu0 0.0
    %7921 = vmatprep.subr.mxu0 0.0
    %7922 = vmatpush1.msra.mxu0 0.0
    %7923 = vmatprep.subr.mxu0 0.0
    %7924 = vmatpush1.msra.mxu0 0.0
    %7925 = vmatprep.subr.mxu0 0.0
    %7926 = vmatpush1.msra.mxu0 0.0
    %7927 = vmatprep.subr.mxu0 0.0
    %7928 = vmatpush1.msra.mxu0 0.0
    %7929 = vmatprep.subr.mxu0 0.0
    %7930 = vmatpush1.msra.mxu0 0.0
    %7931 = vmatprep.subr.mxu0 0.0
    %7932 = vmatpush1.msra.mxu0 0.0
    %7933 = vmatprep.subr.mxu0 0.0
    %7934 = vmatpush1.msra.mxu0 0.0
    %7935 = vmatprep.subr.mxu0 0.0
    %7936 = vmatpush1.msra.mxu0 0.0
    %7937 = vmatprep.subr.mxu0 0.0
    %7938 = vmatpush1.msra.mxu0 0.0
    %7939 = vmatprep.subr.mxu0 0.0
    %7940 = vmatpush1.msra.mxu0 0.0
    %7941 = vmatprep.subr.mxu0 0.0
    %7942 = vmatpush1.msra.mxu0 0.0
    %7943 = vmatprep.subr.mxu0 0.0
    %7944 = vmatpush1.msra.mxu0 0.0
    %7945 = vmatprep.subr.mxu0 0.0
    %7946 = vmatpush1.msra.mxu0 0.0
    %7947 = vmatprep.subr.mxu0 0.0
    %7948 = vmatpush1.msra.mxu0 0.0
    %7949 = vmatprep.subr.mxu0 0.0
    %7950 = vmatpush1.msra.mxu0 0.0
    %7951 = vmatprep.subr.mxu0 0.0
    %7952 = vmatpush1.msra.mxu0 0.0
    %7953 = vmatprep.subr.mxu0 0.0
    %7954 = vmatpush1.msra.mxu0 0.0
    %7955 = vmatprep.subr.mxu0 0.0
    %7956 = vmatpush1.msra.mxu0 0.0
    %7957 = vmatprep.subr.mxu0 0.0
    %7958 = vmatpush1.msra.mxu0 0.0
    %7959 = vmatprep.subr.mxu0 0.0
    %7960 = vmatpush1.msra.mxu0 0.0
    %7961 = vmatprep.subr.mxu0 0.0
    %7962 = vmatpush1.msra.mxu0 0.0
    %7963 = vmatprep.subr.mxu0 0.0
    %7964 = vmatpush1.msra.mxu0 0.0
    %7965 = vmatprep.mubr.f32.mxu0 0.0
    %7966 = vmatmul.mubr.f32.gmra.mrb[0].mxu0 %v7828
    %v7967 = vpop.f32.mrb[0].mxu0
    %v7968 = vadd.f32 %v7897, %v7967
    %v7969 = vpop.f32.mrb[0].mxu0
    %v7970 = vadd.f32 %v7899, %v7969
    %7971 = vdwg.mxu0
    %7972 = vmatprep.subr.mxu0 %v7626
    %7973 = vmatpush1.msra.mxu0 %v7625
    %7974 = vmatprep.subr.mxu0 %v7631
    %7975 = vmatpush1.msra.mxu0 %v7630
    %7976 = vmatprep.subr.mxu0 %v7636
    %7977 = vmatpush1.msra.mxu0 %v7635
    %7978 = vmatprep.subr.mxu0 %v7641
    %7979 = vmatpush1.msra.mxu0 %v7640
    %7980 = vmatprep.subr.mxu0 %v7646
    %7981 = vmatpush1.msra.mxu0 %v7645
    %7982 = vmatprep.subr.mxu0 %v7651
    %7983 = vmatpush1.msra.mxu0 %v7650
    %7984 = vmatprep.subr.mxu0 %v7656
    %7985 = vmatpush1.msra.mxu0 %v7655
    %7986 = vmatprep.subr.mxu0 %v7661
    %7987 = vmatpush1.msra.mxu0 %v7660
    %7988 = vmatprep.subr.mxu0 %v7666
    %7989 = vmatpush1.msra.mxu0 %v7665
    %7990 = vmatprep.subr.mxu0 %v7671
    %7991 = vmatpush1.msra.mxu0 %v7670
    %7992 = vmatprep.subr.mxu0 %v7676
    %7993 = vmatpush1.msra.mxu0 %v7675
    %7994 = vmatprep.subr.mxu0 %v7681
    %7995 = vmatpush1.msra.mxu0 %v7680
    %7996 = vmatprep.subr.mxu0 %v7686
    %7997 = vmatpush1.msra.mxu0 %v7685
    %7998 = vmatprep.subr.mxu0 %v7691
    %7999 = vmatpush1.msra.mxu0 %v7690
    %8000 = vmatprep.subr.mxu0 %v7696
    %8001 = vmatpush1.msra.mxu0 %v7695
    %8002 = vmatprep.subr.mxu0 %v7701
    %8003 = vmatpush1.msra.mxu0 %v7700
    %8004 = vmatprep.subr.mxu0 %v7706
    %8005 = vmatpush1.msra.mxu0 %v7705
    %8006 = vmatprep.subr.mxu0 %v7711
    %8007 = vmatpush1.msra.mxu0 %v7710
    %8008 = vmatprep.subr.mxu0 %v7716
    %8009 = vmatpush1.msra.mxu0 %v7715
    %8010 = vmatprep.subr.mxu0 %v7721
    %8011 = vmatpush1.msra.mxu0 %v7720
    %8012 = vmatprep.subr.mxu0 %v7726
    %8013 = vmatpush1.msra.mxu0 %v7725
    %8014 = vmatprep.subr.mxu0 %v7731
    %8015 = vmatpush1.msra.mxu0 %v7730
    %8016 = vmatprep.subr.mxu0 %v7736
    %8017 = vmatpush1.msra.mxu0 %v7735
    %8018 = vmatprep.subr.mxu0 %v7741
    %8019 = vmatpush1.msra.mxu0 %v7740
    %8020 = vmatprep.subr.mxu0 %v7746
    %8021 = vmatpush1.msra.mxu0 %v7745
    %8022 = vmatprep.subr.mxu0 %v7751
    %8023 = vmatpush1.msra.mxu0 %v7750
    %8024 = vmatprep.subr.mxu0 %v7756
    %8025 = vmatpush1.msra.mxu0 %v7755
    %8026 = vmatprep.subr.mxu0 %v7761
    %8027 = vmatpush1.msra.mxu0 %v7760
    %8028 = vmatprep.subr.mxu0 %v7766
    %8029 = vmatpush1.msra.mxu0 %v7765
    %8030 = vmatprep.subr.mxu0 %v7771
    %8031 = vmatpush1.msra.mxu0 %v7770
    %8032 = vmatprep.subr.mxu0 %v7776
    %8033 = vmatpush1.msra.mxu0 %v7775
    %8034 = vmatprep.subr.mxu0 %v7781
    %8035 = vmatpush1.msra.mxu0 %v7780
    %8036 = vmatprep.mubr.f32.mxu0 %v7824
    %8037 = vmatmul.mubr.f32.gmra.mrb[0].mxu0 %v7823
    %v8038 = vpop.f32.mrb[0].mxu0
    %v8039 = vadd.f32 0.0, %v8038
    %v8040 = vpop.f32.mrb[0].mxu0
    %v8041 = vadd.f32 0.0, %v8040
    %8042 = vdwg.mxu0
    %8043 = vmatprep.subr.mxu0 %v7786
    %8044 = vmatpush1.msra.mxu0 %v7785
    %8045 = vmatprep.subr.mxu0 %v7791
    %8046 = vmatpush1.msra.mxu0 %v7790
    %8047 = vmatprep.subr.mxu0 %v7796
    %8048 = vmatpush1.msra.mxu0 %v7795
    %8049 = vmatprep.subr.mxu0 %v7801
    %8050 = vmatpush1.msra.mxu0 %v7800
    %8051 = vmatprep.subr.mxu0 %v7806
    %8052 = vmatpush1.msra.mxu0 %v7805
    %8053 = vmatprep.subr.mxu0 %v7811
    %8054 = vmatpush1.msra.mxu0 %v7810
    %8055 = vmatprep.subr.mxu0 %v7816
    %8056 = vmatpush1.msra.mxu0 %v7815
    %8057 = vmatprep.subr.mxu0 %v7821
    %8058 = vmatpush1.msra.mxu0 %v7820
    %8059 = vmatprep.subr.mxu0 0.0
    %8060 = vmatpush1.msra.mxu0 0.0
    %8061 = vmatprep.subr.mxu0 0.0
    %8062 = vmatpush1.msra.mxu0 0.0
    %8063 = vmatprep.subr.mxu0 0.0
    %8064 = vmatpush1.msra.mxu0 0.0
    %8065 = vmatprep.subr.mxu0 0.0
    %8066 = vmatpush1.msra.mxu0 0.0
    %8067 = vmatprep.subr.mxu0 0.0
    %8068 = vmatpush1.msra.mxu0 0.0
    %8069 = vmatprep.subr.mxu0 0.0
    %8070 = vmatpush1.msra.mxu0 0.0
    %8071 = vmatprep.subr.mxu0 0.0
    %8072 = vmatpush1.msra.mxu0 0.0
    %8073 = vmatprep.subr.mxu0 0.0
    %8074 = vmatpush1.msra.mxu0 0.0
    %8075 = vmatprep.subr.mxu0 0.0
    %8076 = vmatpush1.msra.mxu0 0.0
    %8077 = vmatprep.subr.mxu0 0.0
    %8078 = vmatpush1.msra.mxu0 0.0
    %8079 = vmatprep.subr.mxu0 0.0
    %8080 = vmatpush1.msra.mxu0 0.0
    %8081 = vmatprep.subr.mxu0 0.0
    %8082 = vmatpush1.msra.mxu0 0.0
    %8083 = vmatprep.subr.mxu0 0.0
    %8084 = vmatpush1.msra.mxu0 0.0
    %8085 = vmatprep.subr.mxu0 0.0
    %8086 = vmatpush1.msra.mxu0 0.0
    %8087 = vmatprep.subr.mxu0 0.0
    %8088 = vmatpush1.msra.mxu0 0.0
    %8089 = vmatprep.subr.mxu0 0.0
    %8090 = vmatpush1.msra.mxu0 0.0
    %8091 = vmatprep.subr.mxu0 0.0
    %8092 = vmatpush1.msra.mxu0 0.0
    %8093 = vmatprep.subr.mxu0 0.0
    %8094 = vmatpush1.msra.mxu0 0.0
    %8095 = vmatprep.subr.mxu0 0.0
    %8096 = vmatpush1.msra.mxu0 0.0
    %8097 = vmatprep.subr.mxu0 0.0
    %8098 = vmatpush1.msra.mxu0 0.0
    %8099 = vmatprep.subr.mxu0 0.0
    %8100 = vmatpush1.msra.mxu0 0.0
    %8101 = vmatprep.subr.mxu0 0.0
    %8102 = vmatpush1.msra.mxu0 0.0
    %8103 = vmatprep.subr.mxu0 0.0
    %8104 = vmatpush1.msra.mxu0 0.0
    %8105 = vmatprep.subr.mxu0 0.0
    %8106 = vmatpush1.msra.mxu0 0.0
    %8107 = vmatprep.mubr.f32.mxu0 0.0
    %8108 = vmatmul.mubr.f32.gmra.mrb[0].mxu0 %v7828
    %v8109 = vpop.f32.mrb[0].mxu0
    %v8110 = vadd.f32 %v8039, %v8109
    %v8111 = vpop.f32.mrb[0].mxu0
    %v8112 = vadd.f32 %v8041, %v8111
    %8113 = vdwg.mxu0
    %8114 = vmatprep.subr.mxu0 0.0
    %8115 = vmatpush1.msra.mxu0 %v7627
    %8116 = vmatprep.subr.mxu0 0.0
    %8117 = vmatpush1.msra.mxu0 %v7632
    %8118 = vmatprep.subr.mxu0 0.0
    %8119 = vmatpush1.msra.mxu0 %v7637
    %8120 = vmatprep.subr.mxu0 0.0
    %8121 = vmatpush1.msra.mxu0 %v7642
    %8122 = vmatprep.subr.mxu0 0.0
    %8123 = vmatpush1.msra.mxu0 %v7647
    %8124 = vmatprep.subr.mxu0 0.0
    %8125 = vmatpush1.msra.mxu0 %v7652
    %8126 = vmatprep.subr.mxu0 0.0
    %8127 = vmatpush1.msra.mxu0 %v7657
    %8128 = vmatprep.subr.mxu0 0.0
    %8129 = vmatpush1.msra.mxu0 %v7662
    %8130 = vmatprep.subr.mxu0 0.0
    %8131 = vmatpush1.msra.mxu0 %v7667
    %8132 = vmatprep.subr.mxu0 0.0
    %8133 = vmatpush1.msra.mxu0 %v7672
    %8134 = vmatprep.subr.mxu0 0.0
    %8135 = vmatpush1.msra.mxu0 %v7677
    %8136 = vmatprep.subr.mxu0 0.0
    %8137 = vmatpush1.msra.mxu0 %v7682
    %8138 = vmatprep.subr.mxu0 0.0
    %8139 = vmatpush1.msra.mxu0 %v7687
    %8140 = vmatprep.subr.mxu0 0.0
    %8141 = vmatpush1.msra.mxu0 %v7692
    %8142 = vmatprep.subr.mxu0 0.0
    %8143 = vmatpush1.msra.mxu0 %v7697
    %8144 = vmatprep.subr.mxu0 0.0
    %8145 = vmatpush1.msra.mxu0 %v7702
    %8146 = vmatprep.subr.mxu0 0.0
    %8147 = vmatpush1.msra.mxu0 %v7707
    %8148 = vmatprep.subr.mxu0 0.0
    %8149 = vmatpush1.msra.mxu0 %v7712
    %8150 = vmatprep.subr.mxu0 0.0
    %8151 = vmatpush1.msra.mxu0 %v7717
    %8152 = vmatprep.subr.mxu0 0.0
    %8153 = vmatpush1.msra.mxu0 %v7722
    %8154 = vmatprep.subr.mxu0 0.0
    %8155 = vmatpush1.msra.mxu0 %v7727
    %8156 = vmatprep.subr.mxu0 0.0
    %8157 = vmatpush1.msra.mxu0 %v7732
    %8158 = vmatprep.subr.mxu0 0.0
    %8159 = vmatpush1.msra.mxu0 %v7737
    %8160 = vmatprep.subr.mxu0 0.0
    %8161 = vmatpush1.msra.mxu0 %v7742
    %8162 = vmatprep.subr.mxu0 0.0
    %8163 = vmatpush1.msra.mxu0 %v7747
    %8164 = vmatprep.subr.mxu0 0.0
    %8165 = vmatpush1.msra.mxu0 %v7752
    %8166 = vmatprep.subr.mxu0 0.0
    %8167 = vmatpush1.msra.mxu0 %v7757
    %8168 = vmatprep.subr.mxu0 0.0
    %8169 = vmatpush1.msra.mxu0 %v7762
    %8170 = vmatprep.subr.mxu0 0.0
    %8171 = vmatpush1.msra.mxu0 %v7767
    %8172 = vmatprep.subr.mxu0 0.0
    %8173 = vmatpush1.msra.mxu0 %v7772
    %8174 = vmatprep.subr.mxu0 0.0
    %8175 = vmatpush1.msra.mxu0 %v7777
    %8176 = vmatprep.subr.mxu0 0.0
    %8177 = vmatpush1.msra.mxu0 %v7782
    %8178 = vmatprep.mubr.f32.mxu0 %v7824
    %8179 = vmatmul.mubr.f32.gmra.mrb[0].mxu0 %v7823
    %v8180 = vpop.f32.mrb[0].mxu0
    %v8181 = vadd.f32 0.0, %v8180
    %v8182 = vpop.f32.mrb[0].mxu0
    %8183 = vdwg.mxu0
    %8184 = vmatprep.subr.mxu0 0.0
    %8185 = vmatpush1.msra.mxu0 %v7787
    %8186 = vmatprep.subr.mxu0 0.0
    %8187 = vmatpush1.msra.mxu0 %v7792
    %8188 = vmatprep.subr.mxu0 0.0
    %8189 = vmatpush1.msra.mxu0 %v7797
    %8190 = vmatprep.subr.mxu0 0.0
    %8191 = vmatpush1.msra.mxu0 %v7802
    %8192 = vmatprep.subr.mxu0 0.0
    %8193 = vmatpush1.msra.mxu0 %v7807
    %8194 = vmatprep.subr.mxu0 0.0
    %8195 = vmatpush1.msra.mxu0 %v7812
    %8196 = vmatprep.subr.mxu0 0.0
    %8197 = vmatpush1.msra.mxu0 %v7817
    %8198 = vmatprep.subr.mxu0 0.0
    %8199 = vmatpush1.msra.mxu0 %v7822
    %8200 = vmatprep.subr.mxu0 0.0
    %8201 = vmatpush1.msra.mxu0 0.0
    %8202 = vmatprep.subr.mxu0 0.0
    %8203 = vmatpush1.msra.mxu0 0.0
    %8204 = vmatprep.subr.mxu0 0.0
    %8205 = vmatpush1.msra.mxu0 0.0
    %8206 = vmatprep.subr.mxu0 0.0
    %8207 = vmatpush1.msra.mxu0 0.0
    %8208 = vmatprep.subr.mxu0 0.0
    %8209 = vmatpush1.msra.mxu0 0.0
    %8210 = vmatprep.subr.mxu0 0.0
    %8211 = vmatpush1.msra.mxu0 0.0
    %8212 = vmatprep.subr.mxu0 0.0
    %8213 = vmatpush1.msra.mxu0 0.0
    %8214 = vmatprep.subr.mxu0 0.0
    %8215 = vmatpush1.msra.mxu0 0.0
    %8216 = vmatprep.subr.mxu0 0.0
    %8217 = vmatpush1.msra.mxu0 0.0
    %8218 = vmatprep.subr.mxu0 0.0
    %8219 = vmatpush1.msra.mxu0 0.0
    %8220 = vmatprep.subr.mxu0 0.0
    %8221 = vmatpush1.msra.mxu0 0.0
    %8222 = vmatprep.subr.mxu0 0.0
    %8223 = vmatpush1.msra.mxu0 0.0
    %8224 = vmatprep.subr.mxu0 0.0
    %8225 = vmatpush1.msra.mxu0 0.0
    %8226 = vmatprep.subr.mxu0 0.0
    %8227 = vmatpush1.msra.mxu0 0.0
    %8228 = vmatprep.subr.mxu0 0.0
    %8229 = vmatpush1.msra.mxu0 0.0
    %8230 = vmatprep.subr.mxu0 0.0
    %8231 = vmatpush1.msra.mxu0 0.0
    %8232 = vmatprep.subr.mxu0 0.0
    %8233 = vmatpush1.msra.mxu0 0.0
    %8234 = vmatprep.subr.mxu0 0.0
    %8235 = vmatpush1.msra.mxu0 0.0
    %8236 = vmatprep.subr.mxu0 0.0
    %8237 = vmatpush1.msra.mxu0 0.0
    %8238 = vmatprep.subr.mxu0 0.0
    %8239 = vmatpush1.msra.mxu0 0.0
    %8240 = vmatprep.subr.mxu0 0.0
    %8241 = vmatpush1.msra.mxu0 0.0
    %8242 = vmatprep.subr.mxu0 0.0
    %8243 = vmatpush1.msra.mxu0 0.0
    %8244 = vmatprep.subr.mxu0 0.0
    %8245 = vmatpush1.msra.mxu0 0.0
    %8246 = vmatprep.subr.mxu0 0.0
    %8247 = vmatpush1.msra.mxu0 0.0
    %8248 = vmatprep.mubr.f32.mxu0 0.0
    %8249 = vmatmul.mubr.f32.gmra.mrb[0].mxu0 %v7828
    %v8250 = vpop.f32.mrb[0].mxu0
    %v8251 = vadd.f32 %v8181, %v8250
    %v8252 = vpop.f32.mrb[0].mxu0
    %8253 = vdwg.mxu0
    %v8254 = vadd.f32 %v7217, %v7968
    %v8255 = vadd.f32 %v7219, %v7970
    %v8256 = vadd.f32 %v7359, %v8110
    %v8257 = vadd.f32 %v7361, %v8112
    %v8258 = vadd.f32 %v7500, %v8251
    %v8259 = vld [vmem:[#allocation29] sm:$0xff]
    %v8260 = vld [vmem:[#allocation29 + $0x8] sm:$0xff]
    %v8261 = vld [vmem:[#allocation29 + $0x10] sm:$0xf]
    %v8262 = vld [vmem:[#allocation29 + $0x14] sm:$0xff]
    %v8263 = vld [vmem:[#allocation29 + $0x1c] sm:$0xff]
    %v8264 = vld [vmem:[#allocation29 + $0x24] sm:$0xf]
    %v8265 = vld [vmem:[#allocation29 + $0x28] sm:$0xff]
    %v8266 = vld [vmem:[#allocation29 + $0x30] sm:$0xff]
    %v8267 = vld [vmem:[#allocation29 + $0x38] sm:$0xf]
    %v8268 = vld [vmem:[#allocation29 + $0x3c] sm:$0xff]
    %v8269 = vld [vmem:[#allocation29 + $0x44] sm:$0xff]
    %v8270 = vld [vmem:[#allocation29 + $0x4c] sm:$0xf]
    %v8271 = vld [vmem:[#allocation29 + $0x50] sm:$0xff]
    %v8272 = vld [vmem:[#allocation29 + $0x58] sm:$0xff]
    %v8273 = vld [vmem:[#allocation29 + $0x60] sm:$0xf]
    %v8274 = vld [vmem:[#allocation29 + $0x64] sm:$0xff]
    %v8275 = vld [vmem:[#allocation29 + $0x6c] sm:$0xff]
    %v8276 = vld [vmem:[#allocation29 + $0x74] sm:$0xf]
    %v8277 = vld [vmem:[#allocation29 + $0x78] sm:$0xff]
    %v8278 = vld [vmem:[#allocation29 + $0x80] sm:$0xff]
    %v8279 = vld [vmem:[#allocation29 + $0x88] sm:$0xf]
    %v8280 = vld [vmem:[#allocation29 + $0x8c] sm:$0xff]
    %v8281 = vld [vmem:[#allocation29 + $0x94] sm:$0xff]
    %v8282 = vld [vmem:[#allocation29 + $0x9c] sm:$0xf]
    %v8283 = vld [vmem:[#allocation29 + $0xa0] sm:$0xff]
    %v8284 = vld [vmem:[#allocation29 + $0xa8] sm:$0xff]
    %v8285 = vld [vmem:[#allocation29 + $0xb0] sm:$0xf]
    %v8286 = vld [vmem:[#allocation29 + $0xb4] sm:$0xff]
    %v8287 = vld [vmem:[#allocation29 + $0xbc] sm:$0xff]
    %v8288 = vld [vmem:[#allocation29 + $0xc4] sm:$0xf]
    %v8289 = vld [vmem:[#allocation29 + $0xc8] sm:$0xff]
    %v8290 = vld [vmem:[#allocation29 + $0xd0] sm:$0xff]
    %v8291 = vld [vmem:[#allocation29 + $0xd8] sm:$0xf]
    %v8292 = vld [vmem:[#allocation29 + $0xdc] sm:$0xff]
    %v8293 = vld [vmem:[#allocation29 + $0xe4] sm:$0xff]
    %v8294 = vld [vmem:[#allocation29 + $0xec] sm:$0xf]
    %v8295 = vld [vmem:[#allocation29 + $0xf0] sm:$0xff]
    %v8296 = vld [vmem:[#allocation29 + $0xf8] sm:$0xff]
    %v8297 = vld [vmem:[#allocation29 + $0x100] sm:$0xf]
    %v8298 = vld [vmem:[#allocation29 + $0x104] sm:$0xff]
    %v8299 = vld [vmem:[#allocation29 + $0x10c] sm:$0xff]
    %v8300 = vld [vmem:[#allocation29 + $0x114] sm:$0xf]
    %v8301 = vld [vmem:[#allocation29 + $0x118] sm:$0xff]
    %v8302 = vld [vmem:[#allocation29 + $0x120] sm:$0xff]
    %v8303 = vld [vmem:[#allocation29 + $0x128] sm:$0xf]
    %v8304 = vld [vmem:[#allocation29 + $0x12c] sm:$0xff]
    %v8305 = vld [vmem:[#allocation29 + $0x134] sm:$0xff]
    %v8306 = vld [vmem:[#allocation29 + $0x13c] sm:$0xf]
    %v8307 = vld [vmem:[#allocation29 + $0x140] sm:$0xff]
    %v8308 = vld [vmem:[#allocation29 + $0x148] sm:$0xff]
    %v8309 = vld [vmem:[#allocation29 + $0x150] sm:$0xf]
    %v8310 = vld [vmem:[#allocation29 + $0x154] sm:$0xff]
    %v8311 = vld [vmem:[#allocation29 + $0x15c] sm:$0xff]
    %v8312 = vld [vmem:[#allocation29 + $0x164] sm:$0xf]
    %v8313 = vld [vmem:[#allocation29 + $0x168] sm:$0xff]
    %v8314 = vld [vmem:[#allocation29 + $0x170] sm:$0xff]
    %v8315 = vld [vmem:[#allocation29 + $0x178] sm:$0xf]
    %v8316 = vld [vmem:[#allocation29 + $0x17c] sm:$0xff]
    %v8317 = vld [vmem:[#allocation29 + $0x184] sm:$0xff]
    %v8318 = vld [vmem:[#allocation29 + $0x18c] sm:$0xf]
    %v8319 = vld [vmem:[#allocation29 + $0x190] sm:$0xff]
    %v8320 = vld [vmem:[#allocation29 + $0x198] sm:$0xff]
    %v8321 = vld [vmem:[#allocation29 + $0x1a0] sm:$0xf]
    %v8322 = vld [vmem:[#allocation29 + $0x1a4] sm:$0xff]
    %v8323 = vld [vmem:[#allocation29 + $0x1ac] sm:$0xff]
    %v8324 = vld [vmem:[#allocation29 + $0x1b4] sm:$0xf]
    %v8325 = vld [vmem:[#allocation29 + $0x1b8] sm:$0xff]
    %v8326 = vld [vmem:[#allocation29 + $0x1c0] sm:$0xff]
    %v8327 = vld [vmem:[#allocation29 + $0x1c8] sm:$0xf]
    %v8328 = vld [vmem:[#allocation29 + $0x1cc] sm:$0xff]
    %v8329 = vld [vmem:[#allocation29 + $0x1d4] sm:$0xff]
    %v8330 = vld [vmem:[#allocation29 + $0x1dc] sm:$0xf]
    %v8331 = vld [vmem:[#allocation29 + $0x1e0] sm:$0xff]
    %v8332 = vld [vmem:[#allocation29 + $0x1e8] sm:$0xff]
    %v8333 = vld [vmem:[#allocation29 + $0x1f0] sm:$0xf]
    %v8334 = vld [vmem:[#allocation29 + $0x1f4] sm:$0xff]
    %v8335 = vld [vmem:[#allocation29 + $0x1fc] sm:$0xff]
    %v8336 = vld [vmem:[#allocation29 + $0x204] sm:$0xf]
    %v8337 = vld [vmem:[#allocation29 + $0x208] sm:$0xff]
    %v8338 = vld [vmem:[#allocation29 + $0x210] sm:$0xff]
    %v8339 = vld [vmem:[#allocation29 + $0x218] sm:$0xf]
    %v8340 = vld [vmem:[#allocation29 + $0x21c] sm:$0xff]
    %v8341 = vld [vmem:[#allocation29 + $0x224] sm:$0xff]
    %v8342 = vld [vmem:[#allocation29 + $0x22c] sm:$0xf]
    %v8343 = vld [vmem:[#allocation29 + $0x230] sm:$0xff]
    %v8344 = vld [vmem:[#allocation29 + $0x238] sm:$0xff]
    %v8345 = vld [vmem:[#allocation29 + $0x240] sm:$0xf]
    %v8346 = vld [vmem:[#allocation29 + $0x244] sm:$0xff]
    %v8347 = vld [vmem:[#allocation29 + $0x24c] sm:$0xff]
    %v8348 = vld [vmem:[#allocation29 + $0x254] sm:$0xf]
    %v8349 = vld [vmem:[#allocation29 + $0x258] sm:$0xff]
    %v8350 = vld [vmem:[#allocation29 + $0x260] sm:$0xff]
    %v8351 = vld [vmem:[#allocation29 + $0x268] sm:$0xf]
    %v8352 = vld [vmem:[#allocation29 + $0x26c] sm:$0xff]
    %v8353 = vld [vmem:[#allocation29 + $0x274] sm:$0xff]
    %v8354 = vld [vmem:[#allocation29 + $0x27c] sm:$0xf]
    %v8355 = vld [vmem:[#allocation29 + $0x280] sm:$0xff]
    %v8356 = vld [vmem:[#allocation29 + $0x288] sm:$0xff]
    %v8357 = vld [vmem:[#allocation29 + $0x290] sm:$0xf]
    %v8358 = vld [vmem:[#allocation29 + $0x294] sm:$0xff]
    %v8359 = vld [vmem:[#allocation29 + $0x29c] sm:$0xff]
    %v8360 = vld [vmem:[#allocation29 + $0x2a4] sm:$0xf]
    %v8361 = vld [vmem:[#allocation29 + $0x2a8] sm:$0xff]
    %v8362 = vld [vmem:[#allocation29 + $0x2b0] sm:$0xff]
    %v8363 = vld [vmem:[#allocation29 + $0x2b8] sm:$0xf]
    %v8364 = vld [vmem:[#allocation29 + $0x2bc] sm:$0xff]
    %v8365 = vld [vmem:[#allocation29 + $0x2c4] sm:$0xff]
    %v8366 = vld [vmem:[#allocation29 + $0x2cc] sm:$0xf]
    %v8367 = vld [vmem:[#allocation29 + $0x2d0] sm:$0xff]
    %v8368 = vld [vmem:[#allocation29 + $0x2d8] sm:$0xff]
    %v8369 = vld [vmem:[#allocation29 + $0x2e0] sm:$0xf]
    %v8370 = vld [vmem:[#allocation29 + $0x2e4] sm:$0xff]
    %v8371 = vld [vmem:[#allocation29 + $0x2ec] sm:$0xff]
    %v8372 = vld [vmem:[#allocation29 + $0x2f4] sm:$0xf]
    %v8373 = vld [vmem:[#allocation29 + $0x2f8] sm:$0xff]
    %v8374 = vld [vmem:[#allocation29 + $0x300] sm:$0xff]
    %v8375 = vld [vmem:[#allocation29 + $0x308] sm:$0xf]
    %v8376 = vld [vmem:[#allocation29 + $0x30c] sm:$0xff]
    %v8377 = vld [vmem:[#allocation29 + $0x314] sm:$0xff]
    %v8378 = vld [vmem:[#allocation29 + $0x31c] sm:$0xf]
    %v8379 = vunpack.c.l.bf16 %v8259
    %v8380 = vunpack.c.h.bf16 %v8259
    %v8381 = vunpack.c.l.bf16 %v8260
    %v8382 = vunpack.c.h.bf16 %v8260
    %v8383 = vunpack.c.l.bf16 %v8261
    %v8384 = vunpack.c.l.bf16 %v8262
    %v8385 = vunpack.c.h.bf16 %v8262
    %v8386 = vunpack.c.l.bf16 %v8263
    %v8387 = vunpack.c.h.bf16 %v8263
    %v8388 = vunpack.c.l.bf16 %v8264
    %v8389 = vunpack.c.l.bf16 %v8265
    %v8390 = vunpack.c.h.bf16 %v8265
    %v8391 = vunpack.c.l.bf16 %v8266
    %v8392 = vunpack.c.h.bf16 %v8266
    %v8393 = vunpack.c.l.bf16 %v8267
    %v8394 = vunpack.c.l.bf16 %v8268
    %v8395 = vunpack.c.h.bf16 %v8268
    %v8396 = vunpack.c.l.bf16 %v8269
    %v8397 = vunpack.c.h.bf16 %v8269
    %v8398 = vunpack.c.l.bf16 %v8270
    %v8399 = vunpack.c.l.bf16 %v8271
    %v8400 = vunpack.c.h.bf16 %v8271
    %v8401 = vunpack.c.l.bf16 %v8272
    %v8402 = vunpack.c.h.bf16 %v8272
    %v8403 = vunpack.c.l.bf16 %v8273
    %v8404 = vunpack.c.l.bf16 %v8274
    %v8405 = vunpack.c.h.bf16 %v8274
    %v8406 = vunpack.c.l.bf16 %v8275
    %v8407 = vunpack.c.h.bf16 %v8275
    %v8408 = vunpack.c.l.bf16 %v8276
    %v8409 = vunpack.c.l.bf16 %v8277
    %v8410 = vunpack.c.h.bf16 %v8277
    %v8411 = vunpack.c.l.bf16 %v8278
    %v8412 = vunpack.c.h.bf16 %v8278
    %v8413 = vunpack.c.l.bf16 %v8279
    %v8414 = vunpack.c.l.bf16 %v8280
    %v8415 = vunpack.c.h.bf16 %v8280
    %v8416 = vunpack.c.l.bf16 %v8281
    %v8417 = vunpack.c.h.bf16 %v8281
    %v8418 = vunpack.c.l.bf16 %v8282
    %v8419 = vunpack.c.l.bf16 %v8283
    %v8420 = vunpack.c.h.bf16 %v8283
    %v8421 = vunpack.c.l.bf16 %v8284
    %v8422 = vunpack.c.h.bf16 %v8284
    %v8423 = vunpack.c.l.bf16 %v8285
    %v8424 = vunpack.c.l.bf16 %v8286
    %v8425 = vunpack.c.h.bf16 %v8286
    %v8426 = vunpack.c.l.bf16 %v8287
    %v8427 = vunpack.c.h.bf16 %v8287
    %v8428 = vunpack.c.l.bf16 %v8288
    %v8429 = vunpack.c.l.bf16 %v8289
    %v8430 = vunpack.c.h.bf16 %v8289
    %v8431 = vunpack.c.l.bf16 %v8290
    %v8432 = vunpack.c.h.bf16 %v8290
    %v8433 = vunpack.c.l.bf16 %v8291
    %v8434 = vunpack.c.l.bf16 %v8292
    %v8435 = vunpack.c.h.bf16 %v8292
    %v8436 = vunpack.c.l.bf16 %v8293
    %v8437 = vunpack.c.h.bf16 %v8293
    %v8438 = vunpack.c.l.bf16 %v8294
    %v8439 = vunpack.c.l.bf16 %v8295
    %v8440 = vunpack.c.h.bf16 %v8295
    %v8441 = vunpack.c.l.bf16 %v8296
    %v8442 = vunpack.c.h.bf16 %v8296
    %v8443 = vunpack.c.l.bf16 %v8297
    %v8444 = vunpack.c.l.bf16 %v8298
    %v8445 = vunpack.c.h.bf16 %v8298
    %v8446 = vunpack.c.l.bf16 %v8299
    %v8447 = vunpack.c.h.bf16 %v8299
    %v8448 = vunpack.c.l.bf16 %v8300
    %v8449 = vunpack.c.l.bf16 %v8301
    %v8450 = vunpack.c.h.bf16 %v8301
    %v8451 = vunpack.c.l.bf16 %v8302
    %v8452 = vunpack.c.h.bf16 %v8302
    %v8453 = vunpack.c.l.bf16 %v8303
    %v8454 = vunpack.c.l.bf16 %v8304
    %v8455 = vunpack.c.h.bf16 %v8304
    %v8456 = vunpack.c.l.bf16 %v8305
    %v8457 = vunpack.c.h.bf16 %v8305
    %v8458 = vunpack.c.l.bf16 %v8306
    %v8459 = vunpack.c.l.bf16 %v8307
    %v8460 = vunpack.c.h.bf16 %v8307
    %v8461 = vunpack.c.l.bf16 %v8308
    %v8462 = vunpack.c.h.bf16 %v8308
    %v8463 = vunpack.c.l.bf16 %v8309
    %v8464 = vunpack.c.l.bf16 %v8310
    %v8465 = vunpack.c.h.bf16 %v8310
    %v8466 = vunpack.c.l.bf16 %v8311
    %v8467 = vunpack.c.h.bf16 %v8311
    %v8468 = vunpack.c.l.bf16 %v8312
    %v8469 = vunpack.c.l.bf16 %v8313
    %v8470 = vunpack.c.h.bf16 %v8313
    %v8471 = vunpack.c.l.bf16 %v8314
    %v8472 = vunpack.c.h.bf16 %v8314
    %v8473 = vunpack.c.l.bf16 %v8315
    %v8474 = vunpack.c.l.bf16 %v8316
    %v8475 = vunpack.c.h.bf16 %v8316
    %v8476 = vunpack.c.l.bf16 %v8317
    %v8477 = vunpack.c.h.bf16 %v8317
    %v8478 = vunpack.c.l.bf16 %v8318
    %v8479 = vunpack.c.l.bf16 %v8319
    %v8480 = vunpack.c.h.bf16 %v8319
    %v8481 = vunpack.c.l.bf16 %v8320
    %v8482 = vunpack.c.h.bf16 %v8320
    %v8483 = vunpack.c.l.bf16 %v8321
    %v8484 = vunpack.c.l.bf16 %v8322
    %v8485 = vunpack.c.h.bf16 %v8322
    %v8486 = vunpack.c.l.bf16 %v8323
    %v8487 = vunpack.c.h.bf16 %v8323
    %v8488 = vunpack.c.l.bf16 %v8324
    %v8489 = vunpack.c.l.bf16 %v8325
    %v8490 = vunpack.c.h.bf16 %v8325
    %v8491 = vunpack.c.l.bf16 %v8326
    %v8492 = vunpack.c.h.bf16 %v8326
    %v8493 = vunpack.c.l.bf16 %v8327
    %v8494 = vunpack.c.l.bf16 %v8328
    %v8495 = vunpack.c.h.bf16 %v8328
    %v8496 = vunpack.c.l.bf16 %v8329
    %v8497 = vunpack.c.h.bf16 %v8329
    %v8498 = vunpack.c.l.bf16 %v8330
    %v8499 = vunpack.c.l.bf16 %v8331
    %v8500 = vunpack.c.h.bf16 %v8331
    %v8501 = vunpack.c.l.bf16 %v8332
    %v8502 = vunpack.c.h.bf16 %v8332
    %v8503 = vunpack.c.l.bf16 %v8333
    %v8504 = vunpack.c.l.bf16 %v8334
    %v8505 = vunpack.c.h.bf16 %v8334
    %v8506 = vunpack.c.l.bf16 %v8335
    %v8507 = vunpack.c.h.bf16 %v8335
    %v8508 = vunpack.c.l.bf16 %v8336
    %v8509 = vunpack.c.l.bf16 %v8337
    %v8510 = vunpack.c.h.bf16 %v8337
    %v8511 = vunpack.c.l.bf16 %v8338
    %v8512 = vunpack.c.h.bf16 %v8338
    %v8513 = vunpack.c.l.bf16 %v8339
    %v8514 = vunpack.c.l.bf16 %v8340
    %v8515 = vunpack.c.h.bf16 %v8340
    %v8516 = vunpack.c.l.bf16 %v8341
    %v8517 = vunpack.c.h.bf16 %v8341
    %v8518 = vunpack.c.l.bf16 %v8342
    %v8519 = vunpack.c.l.bf16 %v8343
    %v8520 = vunpack.c.h.bf16 %v8343
    %v8521 = vunpack.c.l.bf16 %v8344
    %v8522 = vunpack.c.h.bf16 %v8344
    %v8523 = vunpack.c.l.bf16 %v8345
    %v8524 = vunpack.c.l.bf16 %v8346
    %v8525 = vunpack.c.h.bf16 %v8346
    %v8526 = vunpack.c.l.bf16 %v8347
    %v8527 = vunpack.c.h.bf16 %v8347
    %v8528 = vunpack.c.l.bf16 %v8348
    %v8529 = vunpack.c.l.bf16 %v8349
    %v8530 = vunpack.c.h.bf16 %v8349
    %v8531 = vunpack.c.l.bf16 %v8350
    %v8532 = vunpack.c.h.bf16 %v8350
    %v8533 = vunpack.c.l.bf16 %v8351
    %v8534 = vunpack.c.l.bf16 %v8352
    %v8535 = vunpack.c.h.bf16 %v8352
    %v8536 = vunpack.c.l.bf16 %v8353
    %v8537 = vunpack.c.h.bf16 %v8353
    %v8538 = vunpack.c.l.bf16 %v8354
    %v8539 = vunpack.c.l.bf16 %v8355
    %v8540 = vunpack.c.h.bf16 %v8355
    %v8541 = vunpack.c.l.bf16 %v8356
    %v8542 = vunpack.c.h.bf16 %v8356
    %v8543 = vunpack.c.l.bf16 %v8357
    %v8544 = vunpack.c.l.bf16 %v8358
    %v8545 = vunpack.c.h.bf16 %v8358
    %v8546 = vunpack.c.l.bf16 %v8359
    %v8547 = vunpack.c.h.bf16 %v8359
    %v8548 = vunpack.c.l.bf16 %v8360
    %v8549 = vunpack.c.l.bf16 %v8361
    %v8550 = vunpack.c.h.bf16 %v8361
    %v8551 = vunpack.c.l.bf16 %v8362
    %v8552 = vunpack.c.h.bf16 %v8362
    %v8553 = vunpack.c.l.bf16 %v8363
    %v8554 = vunpack.c.l.bf16 %v8364
    %v8555 = vunpack.c.h.bf16 %v8364
    %v8556 = vunpack.c.l.bf16 %v8365
    %v8557 = vunpack.c.h.bf16 %v8365
    %v8558 = vunpack.c.l.bf16 %v8366
    %v8559 = vunpack.c.l.bf16 %v8367
    %v8560 = vunpack.c.h.bf16 %v8367
    %v8561 = vunpack.c.l.bf16 %v8368
    %v8562 = vunpack.c.h.bf16 %v8368
    %v8563 = vunpack.c.l.bf16 %v8369
    %v8564 = vunpack.c.l.bf16 %v8370
    %v8565 = vunpack.c.h.bf16 %v8370
    %v8566 = vunpack.c.l.bf16 %v8371
    %v8567 = vunpack.c.h.bf16 %v8371
    %v8568 = vunpack.c.l.bf16 %v8372
    %v8569 = vunpack.c.l.bf16 %v8373
    %v8570 = vunpack.c.h.bf16 %v8373
    %v8571 = vunpack.c.l.bf16 %v8374
    %v8572 = vunpack.c.h.bf16 %v8374
    %v8573 = vunpack.c.l.bf16 %v8375
    %v8574 = vunpack.c.l.bf16 %v8376
    %v8575 = vunpack.c.h.bf16 %v8376
    %v8576 = vunpack.c.l.bf16 %v8377
    %v8577 = vunpack.c.h.bf16 %v8377
    %v8578 = vunpack.c.l.bf16 %v8378
    %v8579 = vrot.slane %v5929, 3
    %v8580 = vrot.slane %v5931, 3
    %v8581 = vrot.slane %v6000, 3
    %v8584 = vsel %vm2873, %v8581, 0
    %8586 = vmatprep.subr.mxu0 %v8380
    %8587 = vmatpush1.msra.mxu0 %v8379
    %8588 = vmatprep.subr.mxu0 %v8385
    %8589 = vmatpush1.msra.mxu0 %v8384
    %8590 = vmatprep.subr.mxu0 %v8390
    %8591 = vmatpush1.msra.mxu0 %v8389
    %8592 = vmatprep.subr.mxu0 %v8395
    %8593 = vmatpush1.msra.mxu0 %v8394
    %8594 = vmatprep.subr.mxu0 %v8400
    %8595 = vmatpush1.msra.mxu0 %v8399
    %8596 = vmatprep.subr.mxu0 %v8405
    %8597 = vmatpush1.msra.mxu0 %v8404
    %8598 = vmatprep.subr.mxu0 %v8410
    %8599 = vmatpush1.msra.mxu0 %v8409
    %8600 = vmatprep.subr.mxu0 %v8415
    %8601 = vmatpush1.msra.mxu0 %v8414
    %8602 = vmatprep.subr.mxu0 %v8420
    %8603 = vmatpush1.msra.mxu0 %v8419
    %8604 = vmatprep.subr.mxu0 %v8425
    %8605 = vmatpush1.msra.mxu0 %v8424
    %8606 = vmatprep.subr.mxu0 %v8430
    %8607 = vmatpush1.msra.mxu0 %v8429
    %8608 = vmatprep.subr.mxu0 %v8435
    %8609 = vmatpush1.msra.mxu0 %v8434
    %8610 = vmatprep.subr.mxu0 %v8440
    %8611 = vmatpush1.msra.mxu0 %v8439
    %8612 = vmatprep.subr.mxu0 %v8445
    %8613 = vmatpush1.msra.mxu0 %v8444
    %8614 = vmatprep.subr.mxu0 %v8450
    %8615 = vmatpush1.msra.mxu0 %v8449
    %8616 = vmatprep.subr.mxu0 %v8455
    %8617 = vmatpush1.msra.mxu0 %v8454
    %8618 = vmatprep.subr.mxu0 %v8460
    %8619 = vmatpush1.msra.mxu0 %v8459
    %8620 = vmatprep.subr.mxu0 %v8465
    %8621 = vmatpush1.msra.mxu0 %v8464
    %8622 = vmatprep.subr.mxu0 %v8470
    %8623 = vmatpush1.msra.mxu0 %v8469
    %8624 = vmatprep.subr.mxu0 %v8475
    %8625 = vmatpush1.msra.mxu0 %v8474
    %8626 = vmatprep.subr.mxu0 %v8480
    %8627 = vmatpush1.msra.mxu0 %v8479
    %8628 = vmatprep.subr.mxu0 %v8485
    %8629 = vmatpush1.msra.mxu0 %v8484
    %8630 = vmatprep.subr.mxu0 %v8490
    %8631 = vmatpush1.msra.mxu0 %v8489
    %8632 = vmatprep.subr.mxu0 %v8495
    %8633 = vmatpush1.msra.mxu0 %v8494
    %8634 = vmatprep.subr.mxu0 %v8500
    %8635 = vmatpush1.msra.mxu0 %v8499
    %8636 = vmatprep.subr.mxu0 %v8505
    %8637 = vmatpush1.msra.mxu0 %v8504
    %8638 = vmatprep.subr.mxu0 %v8510
    %8639 = vmatpush1.msra.mxu0 %v8509
    %8640 = vmatprep.subr.mxu0 %v8515
    %8641 = vmatpush1.msra.mxu0 %v8514
    %8642 = vmatprep.subr.mxu0 %v8520
    %8643 = vmatpush1.msra.mxu0 %v8519
    %8644 = vmatprep.subr.mxu0 %v8525
    %8645 = vmatpush1.msra.mxu0 %v8524
    %8646 = vmatprep.subr.mxu0 %v8530
    %8647 = vmatpush1.msra.mxu0 %v8529
    %8648 = vmatprep.subr.mxu0 %v8535
    %8649 = vmatpush1.msra.mxu0 %v8534
    %8650 = vmatprep.mubr.f32.mxu0 %v8580
    %8651 = vmatmul.mubr.f32.gmra.mrb[0].mxu0 %v8579
    %v8652 = vpop.f32.mrb[0].mxu0
    %v8653 = vadd.f32 0.0, %v8652
    %v8654 = vpop.f32.mrb[0].mxu0
    %v8655 = vadd.f32 0.0, %v8654
    %8656 = vdwg.mxu0
    %8657 = vmatprep.subr.mxu0 %v8540
    %8658 = vmatpush1.msra.mxu0 %v8539
    %8659 = vmatprep.subr.mxu0 %v8545
    %8660 = vmatpush1.msra.mxu0 %v8544
    %8661 = vmatprep.subr.mxu0 %v8550
    %8662 = vmatpush1.msra.mxu0 %v8549
    %8663 = vmatprep.subr.mxu0 %v8555
    %8664 = vmatpush1.msra.mxu0 %v8554
    %8665 = vmatprep.subr.mxu0 %v8560
    %8666 = vmatpush1.msra.mxu0 %v8559
    %8667 = vmatprep.subr.mxu0 %v8565
    %8668 = vmatpush1.msra.mxu0 %v8564
    %8669 = vmatprep.subr.mxu0 %v8570
    %8670 = vmatpush1.msra.mxu0 %v8569
    %8671 = vmatprep.subr.mxu0 %v8575
    %8672 = vmatpush1.msra.mxu0 %v8574
    %8673 = vmatprep.subr.mxu0 0.0
    %8674 = vmatpush1.msra.mxu0 0.0
    %8675 = vmatprep.subr.mxu0 0.0
    %8676 = vmatpush1.msra.mxu0 0.0
    %8677 = vmatprep.subr.mxu0 0.0
    %8678 = vmatpush1.msra.mxu0 0.0
    %8679 = vmatprep.subr.mxu0 0.0
    %8680 = vmatpush1.msra.mxu0 0.0
    %8681 = vmatprep.subr.mxu0 0.0
    %8682 = vmatpush1.msra.mxu0 0.0
    %8683 = vmatprep.subr.mxu0 0.0
    %8684 = vmatpush1.msra.mxu0 0.0
    %8685 = vmatprep.subr.mxu0 0.0
    %8686 = vmatpush1.msra.mxu0 0.0
    %8687 = vmatprep.subr.mxu0 0.0
    %8688 = vmatpush1.msra.mxu0 0.0
    %8689 = vmatprep.subr.mxu0 0.0
    %8690 = vmatpush1.msra.mxu0 0.0
    %8691 = vmatprep.subr.mxu0 0.0
    %8692 = vmatpush1.msra.mxu0 0.0
    %8693 = vmatprep.subr.mxu0 0.0
    %8694 = vmatpush1.msra.mxu0 0.0
    %8695 = vmatprep.subr.mxu0 0.0
    %8696 = vmatpush1.msra.mxu0 0.0
    %8697 = vmatprep.subr.mxu0 0.0
    %8698 = vmatpush1.msra.mxu0 0.0
    %8699 = vmatprep.subr.mxu0 0.0
    %8700 = vmatpush1.msra.mxu0 0.0
    %8701 = vmatprep.subr.mxu0 0.0
    %8702 = vmatpush1.msra.mxu0 0.0
    %8703 = vmatprep.subr.mxu0 0.0
    %8704 = vmatpush1.msra.mxu0 0.0
    %8705 = vmatprep.subr.mxu0 0.0
    %8706 = vmatpush1.msra.mxu0 0.0
    %8707 = vmatprep.subr.mxu0 0.0
    %8708 = vmatpush1.msra.mxu0 0.0
    %8709 = vmatprep.subr.mxu0 0.0
    %8710 = vmatpush1.msra.mxu0 0.0
    %8711 = vmatprep.subr.mxu0 0.0
    %8712 = vmatpush1.msra.mxu0 0.0
    %8713 = vmatprep.subr.mxu0 0.0
    %8714 = vmatpush1.msra.mxu0 0.0
    %8715 = vmatprep.subr.mxu0 0.0
    %8716 = vmatpush1.msra.mxu0 0.0
    %8717 = vmatprep.subr.mxu0 0.0
    %8718 = vmatpush1.msra.mxu0 0.0
    %8719 = vmatprep.subr.mxu0 0.0
    %8720 = vmatpush1.msra.mxu0 0.0
    %8721 = vmatprep.mubr.f32.mxu0 0.0
    %8722 = vmatmul.mubr.f32.gmra.mrb[0].mxu0 %v8584
    %v8723 = vpop.f32.mrb[0].mxu0
    %v8724 = vadd.f32 %v8653, %v8723
    %v8725 = vpop.f32.mrb[0].mxu0
    %v8726 = vadd.f32 %v8655, %v8725
    %8727 = vdwg.mxu0
    %8728 = vmatprep.subr.mxu0 %v8382
    %8729 = vmatpush1.msra.mxu0 %v8381
    %8730 = vmatprep.subr.mxu0 %v8387
    %8731 = vmatpush1.msra.mxu0 %v8386
    %8732 = vmatprep.subr.mxu0 %v8392
    %8733 = vmatpush1.msra.mxu0 %v8391
    %8734 = vmatprep.subr.mxu0 %v8397
    %8735 = vmatpush1.msra.mxu0 %v8396
    %8736 = vmatprep.subr.mxu0 %v8402
    %8737 = vmatpush1.msra.mxu0 %v8401
    %8738 = vmatprep.subr.mxu0 %v8407
    %8739 = vmatpush1.msra.mxu0 %v8406
    %8740 = vmatprep.subr.mxu0 %v8412
    %8741 = vmatpush1.msra.mxu0 %v8411
    %8742 = vmatprep.subr.mxu0 %v8417
    %8743 = vmatpush1.msra.mxu0 %v8416
    %8744 = vmatprep.subr.mxu0 %v8422
    %8745 = vmatpush1.msra.mxu0 %v8421
    %8746 = vmatprep.subr.mxu0 %v8427
    %8747 = vmatpush1.msra.mxu0 %v8426
    %8748 = vmatprep.subr.mxu0 %v8432
    %8749 = vmatpush1.msra.mxu0 %v8431
    %8750 = vmatprep.subr.mxu0 %v8437
    %8751 = vmatpush1.msra.mxu0 %v8436
    %8752 = vmatprep.subr.mxu0 %v8442
    %8753 = vmatpush1.msra.mxu0 %v8441
    %8754 = vmatprep.subr.mxu0 %v8447
    %8755 = vmatpush1.msra.mxu0 %v8446
    %8756 = vmatprep.subr.mxu0 %v8452
    %8757 = vmatpush1.msra.mxu0 %v8451
    %8758 = vmatprep.subr.mxu0 %v8457
    %8759 = vmatpush1.msra.mxu0 %v8456
    %8760 = vmatprep.subr.mxu0 %v8462
    %8761 = vmatpush1.msra.mxu0 %v8461
    %8762 = vmatprep.subr.mxu0 %v8467
    %8763 = vmatpush1.msra.mxu0 %v8466
    %8764 = vmatprep.subr.mxu0 %v8472
    %8765 = vmatpush1.msra.mxu0 %v8471
    %8766 = vmatprep.subr.mxu0 %v8477
    %8767 = vmatpush1.msra.mxu0 %v8476
    %8768 = vmatprep.subr.mxu0 %v8482
    %8769 = vmatpush1.msra.mxu0 %v8481
    %8770 = vmatprep.subr.mxu0 %v8487
    %8771 = vmatpush1.msra.mxu0 %v8486
    %8772 = vmatprep.subr.mxu0 %v8492
    %8773 = vmatpush1.msra.mxu0 %v8491
    %8774 = vmatprep.subr.mxu0 %v8497
    %8775 = vmatpush1.msra.mxu0 %v8496
    %8776 = vmatprep.subr.mxu0 %v8502
    %8777 = vmatpush1.msra.mxu0 %v8501
    %8778 = vmatprep.subr.mxu0 %v8507
    %8779 = vmatpush1.msra.mxu0 %v8506
    %8780 = vmatprep.subr.mxu0 %v8512
    %8781 = vmatpush1.msra.mxu0 %v8511
    %8782 = vmatprep.subr.mxu0 %v8517
    %8783 = vmatpush1.msra.mxu0 %v8516
    %8784 = vmatprep.subr.mxu0 %v8522
    %8785 = vmatpush1.msra.mxu0 %v8521
    %8786 = vmatprep.subr.mxu0 %v8527
    %8787 = vmatpush1.msra.mxu0 %v8526
    %8788 = vmatprep.subr.mxu0 %v8532
    %8789 = vmatpush1.msra.mxu0 %v8531
    %8790 = vmatprep.subr.mxu0 %v8537
    %8791 = vmatpush1.msra.mxu0 %v8536
    %8792 = vmatprep.mubr.f32.mxu0 %v8580
    %8793 = vmatmul.mubr.f32.gmra.mrb[0].mxu0 %v8579
    %v8794 = vpop.f32.mrb[0].mxu0
    %v8795 = vadd.f32 0.0, %v8794
    %v8796 = vpop.f32.mrb[0].mxu0
    %v8797 = vadd.f32 0.0, %v8796
    %8798 = vdwg.mxu0
    %8799 = vmatprep.subr.mxu0 %v8542
    %8800 = vmatpush1.msra.mxu0 %v8541
    %8801 = vmatprep.subr.mxu0 %v8547
    %8802 = vmatpush1.msra.mxu0 %v8546
    %8803 = vmatprep.subr.mxu0 %v8552
    %8804 = vmatpush1.msra.mxu0 %v8551
    %8805 = vmatprep.subr.mxu0 %v8557
    %8806 = vmatpush1.msra.mxu0 %v8556
    %8807 = vmatprep.subr.mxu0 %v8562
    %8808 = vmatpush1.msra.mxu0 %v8561
    %8809 = vmatprep.subr.mxu0 %v8567
    %8810 = vmatpush1.msra.mxu0 %v8566
    %8811 = vmatprep.subr.mxu0 %v8572
    %8812 = vmatpush1.msra.mxu0 %v8571
    %8813 = vmatprep.subr.mxu0 %v8577
    %8814 = vmatpush1.msra.mxu0 %v8576
    %8815 = vmatprep.subr.mxu0 0.0
    %8816 = vmatpush1.msra.mxu0 0.0
    %8817 = vmatprep.subr.mxu0 0.0
    %8818 = vmatpush1.msra.mxu0 0.0
    %8819 = vmatprep.subr.mxu0 0.0
    %8820 = vmatpush1.msra.mxu0 0.0
    %8821 = vmatprep.subr.mxu0 0.0
    %8822 = vmatpush1.msra.mxu0 0.0
    %8823 = vmatprep.subr.mxu0 0.0
    %8824 = vmatpush1.msra.mxu0 0.0
    %8825 = vmatprep.subr.mxu0 0.0
    %8826 = vmatpush1.msra.mxu0 0.0
    %8827 = vmatprep.subr.mxu0 0.0
    %8828 = vmatpush1.msra.mxu0 0.0
    %8829 = vmatprep.subr.mxu0 0.0
    %8830 = vmatpush1.msra.mxu0 0.0
    %8831 = vmatprep.subr.mxu0 0.0
    %8832 = vmatpush1.msra.mxu0 0.0
    %8833 = vmatprep.subr.mxu0 0.0
    %8834 = vmatpush1.msra.mxu0 0.0
    %8835 = vmatprep.subr.mxu0 0.0
    %8836 = vmatpush1.msra.mxu0 0.0
    %8837 = vmatprep.subr.mxu0 0.0
    %8838 = vmatpush1.msra.mxu0 0.0
    %8839 = vmatprep.subr.mxu0 0.0
    %8840 = vmatpush1.msra.mxu0 0.0
    %8841 = vmatprep.subr.mxu0 0.0
    %8842 = vmatpush1.msra.mxu0 0.0
    %8843 = vmatprep.subr.mxu0 0.0
    %8844 = vmatpush1.msra.mxu0 0.0
    %8845 = vmatprep.subr.mxu0 0.0
    %8846 = vmatpush1.msra.mxu0 0.0
    %8847 = vmatprep.subr.mxu0 0.0
    %8848 = vmatpush1.msra.mxu0 0.0
    %8849 = vmatprep.subr.mxu0 0.0
    %8850 = vmatpush1.msra.mxu0 0.0
    %8851 = vmatprep.subr.mxu0 0.0
    %8852 = vmatpush1.msra.mxu0 0.0
    %8853 = vmatprep.subr.mxu0 0.0
    %8854 = vmatpush1.msra.mxu0 0.0
    %8855 = vmatprep.subr.mxu0 0.0
    %8856 = vmatpush1.msra.mxu0 0.0
    %8857 = vmatprep.subr.mxu0 0.0
    %8858 = vmatpush1.msra.mxu0 0.0
    %8859 = vmatprep.subr.mxu0 0.0
    %8860 = vmatpush1.msra.mxu0 0.0
    %8861 = vmatprep.subr.mxu0 0.0
    %8862 = vmatpush1.msra.mxu0 0.0
    %8863 = vmatprep.mubr.f32.mxu0 0.0
    %8864 = vmatmul.mubr.f32.gmra.mrb[0].mxu0 %v8584
    %v8865 = vpop.f32.mrb[0].mxu0
    %v8866 = vadd.f32 %v8795, %v8865
    %v8867 = vpop.f32.mrb[0].mxu0
    %v8868 = vadd.f32 %v8797, %v8867
    %8869 = vdwg.mxu0
    %8870 = vmatprep.subr.mxu0 0.0
    %8871 = vmatpush1.msra.mxu0 %v8383
    %8872 = vmatprep.subr.mxu0 0.0
    %8873 = vmatpush1.msra.mxu0 %v8388
    %8874 = vmatprep.subr.mxu0 0.0
    %8875 = vmatpush1.msra.mxu0 %v8393
    %8876 = vmatprep.subr.mxu0 0.0
    %8877 = vmatpush1.msra.mxu0 %v8398
    %8878 = vmatprep.subr.mxu0 0.0
    %8879 = vmatpush1.msra.mxu0 %v8403
    %8880 = vmatprep.subr.mxu0 0.0
    %8881 = vmatpush1.msra.mxu0 %v8408
    %8882 = vmatprep.subr.mxu0 0.0
    %8883 = vmatpush1.msra.mxu0 %v8413
    %8884 = vmatprep.subr.mxu0 0.0
    %8885 = vmatpush1.msra.mxu0 %v8418
    %8886 = vmatprep.subr.mxu0 0.0
    %8887 = vmatpush1.msra.mxu0 %v8423
    %8888 = vmatprep.subr.mxu0 0.0
    %8889 = vmatpush1.msra.mxu0 %v8428
    %8890 = vmatprep.subr.mxu0 0.0
    %8891 = vmatpush1.msra.mxu0 %v8433
    %8892 = vmatprep.subr.mxu0 0.0
    %8893 = vmatpush1.msra.mxu0 %v8438
    %8894 = vmatprep.subr.mxu0 0.0
    %8895 = vmatpush1.msra.mxu0 %v8443
    %8896 = vmatprep.subr.mxu0 0.0
    %8897 = vmatpush1.msra.mxu0 %v8448
    %8898 = vmatprep.subr.mxu0 0.0
    %8899 = vmatpush1.msra.mxu0 %v8453
    %8900 = vmatprep.subr.mxu0 0.0
    %8901 = vmatpush1.msra.mxu0 %v8458
    %8902 = vmatprep.subr.mxu0 0.0
    %8903 = vmatpush1.msra.mxu0 %v8463
    %8904 = vmatprep.subr.mxu0 0.0
    %8905 = vmatpush1.msra.mxu0 %v8468
    %8906 = vmatprep.subr.mxu0 0.0
    %8907 = vmatpush1.msra.mxu0 %v8473
    %8908 = vmatprep.subr.mxu0 0.0
    %8909 = vmatpush1.msra.mxu0 %v8478
    %8910 = vmatprep.subr.mxu0 0.0
    %8911 = vmatpush1.msra.mxu0 %v8483
    %8912 = vmatprep.subr.mxu0 0.0
    %8913 = vmatpush1.msra.mxu0 %v8488
    %8914 = vmatprep.subr.mxu0 0.0
    %8915 = vmatpush1.msra.mxu0 %v8493
    %8916 = vmatprep.subr.mxu0 0.0
    %8917 = vmatpush1.msra.mxu0 %v8498
    %8918 = vmatprep.subr.mxu0 0.0
    %8919 = vmatpush1.msra.mxu0 %v8503
    %8920 = vmatprep.subr.mxu0 0.0
    %8921 = vmatpush1.msra.mxu0 %v8508
    %8922 = vmatprep.subr.mxu0 0.0
    %8923 = vmatpush1.msra.mxu0 %v8513
    %8924 = vmatprep.subr.mxu0 0.0
    %8925 = vmatpush1.msra.mxu0 %v8518
    %8926 = vmatprep.subr.mxu0 0.0
    %8927 = vmatpush1.msra.mxu0 %v8523
    %8928 = vmatprep.subr.mxu0 0.0
    %8929 = vmatpush1.msra.mxu0 %v8528
    %8930 = vmatprep.subr.mxu0 0.0
    %8931 = vmatpush1.msra.mxu0 %v8533
    %8932 = vmatprep.subr.mxu0 0.0
    %8933 = vmatpush1.msra.mxu0 %v8538
    %8934 = vmatprep.mubr.f32.mxu0 %v8580
    %8935 = vmatmul.mubr.f32.gmra.mrb[0].mxu0 %v8579
    %v8936 = vpop.f32.mrb[0].mxu0
    %v8937 = vadd.f32 0.0, %v8936
    %v8938 = vpop.f32.mrb[0].mxu0
    %8939 = vdwg.mxu0
    %8940 = vmatprep.subr.mxu0 0.0
    %8941 = vmatpush1.msra.mxu0 %v8543
    %8942 = vmatprep.subr.mxu0 0.0
    %8943 = vmatpush1.msra.mxu0 %v8548
    %8944 = vmatprep.subr.mxu0 0.0
    %8945 = vmatpush1.msra.mxu0 %v8553
    %8946 = vmatprep.subr.mxu0 0.0
    %8947 = vmatpush1.msra.mxu0 %v8558
    %8948 = vmatprep.subr.mxu0 0.0
    %8949 = vmatpush1.msra.mxu0 %v8563
    %8950 = vmatprep.subr.mxu0 0.0
    %8951 = vmatpush1.msra.mxu0 %v8568
    %8952 = vmatprep.subr.mxu0 0.0
    %8953 = vmatpush1.msra.mxu0 %v8573
    %8954 = vmatprep.subr.mxu0 0.0
    %8955 = vmatpush1.msra.mxu0 %v8578
    %8956 = vmatprep.subr.mxu0 0.0
    %8957 = vmatpush1.msra.mxu0 0.0
    %8958 = vmatprep.subr.mxu0 0.0
    %8959 = vmatpush1.msra.mxu0 0.0
    %8960 = vmatprep.subr.mxu0 0.0
    %8961 = vmatpush1.msra.mxu0 0.0
    %8962 = vmatprep.subr.mxu0 0.0
    %8963 = vmatpush1.msra.mxu0 0.0
    %8964 = vmatprep.subr.mxu0 0.0
    %8965 = vmatpush1.msra.mxu0 0.0
    %8966 = vmatprep.subr.mxu0 0.0
    %8967 = vmatpush1.msra.mxu0 0.0
    %8968 = vmatprep.subr.mxu0 0.0
    %8969 = vmatpush1.msra.mxu0 0.0
    %8970 = vmatprep.subr.mxu0 0.0
    %8971 = vmatpush1.msra.mxu0 0.0
    %8972 = vmatprep.subr.mxu0 0.0
    %8973 = vmatpush1.msra.mxu0 0.0
    %8974 = vmatprep.subr.mxu0 0.0
    %8975 = vmatpush1.msra.mxu0 0.0
    %8976 = vmatprep.subr.mxu0 0.0
    %8977 = vmatpush1.msra.mxu0 0.0
    %8978 = vmatprep.subr.mxu0 0.0
    %8979 = vmatpush1.msra.mxu0 0.0
    %8980 = vmatprep.subr.mxu0 0.0
    %8981 = vmatpush1.msra.mxu0 0.0
    %8982 = vmatprep.subr.mxu0 0.0
    %8983 = vmatpush1.msra.mxu0 0.0
    %8984 = vmatprep.subr.mxu0 0.0
    %8985 = vmatpush1.msra.mxu0 0.0
    %8986 = vmatprep.subr.mxu0 0.0
    %8987 = vmatpush1.msra.mxu0 0.0
    %8988 = vmatprep.subr.mxu0 0.0
    %8989 = vmatpush1.msra.mxu0 0.0
    %8990 = vmatprep.subr.mxu0 0.0
    %8991 = vmatpush1.msra.mxu0 0.0
    %8992 = vmatprep.subr.mxu0 0.0
    %8993 = vmatpush1.msra.mxu0 0.0
    %8994 = vmatprep.subr.mxu0 0.0
    %8995 = vmatpush1.msra.mxu0 0.0
    %8996 = vmatprep.subr.mxu0 0.0
    %8997 = vmatpush1.msra.mxu0 0.0
    %8998 = vmatprep.subr.mxu0 0.0
    %8999 = vmatpush1.msra.mxu0 0.0
    %9000 = vmatprep.subr.mxu0 0.0
    %9001 = vmatpush1.msra.mxu0 0.0
    %9002 = vmatprep.subr.mxu0 0.0
    %9003 = vmatpush1.msra.mxu0 0.0
    %9004 = vmatprep.mubr.f32.mxu0 0.0
    %9005 = vmatmul.mubr.f32.gmra.mrb[0].mxu0 %v8584
    %v9006 = vpop.f32.mrb[0].mxu0
    %v9007 = vadd.f32 %v8937, %v9006
    %v9008 = vpop.f32.mrb[0].mxu0
    %9009 = vdwg.mxu0
    %v9010 = vadd.f32 %v8254, %v8724
    %v9011 = vadd.f32 %v8255, %v8726
    %v9012 = vadd.f32 %v8256, %v8866
    %v9013 = vadd.f32 %v8257, %v8868
    %v9014 = vadd.f32 %v8258, %v9007
    %v9015 = vtanh.pop %v9010
    %v9016 = vtanh.pop %v9011
    %v9017 = vtanh.pop %v9012
    %v9018 = vtanh.pop %v9013
    %v9019 = vtanh.pop %v9014
    %v9025 = vcombine.low %v9015, %v9016
    %v9026 = vcombine.low %v9017, %v9018
    %v9028 = vunpack.c.l.s4 1966171168
    %v9029 = vunpack.c.0.s8 %v9028
    %v9030 = vlaneseq
    %v9031 = vshrl.u32 %v9030, 7
    %v9032 = vsub.s32 %v9029, %v9031
    %v9033 = vrot.slane %v9025, %v9032
    %v9035 = vunpack.c.l.s4 1966171168
    %v9036 = vunpack.c.0.s8 %v9035
    %v9037 = vlaneseq
    %v9038 = vshrl.u32 %v9037, 7
    %v9039 = vsub.s32 %v9036, %v9038
    %v9040 = vrot.slane %v9026, %v9039
    %v9042 = vunpack.c.l.s4 1966171168
    %v9043 = vunpack.c.0.s8 %v9042
    %v9044 = vlaneseq
    %v9045 = vshrl.u32 %v9044, 7
    %v9046 = vsub.s32 %v9043, %v9045
    %v9047 = vrot.slane %v9019, %v9046
    %v9048 = vcombine.low %v9033, %v9040
    %v9050 = vunpack.c.l.s4 1966171168
    %v9051 = vunpack.c.0.s8 %v9050
    %v9052 = vlaneseq
    %v9053 = vshrl.u32 %v9052, 7
    %v9054 = vsub.s32 %v9051, %v9053
    %v9055 = vrot.slane %v9048, %v9054
    %v9057 = vunpack.c.l.s4 1966171168
    %v9058 = vunpack.c.0.s8 %v9057
    %v9059 = vlaneseq
    %v9060 = vshrl.u32 %v9059, 7
    %v9061 = vsub.s32 %v9058, %v9060
    %v9062 = vrot.slane %v9047, %v9061
    %v9063 = vcombine.low %v9055, %v9062
    %v9065 = vlaneseq
    %vm9066 = vcmp.ge.s32.totalorder %v9065, 0
    %vm9067 = vcmp.lt.s32.totalorder %v9065, 640
    %vm9068 = vmand %vm9066, %vm9067
    %9069 = vst.msk [vmem:[#allocation31] sm:$0x1f] %vm9068, %v9063
    // Predicated region
    $region262: #{tpu_custom_call.1} parent=1 // pred_check
      _
    $region263: #{tpu_custom_call.1} parent=1 // pred_check_branch
      %9071 = sbr.rel (0) target = $region265
    $region264: #{tpu_custom_call.1} parent=1 // pred_region
      %s9073 = ssub.s32 80, 80
      %9074 = vsyncadd [#allocation4], %s9073
      %s9076 = sshll.u32 [#allocation31], 4
      %s9077 = int_to_ptr.vmem [resolvable:$true] %s9076
      %9079 = dma.vmem_to_hbm [thread:$0]  %s9077, 80, %s95, [#allocation4]
    $region265: #{tpu_custom_call.1} parent=1 // pred_fallthru
      _
    // Predicated region
    $region266: #{tpu_custom_call.1} parent=1 // pred_check
      _
    $region267: #{tpu_custom_call.1} parent=1 // pred_check_branch
      %9081 = sbr.rel (0) target = $region269
    $region268: #{tpu_custom_call.1} parent=1 // pred_region
      %9082 = dma.done [#allocation4], 80
    $region269: #{tpu_custom_call.1} parent=1 // pred_fallthru
      _
    %9083 = vsyncpa [#allocation3], 1
    %9084 = vsyncpa [#allocation6], 1
    %9085 = vsyncpa [#allocation9], 1
    %9086 = vsyncpa [#allocation12], 1
    %9087 = vsyncpa [#allocation15], 1
    %9088 = vsyncpa [#allocation18], 1
    %9089 = vsyncpa [#allocation21], 1
    %9090 = vsyncpa [#allocation24], 1
    %9091 = vsyncpa [#allocation27], 1
    %9092 = vsyncpa [#allocation30], 1
    %9093 = vsyncpa [#allocation4], 1

</llo_original>
